<compile_context>
chip_gen: v5e
topology: v5e:2x2
jax: 0.10.0
libtpu: 0.0.40
codegen_flags: <defaults>
</compile_context>

<pallas_src>
import jax
import jax.numpy as jnp
import numpy as np
from jax import lax
from jax.experimental import pallas as pl
from jax.experimental.pallas import tpu as pltpu

HEAD_PAD = 128   # fused head output lanes: 18 cls + 36 bbox + 74 zero pad
CONV_CH = 512    # RPN_Conv output channels


# ---------------------------------------------------------------------------
# VMEM budgeting / tile selection
# ---------------------------------------------------------------------------
def _vmem_limit_bytes():
    """~75% of per-core physical VMEM (v5e/v6e: 128 MiB, v7x: 64 MiB)."""
    try:
        cap = int(pltpu.get_tpu_info().vmem_capacity_bytes)
    except Exception:
        cap = 64 * 1024 * 1024          # conservative (v7x-sized)
    return max((cap * 3) // 4, 32 * 1024 * 1024)


def _pick_tile_h(H, W, Cin, B, vmem_limit, out_itemsize, target_rows=512):
    """Largest TH dividing H with (TH*W) % 8 == 0 that fits the VMEM budget.

    Bigger row tiles (256-512 output rows) fill the 256x256 MXU on v6e/v7x
    and amortize the ~0.35us/step grid overhead; the byte budget keeps the
    im2col slab + fp32 activations inside v7x's smaller VMEM.  When B == 1,
    prefer >= 2 row tiles so both v7x TensorCores get grid work.
    """
    def tile_bytes(th):
        rows = th * W
        return (rows * 9 * Cin * 2                      # bf16 im2col slab
                + rows * CONV_CH * 4                    # fp32 conv1 activations
                + rows * HEAD_PAD * 4                   # fp32 fused head scores
                + 2 * rows * HEAD_PAD * out_itemsize)   # double-buffered output

    fixed = (2 * (H + 2) * (W + 2) * Cin * 2            # resident padded map x2
             + 9 * Cin * CONV_CH * 2                    # conv weights
             + CONV_CH * HEAD_PAD * 2                   # fused head weights
             + (CONV_CH + HEAD_PAD) * 4)                # biases
    budget = max(vmem_limit // 2 - fixed, 1 << 20)      # leave compiler headroom

    cands = [th for th in range(1, H + 1)
             if H % th == 0 and (th * W) % 8 == 0
             and th * W <= target_rows and tile_bytes(th) <= budget]
    if not cands:
        # Full-extent block is always legal; only tiny feature maps hit this.
        return H
    if B == 1:
        halved = [th for th in cands if H // th >= 2]
        if halved:
            return max(halved)
    return max(cands)


# ---------------------------------------------------------------------------
# Pallas kernel
# ---------------------------------------------------------------------------
def _make_rpn_kernel(TH, H, W, Cin):
    THW = TH * W

    def kernel(x_ref, w1_ref, b1_ref, wh_ref, bh_ref, out_ref):
        t = pl.program_id(1)
        row0 = pl.multiple_of(t * TH, TH)

        # --- 3x3 conv as im2col + one K=9*Cin MXU matmul -------------------
        # Per-tap ref loads: only (TH, W, Cin) slabs are pulled from the
        # resident padded map (never the whole halo window as a value),
        # cutting vreg spills and vld/vst slot pressure.
        cols = []
        for kh in range(3):
            for kw in range(3):
                tap = x_ref[pl.ds(row0 + kh, TH), pl.ds(kw, W), :]
                cols.append(tap.reshape(THW, Cin))
        # Column order (kh, kw, cin) matches w1.reshape(9*Cin, 512).
        patches = jnp.concatenate(cols, axis=-1)              # (THW, 9*Cin) bf16

        acc = jnp.dot(patches, w1_ref[...],
                      preferred_element_type=jnp.float32)     # fp32 accumulate
        conv1 = jnp.maximum(acc + b1_ref[...], 0.0)           # (THW, 512) fp32

        # --- fused 1x1 heads: [w_cls(18) | w_bbox(36) | zero-pad] -> 128 ----
        scores = jnp.dot(conv1.astype(jnp.bfloat16), wh_ref[...],
                         preferred_element_type=jnp.float32) + bh_ref[...]

        # --- 2-way softmax over paired cls channels (c, c+9), fp32 math -----
        # (torch: reshape (B,2,9H,W) -> softmax(dim=1) -> reshape back)
        s0 = scores[:, 0:9]
        s1 = scores[:, 9:18]
        m = jnp.maximum(s0, s1)
        e0 = jnp.exp(s0 - m)
        e1 = jnp.exp(s1 - m)
        # Approx reciprocal on the EUP slot: ~1e-3 relative error in the
        # objectness probabilities (documented choice; use approx=False if
        # exact NMS score ordering near the threshold matters downstream).
        inv = pl.reciprocal(e0 + e1, approx=True)
        p0 = e0 * inv
        p1 = e1 * inv

        # Single lane-dense (THW, 128) bf16 store: [p0 | p1 | bbox | zeros].
        out_ref[...] = jnp.concatenate(
            [p0, p1, scores[:, 18:]], axis=-1).astype(out_ref.dtype)

    return kernel


# ---------------------------------------------------------------------------
# pallas_call construction (with single-buffered-weights capability probe)
# ---------------------------------------------------------------------------
_SINGLE_BUFFER_WEIGHTS = None   # resolved on first call


def _build_call(*, B, Cin, H, W, TH, vmem_limit, out_dtype, single_buffer):
    Hp, Wp = H + 2, W + 2
    HW, THW, NT = H * W, TH * W, H // TH
    out_itemsize = np.dtype(out_dtype).itemsize

    # Grid-invariant operands: single buffer (constant index map) when the
    # Pallas build accepts buffer_count=1 -> frees VMEM for bigger row tiles.
    wmode = {"pipeline_mode": pl.Buffered(1)} if single_buffer else {}

    kernel = _make_rpn_kernel(TH, H, W, Cin)

    flops = 2 * B * HW * (9 * Cin * CONV_CH + CONV_CH * HEAD_PAD)
    transcendentals = B * HW * 27            # 18 exp + 9 reciprocal per pixel
    bytes_accessed = (B * Hp * Wp * Cin * 2              # padded bf16 map
                      + 9 * Cin * CONV_CH * 2            # conv weights
                      + CONV_CH * HEAD_PAD * 2           # fused head weights
                      + (CONV_CH + HEAD_PAD) * 4         # biases
                      + B * HW * HEAD_PAD * out_itemsize)  # fused output slab

    return pl.pallas_call(
        kernel,
        out_shape=jax.ShapeDtypeStruct((B, HW, HEAD_PAD), out_dtype),
        grid_spec=pltpu.PrefetchScalarGridSpec(
            num_scalar_prefetch=0,
            grid=(B, NT),
            in_specs=[
                # full padded map per batch element; resident across row tiles
                pl.BlockSpec((None, Hp, Wp, Cin), lambda b, t: (b, 0, 0, 0)),
                pl.BlockSpec((9 * Cin, CONV_CH), lambda b, t: (0, 0), **wmode),
                pl.BlockSpec((1, CONV_CH), lambda b, t: (0, 0), **wmode),
                pl.BlockSpec((CONV_CH, HEAD_PAD), lambda b, t: (0, 0), **wmode),
                pl.BlockSpec((1, HEAD_PAD), lambda b, t: (0, 0), **wmode),
            ],
            out_specs=pl.BlockSpec((None, THW, HEAD_PAD), lambda b, t: (b, t, 0)),
        ),
        compiler_params=pltpu.CompilerParams(
            dimension_semantics=("parallel", "parallel"),
            vmem_limit_bytes=vmem_limit),
        cost_estimate=pl.CostEstimate(
            flops=flops, transcendentals=transcendentals,
            bytes_accessed=bytes_accessed),
    )


def _run_kernel(x_pad, w1, b1, w_head, b_head, **kw):
    """Run the kernel, probing pl.Buffered(1) support once and caching it."""
    global _SINGLE_BUFFER_WEIGHTS
    args = (x_pad, w1, b1, w_head, b_head)
    if _SINGLE_BUFFER_WEIGHTS is None:
        try:
            out = jax.block_until_ready(
                _build_call(single_buffer=True, **kw)(*args))
            _SINGLE_BUFFER_WEIGHTS = True
            return out
        except Exception:
            # This Pallas build rejects buffer_count=1 -> default buffering.
            _SINGLE_BUFFER_WEIGHTS = False
    return _build_call(single_buffer=_SINGLE_BUFFER_WEIGHTS, **kw)(*args)


# ---------------------------------------------------------------------------
# Wrapper: parameter plumbing + pallas_call
# ---------------------------------------------------------------------------
def rpn_forward_pallas(x_nchw, params):
    B, Cin, H, W = x_nchw.shape
    HW = H * W

    out_dtype = jnp.bfloat16                 # halves fused-slab HBM writeback
    out_itemsize = np.dtype(out_dtype).itemsize

    vmem_limit = _vmem_limit_bytes()
    TH = _pick_tile_h(H, W, Cin, B, vmem_limit, out_itemsize)

    # NCHW -> NHWC (lane = channels), zero pad for the 3x3 'same' conv, bf16.
    x_nhwc = jnp.transpose(x_nchw, (0, 2, 3, 1))
    x_pad = jnp.pad(x_nhwc, ((0, 0), (1, 1), (1, 1), (0, 0))).astype(jnp.bfloat16)

    # (3,3,Cin,512) -> (9*Cin, 512) bf16 (row order kh, kw, cin).
    w1 = params["w1"].reshape(9 * Cin, CONV_CH).astype(jnp.bfloat16)
    b1 = params["b1"].reshape(1, CONV_CH).astype(jnp.float32)

    # Fused, lane-padded head: [w_cls | w_bbox | zeros] -> (512, 128) bf16.
    w_head = jnp.concatenate([params["w_cls"], params["w_bbox"]], axis=1)
    w_head = jnp.pad(w_head, ((0, 0), (0, HEAD_PAD - 54))).astype(jnp.bfloat16)
    b_head = jnp.concatenate([params["b_cls"], params["b_bbox"]])
    b_head = jnp.pad(b_head, (0, HEAD_PAD - 54)).reshape(1, HEAD_PAD)
    b_head = b_head.astype(jnp.float32)

    out = _run_kernel(x_pad, w1, b1, w_head, b_head,
                      B=B, Cin=Cin, H=H, W=W, TH=TH,
                      vmem_limit=vmem_limit, out_dtype=out_dtype)

    # Split the fused bf16 slab and restore torch's fp32 NCHW channel layout.
    cls_prob = jnp.transpose(
        out[..., :18].astype(jnp.float32).reshape(B, H, W, 18), (0, 3, 1, 2))
    bbox_pred = jnp.transpose(
        out[..., 18:54].astype(jnp.float32).reshape(B, H, W, 36), (0, 3, 1, 2))

    # eval mode: losses are 0 (as in the torch module).
    # TODO(synk): rois (ProposalLayer: anchors + NMS) not implemented ->
    #             returning the cls probabilities and bbox deltas it consumes.
    rpn_loss_cls = jnp.float32(0.0)
    rpn_loss_box = jnp.float32(0.0)
    return cls_prob, bbox_pred, rpn_loss_cls, rpn_loss_box


# ---------------------------------------------------------------------------
# Pure-JAX reference (semantics of the PyTorch forward, eval mode, fp32)
# ---------------------------------------------------------------------------
def rpn_forward_ref(x_nchw, params):
    B, Cin, H, W = x_nchw.shape
    w1_oihw = jnp.transpose(params["w1"], (3, 2, 0, 1))          # (512,Cin,3,3)
    conv1 = lax.conv_general_dilated(
        x_nchw, w1_oihw, (1, 1), "SAME",
        dimension_numbers=("NCHW", "OIHW", "NCHW"))
    conv1 = jnp.maximum(conv1 + params["b1"][None, :, None, None], 0.0)

    cls = jnp.einsum("bchw,cd->bdhw", conv1, params["w_cls"]) \
        + params["b_cls"][None, :, None, None]
    # torch: reshape to (B,2,9H,W), softmax over dim 1, reshape back.
    cls_r = cls.reshape(B, 2, 9 * H, W)
    prob_r = jax.nn.softmax(cls_r, axis=1)
    cls_prob = prob_r.reshape(B, 18, H, W)

    bbox = jnp.einsum("bchw,cd->bdhw", conv1, params["w_bbox"]) \
        + params["b_bbox"][None, :, None, None]
    return cls_prob, bbox


# ---------------------------------------------------------------------------
def init_params(key, din):
    k1, k2, k3, k4, k5, k6 = jax.random.split(key, 6)
    scale = 0.05
    return {
        "w1": jax.random.normal(k1, (3, 3, din, CONV_CH), jnp.float32) * scale,
        "b1": jax.random.normal(k2, (CONV_CH,), jnp.float32) * scale,
        "w_cls": jax.random.normal(k3, (CONV_CH, 18), jnp.float32) * scale,
        "b_cls": jax.random.normal(k4, (18,), jnp.float32) * scale,
        "w_bbox": jax.random.normal(k5, (CONV_CH, 36), jnp.float32) * scale,
        "b_bbox": jax.random.normal(k6, (36,), jnp.float32) * scale,
    }


if __name__ == "__main__":
    B, din, H, W = 2, 8, 16, 16
    key = jax.random.PRNGKey(0)
    kx, kp = jax.random.split(key)
    x = jax.random.normal(kx, (B, din, H, W), jnp.float32)
    params = init_params(kp, din)

    cls_prob, bbox_pred, loss_cls, loss_box = jax.block_until_ready(
        rpn_forward_pallas(x, params))

    cls_ref, bbox_ref = rpn_forward_ref(x, params)
    # bf16 operands / bf16 output slab with fp32 accumulation -> loosened
    # tolerance vs the fp32 reference.
    np.testing.assert_allclose(np.asarray(cls_prob), np.asarray(cls_ref),
                               rtol=2e-2, atol=2e-2)
    np.testing.assert_allclose(np.asarray(bbox_pred), np.asarray(bbox_ref),
                               rtol=2e-2, atol=2e-2)
    assert cls_prob.shape == (B, 18, H, W)
    assert bbox_pred.shape == (B, 36, H, W)
    print("KERNEL_OK")
</pallas_src>

<mosaic_0001>
module attributes {stable_mosaic.version = 11 : i64} {
  func.func @kernel(%arg0: i32, %arg1: i32, %arg2: memref<1x18x18x8xbf16, #tpu.memory_space<vmem>>, %arg3: memref<72x512xbf16, #tpu.memory_space<vmem>>, %arg4: memref<1x512xf32, #tpu.memory_space<vmem>>, %arg5: memref<512x128xbf16, #tpu.memory_space<vmem>>, %arg6: memref<1x128xf32, #tpu.memory_space<vmem>>, %arg7: memref<1x256x128xbf16, #tpu.memory_space<vmem>>) attributes {dimension_semantics = [#tpu.dimension_semantics<parallel>, #tpu.dimension_semantics<parallel>], iteration_bounds = array<i64: 2, 1>, scalar_prefetch = 0 : i64, scratch_operands = 0 : i64, tpu.core_type = #tpu.core_type<tc>, window_params = [{transform_indices = @transform_0, window_bounds = array<i64: 1, 18, 18, 8>}, {pipeline_mode = #tpu.pipeline_mode<synchronous>, transform_indices = @transform_1, window_bounds = array<i64: 72, 512>}, {pipeline_mode = #tpu.pipeline_mode<synchronous>, transform_indices = @transform_2, window_bounds = array<i64: 1, 512>}, {pipeline_mode = #tpu.pipeline_mode<synchronous>, transform_indices = @transform_3, window_bounds = array<i64: 512, 128>}, {pipeline_mode = #tpu.pipeline_mode<synchronous>, transform_indices = @transform_4, window_bounds = array<i64: 1, 128>}, {transform_indices = @transform_5, window_bounds = array<i64: 1, 256, 128>}]} {
    %c16_i32 = arith.constant 16 : i32
    %0 = arith.muli %arg1, %c16_i32 : i32
    %1 = tpu.assume_multiple %0, 16 : i32
    %c0_i32 = arith.constant 0 : i32
    %2 = arith.addi %1, %c0_i32 : i32
    %c0 = arith.constant 0 : index
    %3 = arith.index_cast %2 : i32 to index
    %c0_0 = arith.constant 0 : index
    %c0_1 = arith.constant 0 : index
    %4 = vector.load %arg2[%c0, %3, %c0_0, %c0_1] : memref<1x18x18x8xbf16, #tpu.memory_space<vmem>>, vector<1x16x16x8xbf16>
    %5 = vector.shape_cast %4 : vector<1x16x16x8xbf16> to vector<16x16x8xbf16>
    %6 = vector.shape_cast %5 : vector<16x16x8xbf16> to vector<256x8xbf16>
    %c0_i32_2 = arith.constant 0 : i32
    %7 = arith.addi %1, %c0_i32_2 : i32
    %c0_3 = arith.constant 0 : index
    %8 = arith.index_cast %7 : i32 to index
    %c1 = arith.constant 1 : index
    %c0_4 = arith.constant 0 : index
    %9 = vector.load %arg2[%c0_3, %8, %c1, %c0_4] : memref<1x18x18x8xbf16, #tpu.memory_space<vmem>>, vector<1x16x16x8xbf16>
    %10 = vector.shape_cast %9 : vector<1x16x16x8xbf16> to vector<16x16x8xbf16>
    %11 = vector.shape_cast %10 : vector<16x16x8xbf16> to vector<256x8xbf16>
    %c0_i32_5 = arith.constant 0 : i32
    %12 = arith.addi %1, %c0_i32_5 : i32
    %c0_6 = arith.constant 0 : index
    %13 = arith.index_cast %12 : i32 to index
    %c2 = arith.constant 2 : index
    %c0_7 = arith.constant 0 : index
    %14 = vector.load %arg2[%c0_6, %13, %c2, %c0_7] : memref<1x18x18x8xbf16, #tpu.memory_space<vmem>>, vector<1x16x16x8xbf16>
    %15 = vector.shape_cast %14 : vector<1x16x16x8xbf16> to vector<16x16x8xbf16>
    %16 = vector.shape_cast %15 : vector<16x16x8xbf16> to vector<256x8xbf16>
    %c1_i32 = arith.constant 1 : i32
    %17 = arith.addi %1, %c1_i32 : i32
    %c0_8 = arith.constant 0 : index
    %18 = arith.index_cast %17 : i32 to index
    %c0_9 = arith.constant 0 : index
    %c0_10 = arith.constant 0 : index
    %19 = vector.load %arg2[%c0_8, %18, %c0_9, %c0_10] : memref<1x18x18x8xbf16, #tpu.memory_space<vmem>>, vector<1x16x16x8xbf16>
    %20 = vector.shape_cast %19 : vector<1x16x16x8xbf16> to vector<16x16x8xbf16>
    %21 = vector.shape_cast %20 : vector<16x16x8xbf16> to vector<256x8xbf16>
    %c1_i32_11 = arith.constant 1 : i32
    %22 = arith.addi %1, %c1_i32_11 : i32
    %c0_12 = arith.constant 0 : index
    %23 = arith.index_cast %22 : i32 to index
    %c1_13 = arith.constant 1 : index
    %c0_14 = arith.constant 0 : index
    %24 = vector.load %arg2[%c0_12, %23, %c1_13, %c0_14] : memref<1x18x18x8xbf16, #tpu.memory_space<vmem>>, vector<1x16x16x8xbf16>
    %25 = vector.shape_cast %24 : vector<1x16x16x8xbf16> to vector<16x16x8xbf16>
    %26 = vector.shape_cast %25 : vector<16x16x8xbf16> to vector<256x8xbf16>
    %c1_i32_15 = arith.constant 1 : i32
    %27 = arith.addi %1, %c1_i32_15 : i32
    %c0_16 = arith.constant 0 : index
    %28 = arith.index_cast %27 : i32 to index
    %c2_17 = arith.constant 2 : index
    %c0_18 = arith.constant 0 : index
    %29 = vector.load %arg2[%c0_16, %28, %c2_17, %c0_18] : memref<1x18x18x8xbf16, #tpu.memory_space<vmem>>, vector<1x16x16x8xbf16>
    %30 = vector.shape_cast %29 : vector<1x16x16x8xbf16> to vector<16x16x8xbf16>
    %31 = vector.shape_cast %30 : vector<16x16x8xbf16> to vector<256x8xbf16>
    %c2_i32 = arith.constant 2 : i32
    %32 = arith.addi %1, %c2_i32 : i32
    %c0_19 = arith.constant 0 : index
    %33 = arith.index_cast %32 : i32 to index
    %c0_20 = arith.constant 0 : index
    %c0_21 = arith.constant 0 : index
    %34 = vector.load %arg2[%c0_19, %33, %c0_20, %c0_21] : memref<1x18x18x8xbf16, #tpu.memory_space<vmem>>, vector<1x16x16x8xbf16>
    %35 = vector.shape_cast %34 : vector<1x16x16x8xbf16> to vector<16x16x8xbf16>
    %36 = vector.shape_cast %35 : vector<16x16x8xbf16> to vector<256x8xbf16>
    %c2_i32_22 = arith.constant 2 : i32
    %37 = arith.addi %1, %c2_i32_22 : i32
    %c0_23 = arith.constant 0 : index
    %38 = arith.index_cast %37 : i32 to index
    %c1_24 = arith.constant 1 : index
    %c0_25 = arith.constant 0 : index
    %39 = vector.load %arg2[%c0_23, %38, %c1_24, %c0_25] : memref<1x18x18x8xbf16, #tpu.memory_space<vmem>>, vector<1x16x16x8xbf16>
    %40 = vector.shape_cast %39 : vector<1x16x16x8xbf16> to vector<16x16x8xbf16>
    %41 = vector.shape_cast %40 : vector<16x16x8xbf16> to vector<256x8xbf16>
    %c2_i32_26 = arith.constant 2 : i32
    %42 = arith.addi %1, %c2_i32_26 : i32
    %c0_27 = arith.constant 0 : index
    %43 = arith.index_cast %42 : i32 to index
    %c2_28 = arith.constant 2 : index
    %c0_29 = arith.constant 0 : index
    %44 = vector.load %arg2[%c0_27, %43, %c2_28, %c0_29] : memref<1x18x18x8xbf16, #tpu.memory_space<vmem>>, vector<1x16x16x8xbf16>
    %45 = vector.shape_cast %44 : vector<1x16x16x8xbf16> to vector<16x16x8xbf16>
    %46 = vector.shape_cast %45 : vector<16x16x8xbf16> to vector<256x8xbf16>
    %47 = tpu.concatenate %6, %11, %16, %21, %26, %31, %36, %41, %46 in 1 : vector<256x8xbf16>, vector<256x8xbf16>, vector<256x8xbf16>, vector<256x8xbf16>, vector<256x8xbf16>, vector<256x8xbf16>, vector<256x8xbf16>, vector<256x8xbf16>, vector<256x8xbf16> -> vector<256x72xbf16>
    %c0_30 = arith.constant 0 : index
    %c0_31 = arith.constant 0 : index
    %48 = vector.load %arg3[%c0_30, %c0_31] : memref<72x512xbf16, #tpu.memory_space<vmem>>, vector<72x512xbf16>
    %cst = arith.constant dense<0.000000e+00> : vector<256x512xf32>
    %49 = tpu.matmul %47, %48, %cst {dimension_numbers = #tpu.dot_dimension_numbers<[1], [0], [0], [1], [0, 0, 1, 1], [], []>} : vector<256x72xbf16>, vector<72x512xbf16>, vector<256x512xf32> -> vector<256x512xf32>
    %c0_32 = arith.constant 0 : index
    %c0_33 = arith.constant 0 : index
    %50 = vector.load %arg4[%c0_32, %c0_33] : memref<1x512xf32, #tpu.memory_space<vmem>>, vector<1x512xf32>
    %51 = vector.broadcast %50 : vector<1x512xf32> to vector<256x512xf32>
    %52 = arith.addf %49, %51 : vector<256x512xf32>
    %cst_34 = arith.constant 0.000000e+00 : f32
    %53 = vector.broadcast %cst_34 : f32 to vector<256x512xf32>
    %54 = arith.maximumf %52, %53 : vector<256x512xf32>
    %55 = arith.truncf %54 : vector<256x512xf32> to vector<256x512xbf16>
    %c0_35 = arith.constant 0 : index
    %c0_36 = arith.constant 0 : index
    %56 = vector.load %arg5[%c0_35, %c0_36] : memref<512x128xbf16, #tpu.memory_space<vmem>>, vector<512x128xbf16>
    %cst_37 = arith.constant dense<0.000000e+00> : vector<256x128xf32>
    %57 = tpu.matmul %55, %56, %cst_37 {dimension_numbers = #tpu.dot_dimension_numbers<[1], [0], [0], [1], [0, 0, 1, 1], [], []>} : vector<256x512xbf16>, vector<512x128xbf16>, vector<256x128xf32> -> vector<256x128xf32>
    %c0_38 = arith.constant 0 : index
    %c0_39 = arith.constant 0 : index
    %58 = vector.load %arg6[%c0_38, %c0_39] : memref<1x128xf32, #tpu.memory_space<vmem>>, vector<1x128xf32>
    %59 = vector.broadcast %58 : vector<1x128xf32> to vector<256x128xf32>
    %60 = arith.addf %57, %59 : vector<256x128xf32>
    %61 = vector.extract_strided_slice %60 {offsets = [0, 0], sizes = [256, 9], strides = [1, 1]} : vector<256x128xf32> to vector<256x9xf32>
    %62 = vector.extract_strided_slice %60 {offsets = [0, 9], sizes = [256, 9], strides = [1, 1]} : vector<256x128xf32> to vector<256x9xf32>
    %63 = arith.maximumf %61, %62 : vector<256x9xf32>
    %64 = arith.subf %61, %63 : vector<256x9xf32>
    %65 = math.exp %64 : vector<256x9xf32>
    %66 = arith.subf %62, %63 : vector<256x9xf32>
    %67 = math.exp %66 : vector<256x9xf32>
    %68 = arith.addf %65, %67 : vector<256x9xf32>
    %69 = tpu.reciprocal %68 {approx = true} : vector<256x9xf32> -> vector<256x9xf32>
    %70 = arith.mulf %65, %69 : vector<256x9xf32>
    %71 = arith.mulf %67, %69 : vector<256x9xf32>
    %72 = vector.extract_strided_slice %60 {offsets = [0, 18], sizes = [256, 110], strides = [1, 1]} : vector<256x128xf32> to vector<256x110xf32>
    %73 = tpu.concatenate %70, %71, %72 in 1 : vector<256x9xf32>, vector<256x9xf32>, vector<256x110xf32> -> vector<256x128xf32>
    %74 = arith.truncf %73 : vector<256x128xf32> to vector<256x128xbf16>
    %c0_40 = arith.constant 0 : index
    %c0_41 = arith.constant 0 : index
    %c0_42 = arith.constant 0 : index
    %75 = vector.load %arg7[%c0_40, %c0_41, %c0_42] : memref<1x256x128xbf16, #tpu.memory_space<vmem>>, vector<1x256x128xbf16>
    %76 = vector.shape_cast %75 : vector<1x256x128xbf16> to vector<256x128xbf16>
    %77 = vector.shape_cast %74 : vector<256x128xbf16> to vector<1x256x128xbf16>
    tpu.vector_store %arg7[%c0_40, %c0_41, %c0_42], %77 {strides = array<i32>} : memref<1x256x128xbf16, #tpu.memory_space<vmem>>, vector<1x256x128xbf16>,
    return
  }
  func.func @transform_0(%arg0: i32, %arg1: i32) -> (i32, i32, i32, i32) {
    %c0_i32 = arith.constant 0 : i32
    %c0_i32_0 = arith.constant 0 : i32
    %c0_i32_1 = arith.constant 0 : i32
    %c0_i32_2 = arith.constant 0 : i32
    return %arg0, %c0_i32, %c0_i32_0, %c0_i32_1 : i32, i32, i32, i32
  }
  func.func @transform_1(%arg0: i32, %arg1: i32) -> (i32, i32) {
    %c0_i32 = arith.constant 0 : i32
    %c0_i32_0 = arith.constant 0 : i32
    %c0_i32_1 = arith.constant 0 : i32
    return %c0_i32, %c0_i32_0 : i32, i32
  }
  func.func @transform_2(%arg0: i32, %arg1: i32) -> (i32, i32) {
    %c0_i32 = arith.constant 0 : i32
    %c0_i32_0 = arith.constant 0 : i32
    %c0_i32_1 = arith.constant 0 : i32
    return %c0_i32, %c0_i32_0 : i32, i32
  }
  func.func @transform_3(%arg0: i32, %arg1: i32) -> (i32, i32) {
    %c0_i32 = arith.constant 0 : i32
    %c0_i32_0 = arith.constant 0 : i32
    %c0_i32_1 = arith.constant 0 : i32
    return %c0_i32, %c0_i32_0 : i32, i32
  }
  func.func @transform_4(%arg0: i32, %arg1: i32) -> (i32, i32) {
    %c0_i32 = arith.constant 0 : i32
    %c0_i32_0 = arith.constant 0 : i32
    %c0_i32_1 = arith.constant 0 : i32
    return %c0_i32, %c0_i32_0 : i32, i32
  }
  func.func @transform_5(%arg0: i32, %arg1: i32) -> (i32, i32, i32) {
    %c0_i32 = arith.constant 0 : i32
    %c0_i32_0 = arith.constant 0 : i32
    return %arg0, %arg1, %c0_i32 : i32, i32, i32
  }
}

module attributes {stable_mosaic.version = 11 : i64} {
  func.func @kernel(%arg0: i32, %arg1: i32, %arg2: memref<1x18x18x8xbf16, #tpu.memory_space<vmem>>, %arg3: memref<72x512xbf16, #tpu.memory_space<vmem>>, %arg4: memref<1x512xf32, #tpu.memory_space<vmem>>, %arg5: memref<512x128xbf16, #tpu.memory_space<vmem>>, %arg6: memref<1x128xf32, #tpu.memory_space<vmem>>, %arg7: memref<1x256x128xbf16, #tpu.memory_space<vmem>>) attributes {dimension_semantics = [#tpu.dimension_semantics<parallel>, #tpu.dimension_semantics<parallel>], iteration_bounds = array<i64: 2, 1>, scalar_prefetch = 0 : i64, scratch_operands = 0 : i64, tpu.core_type = #tpu.core_type<tc>, window_params = [{transform_indices = @transform_0, window_bounds = array<i64: 1, 18, 18, 8>}, {pipeline_mode = #tpu.pipeline_mode<synchronous>, transform_indices = @transform_1, window_bounds = array<i64: 72, 512>}, {pipeline_mode = #tpu.pipeline_mode<synchronous>, transform_indices = @transform_2, window_bounds = array<i64: 1, 512>}, {pipeline_mode = #tpu.pipeline_mode<synchronous>, transform_indices = @transform_3, window_bounds = array<i64: 512, 128>}, {pipeline_mode = #tpu.pipeline_mode<synchronous>, transform_indices = @transform_4, window_bounds = array<i64: 1, 128>}, {transform_indices = @transform_5, window_bounds = array<i64: 1, 256, 128>}]} {
    %c16_i32 = arith.constant 16 : i32
    %0 = arith.muli %arg1, %c16_i32 : i32
    %1 = tpu.assume_multiple %0, 16 : i32
    %c0_i32 = arith.constant 0 : i32
    %2 = arith.addi %1, %c0_i32 : i32
    %c0 = arith.constant 0 : index
    %3 = arith.index_cast %2 : i32 to index
    %c0_0 = arith.constant 0 : index
    %c0_1 = arith.constant 0 : index
    %4 = vector.load %arg2[%c0, %3, %c0_0, %c0_1] : memref<1x18x18x8xbf16, #tpu.memory_space<vmem>>, vector<1x16x16x8xbf16>
    %5 = vector.shape_cast %4 : vector<1x16x16x8xbf16> to vector<16x16x8xbf16>
    %6 = vector.shape_cast %5 : vector<16x16x8xbf16> to vector<256x8xbf16>
    %c0_i32_2 = arith.constant 0 : i32
    %7 = arith.addi %1, %c0_i32_2 : i32
    %c0_3 = arith.constant 0 : index
    %8 = arith.index_cast %7 : i32 to index
    %c1 = arith.constant 1 : index
    %c0_4 = arith.constant 0 : index
    %9 = vector.load %arg2[%c0_3, %8, %c1, %c0_4] : memref<1x18x18x8xbf16, #tpu.memory_space<vmem>>, vector<1x16x16x8xbf16>
    %10 = vector.shape_cast %9 : vector<1x16x16x8xbf16> to vector<16x16x8xbf16>
    %11 = vector.shape_cast %10 : vector<16x16x8xbf16> to vector<256x8xbf16>
    %c0_i32_5 = arith.constant 0 : i32
    %12 = arith.addi %1, %c0_i32_5 : i32
    %c0_6 = arith.constant 0 : index
    %13 = arith.index_cast %12 : i32 to index
    %c2 = arith.constant 2 : index
    %c0_7 = arith.constant 0 : index
    %14 = vector.load %arg2[%c0_6, %13, %c2, %c0_7] : memref<1x18x18x8xbf16, #tpu.memory_space<vmem>>, vector<1x16x16x8xbf16>
    %15 = vector.shape_cast %14 : vector<1x16x16x8xbf16> to vector<16x16x8xbf16>
    %16 = vector.shape_cast %15 : vector<16x16x8xbf16> to vector<256x8xbf16>
    %c1_i32 = arith.constant 1 : i32
    %17 = arith.addi %1, %c1_i32 : i32
    %c0_8 = arith.constant 0 : index
    %18 = arith.index_cast %17 : i32 to index
    %c0_9 = arith.constant 0 : index
    %c0_10 = arith.constant 0 : index
    %19 = vector.load %arg2[%c0_8, %18, %c0_9, %c0_10] : memref<1x18x18x8xbf16, #tpu.memory_space<vmem>>, vector<1x16x16x8xbf16>
    %20 = vector.shape_cast %19 : vector<1x16x16x8xbf16> to vector<16x16x8xbf16>
    %21 = vector.shape_cast %20 : vector<16x16x8xbf16> to vector<256x8xbf16>
    %c1_i32_11 = arith.constant 1 : i32
    %22 = arith.addi %1, %c1_i32_11 : i32
    %c0_12 = arith.constant 0 : index
    %23 = arith.index_cast %22 : i32 to index
    %c1_13 = arith.constant 1 : index
    %c0_14 = arith.constant 0 : index
    %24 = vector.load %arg2[%c0_12, %23, %c1_13, %c0_14] : memref<1x18x18x8xbf16, #tpu.memory_space<vmem>>, vector<1x16x16x8xbf16>
    %25 = vector.shape_cast %24 : vector<1x16x16x8xbf16> to vector<16x16x8xbf16>
    %26 = vector.shape_cast %25 : vector<16x16x8xbf16> to vector<256x8xbf16>
    %c1_i32_15 = arith.constant 1 : i32
    %27 = arith.addi %1, %c1_i32_15 : i32
    %c0_16 = arith.constant 0 : index
    %28 = arith.index_cast %27 : i32 to index
    %c2_17 = arith.constant 2 : index
    %c0_18 = arith.constant 0 : index
    %29 = vector.load %arg2[%c0_16, %28, %c2_17, %c0_18] : memref<1x18x18x8xbf16, #tpu.memory_space<vmem>>, vector<1x16x16x8xbf16>
    %30 = vector.shape_cast %29 : vector<1x16x16x8xbf16> to vector<16x16x8xbf16>
    %31 = vector.shape_cast %30 : vector<16x16x8xbf16> to vector<256x8xbf16>
    %c2_i32 = arith.constant 2 : i32
    %32 = arith.addi %1, %c2_i32 : i32
    %c0_19 = arith.constant 0 : index
    %33 = arith.index_cast %32 : i32 to index
    %c0_20 = arith.constant 0 : index
    %c0_21 = arith.constant 0 : index
    %34 = vector.load %arg2[%c0_19, %33, %c0_20, %c0_21] : memref<1x18x18x8xbf16, #tpu.memory_space<vmem>>, vector<1x16x16x8xbf16>
    %35 = vector.shape_cast %34 : vector<1x16x16x8xbf16> to vector<16x16x8xbf16>
    %36 = vector.shape_cast %35 : vector<16x16x8xbf16> to vector<256x8xbf16>
    %c2_i32_22 = arith.constant 2 : i32
    %37 = arith.addi %1, %c2_i32_22 : i32
    %c0_23 = arith.constant 0 : index
    %38 = arith.index_cast %37 : i32 to index
    %c1_24 = arith.constant 1 : index
    %c0_25 = arith.constant 0 : index
    %39 = vector.load %arg2[%c0_23, %38, %c1_24, %c0_25] : memref<1x18x18x8xbf16, #tpu.memory_space<vmem>>, vector<1x16x16x8xbf16>
    %40 = vector.shape_cast %39 : vector<1x16x16x8xbf16> to vector<16x16x8xbf16>
    %41 = vector.shape_cast %40 : vector<16x16x8xbf16> to vector<256x8xbf16>
    %c2_i32_26 = arith.constant 2 : i32
    %42 = arith.addi %1, %c2_i32_26 : i32
    %c0_27 = arith.constant 0 : index
    %43 = arith.index_cast %42 : i32 to index
    %c2_28 = arith.constant 2 : index
    %c0_29 = arith.constant 0 : index
    %44 = vector.load %arg2[%c0_27, %43, %c2_28, %c0_29] : memref<1x18x18x8xbf16, #tpu.memory_space<vmem>>, vector<1x16x16x8xbf16>
    %45 = vector.shape_cast %44 : vector<1x16x16x8xbf16> to vector<16x16x8xbf16>
    %46 = vector.shape_cast %45 : vector<16x16x8xbf16> to vector<256x8xbf16>
    %47 = tpu.concatenate %6, %11, %16, %21, %26, %31, %36, %41, %46 in 1 : vector<256x8xbf16>, vector<256x8xbf16>, vector<256x8xbf16>, vector<256x8xbf16>, vector<256x8xbf16>, vector<256x8xbf16>, vector<256x8xbf16>, vector<256x8xbf16>, vector<256x8xbf16> -> vector<256x72xbf16>
    %c0_30 = arith.constant 0 : index
    %c0_31 = arith.constant 0 : index
    %48 = vector.load %arg3[%c0_30, %c0_31] : memref<72x512xbf16, #tpu.memory_space<vmem>>, vector<72x512xbf16>
    %cst = arith.constant dense<0.000000e+00> : vector<256x512xf32>
    %49 = tpu.matmul %47, %48, %cst {dimension_numbers = #tpu.dot_dimension_numbers<[1], [0], [0], [1], [0, 0, 1, 1], [], []>} : vector<256x72xbf16>, vector<72x512xbf16>, vector<256x512xf32> -> vector<256x512xf32>
    %c0_32 = arith.constant 0 : index
    %c0_33 = arith.constant 0 : index
    %50 = vector.load %arg4[%c0_32, %c0_33] : memref<1x512xf32, #tpu.memory_space<vmem>>, vector<1x512xf32>
    %51 = vector.broadcast %50 : vector<1x512xf32> to vector<256x512xf32>
    %52 = arith.addf %49, %51 : vector<256x512xf32>
    %cst_34 = arith.constant 0.000000e+00 : f32
    %53 = vector.broadcast %cst_34 : f32 to vector<256x512xf32>
    %54 = arith.maximumf %52, %53 : vector<256x512xf32>
    %55 = arith.truncf %54 : vector<256x512xf32> to vector<256x512xbf16>
    %c0_35 = arith.constant 0 : index
    %c0_36 = arith.constant 0 : index
    %56 = vector.load %arg5[%c0_35, %c0_36] : memref<512x128xbf16, #tpu.memory_space<vmem>>, vector<512x128xbf16>
    %cst_37 = arith.constant dense<0.000000e+00> : vector<256x128xf32>
    %57 = tpu.matmul %55, %56, %cst_37 {dimension_numbers = #tpu.dot_dimension_numbers<[1], [0], [0], [1], [0, 0, 1, 1], [], []>} : vector<256x512xbf16>, vector<512x128xbf16>, vector<256x128xf32> -> vector<256x128xf32>
    %c0_38 = arith.constant 0 : index
    %c0_39 = arith.constant 0 : index
    %58 = vector.load %arg6[%c0_38, %c0_39] : memref<1x128xf32, #tpu.memory_space<vmem>>, vector<1x128xf32>
    %59 = vector.broadcast %58 : vector<1x128xf32> to vector<256x128xf32>
    %60 = arith.addf %57, %59 : vector<256x128xf32>
    %61 = vector.extract_strided_slice %60 {offsets = [0, 0], sizes = [256, 9], strides = [1, 1]} : vector<256x128xf32> to vector<256x9xf32>
    %62 = vector.extract_strided_slice %60 {offsets = [0, 9], sizes = [256, 9], strides = [1, 1]} : vector<256x128xf32> to vector<256x9xf32>
    %63 = arith.maximumf %61, %62 : vector<256x9xf32>
    %64 = arith.subf %61, %63 : vector<256x9xf32>
    %65 = math.exp %64 : vector<256x9xf32>
    %66 = arith.subf %62, %63 : vector<256x9xf32>
    %67 = math.exp %66 : vector<256x9xf32>
    %68 = arith.addf %65, %67 : vector<256x9xf32>
    %69 = tpu.reciprocal %68 {approx = true} : vector<256x9xf32> -> vector<256x9xf32>
    %70 = arith.mulf %65, %69 : vector<256x9xf32>
    %71 = arith.mulf %67, %69 : vector<256x9xf32>
    %72 = vector.extract_strided_slice %60 {offsets = [0, 18], sizes = [256, 110], strides = [1, 1]} : vector<256x128xf32> to vector<256x110xf32>
    %73 = tpu.concatenate %70, %71, %72 in 1 : vector<256x9xf32>, vector<256x9xf32>, vector<256x110xf32> -> vector<256x128xf32>
    %74 = arith.truncf %73 : vector<256x128xf32> to vector<256x128xbf16>
    %c0_40 = arith.constant 0 : index
    %c0_41 = arith.constant 0 : index
    %c0_42 = arith.constant 0 : index
    %75 = vector.load %arg7[%c0_40, %c0_41, %c0_42] : memref<1x256x128xbf16, #tpu.memory_space<vmem>>, vector<1x256x128xbf16>
    %76 = vector.shape_cast %75 : vector<1x256x128xbf16> to vector<256x128xbf16>
    %77 = vector.shape_cast %74 : vector<256x128xbf16> to vector<1x256x128xbf16>
    tpu.vector_store %arg7[%c0_40, %c0_41, %c0_42], %77 {strides = array<i32>} : memref<1x256x128xbf16, #tpu.memory_space<vmem>>, vector<1x256x128xbf16>,
    return
  }
  func.func @transform_0(%arg0: i32, %arg1: i32) -> (i32, i32, i32, i32) {
    %c0_i32 = arith.constant 0 : i32
    %c0_i32_0 = arith.constant 0 : i32
    %c0_i32_1 = arith.constant 0 : i32
    %c0_i32_2 = arith.constant 0 : i32
    return %arg0, %c0_i32, %c0_i32_0, %c0_i32_1 : i32, i32, i32, i32
  }
  func.func @transform_1(%arg0: i32, %arg1: i32) -> (i32, i32) {
    %c0_i32 = arith.constant 0 : i32
    %c0_i32_0 = arith.constant 0 : i32
    %c0_i32_1 = arith.constant 0 : i32
    return %c0_i32, %c0_i32_0 : i32, i32
  }
  func.func @transform_2(%arg0: i32, %arg1: i32) -> (i32, i32) {
    %c0_i32 = arith.constant 0 : i32
    %c0_i32_0 = arith.constant 0 : i32
    %c0_i32_1 = arith.constant 0 : i32
    return %c0_i32, %c0_i32_0 : i32, i32
  }
  func.func @transform_3(%arg0: i32, %arg1: i32) -> (i32, i32) {
    %c0_i32 = arith.constant 0 : i32
    %c0_i32_0 = arith.constant 0 : i32
    %c0_i32_1 = arith.constant 0 : i32
    return %c0_i32, %c0_i32_0 : i32, i32
  }
  func.func @transform_4(%arg0: i32, %arg1: i32) -> (i32, i32) {
    %c0_i32 = arith.constant 0 : i32
    %c0_i32_0 = arith.constant 0 : i32
    %c0_i32_1 = arith.constant 0 : i32
    return %c0_i32, %c0_i32_0 : i32, i32
  }
  func.func @transform_5(%arg0: i32, %arg1: i32) -> (i32, i32, i32) {
    %c0_i32 = arith.constant 0 : i32
    %c0_i32_0 = arith.constant 0 : i32
    return %arg0, %arg1, %c0_i32 : i32, i32, i32
  }
}

</mosaic_0001>

<llo_original>
// kernel: tpu_custom_call.1
$region0: #{tpu_custom_call.1}
  #allocation0 [shape = 'u32[]', space=smem, size = 0x4, offset = 0x4, fixed_abs, tag = 'smem constant byte address 0x4 - core index']
  #allocation1 [shape = 'u32[72,128]{1,0:T(1,128)}', space=vmem, size = 0x9000, scoped, tag = 'internal scratch']
  %s0 = inlined_call_operand.vmem [shape: bf16[2,18,18,8], index: 0, kind: input, shape index: {}]
  %s1 = inlined_call_operand.vmem [shape: bf16[72,512], index: 1, kind: input, shape index: {}]
  %s2 = inlined_call_operand.vmem [shape: f32[1,512], index: 2, kind: input, shape index: {}]
  %s3 = inlined_call_operand.vmem [shape: bf16[512,128], index: 3, kind: input, shape index: {}]
  %s4 = inlined_call_operand.vmem [shape: f32[1,128], index: 4, kind: input, shape index: {}]
  %s5 = inlined_call_operand.hbm [shape: bf16[2,256,128], index: 5, kind: output, shape index: {}]
  %s6 = sld [smem:[#allocation0]]
  $region53: #{tpu_custom_call.1} parent=0
    _
  %s8 = ssub.s32 1, %s6
  %s9 = scalar_select 0, %s8, %s6
  $region1: #{tpu_custom_call.1} parent=0
    #allocation2 [shape = 'u8[131072]{0}', space=vmem, size = 0x20000, scoped, tag = 'output window, operand 0']
    #allocation3 [shape = 's32[2]{0}', space=sflag, size = 0x8, scoped, tag = 'scoped memory for tpu_custom_call.1']
    %10 = vsyncpa [#allocation3], 0
    %s11 = scalar_lea.sflag [#allocation3], 1
    %12 = vsyncpa %s11, 0
    loop: start=0, step=1, limit=4
    $region2: #{tpu_custom_call.1} parent=1 // loop_pre_header
      _
    $region3: #{tpu_custom_call.1} parent=1 // loop_header
      %s14 = sphi 0, %s18
      %p15 = scmp.ge.s32.totalorder %s14, 4
      %s21 = sphi 0, %s33
      %s22 = sphi 0, %s29
      %s23 = sphi 0, %s21
      %s24 = sphi 0, %s22
      %s25 = sphi 0, %s23
      %s26 = sphi 0, %s24
      %s36 = sphi 0, %s38
      %s39 = sphi 0, %s36
      %s40 = sphi 0, %s39
      %s56 = sphi 0, %s40
      %s60 = sphi 0, %s60
      %s62 = sphi 0, %s60
      %s63 = sphi 0, %s62
      %s77 = sphi 0, %s63
      %s81 = sphi 0, %s81
      %s83 = sphi 0, %s81
      %s84 = sphi 0, %s83
      %s98 = sphi 0, %s84
      %s102 = sphi 0, %s102
      %s104 = sphi 0, %s102
      %s105 = sphi 0, %s104
      %s119 = sphi 0, %s105
      %s123 = sphi 0, %s123
      %s125 = sphi 0, %s123
      %s126 = sphi 0, %s125
      %s140 = sphi 0, %s126
      %s148 = sphi 0, %s150
      %s151 = sphi 0, %s148
      %s152 = sphi 0, %s151
      %s168 = sphi 0, %s152
    $region4: #{tpu_custom_call.1} parent=1 // loop_header_branch
      %17 = sbr.rel (%p15) target = $region8
    $region5: #{tpu_custom_call.1} parent=1 // loop_body
      %s19 = ssub.s32 %s14, 1
      %s20 = ssub.s32 %s14, 2
      %s27 = sadd.s32 1, %s22
      %p28 = scmp.ge.s32.totalorder %s27, 1
      %s29 = scalar_select %p28, 0, %s27
      %s30 = sadd.s32 1, %s21
      %s31 = scalar_select %p28, %s30, %s21
      %p32 = scmp.ge.s32.totalorder %s31, 2
      %s33 = scalar_select %p32, 0, %s31
      %s34 = ssub.s32 %s21, %s33
      %p35 = scmp.eq.s32.totalorder %s34, 0
      %s37 = sadd.s32 %s36, 1
      %s38 = scalar_select %p35, %s36, %s37
      %p41 = pneg %p35
      %p42 = scmp.eq.s32.totalorder %s14, 1
      %p43 = por %p41, %p42
      %p44 = scmp.ne.s32.totalorder %s36, %s39
      %p45 = scmp.eq.s32.totalorder %s14, 0
      %p46 = por %p44, %p45
      %p47 = scmp.ne.s32.totalorder %s36, %s39
      %p48 = scmp.eq.s32.totalorder %s19, 1
      %p49 = por %p47, %p48
      %p50 = scmp.ne.s32.totalorder %s39, %s40
      %p51 = scmp.eq.s32.totalorder %s19, 0
      %p52 = por %p50, %p51
      %p53 = scmp.ne.s32.totalorder %s39, %s40
      %p54 = scmp.eq.s32.totalorder %s20, 1
      %p55 = por %p53, %p54
      %p57 = scmp.ne.s32.totalorder %s40, %s56
      %p58 = scmp.eq.s32.totalorder %s20, 0
      %p59 = por %p57, %p58
      %s61 = sadd.s32 %s60, 1
      %p64 = scmp.eq.s32.totalorder %s14, 1
      %p65 = scmp.ne.s32.totalorder %s60, %s62
      %p66 = scmp.eq.s32.totalorder %s14, 0
      %p67 = por %p65, %p66
      %p68 = scmp.ne.s32.totalorder %s60, %s62
      %p69 = scmp.eq.s32.totalorder %s19, 1
      %p70 = por %p68, %p69
      %p71 = scmp.ne.s32.totalorder %s62, %s63
      %p72 = scmp.eq.s32.totalorder %s19, 0
      %p73 = por %p71, %p72
      %p74 = scmp.ne.s32.totalorder %s62, %s63
      %p75 = scmp.eq.s32.totalorder %s20, 1
      %p76 = por %p74, %p75
      %p78 = scmp.ne.s32.totalorder %s63, %s77
      %p79 = scmp.eq.s32.totalorder %s20, 0
      %p80 = por %p78, %p79
      %s82 = sadd.s32 %s81, 1
      %p85 = scmp.eq.s32.totalorder %s14, 1
      %p86 = scmp.ne.s32.totalorder %s81, %s83
      %p87 = scmp.eq.s32.totalorder %s14, 0
      %p88 = por %p86, %p87
      %p89 = scmp.ne.s32.totalorder %s81, %s83
      %p90 = scmp.eq.s32.totalorder %s19, 1
      %p91 = por %p89, %p90
      %p92 = scmp.ne.s32.totalorder %s83, %s84
      %p93 = scmp.eq.s32.totalorder %s19, 0
      %p94 = por %p92, %p93
      %p95 = scmp.ne.s32.totalorder %s83, %s84
      %p96 = scmp.eq.s32.totalorder %s20, 1
      %p97 = por %p95, %p96
      %p99 = scmp.ne.s32.totalorder %s84, %s98
      %p100 = scmp.eq.s32.totalorder %s20, 0
      %p101 = por %p99, %p100
      %s103 = sadd.s32 %s102, 1
      %p106 = scmp.eq.s32.totalorder %s14, 1
      %p107 = scmp.ne.s32.totalorder %s102, %s104
      %p108 = scmp.eq.s32.totalorder %s14, 0
      %p109 = por %p107, %p108
      %p110 = scmp.ne.s32.totalorder %s102, %s104
      %p111 = scmp.eq.s32.totalorder %s19, 1
      %p112 = por %p110, %p111
      %p113 = scmp.ne.s32.totalorder %s104, %s105
      %p114 = scmp.eq.s32.totalorder %s19, 0
      %p115 = por %p113, %p114
      %p116 = scmp.ne.s32.totalorder %s104, %s105
      %p117 = scmp.eq.s32.totalorder %s20, 1
      %p118 = por %p116, %p117
      %p120 = scmp.ne.s32.totalorder %s105, %s119
      %p121 = scmp.eq.s32.totalorder %s20, 0
      %p122 = por %p120, %p121
      %s124 = sadd.s32 %s123, 1
      %p127 = scmp.eq.s32.totalorder %s14, 1
      %p128 = scmp.ne.s32.totalorder %s123, %s125
      %p129 = scmp.eq.s32.totalorder %s14, 0
      %p130 = por %p128, %p129
      %p131 = scmp.ne.s32.totalorder %s123, %s125
      %p132 = scmp.eq.s32.totalorder %s19, 1
      %p133 = por %p131, %p132
      %p134 = scmp.ne.s32.totalorder %s125, %s126
      %p135 = scmp.eq.s32.totalorder %s19, 0
      %p136 = por %p134, %p135
      %p137 = scmp.ne.s32.totalorder %s125, %s126
      %p138 = scmp.eq.s32.totalorder %s20, 1
      %p139 = por %p137, %p138
      %p141 = scmp.ne.s32.totalorder %s126, %s140
      %p142 = scmp.eq.s32.totalorder %s20, 0
      %p143 = por %p141, %p142
      %s144 = ssub.s32 %s21, %s33
      %s145 = ssub.s32 %s22, %s29
      %s146 = sor.u32 %s144, %s145
      %p147 = scmp.eq.s32.totalorder %s146, 0
      %s149 = sadd.s32 %s148, 1
      %s150 = scalar_select %p147, %s148, %s149
      %p153 = pneg %p147
      %p154 = scmp.eq.s32.totalorder %s14, 1
      %p155 = por %p153, %p154
      %p156 = scmp.ne.s32.totalorder %s148, %s151
      %p157 = scmp.eq.s32.totalorder %s14, 0
      %p158 = por %p156, %p157
      %p159 = scmp.ne.s32.totalorder %s148, %s151
      %p160 = scmp.eq.s32.totalorder %s19, 1
      %p161 = por %p159, %p160
      %p162 = scmp.ne.s32.totalorder %s151, %s152
      %p163 = scmp.eq.s32.totalorder %s19, 0
      %p164 = por %p162, %p163
      %p165 = scmp.ne.s32.totalorder %s151, %s152
      %p166 = scmp.eq.s32.totalorder %s20, 1
      %p167 = por %p165, %p166
      %p169 = scmp.ne.s32.totalorder %s152, %s168
      %p170 = scmp.eq.s32.totalorder %s20, 0
      %p171 = por %p169, %p170
      %p172 = scmp.le.s32.totalorder 1, %s14
      %p173 = scmp.lt.s32.totalorder %s14, 3
      %p174 = pnand %p172, %p173
      %p175 = pneg %p174
      // Predicated region
      $region9: #{tpu_custom_call.1} parent=5 // pred_check
        _
      $region10: #{tpu_custom_call.1} parent=5 // pred_check_branch
        %177 = sbr.rel (%p174) target = $region12
      $region11: #{tpu_custom_call.1} parent=5 // pred_region
        %s178 = ssub.s32 %s14, 1
        // Predicated region
        $region13: #{tpu_custom_call.1} parent=11 // pred_check
          %p179 = pneg %p73
        $region14: #{tpu_custom_call.1} parent=11 // pred_check_branch
          %181 = sbr.rel (%p179) target = $region16
        $region15: #{tpu_custom_call.1} parent=11 // pred_region
          _
        $region16: #{tpu_custom_call.1} parent=11 // pred_fallthru
          _
        // Predicated region
        $region17: #{tpu_custom_call.1} parent=11 // pred_check
          %p182 = pneg %p94
        $region18: #{tpu_custom_call.1} parent=11 // pred_check_branch
          %184 = sbr.rel (%p182) target = $region20
        $region19: #{tpu_custom_call.1} parent=11 // pred_region
          _
        $region20: #{tpu_custom_call.1} parent=11 // pred_fallthru
          _
        // Predicated region
        $region21: #{tpu_custom_call.1} parent=11 // pred_check
          %p185 = pneg %p115
        $region22: #{tpu_custom_call.1} parent=11 // pred_check_branch
          %187 = sbr.rel (%p185) target = $region24
        $region23: #{tpu_custom_call.1} parent=11 // pred_region
          _
        $region24: #{tpu_custom_call.1} parent=11 // pred_fallthru
          _
        // Predicated region
        $region25: #{tpu_custom_call.1} parent=11 // pred_check
          %p188 = pneg %p136
        $region26: #{tpu_custom_call.1} parent=11 // pred_check_branch
          %190 = sbr.rel (%p188) target = $region28
        $region27: #{tpu_custom_call.1} parent=11 // pred_region
          _
        $region28: #{tpu_custom_call.1} parent=11 // pred_fallthru
          _
      $region12: #{tpu_custom_call.1} parent=5 // pred_fallthru
        _
      %p191 = scmp.lt.s32.totalorder %s14, 2
      // Predicated region
      $region29: #{tpu_custom_call.1} parent=5 // pred_check
        %p192 = pneg %p191
      $region30: #{tpu_custom_call.1} parent=5 // pred_check_branch
        %194 = sbr.rel (%p192) target = $region32
      $region31: #{tpu_custom_call.1} parent=5 // pred_region
        // Predicated region
        $region33: #{tpu_custom_call.1} parent=31 // pred_check
          %p195 = pneg %p46
        $region34: #{tpu_custom_call.1} parent=31 // pred_check_branch
          %197 = sbr.rel (%p195) target = $region36
        $region35: #{tpu_custom_call.1} parent=31 // pred_region
          %p198 = scmp.lt.s32.totalorder %s21, 1
          %s199 = scalar_select %p198, %s21, 1
          %s200 = smul.addr %s199, 54
          %s201 = smul.addr %s200, 4
          %s202 = scalar_lea.vmem %s0, %s201
        $region36: #{tpu_custom_call.1} parent=31 // pred_fallthru
          _
      $region32: #{tpu_custom_call.1} parent=5 // pred_fallthru
        _
      %p203 = scmp.le.s32.totalorder 1, %s14
      %p204 = scmp.lt.s32.totalorder %s14, 3
      %p205 = pnand %p203, %p204
      %p206 = pneg %p205
      // Predicated region
      $region37: #{tpu_custom_call.1} parent=5 // pred_check
        _
      $region38: #{tpu_custom_call.1} parent=5 // pred_check_branch
        %208 = sbr.rel (%p205) target = $region40
      $region39: #{tpu_custom_call.1} parent=5 // pred_region
        %s209 = ssub.s32 %s14, 1
        %p210 = scmp.lt.s32.totalorder %s23, 1
        %s211 = scalar_select %p210, %s23, 1
        %s212 = smul.addr %s211, 54
        %s213 = smul.addr %s212, 4
        %s214 = scalar_lea.vmem %s0, %s213
        %p215 = pneg %p52
        %p216 = pneg %p49
        %p217 = pneg %p73
        %p218 = pneg %p70
        %p219 = pneg %p94
        %p220 = pneg %p91
        %p221 = pneg %p115
        %p222 = pneg %p112
        %p223 = pneg %p136
        %p224 = pneg %p133
        %p225 = pneg %p164
        %p226 = pneg %p161
        %s227 = sand.u32 %s151, 1
        %s228 = scalar_lea.sflag [#allocation3], %s227
        %s229 = sand.u32 %s151, 1
        %s230 = smul.addr %s229, 128
        %s231 = scalar_lea.vmem [#allocation2], %s230
        %p232 = scmp.lt.s32.totalorder %s23, 1
        %s233 = scalar_select %p232, %s23, 1
        %s234 = smul.addr %s233, 54
        %s235 = smul.addr %s234, 4
        %s236 = scalar_lea.vmem %s0, %s235
        %s237 = smul.u32 32, %s24
        %s239 = smul.u32 %s24, 16
        %s240 = smul.u32 %s239, 3
        %s241 = smul.addr %s240, 4
        %s242 = scalar_lea.vmem %s236, %s241
        %v243 = vld [vmem:[%s242] sm:$0xf]
        %v244 = vld [vmem:[%s242 + $0x4] sm:$0xf]
        %v245 = vld [vmem:[%s242 + $0xc] sm:$0xf]
        %v246 = vld [vmem:[%s242 + $0x10] sm:$0xf]
        %v247 = vld [vmem:[%s242 + $0x18] sm:$0xf]
        %v248 = vld [vmem:[%s242 + $0x1c] sm:$0xf]
        %v249 = vld [vmem:[%s242 + $0x24] sm:$0xf]
        %v250 = vld [vmem:[%s242 + $0x28] sm:$0xf]
        %v251 = vld [vmem:[%s242 + $0x30] sm:$0xf]
        %v252 = vld [vmem:[%s242 + $0x34] sm:$0xf]
        %v253 = vld [vmem:[%s242 + $0x3c] sm:$0xf]
        %v254 = vld [vmem:[%s242 + $0x40] sm:$0xf]
        %v255 = vld [vmem:[%s242 + $0x48] sm:$0xf]
        %v256 = vld [vmem:[%s242 + $0x4c] sm:$0xf]
        %v257 = vld [vmem:[%s242 + $0x54] sm:$0xf]
        %v258 = vld [vmem:[%s242 + $0x58] sm:$0xf]
        %v259 = vld [vmem:[%s242 + $0x60] sm:$0xf]
        %v260 = vld [vmem:[%s242 + $0x64] sm:$0xf]
        %v261 = vld [vmem:[%s242 + $0x6c] sm:$0xf]
        %v262 = vld [vmem:[%s242 + $0x70] sm:$0xf]
        %v263 = vld [vmem:[%s242 + $0x78] sm:$0xf]
        %v264 = vld [vmem:[%s242 + $0x7c] sm:$0xf]
        %v265 = vld [vmem:[%s242 + $0x84] sm:$0xf]
        %v266 = vld [vmem:[%s242 + $0x88] sm:$0xf]
        %v267 = vld [vmem:[%s242 + $0x90] sm:$0xf]
        %v268 = vld [vmem:[%s242 + $0x94] sm:$0xf]
        %v269 = vld [vmem:[%s242 + $0x9c] sm:$0xf]
        %v270 = vld [vmem:[%s242 + $0xa0] sm:$0xf]
        %v271 = vld [vmem:[%s242 + $0xa8] sm:$0xf]
        %v272 = vld [vmem:[%s242 + $0xac] sm:$0xf]
        %v273 = vld [vmem:[%s242 + $0xb4] sm:$0xf]
        %v274 = vld [vmem:[%s242 + $0xb8] sm:$0xf]
        %v275 = vld [vmem:[%s242 + $0x8] sm:$0x1]
        %v276 = vld [vmem:[%s242 + $0x14] sm:$0x1]
        %v277 = vld [vmem:[%s242 + $0x20] sm:$0x1]
        %v278 = vld [vmem:[%s242 + $0x2c] sm:$0x1]
        %v279 = vld [vmem:[%s242 + $0x38] sm:$0x1]
        %v280 = vld [vmem:[%s242 + $0x44] sm:$0x1]
        %v281 = vld [vmem:[%s242 + $0x50] sm:$0x1]
        %v282 = vld [vmem:[%s242 + $0x5c] sm:$0x1]
        %v283 = vld [vmem:[%s242 + $0x68] sm:$0x1]
        %v284 = vld [vmem:[%s242 + $0x74] sm:$0x1]
        %v285 = vld [vmem:[%s242 + $0x80] sm:$0x1]
        %v286 = vld [vmem:[%s242 + $0x8c] sm:$0x1]
        %v287 = vld [vmem:[%s242 + $0x98] sm:$0x1]
        %v288 = vld [vmem:[%s242 + $0xa4] sm:$0x1]
        %v289 = vld [vmem:[%s242 + $0xb0] sm:$0x1]
        %v290 = vld [vmem:[%s242 + $0xbc] sm:$0x1]
        %vm291 = vsmask.f32 3328
        %vm292 = vsmask.f32 7440
        %vm293 = vmor %vm291, %vm292
        %v295 = vshrl.u32 %v243, 16
        %v297 = vrot.slane %v295, 4
        %v298 = vshll.u32 %v243, 16
        %v300 = vrot.slane %v298, 5
        %v301 = vor.u32 %v297, %v300
        %v302 = vrot.slane %v301, 4
        %v304 = vshll.u32 %v244, 16
        %v306 = vrot.slane %v304, 5
        %v307 = vsel %vm293, %v302, %v306
        %v308 = vshrl.u32 %v244, 16
        %v310 = vrot.slane %v308, 4
        %v311 = vor.u32 %v310, %v306
        %v312 = vrot.slane %v311, 4
        %v314 = vshll.u32 %v275, 16
        %v316 = vrot.slane %v314, 5
        %v317 = vsel %vm293, %v312, %v316
        %v319 = vshrl.u32 %v245, 16
        %v321 = vrot.slane %v319, 4
        %v322 = vshll.u32 %v245, 16
        %v324 = vrot.slane %v322, 5
        %v325 = vor.u32 %v321, %v324
        %v326 = vrot.slane %v325, 4
        %v328 = vshll.u32 %v246, 16
        %v330 = vrot.slane %v328, 5
        %v331 = vsel %vm293, %v326, %v330
        %v332 = vshrl.u32 %v246, 16
        %v334 = vrot.slane %v332, 4
        %v335 = vor.u32 %v334, %v330
        %v336 = vrot.slane %v335, 4
        %v338 = vshll.u32 %v276, 16
        %v340 = vrot.slane %v338, 5
        %v341 = vsel %vm293, %v336, %v340
        %v343 = vshrl.u32 %v247, 16
        %v345 = vrot.slane %v343, 4
        %v346 = vshll.u32 %v247, 16
        %v348 = vrot.slane %v346, 5
        %v349 = vor.u32 %v345, %v348
        %v350 = vrot.slane %v349, 4
        %v352 = vshll.u32 %v248, 16
        %v354 = vrot.slane %v352, 5
        %v355 = vsel %vm293, %v350, %v354
        %v356 = vshrl.u32 %v248, 16
        %v358 = vrot.slane %v356, 4
        %v359 = vor.u32 %v358, %v354
        %v360 = vrot.slane %v359, 4
        %v362 = vshll.u32 %v277, 16
        %v364 = vrot.slane %v362, 5
        %v365 = vsel %vm293, %v360, %v364
        %v367 = vshrl.u32 %v249, 16
        %v369 = vrot.slane %v367, 4
        %v370 = vshll.u32 %v249, 16
        %v372 = vrot.slane %v370, 5
        %v373 = vor.u32 %v369, %v372
        %v374 = vrot.slane %v373, 4
        %v376 = vshll.u32 %v250, 16
        %v378 = vrot.slane %v376, 5
        %v379 = vsel %vm293, %v374, %v378
        %v380 = vshrl.u32 %v250, 16
        %v382 = vrot.slane %v380, 4
        %v383 = vor.u32 %v382, %v378
        %v384 = vrot.slane %v383, 4
        %v386 = vshll.u32 %v278, 16
        %v388 = vrot.slane %v386, 5
        %v389 = vsel %vm293, %v384, %v388
        %v391 = vshrl.u32 %v251, 16
        %v393 = vrot.slane %v391, 4
        %v394 = vshll.u32 %v251, 16
        %v396 = vrot.slane %v394, 5
        %v397 = vor.u32 %v393, %v396
        %v398 = vrot.slane %v397, 4
        %v400 = vshll.u32 %v252, 16
        %v402 = vrot.slane %v400, 5
        %v403 = vsel %vm293, %v398, %v402
        %v404 = vshrl.u32 %v252, 16
        %v406 = vrot.slane %v404, 4
        %v407 = vor.u32 %v406, %v402
        %v408 = vrot.slane %v407, 4
        %v410 = vshll.u32 %v279, 16
        %v412 = vrot.slane %v410, 5
        %v413 = vsel %vm293, %v408, %v412
        %v415 = vshrl.u32 %v253, 16
        %v417 = vrot.slane %v415, 4
        %v418 = vshll.u32 %v253, 16
        %v420 = vrot.slane %v418, 5
        %v421 = vor.u32 %v417, %v420
        %v422 = vrot.slane %v421, 4
        %v424 = vshll.u32 %v254, 16
        %v426 = vrot.slane %v424, 5
        %v427 = vsel %vm293, %v422, %v426
        %v428 = vshrl.u32 %v254, 16
        %v430 = vrot.slane %v428, 4
        %v431 = vor.u32 %v430, %v426
        %v432 = vrot.slane %v431, 4
        %v434 = vshll.u32 %v280, 16
        %v436 = vrot.slane %v434, 5
        %v437 = vsel %vm293, %v432, %v436
        %v439 = vshrl.u32 %v255, 16
        %v441 = vrot.slane %v439, 4
        %v442 = vshll.u32 %v255, 16
        %v444 = vrot.slane %v442, 5
        %v445 = vor.u32 %v441, %v444
        %v446 = vrot.slane %v445, 4
        %v448 = vshll.u32 %v256, 16
        %v450 = vrot.slane %v448, 5
        %v451 = vsel %vm293, %v446, %v450
        %v452 = vshrl.u32 %v256, 16
        %v454 = vrot.slane %v452, 4
        %v455 = vor.u32 %v454, %v450
        %v456 = vrot.slane %v455, 4
        %v458 = vshll.u32 %v281, 16
        %v460 = vrot.slane %v458, 5
        %v461 = vsel %vm293, %v456, %v460
        %v463 = vshrl.u32 %v257, 16
        %v465 = vrot.slane %v463, 4
        %v466 = vshll.u32 %v257, 16
        %v468 = vrot.slane %v466, 5
        %v469 = vor.u32 %v465, %v468
        %v470 = vrot.slane %v469, 4
        %v472 = vshll.u32 %v258, 16
        %v474 = vrot.slane %v472, 5
        %v475 = vsel %vm293, %v470, %v474
        %v476 = vshrl.u32 %v258, 16
        %v478 = vrot.slane %v476, 4
        %v479 = vor.u32 %v478, %v474
        %v480 = vrot.slane %v479, 4
        %v482 = vshll.u32 %v282, 16
        %v484 = vrot.slane %v482, 5
        %v485 = vsel %vm293, %v480, %v484
        %v487 = vshrl.u32 %v259, 16
        %v489 = vrot.slane %v487, 4
        %v490 = vshll.u32 %v259, 16
        %v492 = vrot.slane %v490, 5
        %v493 = vor.u32 %v489, %v492
        %v494 = vrot.slane %v493, 4
        %v496 = vshll.u32 %v260, 16
        %v498 = vrot.slane %v496, 5
        %v499 = vsel %vm293, %v494, %v498
        %v500 = vshrl.u32 %v260, 16
        %v502 = vrot.slane %v500, 4
        %v503 = vor.u32 %v502, %v498
        %v504 = vrot.slane %v503, 4
        %v506 = vshll.u32 %v283, 16
        %v508 = vrot.slane %v506, 5
        %v509 = vsel %vm293, %v504, %v508
        %v511 = vshrl.u32 %v261, 16
        %v513 = vrot.slane %v511, 4
        %v514 = vshll.u32 %v261, 16
        %v516 = vrot.slane %v514, 5
        %v517 = vor.u32 %v513, %v516
        %v518 = vrot.slane %v517, 4
        %v520 = vshll.u32 %v262, 16
        %v522 = vrot.slane %v520, 5
        %v523 = vsel %vm293, %v518, %v522
        %v524 = vshrl.u32 %v262, 16
        %v526 = vrot.slane %v524, 4
        %v527 = vor.u32 %v526, %v522
        %v528 = vrot.slane %v527, 4
        %v530 = vshll.u32 %v284, 16
        %v532 = vrot.slane %v530, 5
        %v533 = vsel %vm293, %v528, %v532
        %v535 = vshrl.u32 %v263, 16
        %v537 = vrot.slane %v535, 4
        %v538 = vshll.u32 %v263, 16
        %v540 = vrot.slane %v538, 5
        %v541 = vor.u32 %v537, %v540
        %v542 = vrot.slane %v541, 4
        %v544 = vshll.u32 %v264, 16
        %v546 = vrot.slane %v544, 5
        %v547 = vsel %vm293, %v542, %v546
        %v548 = vshrl.u32 %v264, 16
        %v550 = vrot.slane %v548, 4
        %v551 = vor.u32 %v550, %v546
        %v552 = vrot.slane %v551, 4
        %v554 = vshll.u32 %v285, 16
        %v556 = vrot.slane %v554, 5
        %v557 = vsel %vm293, %v552, %v556
        %v559 = vshrl.u32 %v265, 16
        %v561 = vrot.slane %v559, 4
        %v562 = vshll.u32 %v265, 16
        %v564 = vrot.slane %v562, 5
        %v565 = vor.u32 %v561, %v564
        %v566 = vrot.slane %v565, 4
        %v568 = vshll.u32 %v266, 16
        %v570 = vrot.slane %v568, 5
        %v571 = vsel %vm293, %v566, %v570
        %v572 = vshrl.u32 %v266, 16
        %v574 = vrot.slane %v572, 4
        %v575 = vor.u32 %v574, %v570
        %v576 = vrot.slane %v575, 4
        %v578 = vshll.u32 %v286, 16
        %v580 = vrot.slane %v578, 5
        %v581 = vsel %vm293, %v576, %v580
        %v583 = vshrl.u32 %v267, 16
        %v585 = vrot.slane %v583, 4
        %v586 = vshll.u32 %v267, 16
        %v588 = vrot.slane %v586, 5
        %v589 = vor.u32 %v585, %v588
        %v590 = vrot.slane %v589, 4
        %v592 = vshll.u32 %v268, 16
        %v594 = vrot.slane %v592, 5
        %v595 = vsel %vm293, %v590, %v594
        %v596 = vshrl.u32 %v268, 16
        %v598 = vrot.slane %v596, 4
        %v599 = vor.u32 %v598, %v594
        %v600 = vrot.slane %v599, 4
        %v602 = vshll.u32 %v287, 16
        %v604 = vrot.slane %v602, 5
        %v605 = vsel %vm293, %v600, %v604
        %v607 = vshrl.u32 %v269, 16
        %v609 = vrot.slane %v607, 4
        %v610 = vshll.u32 %v269, 16
        %v612 = vrot.slane %v610, 5
        %v613 = vor.u32 %v609, %v612
        %v614 = vrot.slane %v613, 4
        %v616 = vshll.u32 %v270, 16
        %v618 = vrot.slane %v616, 5
        %v619 = vsel %vm293, %v614, %v618
        %v620 = vshrl.u32 %v270, 16
        %v622 = vrot.slane %v620, 4
        %v623 = vor.u32 %v622, %v618
        %v624 = vrot.slane %v623, 4
        %v626 = vshll.u32 %v288, 16
        %v628 = vrot.slane %v626, 5
        %v629 = vsel %vm293, %v624, %v628
        %v631 = vshrl.u32 %v271, 16
        %v633 = vrot.slane %v631, 4
        %v634 = vshll.u32 %v271, 16
        %v636 = vrot.slane %v634, 5
        %v637 = vor.u32 %v633, %v636
        %v638 = vrot.slane %v637, 4
        %v640 = vshll.u32 %v272, 16
        %v642 = vrot.slane %v640, 5
        %v643 = vsel %vm293, %v638, %v642
        %v644 = vshrl.u32 %v272, 16
        %v646 = vrot.slane %v644, 4
        %v647 = vor.u32 %v646, %v642
        %v648 = vrot.slane %v647, 4
        %v650 = vshll.u32 %v289, 16
        %v652 = vrot.slane %v650, 5
        %v653 = vsel %vm293, %v648, %v652
        %v655 = vshrl.u32 %v273, 16
        %v657 = vrot.slane %v655, 4
        %v658 = vshll.u32 %v273, 16
        %v660 = vrot.slane %v658, 5
        %v661 = vor.u32 %v657, %v660
        %v662 = vrot.slane %v661, 4
        %v664 = vshll.u32 %v274, 16
        %v666 = vrot.slane %v664, 5
        %v667 = vsel %vm293, %v662, %v666
        %v668 = vshrl.u32 %v274, 16
        %v670 = vrot.slane %v668, 4
        %v671 = vor.u32 %v670, %v666
        %v672 = vrot.slane %v671, 4
        %v674 = vshll.u32 %v290, 16
        %v676 = vrot.slane %v674, 5
        %v677 = vsel %vm293, %v672, %v676
        %v678 = vld [vmem:[%s242] sm:$0xe]
        %v679 = vld [vmem:[%s242 + $0xc] sm:$0xe]
        %v680 = vld [vmem:[%s242 + $0x18] sm:$0xe]
        %v681 = vld [vmem:[%s242 + $0x24] sm:$0xe]
        %v682 = vld [vmem:[%s242 + $0x30] sm:$0xe]
        %v683 = vld [vmem:[%s242 + $0x3c] sm:$0xe]
        %v684 = vld [vmem:[%s242 + $0x48] sm:$0xe]
        %v685 = vld [vmem:[%s242 + $0x54] sm:$0xe]
        %v686 = vld [vmem:[%s242 + $0x60] sm:$0xe]
        %v687 = vld [vmem:[%s242 + $0x6c] sm:$0xe]
        %v688 = vld [vmem:[%s242 + $0x78] sm:$0xe]
        %v689 = vld [vmem:[%s242 + $0x84] sm:$0xe]
        %v690 = vld [vmem:[%s242 + $0x90] sm:$0xe]
        %v691 = vld [vmem:[%s242 + $0x9c] sm:$0xe]
        %v692 = vld [vmem:[%s242 + $0xa8] sm:$0xe]
        %v693 = vld [vmem:[%s242 + $0xb4] sm:$0xe]
        %vm742 = vcmask 1042432
        %vm743 = vcmask 1046532
        %vm744 = vmor %vm742, %vm743
        %v745 = vrot.slane %v678, 5
        %v746 = vrot.slane %v745, 4
        %v747 = vrot.slane %v244, 5
        %v748 = vsel %vm744, %v746, %v747
        %v749 = vrot.slane %v747, 4
        %v750 = vrot.slane %v275, 5
        %v751 = vsel %vm744, %v749, %v750
        %v752 = vrot.slane %v679, 5
        %v753 = vrot.slane %v752, 4
        %v754 = vrot.slane %v246, 5
        %v755 = vsel %vm744, %v753, %v754
        %v756 = vrot.slane %v754, 4
        %v757 = vrot.slane %v276, 5
        %v758 = vsel %vm744, %v756, %v757
        %v759 = vrot.slane %v680, 5
        %v760 = vrot.slane %v759, 4
        %v761 = vrot.slane %v248, 5
        %v762 = vsel %vm744, %v760, %v761
        %v763 = vrot.slane %v761, 4
        %v764 = vrot.slane %v277, 5
        %v765 = vsel %vm744, %v763, %v764
        %v766 = vrot.slane %v681, 5
        %v767 = vrot.slane %v766, 4
        %v768 = vrot.slane %v250, 5
        %v769 = vsel %vm744, %v767, %v768
        %v770 = vrot.slane %v768, 4
        %v771 = vrot.slane %v278, 5
        %v772 = vsel %vm744, %v770, %v771
        %v773 = vrot.slane %v682, 5
        %v774 = vrot.slane %v773, 4
        %v775 = vrot.slane %v252, 5
        %v776 = vsel %vm744, %v774, %v775
        %v777 = vrot.slane %v775, 4
        %v778 = vrot.slane %v279, 5
        %v779 = vsel %vm744, %v777, %v778
        %v780 = vrot.slane %v683, 5
        %v781 = vrot.slane %v780, 4
        %v782 = vrot.slane %v254, 5
        %v783 = vsel %vm744, %v781, %v782
        %v784 = vrot.slane %v782, 4
        %v785 = vrot.slane %v280, 5
        %v786 = vsel %vm744, %v784, %v785
        %v787 = vrot.slane %v684, 5
        %v788 = vrot.slane %v787, 4
        %v789 = vrot.slane %v256, 5
        %v790 = vsel %vm744, %v788, %v789
        %v791 = vrot.slane %v789, 4
        %v792 = vrot.slane %v281, 5
        %v793 = vsel %vm744, %v791, %v792
        %v794 = vrot.slane %v685, 5
        %v795 = vrot.slane %v794, 4
        %v796 = vrot.slane %v258, 5
        %v797 = vsel %vm744, %v795, %v796
        %v798 = vrot.slane %v796, 4
        %v799 = vrot.slane %v282, 5
        %v800 = vsel %vm744, %v798, %v799
        %v801 = vrot.slane %v686, 5
        %v802 = vrot.slane %v801, 4
        %v803 = vrot.slane %v260, 5
        %v804 = vsel %vm744, %v802, %v803
        %v805 = vrot.slane %v803, 4
        %v806 = vrot.slane %v283, 5
        %v807 = vsel %vm744, %v805, %v806
        %v808 = vrot.slane %v687, 5
        %v809 = vrot.slane %v808, 4
        %v810 = vrot.slane %v262, 5
        %v811 = vsel %vm744, %v809, %v810
        %v812 = vrot.slane %v810, 4
        %v813 = vrot.slane %v284, 5
        %v814 = vsel %vm744, %v812, %v813
        %v815 = vrot.slane %v688, 5
        %v816 = vrot.slane %v815, 4
        %v817 = vrot.slane %v264, 5
        %v818 = vsel %vm744, %v816, %v817
        %v819 = vrot.slane %v817, 4
        %v820 = vrot.slane %v285, 5
        %v821 = vsel %vm744, %v819, %v820
        %v822 = vrot.slane %v689, 5
        %v823 = vrot.slane %v822, 4
        %v824 = vrot.slane %v266, 5
        %v825 = vsel %vm744, %v823, %v824
        %v826 = vrot.slane %v824, 4
        %v827 = vrot.slane %v286, 5
        %v828 = vsel %vm744, %v826, %v827
        %v829 = vrot.slane %v690, 5
        %v830 = vrot.slane %v829, 4
        %v831 = vrot.slane %v268, 5
        %v832 = vsel %vm744, %v830, %v831
        %v833 = vrot.slane %v831, 4
        %v834 = vrot.slane %v287, 5
        %v835 = vsel %vm744, %v833, %v834
        %v836 = vrot.slane %v691, 5
        %v837 = vrot.slane %v836, 4
        %v838 = vrot.slane %v270, 5
        %v839 = vsel %vm744, %v837, %v838
        %v840 = vrot.slane %v838, 4
        %v841 = vrot.slane %v288, 5
        %v842 = vsel %vm744, %v840, %v841
        %v843 = vrot.slane %v692, 5
        %v844 = vrot.slane %v843, 4
        %v845 = vrot.slane %v272, 5
        %v846 = vsel %vm744, %v844, %v845
        %v847 = vrot.slane %v845, 4
        %v848 = vrot.slane %v289, 5
        %v849 = vsel %vm744, %v847, %v848
        %v850 = vrot.slane %v693, 5
        %v851 = vrot.slane %v850, 4
        %v852 = vrot.slane %v274, 5
        %v853 = vsel %vm744, %v851, %v852
        %v854 = vrot.slane %v852, 4
        %v855 = vrot.slane %v290, 5
        %v856 = vsel %vm744, %v854, %v855
        %s857 = sadd.s32 %s239, 1
        %s858 = smul.u32 %s857, 3
        %s859 = smul.addr %s858, 4
        %s860 = scalar_lea.vmem %s236, %s859
        %v861 = vld [vmem:[%s860] sm:$0xf]
        %v862 = vld [vmem:[%s860 + $0x4] sm:$0xf]
        %v863 = vld [vmem:[%s860 + $0xc] sm:$0xf]
        %v864 = vld [vmem:[%s860 + $0x10] sm:$0xf]
        %v865 = vld [vmem:[%s860 + $0x18] sm:$0xf]
        %v866 = vld [vmem:[%s860 + $0x1c] sm:$0xf]
        %v867 = vld [vmem:[%s860 + $0x24] sm:$0xf]
        %v868 = vld [vmem:[%s860 + $0x28] sm:$0xf]
        %v869 = vld [vmem:[%s860 + $0x30] sm:$0xf]
        %v870 = vld [vmem:[%s860 + $0x34] sm:$0xf]
        %v871 = vld [vmem:[%s860 + $0x3c] sm:$0xf]
        %v872 = vld [vmem:[%s860 + $0x40] sm:$0xf]
        %v873 = vld [vmem:[%s860 + $0x48] sm:$0xf]
        %v874 = vld [vmem:[%s860 + $0x4c] sm:$0xf]
        %v875 = vld [vmem:[%s860 + $0x54] sm:$0xf]
        %v876 = vld [vmem:[%s860 + $0x58] sm:$0xf]
        %v877 = vld [vmem:[%s860 + $0x60] sm:$0xf]
        %v878 = vld [vmem:[%s860 + $0x64] sm:$0xf]
        %v879 = vld [vmem:[%s860 + $0x6c] sm:$0xf]
        %v880 = vld [vmem:[%s860 + $0x70] sm:$0xf]
        %v881 = vld [vmem:[%s860 + $0x78] sm:$0xf]
        %v882 = vld [vmem:[%s860 + $0x7c] sm:$0xf]
        %v883 = vld [vmem:[%s860 + $0x84] sm:$0xf]
        %v884 = vld [vmem:[%s860 + $0x88] sm:$0xf]
        %v885 = vld [vmem:[%s860 + $0x90] sm:$0xf]
        %v886 = vld [vmem:[%s860 + $0x94] sm:$0xf]
        %v887 = vld [vmem:[%s860 + $0x9c] sm:$0xf]
        %v888 = vld [vmem:[%s860 + $0xa0] sm:$0xf]
        %v889 = vld [vmem:[%s860 + $0xa8] sm:$0xf]
        %v890 = vld [vmem:[%s860 + $0xac] sm:$0xf]
        %v891 = vld [vmem:[%s860 + $0xb4] sm:$0xf]
        %v892 = vld [vmem:[%s860 + $0xb8] sm:$0xf]
        %v893 = vld [vmem:[%s860 + $0x8] sm:$0x1]
        %v894 = vld [vmem:[%s860 + $0x14] sm:$0x1]
        %v895 = vld [vmem:[%s860 + $0x20] sm:$0x1]
        %v896 = vld [vmem:[%s860 + $0x2c] sm:$0x1]
        %v897 = vld [vmem:[%s860 + $0x38] sm:$0x1]
        %v898 = vld [vmem:[%s860 + $0x44] sm:$0x1]
        %v899 = vld [vmem:[%s860 + $0x50] sm:$0x1]
        %v900 = vld [vmem:[%s860 + $0x5c] sm:$0x1]
        %v901 = vld [vmem:[%s860 + $0x68] sm:$0x1]
        %v902 = vld [vmem:[%s860 + $0x74] sm:$0x1]
        %v903 = vld [vmem:[%s860 + $0x80] sm:$0x1]
        %v904 = vld [vmem:[%s860 + $0x8c] sm:$0x1]
        %v905 = vld [vmem:[%s860 + $0x98] sm:$0x1]
        %v906 = vld [vmem:[%s860 + $0xa4] sm:$0x1]
        %v907 = vld [vmem:[%s860 + $0xb0] sm:$0x1]
        %v908 = vld [vmem:[%s860 + $0xbc] sm:$0x1]
        %v910 = vshrl.u32 %v861, 16
        %v912 = vrot.slane %v910, 4
        %v913 = vshll.u32 %v861, 16
        %v915 = vrot.slane %v913, 5
        %v916 = vor.u32 %v912, %v915
        %v917 = vrot.slane %v916, 4
        %v919 = vshll.u32 %v862, 16
        %v921 = vrot.slane %v919, 5
        %v922 = vsel %vm293, %v917, %v921
        %v923 = vshrl.u32 %v862, 16
        %v925 = vrot.slane %v923, 4
        %v926 = vor.u32 %v925, %v921
        %v927 = vrot.slane %v926, 4
        %v929 = vshll.u32 %v893, 16
        %v931 = vrot.slane %v929, 5
        %v932 = vsel %vm293, %v927, %v931
        %v934 = vshrl.u32 %v863, 16
        %v936 = vrot.slane %v934, 4
        %v937 = vshll.u32 %v863, 16
        %v939 = vrot.slane %v937, 5
        %v940 = vor.u32 %v936, %v939
        %v941 = vrot.slane %v940, 4
        %v943 = vshll.u32 %v864, 16
        %v945 = vrot.slane %v943, 5
        %v946 = vsel %vm293, %v941, %v945
        %v947 = vshrl.u32 %v864, 16
        %v949 = vrot.slane %v947, 4
        %v950 = vor.u32 %v949, %v945
        %v951 = vrot.slane %v950, 4
        %v953 = vshll.u32 %v894, 16
        %v955 = vrot.slane %v953, 5
        %v956 = vsel %vm293, %v951, %v955
        %v958 = vshrl.u32 %v865, 16
        %v960 = vrot.slane %v958, 4
        %v961 = vshll.u32 %v865, 16
        %v963 = vrot.slane %v961, 5
        %v964 = vor.u32 %v960, %v963
        %v965 = vrot.slane %v964, 4
        %v967 = vshll.u32 %v866, 16
        %v969 = vrot.slane %v967, 5
        %v970 = vsel %vm293, %v965, %v969
        %v971 = vshrl.u32 %v866, 16
        %v973 = vrot.slane %v971, 4
        %v974 = vor.u32 %v973, %v969
        %v975 = vrot.slane %v974, 4
        %v977 = vshll.u32 %v895, 16
        %v979 = vrot.slane %v977, 5
        %v980 = vsel %vm293, %v975, %v979
        %v982 = vshrl.u32 %v867, 16
        %v984 = vrot.slane %v982, 4
        %v985 = vshll.u32 %v867, 16
        %v987 = vrot.slane %v985, 5
        %v988 = vor.u32 %v984, %v987
        %v989 = vrot.slane %v988, 4
        %v991 = vshll.u32 %v868, 16
        %v993 = vrot.slane %v991, 5
        %v994 = vsel %vm293, %v989, %v993
        %v995 = vshrl.u32 %v868, 16
        %v997 = vrot.slane %v995, 4
        %v998 = vor.u32 %v997, %v993
        %v999 = vrot.slane %v998, 4
        %v1001 = vshll.u32 %v896, 16
        %v1003 = vrot.slane %v1001, 5
        %v1004 = vsel %vm293, %v999, %v1003
        %v1006 = vshrl.u32 %v869, 16
        %v1008 = vrot.slane %v1006, 4
        %v1009 = vshll.u32 %v869, 16
        %v1011 = vrot.slane %v1009, 5
        %v1012 = vor.u32 %v1008, %v1011
        %v1013 = vrot.slane %v1012, 4
        %v1015 = vshll.u32 %v870, 16
        %v1017 = vrot.slane %v1015, 5
        %v1018 = vsel %vm293, %v1013, %v1017
        %v1019 = vshrl.u32 %v870, 16
        %v1021 = vrot.slane %v1019, 4
        %v1022 = vor.u32 %v1021, %v1017
        %v1023 = vrot.slane %v1022, 4
        %v1025 = vshll.u32 %v897, 16
        %v1027 = vrot.slane %v1025, 5
        %v1028 = vsel %vm293, %v1023, %v1027
        %v1030 = vshrl.u32 %v871, 16
        %v1032 = vrot.slane %v1030, 4
        %v1033 = vshll.u32 %v871, 16
        %v1035 = vrot.slane %v1033, 5
        %v1036 = vor.u32 %v1032, %v1035
        %v1037 = vrot.slane %v1036, 4
        %v1039 = vshll.u32 %v872, 16
        %v1041 = vrot.slane %v1039, 5
        %v1042 = vsel %vm293, %v1037, %v1041
        %v1043 = vshrl.u32 %v872, 16
        %v1045 = vrot.slane %v1043, 4
        %v1046 = vor.u32 %v1045, %v1041
        %v1047 = vrot.slane %v1046, 4
        %v1049 = vshll.u32 %v898, 16
        %v1051 = vrot.slane %v1049, 5
        %v1052 = vsel %vm293, %v1047, %v1051
        %v1054 = vshrl.u32 %v873, 16
        %v1056 = vrot.slane %v1054, 4
        %v1057 = vshll.u32 %v873, 16
        %v1059 = vrot.slane %v1057, 5
        %v1060 = vor.u32 %v1056, %v1059
        %v1061 = vrot.slane %v1060, 4
        %v1063 = vshll.u32 %v874, 16
        %v1065 = vrot.slane %v1063, 5
        %v1066 = vsel %vm293, %v1061, %v1065
        %v1067 = vshrl.u32 %v874, 16
        %v1069 = vrot.slane %v1067, 4
        %v1070 = vor.u32 %v1069, %v1065
        %v1071 = vrot.slane %v1070, 4
        %v1073 = vshll.u32 %v899, 16
        %v1075 = vrot.slane %v1073, 5
        %v1076 = vsel %vm293, %v1071, %v1075
        %v1078 = vshrl.u32 %v875, 16
        %v1080 = vrot.slane %v1078, 4
        %v1081 = vshll.u32 %v875, 16
        %v1083 = vrot.slane %v1081, 5
        %v1084 = vor.u32 %v1080, %v1083
        %v1085 = vrot.slane %v1084, 4
        %v1087 = vshll.u32 %v876, 16
        %v1089 = vrot.slane %v1087, 5
        %v1090 = vsel %vm293, %v1085, %v1089
        %v1091 = vshrl.u32 %v876, 16
        %v1093 = vrot.slane %v1091, 4
        %v1094 = vor.u32 %v1093, %v1089
        %v1095 = vrot.slane %v1094, 4
        %v1097 = vshll.u32 %v900, 16
        %v1099 = vrot.slane %v1097, 5
        %v1100 = vsel %vm293, %v1095, %v1099
        %v1102 = vshrl.u32 %v877, 16
        %v1104 = vrot.slane %v1102, 4
        %v1105 = vshll.u32 %v877, 16
        %v1107 = vrot.slane %v1105, 5
        %v1108 = vor.u32 %v1104, %v1107
        %v1109 = vrot.slane %v1108, 4
        %v1111 = vshll.u32 %v878, 16
        %v1113 = vrot.slane %v1111, 5
        %v1114 = vsel %vm293, %v1109, %v1113
        %v1115 = vshrl.u32 %v878, 16
        %v1117 = vrot.slane %v1115, 4
        %v1118 = vor.u32 %v1117, %v1113
        %v1119 = vrot.slane %v1118, 4
        %v1121 = vshll.u32 %v901, 16
        %v1123 = vrot.slane %v1121, 5
        %v1124 = vsel %vm293, %v1119, %v1123
        %v1126 = vshrl.u32 %v879, 16
        %v1128 = vrot.slane %v1126, 4
        %v1129 = vshll.u32 %v879, 16
        %v1131 = vrot.slane %v1129, 5
        %v1132 = vor.u32 %v1128, %v1131
        %v1133 = vrot.slane %v1132, 4
        %v1135 = vshll.u32 %v880, 16
        %v1137 = vrot.slane %v1135, 5
        %v1138 = vsel %vm293, %v1133, %v1137
        %v1139 = vshrl.u32 %v880, 16
        %v1141 = vrot.slane %v1139, 4
        %v1142 = vor.u32 %v1141, %v1137
        %v1143 = vrot.slane %v1142, 4
        %v1145 = vshll.u32 %v902, 16
        %v1147 = vrot.slane %v1145, 5
        %v1148 = vsel %vm293, %v1143, %v1147
        %v1150 = vshrl.u32 %v881, 16
        %v1152 = vrot.slane %v1150, 4
        %v1153 = vshll.u32 %v881, 16
        %v1155 = vrot.slane %v1153, 5
        %v1156 = vor.u32 %v1152, %v1155
        %v1157 = vrot.slane %v1156, 4
        %v1159 = vshll.u32 %v882, 16
        %v1161 = vrot.slane %v1159, 5
        %v1162 = vsel %vm293, %v1157, %v1161
        %v1163 = vshrl.u32 %v882, 16
        %v1165 = vrot.slane %v1163, 4
        %v1166 = vor.u32 %v1165, %v1161
        %v1167 = vrot.slane %v1166, 4
        %v1169 = vshll.u32 %v903, 16
        %v1171 = vrot.slane %v1169, 5
        %v1172 = vsel %vm293, %v1167, %v1171
        %v1174 = vshrl.u32 %v883, 16
        %v1176 = vrot.slane %v1174, 4
        %v1177 = vshll.u32 %v883, 16
        %v1179 = vrot.slane %v1177, 5
        %v1180 = vor.u32 %v1176, %v1179
        %v1181 = vrot.slane %v1180, 4
        %v1183 = vshll.u32 %v884, 16
        %v1185 = vrot.slane %v1183, 5
        %v1186 = vsel %vm293, %v1181, %v1185
        %v1187 = vshrl.u32 %v884, 16
        %v1189 = vrot.slane %v1187, 4
        %v1190 = vor.u32 %v1189, %v1185
        %v1191 = vrot.slane %v1190, 4
        %v1193 = vshll.u32 %v904, 16
        %v1195 = vrot.slane %v1193, 5
        %v1196 = vsel %vm293, %v1191, %v1195
        %v1198 = vshrl.u32 %v885, 16
        %v1200 = vrot.slane %v1198, 4
        %v1201 = vshll.u32 %v885, 16
        %v1203 = vrot.slane %v1201, 5
        %v1204 = vor.u32 %v1200, %v1203
        %v1205 = vrot.slane %v1204, 4
        %v1207 = vshll.u32 %v886, 16
        %v1209 = vrot.slane %v1207, 5
        %v1210 = vsel %vm293, %v1205, %v1209
        %v1211 = vshrl.u32 %v886, 16
        %v1213 = vrot.slane %v1211, 4
        %v1214 = vor.u32 %v1213, %v1209
        %v1215 = vrot.slane %v1214, 4
        %v1217 = vshll.u32 %v905, 16
        %v1219 = vrot.slane %v1217, 5
        %v1220 = vsel %vm293, %v1215, %v1219
        %v1222 = vshrl.u32 %v887, 16
        %v1224 = vrot.slane %v1222, 4
        %v1225 = vshll.u32 %v887, 16
        %v1227 = vrot.slane %v1225, 5
        %v1228 = vor.u32 %v1224, %v1227
        %v1229 = vrot.slane %v1228, 4
        %v1231 = vshll.u32 %v888, 16
        %v1233 = vrot.slane %v1231, 5
        %v1234 = vsel %vm293, %v1229, %v1233
        %v1235 = vshrl.u32 %v888, 16
        %v1237 = vrot.slane %v1235, 4
        %v1238 = vor.u32 %v1237, %v1233
        %v1239 = vrot.slane %v1238, 4
        %v1241 = vshll.u32 %v906, 16
        %v1243 = vrot.slane %v1241, 5
        %v1244 = vsel %vm293, %v1239, %v1243
        %v1246 = vshrl.u32 %v889, 16
        %v1248 = vrot.slane %v1246, 4
        %v1249 = vshll.u32 %v889, 16
        %v1251 = vrot.slane %v1249, 5
        %v1252 = vor.u32 %v1248, %v1251
        %v1253 = vrot.slane %v1252, 4
        %v1255 = vshll.u32 %v890, 16
        %v1257 = vrot.slane %v1255, 5
        %v1258 = vsel %vm293, %v1253, %v1257
        %v1259 = vshrl.u32 %v890, 16
        %v1261 = vrot.slane %v1259, 4
        %v1262 = vor.u32 %v1261, %v1257
        %v1263 = vrot.slane %v1262, 4
        %v1265 = vshll.u32 %v907, 16
        %v1267 = vrot.slane %v1265, 5
        %v1268 = vsel %vm293, %v1263, %v1267
        %v1270 = vshrl.u32 %v891, 16
        %v1272 = vrot.slane %v1270, 4
        %v1273 = vshll.u32 %v891, 16
        %v1275 = vrot.slane %v1273, 5
        %v1276 = vor.u32 %v1272, %v1275
        %v1277 = vrot.slane %v1276, 4
        %v1279 = vshll.u32 %v892, 16
        %v1281 = vrot.slane %v1279, 5
        %v1282 = vsel %vm293, %v1277, %v1281
        %v1283 = vshrl.u32 %v892, 16
        %v1285 = vrot.slane %v1283, 4
        %v1286 = vor.u32 %v1285, %v1281
        %v1287 = vrot.slane %v1286, 4
        %v1289 = vshll.u32 %v908, 16
        %v1291 = vrot.slane %v1289, 5
        %v1292 = vsel %vm293, %v1287, %v1291
        %v1293 = vld [vmem:[%s860] sm:$0xe]
        %v1294 = vld [vmem:[%s860 + $0xc] sm:$0xe]
        %v1295 = vld [vmem:[%s860 + $0x18] sm:$0xe]
        %v1296 = vld [vmem:[%s860 + $0x24] sm:$0xe]
        %v1297 = vld [vmem:[%s860 + $0x30] sm:$0xe]
        %v1298 = vld [vmem:[%s860 + $0x3c] sm:$0xe]
        %v1299 = vld [vmem:[%s860 + $0x48] sm:$0xe]
        %v1300 = vld [vmem:[%s860 + $0x54] sm:$0xe]
        %v1301 = vld [vmem:[%s860 + $0x60] sm:$0xe]
        %v1302 = vld [vmem:[%s860 + $0x6c] sm:$0xe]
        %v1303 = vld [vmem:[%s860 + $0x78] sm:$0xe]
        %v1304 = vld [vmem:[%s860 + $0x84] sm:$0xe]
        %v1305 = vld [vmem:[%s860 + $0x90] sm:$0xe]
        %v1306 = vld [vmem:[%s860 + $0x9c] sm:$0xe]
        %v1307 = vld [vmem:[%s860 + $0xa8] sm:$0xe]
        %v1308 = vld [vmem:[%s860 + $0xb4] sm:$0xe]
        %v1357 = vrot.slane %v1293, 5
        %v1358 = vrot.slane %v1357, 4
        %v1359 = vrot.slane %v862, 5
        %v1360 = vsel %vm744, %v1358, %v1359
        %v1361 = vrot.slane %v1359, 4
        %v1362 = vrot.slane %v893, 5
        %v1363 = vsel %vm744, %v1361, %v1362
        %v1364 = vrot.slane %v1294, 5
        %v1365 = vrot.slane %v1364, 4
        %v1366 = vrot.slane %v864, 5
        %v1367 = vsel %vm744, %v1365, %v1366
        %v1368 = vrot.slane %v1366, 4
        %v1369 = vrot.slane %v894, 5
        %v1370 = vsel %vm744, %v1368, %v1369
        %v1371 = vrot.slane %v1295, 5
        %v1372 = vrot.slane %v1371, 4
        %v1373 = vrot.slane %v866, 5
        %v1374 = vsel %vm744, %v1372, %v1373
        %v1375 = vrot.slane %v1373, 4
        %v1376 = vrot.slane %v895, 5
        %v1377 = vsel %vm744, %v1375, %v1376
        %v1378 = vrot.slane %v1296, 5
        %v1379 = vrot.slane %v1378, 4
        %v1380 = vrot.slane %v868, 5
        %v1381 = vsel %vm744, %v1379, %v1380
        %v1382 = vrot.slane %v1380, 4
        %v1383 = vrot.slane %v896, 5
        %v1384 = vsel %vm744, %v1382, %v1383
        %v1385 = vrot.slane %v1297, 5
        %v1386 = vrot.slane %v1385, 4
        %v1387 = vrot.slane %v870, 5
        %v1388 = vsel %vm744, %v1386, %v1387
        %v1389 = vrot.slane %v1387, 4
        %v1390 = vrot.slane %v897, 5
        %v1391 = vsel %vm744, %v1389, %v1390
        %v1392 = vrot.slane %v1298, 5
        %v1393 = vrot.slane %v1392, 4
        %v1394 = vrot.slane %v872, 5
        %v1395 = vsel %vm744, %v1393, %v1394
        %v1396 = vrot.slane %v1394, 4
        %v1397 = vrot.slane %v898, 5
        %v1398 = vsel %vm744, %v1396, %v1397
        %v1399 = vrot.slane %v1299, 5
        %v1400 = vrot.slane %v1399, 4
        %v1401 = vrot.slane %v874, 5
        %v1402 = vsel %vm744, %v1400, %v1401
        %v1403 = vrot.slane %v1401, 4
        %v1404 = vrot.slane %v899, 5
        %v1405 = vsel %vm744, %v1403, %v1404
        %v1406 = vrot.slane %v1300, 5
        %v1407 = vrot.slane %v1406, 4
        %v1408 = vrot.slane %v876, 5
        %v1409 = vsel %vm744, %v1407, %v1408
        %v1410 = vrot.slane %v1408, 4
        %v1411 = vrot.slane %v900, 5
        %v1412 = vsel %vm744, %v1410, %v1411
        %v1413 = vrot.slane %v1301, 5
        %v1414 = vrot.slane %v1413, 4
        %v1415 = vrot.slane %v878, 5
        %v1416 = vsel %vm744, %v1414, %v1415
        %v1417 = vrot.slane %v1415, 4
        %v1418 = vrot.slane %v901, 5
        %v1419 = vsel %vm744, %v1417, %v1418
        %v1420 = vrot.slane %v1302, 5
        %v1421 = vrot.slane %v1420, 4
        %v1422 = vrot.slane %v880, 5
        %v1423 = vsel %vm744, %v1421, %v1422
        %v1424 = vrot.slane %v1422, 4
        %v1425 = vrot.slane %v902, 5
        %v1426 = vsel %vm744, %v1424, %v1425
        %v1427 = vrot.slane %v1303, 5
        %v1428 = vrot.slane %v1427, 4
        %v1429 = vrot.slane %v882, 5
        %v1430 = vsel %vm744, %v1428, %v1429
        %v1431 = vrot.slane %v1429, 4
        %v1432 = vrot.slane %v903, 5
        %v1433 = vsel %vm744, %v1431, %v1432
        %v1434 = vrot.slane %v1304, 5
        %v1435 = vrot.slane %v1434, 4
        %v1436 = vrot.slane %v884, 5
        %v1437 = vsel %vm744, %v1435, %v1436
        %v1438 = vrot.slane %v1436, 4
        %v1439 = vrot.slane %v904, 5
        %v1440 = vsel %vm744, %v1438, %v1439
        %v1441 = vrot.slane %v1305, 5
        %v1442 = vrot.slane %v1441, 4
        %v1443 = vrot.slane %v886, 5
        %v1444 = vsel %vm744, %v1442, %v1443
        %v1445 = vrot.slane %v1443, 4
        %v1446 = vrot.slane %v905, 5
        %v1447 = vsel %vm744, %v1445, %v1446
        %v1448 = vrot.slane %v1306, 5
        %v1449 = vrot.slane %v1448, 4
        %v1450 = vrot.slane %v888, 5
        %v1451 = vsel %vm744, %v1449, %v1450
        %v1452 = vrot.slane %v1450, 4
        %v1453 = vrot.slane %v906, 5
        %v1454 = vsel %vm744, %v1452, %v1453
        %v1455 = vrot.slane %v1307, 5
        %v1456 = vrot.slane %v1455, 4
        %v1457 = vrot.slane %v890, 5
        %v1458 = vsel %vm744, %v1456, %v1457
        %v1459 = vrot.slane %v1457, 4
        %v1460 = vrot.slane %v907, 5
        %v1461 = vsel %vm744, %v1459, %v1460
        %v1462 = vrot.slane %v1308, 5
        %v1463 = vrot.slane %v1462, 4
        %v1464 = vrot.slane %v892, 5
        %v1465 = vsel %vm744, %v1463, %v1464
        %v1466 = vrot.slane %v1464, 4
        %v1467 = vrot.slane %v908, 5
        %v1468 = vsel %vm744, %v1466, %v1467
        %s1469 = sadd.s32 %s239, 2
        %s1470 = smul.u32 %s1469, 3
        %s1471 = smul.addr %s1470, 4
        %s1472 = scalar_lea.vmem %s236, %s1471
        %v1473 = vld [vmem:[%s1472] sm:$0xf]
        %v1474 = vld [vmem:[%s1472 + $0x4] sm:$0xf]
        %v1475 = vld [vmem:[%s1472 + $0xc] sm:$0xf]
        %v1476 = vld [vmem:[%s1472 + $0x10] sm:$0xf]
        %v1477 = vld [vmem:[%s1472 + $0x18] sm:$0xf]
        %v1478 = vld [vmem:[%s1472 + $0x1c] sm:$0xf]
        %v1479 = vld [vmem:[%s1472 + $0x24] sm:$0xf]
        %v1480 = vld [vmem:[%s1472 + $0x28] sm:$0xf]
        %v1481 = vld [vmem:[%s1472 + $0x30] sm:$0xf]
        %v1482 = vld [vmem:[%s1472 + $0x34] sm:$0xf]
        %v1483 = vld [vmem:[%s1472 + $0x3c] sm:$0xf]
        %v1484 = vld [vmem:[%s1472 + $0x40] sm:$0xf]
        %v1485 = vld [vmem:[%s1472 + $0x48] sm:$0xf]
        %v1486 = vld [vmem:[%s1472 + $0x4c] sm:$0xf]
        %v1487 = vld [vmem:[%s1472 + $0x54] sm:$0xf]
        %v1488 = vld [vmem:[%s1472 + $0x58] sm:$0xf]
        %v1489 = vld [vmem:[%s1472 + $0x60] sm:$0xf]
        %v1490 = vld [vmem:[%s1472 + $0x64] sm:$0xf]
        %v1491 = vld [vmem:[%s1472 + $0x6c] sm:$0xf]
        %v1492 = vld [vmem:[%s1472 + $0x70] sm:$0xf]
        %v1493 = vld [vmem:[%s1472 + $0x78] sm:$0xf]
        %v1494 = vld [vmem:[%s1472 + $0x7c] sm:$0xf]
        %v1495 = vld [vmem:[%s1472 + $0x84] sm:$0xf]
        %v1496 = vld [vmem:[%s1472 + $0x88] sm:$0xf]
        %v1497 = vld [vmem:[%s1472 + $0x90] sm:$0xf]
        %v1498 = vld [vmem:[%s1472 + $0x94] sm:$0xf]
        %v1499 = vld [vmem:[%s1472 + $0x9c] sm:$0xf]
        %v1500 = vld [vmem:[%s1472 + $0xa0] sm:$0xf]
        %v1501 = vld [vmem:[%s1472 + $0xa8] sm:$0xf]
        %v1502 = vld [vmem:[%s1472 + $0xac] sm:$0xf]
        %v1503 = vld [vmem:[%s1472 + $0xb4] sm:$0xf]
        %v1504 = vld [vmem:[%s1472 + $0xb8] sm:$0xf]
        %v1505 = vld [vmem:[%s1472 + $0x8] sm:$0x1]
        %v1506 = vld [vmem:[%s1472 + $0x14] sm:$0x1]
        %v1507 = vld [vmem:[%s1472 + $0x20] sm:$0x1]
        %v1508 = vld [vmem:[%s1472 + $0x2c] sm:$0x1]
        %v1509 = vld [vmem:[%s1472 + $0x38] sm:$0x1]
        %v1510 = vld [vmem:[%s1472 + $0x44] sm:$0x1]
        %v1511 = vld [vmem:[%s1472 + $0x50] sm:$0x1]
        %v1512 = vld [vmem:[%s1472 + $0x5c] sm:$0x1]
        %v1513 = vld [vmem:[%s1472 + $0x68] sm:$0x1]
        %v1514 = vld [vmem:[%s1472 + $0x74] sm:$0x1]
        %v1515 = vld [vmem:[%s1472 + $0x80] sm:$0x1]
        %v1516 = vld [vmem:[%s1472 + $0x8c] sm:$0x1]
        %v1517 = vld [vmem:[%s1472 + $0x98] sm:$0x1]
        %v1518 = vld [vmem:[%s1472 + $0xa4] sm:$0x1]
        %v1519 = vld [vmem:[%s1472 + $0xb0] sm:$0x1]
        %v1520 = vld [vmem:[%s1472 + $0xbc] sm:$0x1]
        %v1522 = vshrl.u32 %v1473, 16
        %v1524 = vrot.slane %v1522, 4
        %v1525 = vshll.u32 %v1473, 16
        %v1527 = vrot.slane %v1525, 5
        %v1528 = vor.u32 %v1524, %v1527
        %v1529 = vrot.slane %v1528, 4
        %v1531 = vshll.u32 %v1474, 16
        %v1533 = vrot.slane %v1531, 5
        %v1534 = vsel %vm293, %v1529, %v1533
        %v1535 = vshrl.u32 %v1474, 16
        %v1537 = vrot.slane %v1535, 4
        %v1538 = vor.u32 %v1537, %v1533
        %v1539 = vrot.slane %v1538, 4
        %v1541 = vshll.u32 %v1505, 16
        %v1543 = vrot.slane %v1541, 5
        %v1544 = vsel %vm293, %v1539, %v1543
        %v1546 = vshrl.u32 %v1475, 16
        %v1548 = vrot.slane %v1546, 4
        %v1549 = vshll.u32 %v1475, 16
        %v1551 = vrot.slane %v1549, 5
        %v1552 = vor.u32 %v1548, %v1551
        %v1553 = vrot.slane %v1552, 4
        %v1555 = vshll.u32 %v1476, 16
        %v1557 = vrot.slane %v1555, 5
        %v1558 = vsel %vm293, %v1553, %v1557
        %v1559 = vshrl.u32 %v1476, 16
        %v1561 = vrot.slane %v1559, 4
        %v1562 = vor.u32 %v1561, %v1557
        %v1563 = vrot.slane %v1562, 4
        %v1565 = vshll.u32 %v1506, 16
        %v1567 = vrot.slane %v1565, 5
        %v1568 = vsel %vm293, %v1563, %v1567
        %v1570 = vshrl.u32 %v1477, 16
        %v1572 = vrot.slane %v1570, 4
        %v1573 = vshll.u32 %v1477, 16
        %v1575 = vrot.slane %v1573, 5
        %v1576 = vor.u32 %v1572, %v1575
        %v1577 = vrot.slane %v1576, 4
        %v1579 = vshll.u32 %v1478, 16
        %v1581 = vrot.slane %v1579, 5
        %v1582 = vsel %vm293, %v1577, %v1581
        %v1583 = vshrl.u32 %v1478, 16
        %v1585 = vrot.slane %v1583, 4
        %v1586 = vor.u32 %v1585, %v1581
        %v1587 = vrot.slane %v1586, 4
        %v1589 = vshll.u32 %v1507, 16
        %v1591 = vrot.slane %v1589, 5
        %v1592 = vsel %vm293, %v1587, %v1591
        %v1594 = vshrl.u32 %v1479, 16
        %v1596 = vrot.slane %v1594, 4
        %v1597 = vshll.u32 %v1479, 16
        %v1599 = vrot.slane %v1597, 5
        %v1600 = vor.u32 %v1596, %v1599
        %v1601 = vrot.slane %v1600, 4
        %v1603 = vshll.u32 %v1480, 16
        %v1605 = vrot.slane %v1603, 5
        %v1606 = vsel %vm293, %v1601, %v1605
        %v1607 = vshrl.u32 %v1480, 16
        %v1609 = vrot.slane %v1607, 4
        %v1610 = vor.u32 %v1609, %v1605
        %v1611 = vrot.slane %v1610, 4
        %v1613 = vshll.u32 %v1508, 16
        %v1615 = vrot.slane %v1613, 5
        %v1616 = vsel %vm293, %v1611, %v1615
        %v1618 = vshrl.u32 %v1481, 16
        %v1620 = vrot.slane %v1618, 4
        %v1621 = vshll.u32 %v1481, 16
        %v1623 = vrot.slane %v1621, 5
        %v1624 = vor.u32 %v1620, %v1623
        %v1625 = vrot.slane %v1624, 4
        %v1627 = vshll.u32 %v1482, 16
        %v1629 = vrot.slane %v1627, 5
        %v1630 = vsel %vm293, %v1625, %v1629
        %v1631 = vshrl.u32 %v1482, 16
        %v1633 = vrot.slane %v1631, 4
        %v1634 = vor.u32 %v1633, %v1629
        %v1635 = vrot.slane %v1634, 4
        %v1637 = vshll.u32 %v1509, 16
        %v1639 = vrot.slane %v1637, 5
        %v1640 = vsel %vm293, %v1635, %v1639
        %v1642 = vshrl.u32 %v1483, 16
        %v1644 = vrot.slane %v1642, 4
        %v1645 = vshll.u32 %v1483, 16
        %v1647 = vrot.slane %v1645, 5
        %v1648 = vor.u32 %v1644, %v1647
        %v1649 = vrot.slane %v1648, 4
        %v1651 = vshll.u32 %v1484, 16
        %v1653 = vrot.slane %v1651, 5
        %v1654 = vsel %vm293, %v1649, %v1653
        %v1655 = vshrl.u32 %v1484, 16
        %v1657 = vrot.slane %v1655, 4
        %v1658 = vor.u32 %v1657, %v1653
        %v1659 = vrot.slane %v1658, 4
        %v1661 = vshll.u32 %v1510, 16
        %v1663 = vrot.slane %v1661, 5
        %v1664 = vsel %vm293, %v1659, %v1663
        %v1666 = vshrl.u32 %v1485, 16
        %v1668 = vrot.slane %v1666, 4
        %v1669 = vshll.u32 %v1485, 16
        %v1671 = vrot.slane %v1669, 5
        %v1672 = vor.u32 %v1668, %v1671
        %v1673 = vrot.slane %v1672, 4
        %v1675 = vshll.u32 %v1486, 16
        %v1677 = vrot.slane %v1675, 5
        %v1678 = vsel %vm293, %v1673, %v1677
        %v1679 = vshrl.u32 %v1486, 16
        %v1681 = vrot.slane %v1679, 4
        %v1682 = vor.u32 %v1681, %v1677
        %v1683 = vrot.slane %v1682, 4
        %v1685 = vshll.u32 %v1511, 16
        %v1687 = vrot.slane %v1685, 5
        %v1688 = vsel %vm293, %v1683, %v1687
        %v1690 = vshrl.u32 %v1487, 16
        %v1692 = vrot.slane %v1690, 4
        %v1693 = vshll.u32 %v1487, 16
        %v1695 = vrot.slane %v1693, 5
        %v1696 = vor.u32 %v1692, %v1695
        %v1697 = vrot.slane %v1696, 4
        %v1699 = vshll.u32 %v1488, 16
        %v1701 = vrot.slane %v1699, 5
        %v1702 = vsel %vm293, %v1697, %v1701
        %v1703 = vshrl.u32 %v1488, 16
        %v1705 = vrot.slane %v1703, 4
        %v1706 = vor.u32 %v1705, %v1701
        %v1707 = vrot.slane %v1706, 4
        %v1709 = vshll.u32 %v1512, 16
        %v1711 = vrot.slane %v1709, 5
        %v1712 = vsel %vm293, %v1707, %v1711
        %v1714 = vshrl.u32 %v1489, 16
        %v1716 = vrot.slane %v1714, 4
        %v1717 = vshll.u32 %v1489, 16
        %v1719 = vrot.slane %v1717, 5
        %v1720 = vor.u32 %v1716, %v1719
        %v1721 = vrot.slane %v1720, 4
        %v1723 = vshll.u32 %v1490, 16
        %v1725 = vrot.slane %v1723, 5
        %v1726 = vsel %vm293, %v1721, %v1725
        %v1727 = vshrl.u32 %v1490, 16
        %v1729 = vrot.slane %v1727, 4
        %v1730 = vor.u32 %v1729, %v1725
        %v1731 = vrot.slane %v1730, 4
        %v1733 = vshll.u32 %v1513, 16
        %v1735 = vrot.slane %v1733, 5
        %v1736 = vsel %vm293, %v1731, %v1735
        %v1738 = vshrl.u32 %v1491, 16
        %v1740 = vrot.slane %v1738, 4
        %v1741 = vshll.u32 %v1491, 16
        %v1743 = vrot.slane %v1741, 5
        %v1744 = vor.u32 %v1740, %v1743
        %v1745 = vrot.slane %v1744, 4
        %v1747 = vshll.u32 %v1492, 16
        %v1749 = vrot.slane %v1747, 5
        %v1750 = vsel %vm293, %v1745, %v1749
        %v1751 = vshrl.u32 %v1492, 16
        %v1753 = vrot.slane %v1751, 4
        %v1754 = vor.u32 %v1753, %v1749
        %v1755 = vrot.slane %v1754, 4
        %v1757 = vshll.u32 %v1514, 16
        %v1759 = vrot.slane %v1757, 5
        %v1760 = vsel %vm293, %v1755, %v1759
        %v1762 = vshrl.u32 %v1493, 16
        %v1764 = vrot.slane %v1762, 4
        %v1765 = vshll.u32 %v1493, 16
        %v1767 = vrot.slane %v1765, 5
        %v1768 = vor.u32 %v1764, %v1767
        %v1769 = vrot.slane %v1768, 4
        %v1771 = vshll.u32 %v1494, 16
        %v1773 = vrot.slane %v1771, 5
        %v1774 = vsel %vm293, %v1769, %v1773
        %v1775 = vshrl.u32 %v1494, 16
        %v1777 = vrot.slane %v1775, 4
        %v1778 = vor.u32 %v1777, %v1773
        %v1779 = vrot.slane %v1778, 4
        %v1781 = vshll.u32 %v1515, 16
        %v1783 = vrot.slane %v1781, 5
        %v1784 = vsel %vm293, %v1779, %v1783
        %v1786 = vshrl.u32 %v1495, 16
        %v1788 = vrot.slane %v1786, 4
        %v1789 = vshll.u32 %v1495, 16
        %v1791 = vrot.slane %v1789, 5
        %v1792 = vor.u32 %v1788, %v1791
        %v1793 = vrot.slane %v1792, 4
        %v1795 = vshll.u32 %v1496, 16
        %v1797 = vrot.slane %v1795, 5
        %v1798 = vsel %vm293, %v1793, %v1797
        %v1799 = vshrl.u32 %v1496, 16
        %v1801 = vrot.slane %v1799, 4
        %v1802 = vor.u32 %v1801, %v1797
        %v1803 = vrot.slane %v1802, 4
        %v1805 = vshll.u32 %v1516, 16
        %v1807 = vrot.slane %v1805, 5
        %v1808 = vsel %vm293, %v1803, %v1807
        %v1810 = vshrl.u32 %v1497, 16
        %v1812 = vrot.slane %v1810, 4
        %v1813 = vshll.u32 %v1497, 16
        %v1815 = vrot.slane %v1813, 5
        %v1816 = vor.u32 %v1812, %v1815
        %v1817 = vrot.slane %v1816, 4
        %v1819 = vshll.u32 %v1498, 16
        %v1821 = vrot.slane %v1819, 5
        %v1822 = vsel %vm293, %v1817, %v1821
        %v1823 = vshrl.u32 %v1498, 16
        %v1825 = vrot.slane %v1823, 4
        %v1826 = vor.u32 %v1825, %v1821
        %v1827 = vrot.slane %v1826, 4
        %v1829 = vshll.u32 %v1517, 16
        %v1831 = vrot.slane %v1829, 5
        %v1832 = vsel %vm293, %v1827, %v1831
        %v1834 = vshrl.u32 %v1499, 16
        %v1836 = vrot.slane %v1834, 4
        %v1837 = vshll.u32 %v1499, 16
        %v1839 = vrot.slane %v1837, 5
        %v1840 = vor.u32 %v1836, %v1839
        %v1841 = vrot.slane %v1840, 4
        %v1843 = vshll.u32 %v1500, 16
        %v1845 = vrot.slane %v1843, 5
        %v1846 = vsel %vm293, %v1841, %v1845
        %v1847 = vshrl.u32 %v1500, 16
        %v1849 = vrot.slane %v1847, 4
        %v1850 = vor.u32 %v1849, %v1845
        %v1851 = vrot.slane %v1850, 4
        %v1853 = vshll.u32 %v1518, 16
        %v1855 = vrot.slane %v1853, 5
        %v1856 = vsel %vm293, %v1851, %v1855
        %v1858 = vshrl.u32 %v1501, 16
        %v1860 = vrot.slane %v1858, 4
        %v1861 = vshll.u32 %v1501, 16
        %v1863 = vrot.slane %v1861, 5
        %v1864 = vor.u32 %v1860, %v1863
        %v1865 = vrot.slane %v1864, 4
        %v1867 = vshll.u32 %v1502, 16
        %v1869 = vrot.slane %v1867, 5
        %v1870 = vsel %vm293, %v1865, %v1869
        %v1871 = vshrl.u32 %v1502, 16
        %v1873 = vrot.slane %v1871, 4
        %v1874 = vor.u32 %v1873, %v1869
        %v1875 = vrot.slane %v1874, 4
        %v1877 = vshll.u32 %v1519, 16
        %v1879 = vrot.slane %v1877, 5
        %v1880 = vsel %vm293, %v1875, %v1879
        %v1882 = vshrl.u32 %v1503, 16
        %v1884 = vrot.slane %v1882, 4
        %v1885 = vshll.u32 %v1503, 16
        %v1887 = vrot.slane %v1885, 5
        %v1888 = vor.u32 %v1884, %v1887
        %v1889 = vrot.slane %v1888, 4
        %v1891 = vshll.u32 %v1504, 16
        %v1893 = vrot.slane %v1891, 5
        %v1894 = vsel %vm293, %v1889, %v1893
        %v1895 = vshrl.u32 %v1504, 16
        %v1897 = vrot.slane %v1895, 4
        %v1898 = vor.u32 %v1897, %v1893
        %v1899 = vrot.slane %v1898, 4
        %v1901 = vshll.u32 %v1520, 16
        %v1903 = vrot.slane %v1901, 5
        %v1904 = vsel %vm293, %v1899, %v1903
        %v1905 = vld [vmem:[%s1472] sm:$0xe]
        %v1906 = vld [vmem:[%s1472 + $0xc] sm:$0xe]
        %v1907 = vld [vmem:[%s1472 + $0x18] sm:$0xe]
        %v1908 = vld [vmem:[%s1472 + $0x24] sm:$0xe]
        %v1909 = vld [vmem:[%s1472 + $0x30] sm:$0xe]
        %v1910 = vld [vmem:[%s1472 + $0x3c] sm:$0xe]
        %v1911 = vld [vmem:[%s1472 + $0x48] sm:$0xe]
        %v1912 = vld [vmem:[%s1472 + $0x54] sm:$0xe]
        %v1913 = vld [vmem:[%s1472 + $0x60] sm:$0xe]
        %v1914 = vld [vmem:[%s1472 + $0x6c] sm:$0xe]
        %v1915 = vld [vmem:[%s1472 + $0x78] sm:$0xe]
        %v1916 = vld [vmem:[%s1472 + $0x84] sm:$0xe]
        %v1917 = vld [vmem:[%s1472 + $0x90] sm:$0xe]
        %v1918 = vld [vmem:[%s1472 + $0x9c] sm:$0xe]
        %v1919 = vld [vmem:[%s1472 + $0xa8] sm:$0xe]
        %v1920 = vld [vmem:[%s1472 + $0xb4] sm:$0xe]
        %v1969 = vrot.slane %v1905, 5
        %v1970 = vrot.slane %v1969, 4
        %v1971 = vrot.slane %v1474, 5
        %v1972 = vsel %vm744, %v1970, %v1971
        %v1973 = vrot.slane %v1971, 4
        %v1974 = vrot.slane %v1505, 5
        %v1975 = vsel %vm744, %v1973, %v1974
        %v1976 = vrot.slane %v1906, 5
        %v1977 = vrot.slane %v1976, 4
        %v1978 = vrot.slane %v1476, 5
        %v1979 = vsel %vm744, %v1977, %v1978
        %v1980 = vrot.slane %v1978, 4
        %v1981 = vrot.slane %v1506, 5
        %v1982 = vsel %vm744, %v1980, %v1981
        %v1983 = vrot.slane %v1907, 5
        %v1984 = vrot.slane %v1983, 4
        %v1985 = vrot.slane %v1478, 5
        %v1986 = vsel %vm744, %v1984, %v1985
        %v1987 = vrot.slane %v1985, 4
        %v1988 = vrot.slane %v1507, 5
        %v1989 = vsel %vm744, %v1987, %v1988
        %v1990 = vrot.slane %v1908, 5
        %v1991 = vrot.slane %v1990, 4
        %v1992 = vrot.slane %v1480, 5
        %v1993 = vsel %vm744, %v1991, %v1992
        %v1994 = vrot.slane %v1992, 4
        %v1995 = vrot.slane %v1508, 5
        %v1996 = vsel %vm744, %v1994, %v1995
        %v1997 = vrot.slane %v1909, 5
        %v1998 = vrot.slane %v1997, 4
        %v1999 = vrot.slane %v1482, 5
        %v2000 = vsel %vm744, %v1998, %v1999
        %v2001 = vrot.slane %v1999, 4
        %v2002 = vrot.slane %v1509, 5
        %v2003 = vsel %vm744, %v2001, %v2002
        %v2004 = vrot.slane %v1910, 5
        %v2005 = vrot.slane %v2004, 4
        %v2006 = vrot.slane %v1484, 5
        %v2007 = vsel %vm744, %v2005, %v2006
        %v2008 = vrot.slane %v2006, 4
        %v2009 = vrot.slane %v1510, 5
        %v2010 = vsel %vm744, %v2008, %v2009
        %v2011 = vrot.slane %v1911, 5
        %v2012 = vrot.slane %v2011, 4
        %v2013 = vrot.slane %v1486, 5
        %v2014 = vsel %vm744, %v2012, %v2013
        %v2015 = vrot.slane %v2013, 4
        %v2016 = vrot.slane %v1511, 5
        %v2017 = vsel %vm744, %v2015, %v2016
        %v2018 = vrot.slane %v1912, 5
        %v2019 = vrot.slane %v2018, 4
        %v2020 = vrot.slane %v1488, 5
        %v2021 = vsel %vm744, %v2019, %v2020
        %v2022 = vrot.slane %v2020, 4
        %v2023 = vrot.slane %v1512, 5
        %v2024 = vsel %vm744, %v2022, %v2023
        %v2025 = vrot.slane %v1913, 5
        %v2026 = vrot.slane %v2025, 4
        %v2027 = vrot.slane %v1490, 5
        %v2028 = vsel %vm744, %v2026, %v2027
        %v2029 = vrot.slane %v2027, 4
        %v2030 = vrot.slane %v1513, 5
        %v2031 = vsel %vm744, %v2029, %v2030
        %v2032 = vrot.slane %v1914, 5
        %v2033 = vrot.slane %v2032, 4
        %v2034 = vrot.slane %v1492, 5
        %v2035 = vsel %vm744, %v2033, %v2034
        %v2036 = vrot.slane %v2034, 4
        %v2037 = vrot.slane %v1514, 5
        %v2038 = vsel %vm744, %v2036, %v2037
        %v2039 = vrot.slane %v1915, 5
        %v2040 = vrot.slane %v2039, 4
        %v2041 = vrot.slane %v1494, 5
        %v2042 = vsel %vm744, %v2040, %v2041
        %v2043 = vrot.slane %v2041, 4
        %v2044 = vrot.slane %v1515, 5
        %v2045 = vsel %vm744, %v2043, %v2044
        %v2046 = vrot.slane %v1916, 5
        %v2047 = vrot.slane %v2046, 4
        %v2048 = vrot.slane %v1496, 5
        %v2049 = vsel %vm744, %v2047, %v2048
        %v2050 = vrot.slane %v2048, 4
        %v2051 = vrot.slane %v1516, 5
        %v2052 = vsel %vm744, %v2050, %v2051
        %v2053 = vrot.slane %v1917, 5
        %v2054 = vrot.slane %v2053, 4
        %v2055 = vrot.slane %v1498, 5
        %v2056 = vsel %vm744, %v2054, %v2055
        %v2057 = vrot.slane %v2055, 4
        %v2058 = vrot.slane %v1517, 5
        %v2059 = vsel %vm744, %v2057, %v2058
        %v2060 = vrot.slane %v1918, 5
        %v2061 = vrot.slane %v2060, 4
        %v2062 = vrot.slane %v1500, 5
        %v2063 = vsel %vm744, %v2061, %v2062
        %v2064 = vrot.slane %v2062, 4
        %v2065 = vrot.slane %v1518, 5
        %v2066 = vsel %vm744, %v2064, %v2065
        %v2067 = vrot.slane %v1919, 5
        %v2068 = vrot.slane %v2067, 4
        %v2069 = vrot.slane %v1502, 5
        %v2070 = vsel %vm744, %v2068, %v2069
        %v2071 = vrot.slane %v2069, 4
        %v2072 = vrot.slane %v1519, 5
        %v2073 = vsel %vm744, %v2071, %v2072
        %v2074 = vrot.slane %v1920, 5
        %v2075 = vrot.slane %v2074, 4
        %v2076 = vrot.slane %v1504, 5
        %v2077 = vsel %vm744, %v2075, %v2076
        %v2078 = vrot.slane %v2076, 4
        %v2079 = vrot.slane %v1520, 5
        %v2080 = vsel %vm744, %v2078, %v2079
        %v2097 = vunpack.c.l.b16 %v243
        %v2098 = vunpack.c.l.b16 %v244
        %v2099 = vunpack.c.l.b16 %v245
        %v2100 = vunpack.c.l.b16 %v246
        %v2101 = vunpack.c.l.b16 %v247
        %v2102 = vunpack.c.l.b16 %v248
        %v2103 = vunpack.c.l.b16 %v249
        %v2104 = vunpack.c.l.b16 %v250
        %v2105 = vunpack.c.l.b16 %v251
        %v2106 = vunpack.c.l.b16 %v252
        %v2107 = vunpack.c.l.b16 %v253
        %v2108 = vunpack.c.l.b16 %v254
        %v2109 = vunpack.c.l.b16 %v255
        %v2110 = vunpack.c.l.b16 %v256
        %v2111 = vunpack.c.l.b16 %v257
        %v2112 = vunpack.c.l.b16 %v258
        %v2113 = vunpack.c.l.b16 %v259
        %v2114 = vunpack.c.l.b16 %v260
        %v2115 = vunpack.c.l.b16 %v261
        %v2116 = vunpack.c.l.b16 %v262
        %v2117 = vunpack.c.l.b16 %v263
        %v2118 = vunpack.c.l.b16 %v264
        %v2119 = vunpack.c.l.b16 %v265
        %v2120 = vunpack.c.l.b16 %v266
        %v2121 = vunpack.c.l.b16 %v267
        %v2122 = vunpack.c.l.b16 %v268
        %v2123 = vunpack.c.l.b16 %v269
        %v2124 = vunpack.c.l.b16 %v270
        %v2125 = vunpack.c.l.b16 %v271
        %v2126 = vunpack.c.l.b16 %v272
        %v2127 = vunpack.c.l.b16 %v273
        %v2128 = vunpack.c.l.b16 %v274
        %v2129 = vpack.c.b16 %v2098, %v2097
        %v2130 = vpack.c.b16 %v2100, %v2099
        %v2131 = vpack.c.b16 %v2102, %v2101
        %v2132 = vpack.c.b16 %v2104, %v2103
        %v2133 = vpack.c.b16 %v2106, %v2105
        %v2134 = vpack.c.b16 %v2108, %v2107
        %v2135 = vpack.c.b16 %v2110, %v2109
        %v2136 = vpack.c.b16 %v2112, %v2111
        %v2137 = vpack.c.b16 %v2114, %v2113
        %v2138 = vpack.c.b16 %v2116, %v2115
        %v2139 = vpack.c.b16 %v2118, %v2117
        %v2140 = vpack.c.b16 %v2120, %v2119
        %v2141 = vpack.c.b16 %v2122, %v2121
        %v2142 = vpack.c.b16 %v2124, %v2123
        %v2143 = vpack.c.b16 %v2126, %v2125
        %v2144 = vpack.c.b16 %v2128, %v2127
        %v2145 = vunpack.c.l.b16 %v307
        %v2146 = vunpack.c.l.b16 %v317
        %v2147 = vunpack.c.l.b16 %v331
        %v2148 = vunpack.c.l.b16 %v341
        %v2149 = vunpack.c.l.b16 %v355
        %v2150 = vunpack.c.l.b16 %v365
        %v2151 = vunpack.c.l.b16 %v379
        %v2152 = vunpack.c.l.b16 %v389
        %v2153 = vunpack.c.l.b16 %v403
        %v2154 = vunpack.c.l.b16 %v413
        %v2155 = vunpack.c.l.b16 %v427
        %v2156 = vunpack.c.l.b16 %v437
        %v2157 = vunpack.c.l.b16 %v451
        %v2158 = vunpack.c.l.b16 %v461
        %v2159 = vunpack.c.l.b16 %v475
        %v2160 = vunpack.c.l.b16 %v485
        %v2161 = vunpack.c.l.b16 %v499
        %v2162 = vunpack.c.l.b16 %v509
        %v2163 = vunpack.c.l.b16 %v523
        %v2164 = vunpack.c.l.b16 %v533
        %v2165 = vunpack.c.l.b16 %v547
        %v2166 = vunpack.c.l.b16 %v557
        %v2167 = vunpack.c.l.b16 %v571
        %v2168 = vunpack.c.l.b16 %v581
        %v2169 = vunpack.c.l.b16 %v595
        %v2170 = vunpack.c.l.b16 %v605
        %v2171 = vunpack.c.l.b16 %v619
        %v2172 = vunpack.c.l.b16 %v629
        %v2173 = vunpack.c.l.b16 %v643
        %v2174 = vunpack.c.l.b16 %v653
        %v2175 = vunpack.c.l.b16 %v667
        %v2176 = vunpack.c.l.b16 %v677
        %v2177 = vpack.c.b16 %v2146, %v2145
        %v2178 = vpack.c.b16 %v2148, %v2147
        %v2179 = vpack.c.b16 %v2150, %v2149
        %v2180 = vpack.c.b16 %v2152, %v2151
        %v2181 = vpack.c.b16 %v2154, %v2153
        %v2182 = vpack.c.b16 %v2156, %v2155
        %v2183 = vpack.c.b16 %v2158, %v2157
        %v2184 = vpack.c.b16 %v2160, %v2159
        %v2185 = vpack.c.b16 %v2162, %v2161
        %v2186 = vpack.c.b16 %v2164, %v2163
        %v2187 = vpack.c.b16 %v2166, %v2165
        %v2188 = vpack.c.b16 %v2168, %v2167
        %v2189 = vpack.c.b16 %v2170, %v2169
        %v2190 = vpack.c.b16 %v2172, %v2171
        %v2191 = vpack.c.b16 %v2174, %v2173
        %v2192 = vpack.c.b16 %v2176, %v2175
        %2193 = vrot.lane.b32.xlu0 %v2177, 8
        %v2194 = vpop.permute.xlu0 %2193
        %2195 = vrot.lane.b32.xlu0 %v2178, 8
        %v2196 = vpop.permute.xlu0 %2195
        %2197 = vrot.lane.b32.xlu0 %v2179, 8
        %v2198 = vpop.permute.xlu0 %2197
        %2199 = vrot.lane.b32.xlu0 %v2180, 8
        %v2200 = vpop.permute.xlu0 %2199
        %2201 = vrot.lane.b32.xlu0 %v2181, 8
        %v2202 = vpop.permute.xlu0 %2201
        %2203 = vrot.lane.b32.xlu0 %v2182, 8
        %v2204 = vpop.permute.xlu0 %2203
        %2205 = vrot.lane.b32.xlu0 %v2183, 8
        %v2206 = vpop.permute.xlu0 %2205
        %2207 = vrot.lane.b32.xlu0 %v2184, 8
        %v2208 = vpop.permute.xlu0 %2207
        %2209 = vrot.lane.b32.xlu0 %v2185, 8
        %v2210 = vpop.permute.xlu0 %2209
        %2211 = vrot.lane.b32.xlu0 %v2186, 8
        %v2212 = vpop.permute.xlu0 %2211
        %2213 = vrot.lane.b32.xlu0 %v2187, 8
        %v2214 = vpop.permute.xlu0 %2213
        %2215 = vrot.lane.b32.xlu0 %v2188, 8
        %v2216 = vpop.permute.xlu0 %2215
        %2217 = vrot.lane.b32.xlu0 %v2189, 8
        %v2218 = vpop.permute.xlu0 %2217
        %2219 = vrot.lane.b32.xlu0 %v2190, 8
        %v2220 = vpop.permute.xlu0 %2219
        %2221 = vrot.lane.b32.xlu0 %v2191, 8
        %v2222 = vpop.permute.xlu0 %2221
        %2223 = vrot.lane.b32.xlu0 %v2192, 8
        %v2224 = vpop.permute.xlu0 %2223
        %v2225 = vunpack.c.l.b16 %v748
        %v2226 = vunpack.c.l.b16 %v751
        %v2227 = vunpack.c.l.b16 %v755
        %v2228 = vunpack.c.l.b16 %v758
        %v2229 = vunpack.c.l.b16 %v762
        %v2230 = vunpack.c.l.b16 %v765
        %v2231 = vunpack.c.l.b16 %v769
        %v2232 = vunpack.c.l.b16 %v772
        %v2233 = vunpack.c.l.b16 %v776
        %v2234 = vunpack.c.l.b16 %v779
        %v2235 = vunpack.c.l.b16 %v783
        %v2236 = vunpack.c.l.b16 %v786
        %v2237 = vunpack.c.l.b16 %v790
        %v2238 = vunpack.c.l.b16 %v793
        %v2239 = vunpack.c.l.b16 %v797
        %v2240 = vunpack.c.l.b16 %v800
        %v2241 = vunpack.c.l.b16 %v804
        %v2242 = vunpack.c.l.b16 %v807
        %v2243 = vunpack.c.l.b16 %v811
        %v2244 = vunpack.c.l.b16 %v814
        %v2245 = vunpack.c.l.b16 %v818
        %v2246 = vunpack.c.l.b16 %v821
        %v2247 = vunpack.c.l.b16 %v825
        %v2248 = vunpack.c.l.b16 %v828
        %v2249 = vunpack.c.l.b16 %v832
        %v2250 = vunpack.c.l.b16 %v835
        %v2251 = vunpack.c.l.b16 %v839
        %v2252 = vunpack.c.l.b16 %v842
        %v2253 = vunpack.c.l.b16 %v846
        %v2254 = vunpack.c.l.b16 %v849
        %v2255 = vunpack.c.l.b16 %v853
        %v2256 = vunpack.c.l.b16 %v856
        %v2257 = vpack.c.b16 %v2226, %v2225
        %v2258 = vpack.c.b16 %v2228, %v2227
        %v2259 = vpack.c.b16 %v2230, %v2229
        %v2260 = vpack.c.b16 %v2232, %v2231
        %v2261 = vpack.c.b16 %v2234, %v2233
        %v2262 = vpack.c.b16 %v2236, %v2235
        %v2263 = vpack.c.b16 %v2238, %v2237
        %v2264 = vpack.c.b16 %v2240, %v2239
        %v2265 = vpack.c.b16 %v2242, %v2241
        %v2266 = vpack.c.b16 %v2244, %v2243
        %v2267 = vpack.c.b16 %v2246, %v2245
        %v2268 = vpack.c.b16 %v2248, %v2247
        %v2269 = vpack.c.b16 %v2250, %v2249
        %v2270 = vpack.c.b16 %v2252, %v2251
        %v2271 = vpack.c.b16 %v2254, %v2253
        %v2272 = vpack.c.b16 %v2256, %v2255
        %2273 = vrot.lane.b32.xlu0 %v2257, 16
        %v2274 = vpop.permute.xlu0 %2273
        %2275 = vrot.lane.b32.xlu0 %v2258, 16
        %v2276 = vpop.permute.xlu0 %2275
        %2277 = vrot.lane.b32.xlu0 %v2259, 16
        %v2278 = vpop.permute.xlu0 %2277
        %2279 = vrot.lane.b32.xlu0 %v2260, 16
        %v2280 = vpop.permute.xlu0 %2279
        %2281 = vrot.lane.b32.xlu0 %v2261, 16
        %v2282 = vpop.permute.xlu0 %2281
        %2283 = vrot.lane.b32.xlu0 %v2262, 16
        %v2284 = vpop.permute.xlu0 %2283
        %2285 = vrot.lane.b32.xlu0 %v2263, 16
        %v2286 = vpop.permute.xlu0 %2285
        %2287 = vrot.lane.b32.xlu0 %v2264, 16
        %v2288 = vpop.permute.xlu0 %2287
        %2289 = vrot.lane.b32.xlu0 %v2265, 16
        %v2290 = vpop.permute.xlu0 %2289
        %2291 = vrot.lane.b32.xlu0 %v2266, 16
        %v2292 = vpop.permute.xlu0 %2291
        %2293 = vrot.lane.b32.xlu0 %v2267, 16
        %v2294 = vpop.permute.xlu0 %2293
        %2295 = vrot.lane.b32.xlu0 %v2268, 16
        %v2296 = vpop.permute.xlu0 %2295
        %2297 = vrot.lane.b32.xlu0 %v2269, 16
        %v2298 = vpop.permute.xlu0 %2297
        %2299 = vrot.lane.b32.xlu0 %v2270, 16
        %v2300 = vpop.permute.xlu0 %2299
        %2301 = vrot.lane.b32.xlu0 %v2271, 16
        %v2302 = vpop.permute.xlu0 %2301
        %2303 = vrot.lane.b32.xlu0 %v2272, 16
        %v2304 = vpop.permute.xlu0 %2303
        %v2321 = vunpack.c.l.b16 %v861
        %v2322 = vunpack.c.l.b16 %v862
        %v2323 = vunpack.c.l.b16 %v863
        %v2324 = vunpack.c.l.b16 %v864
        %v2325 = vunpack.c.l.b16 %v865
        %v2326 = vunpack.c.l.b16 %v866
        %v2327 = vunpack.c.l.b16 %v867
        %v2328 = vunpack.c.l.b16 %v868
        %v2329 = vunpack.c.l.b16 %v869
        %v2330 = vunpack.c.l.b16 %v870
        %v2331 = vunpack.c.l.b16 %v871
        %v2332 = vunpack.c.l.b16 %v872
        %v2333 = vunpack.c.l.b16 %v873
        %v2334 = vunpack.c.l.b16 %v874
        %v2335 = vunpack.c.l.b16 %v875
        %v2336 = vunpack.c.l.b16 %v876
        %v2337 = vunpack.c.l.b16 %v877
        %v2338 = vunpack.c.l.b16 %v878
        %v2339 = vunpack.c.l.b16 %v879
        %v2340 = vunpack.c.l.b16 %v880
        %v2341 = vunpack.c.l.b16 %v881
        %v2342 = vunpack.c.l.b16 %v882
        %v2343 = vunpack.c.l.b16 %v883
        %v2344 = vunpack.c.l.b16 %v884
        %v2345 = vunpack.c.l.b16 %v885
        %v2346 = vunpack.c.l.b16 %v886
        %v2347 = vunpack.c.l.b16 %v887
        %v2348 = vunpack.c.l.b16 %v888
        %v2349 = vunpack.c.l.b16 %v889
        %v2350 = vunpack.c.l.b16 %v890
        %v2351 = vunpack.c.l.b16 %v891
        %v2352 = vunpack.c.l.b16 %v892
        %v2353 = vpack.c.b16 %v2322, %v2321
        %v2354 = vpack.c.b16 %v2324, %v2323
        %v2355 = vpack.c.b16 %v2326, %v2325
        %v2356 = vpack.c.b16 %v2328, %v2327
        %v2357 = vpack.c.b16 %v2330, %v2329
        %v2358 = vpack.c.b16 %v2332, %v2331
        %v2359 = vpack.c.b16 %v2334, %v2333
        %v2360 = vpack.c.b16 %v2336, %v2335
        %v2361 = vpack.c.b16 %v2338, %v2337
        %v2362 = vpack.c.b16 %v2340, %v2339
        %v2363 = vpack.c.b16 %v2342, %v2341
        %v2364 = vpack.c.b16 %v2344, %v2343
        %v2365 = vpack.c.b16 %v2346, %v2345
        %v2366 = vpack.c.b16 %v2348, %v2347
        %v2367 = vpack.c.b16 %v2350, %v2349
        %v2368 = vpack.c.b16 %v2352, %v2351
        %2369 = vrot.lane.b32.xlu0 %v2353, 24
        %v2370 = vpop.permute.xlu0 %2369
        %2371 = vrot.lane.b32.xlu0 %v2354, 24
        %v2372 = vpop.permute.xlu0 %2371
        %2373 = vrot.lane.b32.xlu0 %v2355, 24
        %v2374 = vpop.permute.xlu0 %2373
        %2375 = vrot.lane.b32.xlu0 %v2356, 24
        %v2376 = vpop.permute.xlu0 %2375
        %2377 = vrot.lane.b32.xlu0 %v2357, 24
        %v2378 = vpop.permute.xlu0 %2377
        %2379 = vrot.lane.b32.xlu0 %v2358, 24
        %v2380 = vpop.permute.xlu0 %2379
        %2381 = vrot.lane.b32.xlu0 %v2359, 24
        %v2382 = vpop.permute.xlu0 %2381
        %2383 = vrot.lane.b32.xlu0 %v2360, 24
        %v2384 = vpop.permute.xlu0 %2383
        %2385 = vrot.lane.b32.xlu0 %v2361, 24
        %v2386 = vpop.permute.xlu0 %2385
        %2387 = vrot.lane.b32.xlu0 %v2362, 24
        %v2388 = vpop.permute.xlu0 %2387
        %2389 = vrot.lane.b32.xlu0 %v2363, 24
        %v2390 = vpop.permute.xlu0 %2389
        %2391 = vrot.lane.b32.xlu0 %v2364, 24
        %v2392 = vpop.permute.xlu0 %2391
        %2393 = vrot.lane.b32.xlu0 %v2365, 24
        %v2394 = vpop.permute.xlu0 %2393
        %2395 = vrot.lane.b32.xlu0 %v2366, 24
        %v2396 = vpop.permute.xlu0 %2395
        %2397 = vrot.lane.b32.xlu0 %v2367, 24
        %v2398 = vpop.permute.xlu0 %2397
        %2399 = vrot.lane.b32.xlu0 %v2368, 24
        %v2400 = vpop.permute.xlu0 %2399
        %v2401 = vunpack.c.l.b16 %v922
        %v2402 = vunpack.c.l.b16 %v932
        %v2403 = vunpack.c.l.b16 %v946
        %v2404 = vunpack.c.l.b16 %v956
        %v2405 = vunpack.c.l.b16 %v970
        %v2406 = vunpack.c.l.b16 %v980
        %v2407 = vunpack.c.l.b16 %v994
        %v2408 = vunpack.c.l.b16 %v1004
        %v2409 = vunpack.c.l.b16 %v1018
        %v2410 = vunpack.c.l.b16 %v1028
        %v2411 = vunpack.c.l.b16 %v1042
        %v2412 = vunpack.c.l.b16 %v1052
        %v2413 = vunpack.c.l.b16 %v1066
        %v2414 = vunpack.c.l.b16 %v1076
        %v2415 = vunpack.c.l.b16 %v1090
        %v2416 = vunpack.c.l.b16 %v1100
        %v2417 = vunpack.c.l.b16 %v1114
        %v2418 = vunpack.c.l.b16 %v1124
        %v2419 = vunpack.c.l.b16 %v1138
        %v2420 = vunpack.c.l.b16 %v1148
        %v2421 = vunpack.c.l.b16 %v1162
        %v2422 = vunpack.c.l.b16 %v1172
        %v2423 = vunpack.c.l.b16 %v1186
        %v2424 = vunpack.c.l.b16 %v1196
        %v2425 = vunpack.c.l.b16 %v1210
        %v2426 = vunpack.c.l.b16 %v1220
        %v2427 = vunpack.c.l.b16 %v1234
        %v2428 = vunpack.c.l.b16 %v1244
        %v2429 = vunpack.c.l.b16 %v1258
        %v2430 = vunpack.c.l.b16 %v1268
        %v2431 = vunpack.c.l.b16 %v1282
        %v2432 = vunpack.c.l.b16 %v1292
        %v2433 = vpack.c.b16 %v2402, %v2401
        %v2434 = vpack.c.b16 %v2404, %v2403
        %v2435 = vpack.c.b16 %v2406, %v2405
        %v2436 = vpack.c.b16 %v2408, %v2407
        %v2437 = vpack.c.b16 %v2410, %v2409
        %v2438 = vpack.c.b16 %v2412, %v2411
        %v2439 = vpack.c.b16 %v2414, %v2413
        %v2440 = vpack.c.b16 %v2416, %v2415
        %v2441 = vpack.c.b16 %v2418, %v2417
        %v2442 = vpack.c.b16 %v2420, %v2419
        %v2443 = vpack.c.b16 %v2422, %v2421
        %v2444 = vpack.c.b16 %v2424, %v2423
        %v2445 = vpack.c.b16 %v2426, %v2425
        %v2446 = vpack.c.b16 %v2428, %v2427
        %v2447 = vpack.c.b16 %v2430, %v2429
        %v2448 = vpack.c.b16 %v2432, %v2431
        %2449 = vrot.lane.b32.xlu0 %v2433, 32
        %v2450 = vpop.permute.xlu0 %2449
        %2451 = vrot.lane.b32.xlu0 %v2434, 32
        %v2452 = vpop.permute.xlu0 %2451
        %2453 = vrot.lane.b32.xlu0 %v2435, 32
        %v2454 = vpop.permute.xlu0 %2453
        %2455 = vrot.lane.b32.xlu0 %v2436, 32
        %v2456 = vpop.permute.xlu0 %2455
        %2457 = vrot.lane.b32.xlu0 %v2437, 32
        %v2458 = vpop.permute.xlu0 %2457
        %2459 = vrot.lane.b32.xlu0 %v2438, 32
        %v2460 = vpop.permute.xlu0 %2459
        %2461 = vrot.lane.b32.xlu0 %v2439, 32
        %v2462 = vpop.permute.xlu0 %2461
        %2463 = vrot.lane.b32.xlu0 %v2440, 32
        %v2464 = vpop.permute.xlu0 %2463
        %2465 = vrot.lane.b32.xlu0 %v2441, 32
        %v2466 = vpop.permute.xlu0 %2465
        %2467 = vrot.lane.b32.xlu0 %v2442, 32
        %v2468 = vpop.permute.xlu0 %2467
        %2469 = vrot.lane.b32.xlu0 %v2443, 32
        %v2470 = vpop.permute.xlu0 %2469
        %2471 = vrot.lane.b32.xlu0 %v2444, 32
        %v2472 = vpop.permute.xlu0 %2471
        %2473 = vrot.lane.b32.xlu0 %v2445, 32
        %v2474 = vpop.permute.xlu0 %2473
        %2475 = vrot.lane.b32.xlu0 %v2446, 32
        %v2476 = vpop.permute.xlu0 %2475
        %2477 = vrot.lane.b32.xlu0 %v2447, 32
        %v2478 = vpop.permute.xlu0 %2477
        %2479 = vrot.lane.b32.xlu0 %v2448, 32
        %v2480 = vpop.permute.xlu0 %2479
        %v2481 = vunpack.c.l.b16 %v1360
        %v2482 = vunpack.c.l.b16 %v1363
        %v2483 = vunpack.c.l.b16 %v1367
        %v2484 = vunpack.c.l.b16 %v1370
        %v2485 = vunpack.c.l.b16 %v1374
        %v2486 = vunpack.c.l.b16 %v1377
        %v2487 = vunpack.c.l.b16 %v1381
        %v2488 = vunpack.c.l.b16 %v1384
        %v2489 = vunpack.c.l.b16 %v1388
        %v2490 = vunpack.c.l.b16 %v1391
        %v2491 = vunpack.c.l.b16 %v1395
        %v2492 = vunpack.c.l.b16 %v1398
        %v2493 = vunpack.c.l.b16 %v1402
        %v2494 = vunpack.c.l.b16 %v1405
        %v2495 = vunpack.c.l.b16 %v1409
        %v2496 = vunpack.c.l.b16 %v1412
        %v2497 = vunpack.c.l.b16 %v1416
        %v2498 = vunpack.c.l.b16 %v1419
        %v2499 = vunpack.c.l.b16 %v1423
        %v2500 = vunpack.c.l.b16 %v1426
        %v2501 = vunpack.c.l.b16 %v1430
        %v2502 = vunpack.c.l.b16 %v1433
        %v2503 = vunpack.c.l.b16 %v1437
        %v2504 = vunpack.c.l.b16 %v1440
        %v2505 = vunpack.c.l.b16 %v1444
        %v2506 = vunpack.c.l.b16 %v1447
        %v2507 = vunpack.c.l.b16 %v1451
        %v2508 = vunpack.c.l.b16 %v1454
        %v2509 = vunpack.c.l.b16 %v1458
        %v2510 = vunpack.c.l.b16 %v1461
        %v2511 = vunpack.c.l.b16 %v1465
        %v2512 = vunpack.c.l.b16 %v1468
        %v2513 = vpack.c.b16 %v2482, %v2481
        %v2514 = vpack.c.b16 %v2484, %v2483
        %v2515 = vpack.c.b16 %v2486, %v2485
        %v2516 = vpack.c.b16 %v2488, %v2487
        %v2517 = vpack.c.b16 %v2490, %v2489
        %v2518 = vpack.c.b16 %v2492, %v2491
        %v2519 = vpack.c.b16 %v2494, %v2493
        %v2520 = vpack.c.b16 %v2496, %v2495
        %v2521 = vpack.c.b16 %v2498, %v2497
        %v2522 = vpack.c.b16 %v2500, %v2499
        %v2523 = vpack.c.b16 %v2502, %v2501
        %v2524 = vpack.c.b16 %v2504, %v2503
        %v2525 = vpack.c.b16 %v2506, %v2505
        %v2526 = vpack.c.b16 %v2508, %v2507
        %v2527 = vpack.c.b16 %v2510, %v2509
        %v2528 = vpack.c.b16 %v2512, %v2511
        %2529 = vrot.lane.b32.xlu0 %v2513, 40
        %v2530 = vpop.permute.xlu0 %2529
        %2531 = vrot.lane.b32.xlu0 %v2514, 40
        %v2532 = vpop.permute.xlu0 %2531
        %2533 = vrot.lane.b32.xlu0 %v2515, 40
        %v2534 = vpop.permute.xlu0 %2533
        %2535 = vrot.lane.b32.xlu0 %v2516, 40
        %v2536 = vpop.permute.xlu0 %2535
        %2537 = vrot.lane.b32.xlu0 %v2517, 40
        %v2538 = vpop.permute.xlu0 %2537
        %2539 = vrot.lane.b32.xlu0 %v2518, 40
        %v2540 = vpop.permute.xlu0 %2539
        %2541 = vrot.lane.b32.xlu0 %v2519, 40
        %v2542 = vpop.permute.xlu0 %2541
        %2543 = vrot.lane.b32.xlu0 %v2520, 40
        %v2544 = vpop.permute.xlu0 %2543
        %2545 = vrot.lane.b32.xlu0 %v2521, 40
        %v2546 = vpop.permute.xlu0 %2545
        %2547 = vrot.lane.b32.xlu0 %v2522, 40
        %v2548 = vpop.permute.xlu0 %2547
        %2549 = vrot.lane.b32.xlu0 %v2523, 40
        %v2550 = vpop.permute.xlu0 %2549
        %2551 = vrot.lane.b32.xlu0 %v2524, 40
        %v2552 = vpop.permute.xlu0 %2551
        %2553 = vrot.lane.b32.xlu0 %v2525, 40
        %v2554 = vpop.permute.xlu0 %2553
        %2555 = vrot.lane.b32.xlu0 %v2526, 40
        %v2556 = vpop.permute.xlu0 %2555
        %2557 = vrot.lane.b32.xlu0 %v2527, 40
        %v2558 = vpop.permute.xlu0 %2557
        %2559 = vrot.lane.b32.xlu0 %v2528, 40
        %v2560 = vpop.permute.xlu0 %2559
        %v2577 = vunpack.c.l.b16 %v1473
        %v2578 = vunpack.c.l.b16 %v1474
        %v2579 = vunpack.c.l.b16 %v1475
        %v2580 = vunpack.c.l.b16 %v1476
        %v2581 = vunpack.c.l.b16 %v1477
        %v2582 = vunpack.c.l.b16 %v1478
        %v2583 = vunpack.c.l.b16 %v1479
        %v2584 = vunpack.c.l.b16 %v1480
        %v2585 = vunpack.c.l.b16 %v1481
        %v2586 = vunpack.c.l.b16 %v1482
        %v2587 = vunpack.c.l.b16 %v1483
        %v2588 = vunpack.c.l.b16 %v1484
        %v2589 = vunpack.c.l.b16 %v1485
        %v2590 = vunpack.c.l.b16 %v1486
        %v2591 = vunpack.c.l.b16 %v1487
        %v2592 = vunpack.c.l.b16 %v1488
        %v2593 = vunpack.c.l.b16 %v1489
        %v2594 = vunpack.c.l.b16 %v1490
        %v2595 = vunpack.c.l.b16 %v1491
        %v2596 = vunpack.c.l.b16 %v1492
        %v2597 = vunpack.c.l.b16 %v1493
        %v2598 = vunpack.c.l.b16 %v1494
        %v2599 = vunpack.c.l.b16 %v1495
        %v2600 = vunpack.c.l.b16 %v1496
        %v2601 = vunpack.c.l.b16 %v1497
        %v2602 = vunpack.c.l.b16 %v1498
        %v2603 = vunpack.c.l.b16 %v1499
        %v2604 = vunpack.c.l.b16 %v1500
        %v2605 = vunpack.c.l.b16 %v1501
        %v2606 = vunpack.c.l.b16 %v1502
        %v2607 = vunpack.c.l.b16 %v1503
        %v2608 = vunpack.c.l.b16 %v1504
        %v2609 = vpack.c.b16 %v2578, %v2577
        %v2610 = vpack.c.b16 %v2580, %v2579
        %v2611 = vpack.c.b16 %v2582, %v2581
        %v2612 = vpack.c.b16 %v2584, %v2583
        %v2613 = vpack.c.b16 %v2586, %v2585
        %v2614 = vpack.c.b16 %v2588, %v2587
        %v2615 = vpack.c.b16 %v2590, %v2589
        %v2616 = vpack.c.b16 %v2592, %v2591
        %v2617 = vpack.c.b16 %v2594, %v2593
        %v2618 = vpack.c.b16 %v2596, %v2595
        %v2619 = vpack.c.b16 %v2598, %v2597
        %v2620 = vpack.c.b16 %v2600, %v2599
        %v2621 = vpack.c.b16 %v2602, %v2601
        %v2622 = vpack.c.b16 %v2604, %v2603
        %v2623 = vpack.c.b16 %v2606, %v2605
        %v2624 = vpack.c.b16 %v2608, %v2607
        %2625 = vrot.lane.b32.xlu0 %v2609, 48
        %v2626 = vpop.permute.xlu0 %2625
        %2627 = vrot.lane.b32.xlu0 %v2610, 48
        %v2628 = vpop.permute.xlu0 %2627
        %2629 = vrot.lane.b32.xlu0 %v2611, 48
        %v2630 = vpop.permute.xlu0 %2629
        %2631 = vrot.lane.b32.xlu0 %v2612, 48
        %v2632 = vpop.permute.xlu0 %2631
        %2633 = vrot.lane.b32.xlu0 %v2613, 48
        %v2634 = vpop.permute.xlu0 %2633
        %2635 = vrot.lane.b32.xlu0 %v2614, 48
        %v2636 = vpop.permute.xlu0 %2635
        %2637 = vrot.lane.b32.xlu0 %v2615, 48
        %v2638 = vpop.permute.xlu0 %2637
        %2639 = vrot.lane.b32.xlu0 %v2616, 48
        %v2640 = vpop.permute.xlu0 %2639
        %2641 = vrot.lane.b32.xlu0 %v2617, 48
        %v2642 = vpop.permute.xlu0 %2641
        %2643 = vrot.lane.b32.xlu0 %v2618, 48
        %v2644 = vpop.permute.xlu0 %2643
        %2645 = vrot.lane.b32.xlu0 %v2619, 48
        %v2646 = vpop.permute.xlu0 %2645
        %2647 = vrot.lane.b32.xlu0 %v2620, 48
        %v2648 = vpop.permute.xlu0 %2647
        %2649 = vrot.lane.b32.xlu0 %v2621, 48
        %v2650 = vpop.permute.xlu0 %2649
        %2651 = vrot.lane.b32.xlu0 %v2622, 48
        %v2652 = vpop.permute.xlu0 %2651
        %2653 = vrot.lane.b32.xlu0 %v2623, 48
        %v2654 = vpop.permute.xlu0 %2653
        %2655 = vrot.lane.b32.xlu0 %v2624, 48
        %v2656 = vpop.permute.xlu0 %2655
        %v2657 = vunpack.c.l.b16 %v1534
        %v2658 = vunpack.c.l.b16 %v1544
        %v2659 = vunpack.c.l.b16 %v1558
        %v2660 = vunpack.c.l.b16 %v1568
        %v2661 = vunpack.c.l.b16 %v1582
        %v2662 = vunpack.c.l.b16 %v1592
        %v2663 = vunpack.c.l.b16 %v1606
        %v2664 = vunpack.c.l.b16 %v1616
        %v2665 = vunpack.c.l.b16 %v1630
        %v2666 = vunpack.c.l.b16 %v1640
        %v2667 = vunpack.c.l.b16 %v1654
        %v2668 = vunpack.c.l.b16 %v1664
        %v2669 = vunpack.c.l.b16 %v1678
        %v2670 = vunpack.c.l.b16 %v1688
        %v2671 = vunpack.c.l.b16 %v1702
        %v2672 = vunpack.c.l.b16 %v1712
        %v2673 = vunpack.c.l.b16 %v1726
        %v2674 = vunpack.c.l.b16 %v1736
        %v2675 = vunpack.c.l.b16 %v1750
        %v2676 = vunpack.c.l.b16 %v1760
        %v2677 = vunpack.c.l.b16 %v1774
        %v2678 = vunpack.c.l.b16 %v1784
        %v2679 = vunpack.c.l.b16 %v1798
        %v2680 = vunpack.c.l.b16 %v1808
        %v2681 = vunpack.c.l.b16 %v1822
        %v2682 = vunpack.c.l.b16 %v1832
        %v2683 = vunpack.c.l.b16 %v1846
        %v2684 = vunpack.c.l.b16 %v1856
        %v2685 = vunpack.c.l.b16 %v1870
        %v2686 = vunpack.c.l.b16 %v1880
        %v2687 = vunpack.c.l.b16 %v1894
        %v2688 = vunpack.c.l.b16 %v1904
        %v2689 = vpack.c.b16 %v2658, %v2657
        %v2690 = vpack.c.b16 %v2660, %v2659
        %v2691 = vpack.c.b16 %v2662, %v2661
        %v2692 = vpack.c.b16 %v2664, %v2663
        %v2693 = vpack.c.b16 %v2666, %v2665
        %v2694 = vpack.c.b16 %v2668, %v2667
        %v2695 = vpack.c.b16 %v2670, %v2669
        %v2696 = vpack.c.b16 %v2672, %v2671
        %v2697 = vpack.c.b16 %v2674, %v2673
        %v2698 = vpack.c.b16 %v2676, %v2675
        %v2699 = vpack.c.b16 %v2678, %v2677
        %v2700 = vpack.c.b16 %v2680, %v2679
        %v2701 = vpack.c.b16 %v2682, %v2681
        %v2702 = vpack.c.b16 %v2684, %v2683
        %v2703 = vpack.c.b16 %v2686, %v2685
        %v2704 = vpack.c.b16 %v2688, %v2687
        %2705 = vrot.lane.b32.xlu0 %v2689, 56
        %v2706 = vpop.permute.xlu0 %2705
        %2707 = vrot.lane.b32.xlu0 %v2690, 56
        %v2708 = vpop.permute.xlu0 %2707
        %2709 = vrot.lane.b32.xlu0 %v2691, 56
        %v2710 = vpop.permute.xlu0 %2709
        %2711 = vrot.lane.b32.xlu0 %v2692, 56
        %v2712 = vpop.permute.xlu0 %2711
        %2713 = vrot.lane.b32.xlu0 %v2693, 56
        %v2714 = vpop.permute.xlu0 %2713
        %2715 = vrot.lane.b32.xlu0 %v2694, 56
        %v2716 = vpop.permute.xlu0 %2715
        %2717 = vrot.lane.b32.xlu0 %v2695, 56
        %v2718 = vpop.permute.xlu0 %2717
        %2719 = vrot.lane.b32.xlu0 %v2696, 56
        %v2720 = vpop.permute.xlu0 %2719
        %2721 = vrot.lane.b32.xlu0 %v2697, 56
        %v2722 = vpop.permute.xlu0 %2721
        %2723 = vrot.lane.b32.xlu0 %v2698, 56
        %v2724 = vpop.permute.xlu0 %2723
        %2725 = vrot.lane.b32.xlu0 %v2699, 56
        %v2726 = vpop.permute.xlu0 %2725
        %2727 = vrot.lane.b32.xlu0 %v2700, 56
        %v2728 = vpop.permute.xlu0 %2727
        %2729 = vrot.lane.b32.xlu0 %v2701, 56
        %v2730 = vpop.permute.xlu0 %2729
        %2731 = vrot.lane.b32.xlu0 %v2702, 56
        %v2732 = vpop.permute.xlu0 %2731
        %2733 = vrot.lane.b32.xlu0 %v2703, 56
        %v2734 = vpop.permute.xlu0 %2733
        %2735 = vrot.lane.b32.xlu0 %v2704, 56
        %v2736 = vpop.permute.xlu0 %2735
        %v2737 = vunpack.c.l.b16 %v1972
        %v2738 = vunpack.c.l.b16 %v1975
        %v2739 = vunpack.c.l.b16 %v1979
        %v2740 = vunpack.c.l.b16 %v1982
        %v2741 = vunpack.c.l.b16 %v1986
        %v2742 = vunpack.c.l.b16 %v1989
        %v2743 = vunpack.c.l.b16 %v1993
        %v2744 = vunpack.c.l.b16 %v1996
        %v2745 = vunpack.c.l.b16 %v2000
        %v2746 = vunpack.c.l.b16 %v2003
        %v2747 = vunpack.c.l.b16 %v2007
        %v2748 = vunpack.c.l.b16 %v2010
        %v2749 = vunpack.c.l.b16 %v2014
        %v2750 = vunpack.c.l.b16 %v2017
        %v2751 = vunpack.c.l.b16 %v2021
        %v2752 = vunpack.c.l.b16 %v2024
        %v2753 = vunpack.c.l.b16 %v2028
        %v2754 = vunpack.c.l.b16 %v2031
        %v2755 = vunpack.c.l.b16 %v2035
        %v2756 = vunpack.c.l.b16 %v2038
        %v2757 = vunpack.c.l.b16 %v2042
        %v2758 = vunpack.c.l.b16 %v2045
        %v2759 = vunpack.c.l.b16 %v2049
        %v2760 = vunpack.c.l.b16 %v2052
        %v2761 = vunpack.c.l.b16 %v2056
        %v2762 = vunpack.c.l.b16 %v2059
        %v2763 = vunpack.c.l.b16 %v2063
        %v2764 = vunpack.c.l.b16 %v2066
        %v2765 = vunpack.c.l.b16 %v2070
        %v2766 = vunpack.c.l.b16 %v2073
        %v2767 = vunpack.c.l.b16 %v2077
        %v2768 = vunpack.c.l.b16 %v2080
        %v2769 = vpack.c.b16 %v2738, %v2737
        %v2770 = vpack.c.b16 %v2740, %v2739
        %v2771 = vpack.c.b16 %v2742, %v2741
        %v2772 = vpack.c.b16 %v2744, %v2743
        %v2773 = vpack.c.b16 %v2746, %v2745
        %v2774 = vpack.c.b16 %v2748, %v2747
        %v2775 = vpack.c.b16 %v2750, %v2749
        %v2776 = vpack.c.b16 %v2752, %v2751
        %v2777 = vpack.c.b16 %v2754, %v2753
        %v2778 = vpack.c.b16 %v2756, %v2755
        %v2779 = vpack.c.b16 %v2758, %v2757
        %v2780 = vpack.c.b16 %v2760, %v2759
        %v2781 = vpack.c.b16 %v2762, %v2761
        %v2782 = vpack.c.b16 %v2764, %v2763
        %v2783 = vpack.c.b16 %v2766, %v2765
        %v2784 = vpack.c.b16 %v2768, %v2767
        %2785 = vrot.lane.b32.xlu0 %v2769, 64
        %v2786 = vpop.permute.xlu0 %2785
        %2787 = vrot.lane.b32.xlu0 %v2770, 64
        %v2788 = vpop.permute.xlu0 %2787
        %2789 = vrot.lane.b32.xlu0 %v2771, 64
        %v2790 = vpop.permute.xlu0 %2789
        %2791 = vrot.lane.b32.xlu0 %v2772, 64
        %v2792 = vpop.permute.xlu0 %2791
        %2793 = vrot.lane.b32.xlu0 %v2773, 64
        %v2794 = vpop.permute.xlu0 %2793
        %2795 = vrot.lane.b32.xlu0 %v2774, 64
        %v2796 = vpop.permute.xlu0 %2795
        %2797 = vrot.lane.b32.xlu0 %v2775, 64
        %v2798 = vpop.permute.xlu0 %2797
        %2799 = vrot.lane.b32.xlu0 %v2776, 64
        %v2800 = vpop.permute.xlu0 %2799
        %2801 = vrot.lane.b32.xlu0 %v2777, 64
        %v2802 = vpop.permute.xlu0 %2801
        %2803 = vrot.lane.b32.xlu0 %v2778, 64
        %v2804 = vpop.permute.xlu0 %2803
        %2805 = vrot.lane.b32.xlu0 %v2779, 64
        %v2806 = vpop.permute.xlu0 %2805
        %2807 = vrot.lane.b32.xlu0 %v2780, 64
        %v2808 = vpop.permute.xlu0 %2807
        %2809 = vrot.lane.b32.xlu0 %v2781, 64
        %v2810 = vpop.permute.xlu0 %2809
        %2811 = vrot.lane.b32.xlu0 %v2782, 64
        %v2812 = vpop.permute.xlu0 %2811
        %2813 = vrot.lane.b32.xlu0 %v2783, 64
        %v2814 = vpop.permute.xlu0 %2813
        %2815 = vrot.lane.b32.xlu0 %v2784, 64
        %v2816 = vpop.permute.xlu0 %2815
        %vm2817 = vcmask 64512
        %v2820 = vsel %vm2817, %v2129, %v2194
        %v2823 = vsel %vm2817, %v2130, %v2196
        %v2826 = vsel %vm2817, %v2131, %v2198
        %v2829 = vsel %vm2817, %v2132, %v2200
        %v2832 = vsel %vm2817, %v2133, %v2202
        %v2835 = vsel %vm2817, %v2134, %v2204
        %v2838 = vsel %vm2817, %v2135, %v2206
        %v2841 = vsel %vm2817, %v2136, %v2208
        %v2844 = vsel %vm2817, %v2137, %v2210
        %v2847 = vsel %vm2817, %v2138, %v2212
        %v2850 = vsel %vm2817, %v2139, %v2214
        %v2853 = vsel %vm2817, %v2140, %v2216
        %v2856 = vsel %vm2817, %v2141, %v2218
        %v2859 = vsel %vm2817, %v2142, %v2220
        %v2862 = vsel %vm2817, %v2143, %v2222
        %v2865 = vsel %vm2817, %v2144, %v2224
        %vm2866 = vcmask 130048
        %v2868 = vsel %vm2866, %v2820, %v2274
        %v2870 = vsel %vm2866, %v2823, %v2276
        %v2872 = vsel %vm2866, %v2826, %v2278
        %v2874 = vsel %vm2866, %v2829, %v2280
        %v2876 = vsel %vm2866, %v2832, %v2282
        %v2878 = vsel %vm2866, %v2835, %v2284
        %v2880 = vsel %vm2866, %v2838, %v2286
        %v2882 = vsel %vm2866, %v2841, %v2288
        %v2884 = vsel %vm2866, %v2844, %v2290
        %v2886 = vsel %vm2866, %v2847, %v2292
        %v2888 = vsel %vm2866, %v2850, %v2294
        %v2890 = vsel %vm2866, %v2853, %v2296
        %v2892 = vsel %vm2866, %v2856, %v2298
        %v2894 = vsel %vm2866, %v2859, %v2300
        %v2896 = vsel %vm2866, %v2862, %v2302
        %v2898 = vsel %vm2866, %v2865, %v2304
        %vm2899 = vcmask 195584
        %v2901 = vsel %vm2899, %v2868, %v2370
        %v2903 = vsel %vm2899, %v2870, %v2372
        %v2905 = vsel %vm2899, %v2872, %v2374
        %v2907 = vsel %vm2899, %v2874, %v2376
        %v2909 = vsel %vm2899, %v2876, %v2378
        %v2911 = vsel %vm2899, %v2878, %v2380
        %v2913 = vsel %vm2899, %v2880, %v2382
        %v2915 = vsel %vm2899, %v2882, %v2384
        %v2917 = vsel %vm2899, %v2884, %v2386
        %v2919 = vsel %vm2899, %v2886, %v2388
        %v2921 = vsel %vm2899, %v2888, %v2390
        %v2923 = vsel %vm2899, %v2890, %v2392
        %v2925 = vsel %vm2899, %v2892, %v2394
        %v2927 = vsel %vm2899, %v2894, %v2396
        %v2929 = vsel %vm2899, %v2896, %v2398
        %v2931 = vsel %vm2899, %v2898, %v2400
        %vm2932 = vcmask 261120
        %v2934 = vsel %vm2932, %v2901, %v2450
        %v2936 = vsel %vm2932, %v2903, %v2452
        %v2938 = vsel %vm2932, %v2905, %v2454
        %v2940 = vsel %vm2932, %v2907, %v2456
        %v2942 = vsel %vm2932, %v2909, %v2458
        %v2944 = vsel %vm2932, %v2911, %v2460
        %v2946 = vsel %vm2932, %v2913, %v2462
        %v2948 = vsel %vm2932, %v2915, %v2464
        %v2950 = vsel %vm2932, %v2917, %v2466
        %v2952 = vsel %vm2932, %v2919, %v2468
        %v2954 = vsel %vm2932, %v2921, %v2470
        %v2956 = vsel %vm2932, %v2923, %v2472
        %v2958 = vsel %vm2932, %v2925, %v2474
        %v2960 = vsel %vm2932, %v2927, %v2476
        %v2962 = vsel %vm2932, %v2929, %v2478
        %v2964 = vsel %vm2932, %v2931, %v2480
        %vm2965 = vcmask 326656
        %v2967 = vsel %vm2965, %v2934, %v2530
        %v2969 = vsel %vm2965, %v2936, %v2532
        %v2971 = vsel %vm2965, %v2938, %v2534
        %v2973 = vsel %vm2965, %v2940, %v2536
        %v2975 = vsel %vm2965, %v2942, %v2538
        %v2977 = vsel %vm2965, %v2944, %v2540
        %v2979 = vsel %vm2965, %v2946, %v2542
        %v2981 = vsel %vm2965, %v2948, %v2544
        %v2983 = vsel %vm2965, %v2950, %v2546
        %v2985 = vsel %vm2965, %v2952, %v2548
        %v2987 = vsel %vm2965, %v2954, %v2550
        %v2989 = vsel %vm2965, %v2956, %v2552
        %v2991 = vsel %vm2965, %v2958, %v2554
        %v2993 = vsel %vm2965, %v2960, %v2556
        %v2995 = vsel %vm2965, %v2962, %v2558
        %v2997 = vsel %vm2965, %v2964, %v2560
        %vm2998 = vcmask 392192
        %v3000 = vsel %vm2998, %v2967, %v2626
        %v3002 = vsel %vm2998, %v2969, %v2628
        %v3004 = vsel %vm2998, %v2971, %v2630
        %v3006 = vsel %vm2998, %v2973, %v2632
        %v3008 = vsel %vm2998, %v2975, %v2634
        %v3010 = vsel %vm2998, %v2977, %v2636
        %v3012 = vsel %vm2998, %v2979, %v2638
        %v3014 = vsel %vm2998, %v2981, %v2640
        %v3016 = vsel %vm2998, %v2983, %v2642
        %v3018 = vsel %vm2998, %v2985, %v2644
        %v3020 = vsel %vm2998, %v2987, %v2646
        %v3022 = vsel %vm2998, %v2989, %v2648
        %v3024 = vsel %vm2998, %v2991, %v2650
        %v3026 = vsel %vm2998, %v2993, %v2652
        %v3028 = vsel %vm2998, %v2995, %v2654
        %v3030 = vsel %vm2998, %v2997, %v2656
        %vm3031 = vcmask 457728
        %v3033 = vsel %vm3031, %v3000, %v2706
        %v3035 = vsel %vm3031, %v3002, %v2708
        %v3037 = vsel %vm3031, %v3004, %v2710
        %v3039 = vsel %vm3031, %v3006, %v2712
        %v3041 = vsel %vm3031, %v3008, %v2714
        %v3043 = vsel %vm3031, %v3010, %v2716
        %v3045 = vsel %vm3031, %v3012, %v2718
        %v3047 = vsel %vm3031, %v3014, %v2720
        %v3049 = vsel %vm3031, %v3016, %v2722
        %v3051 = vsel %vm3031, %v3018, %v2724
        %v3053 = vsel %vm3031, %v3020, %v2726
        %v3055 = vsel %vm3031, %v3022, %v2728
        %v3057 = vsel %vm3031, %v3024, %v2730
        %v3059 = vsel %vm3031, %v3026, %v2732
        %v3061 = vsel %vm3031, %v3028, %v2734
        %v3063 = vsel %vm3031, %v3030, %v2736
        %vm3064 = vcmask 523264
        %v3066 = vsel %vm3064, %v3033, %v2786
        %v3068 = vsel %vm3064, %v3035, %v2788
        %v3070 = vsel %vm3064, %v3037, %v2790
        %v3072 = vsel %vm3064, %v3039, %v2792
        %v3074 = vsel %vm3064, %v3041, %v2794
        %v3076 = vsel %vm3064, %v3043, %v2796
        %v3078 = vsel %vm3064, %v3045, %v2798
        %v3080 = vsel %vm3064, %v3047, %v2800
        %v3082 = vsel %vm3064, %v3049, %v2802
        %v3084 = vsel %vm3064, %v3051, %v2804
        %v3086 = vsel %vm3064, %v3053, %v2806
        %v3088 = vsel %vm3064, %v3055, %v2808
        %v3090 = vsel %vm3064, %v3057, %v2810
        %v3092 = vsel %vm3064, %v3059, %v2812
        %v3094 = vsel %vm3064, %v3061, %v2814
        %v3096 = vsel %vm3064, %v3063, %v2816
        %v3097 = vld [vmem:[%s1] sm:$0xff]
        %v3098 = vld [vmem:[%s1 + $0x8] sm:$0xff]
        %v3099 = vld [vmem:[%s1 + $0x10] sm:$0xff]
        %v3100 = vld [vmem:[%s1 + $0x18] sm:$0xff]
        %v3101 = vld [vmem:[%s1 + $0x20] sm:$0xff]
        %v3102 = vld [vmem:[%s1 + $0x28] sm:$0xff]
        %v3103 = vld [vmem:[%s1 + $0x30] sm:$0xff]
        %v3104 = vld [vmem:[%s1 + $0x38] sm:$0xff]
        %v3105 = vld [vmem:[%s1 + $0x40] sm:$0xff]
        %v3106 = vld [vmem:[%s1 + $0x48] sm:$0xff]
        %v3107 = vld [vmem:[%s1 + $0x50] sm:$0xff]
        %v3108 = vld [vmem:[%s1 + $0x58] sm:$0xff]
        %v3109 = vld [vmem:[%s1 + $0x60] sm:$0xff]
        %v3110 = vld [vmem:[%s1 + $0x68] sm:$0xff]
        %v3111 = vld [vmem:[%s1 + $0x70] sm:$0xff]
        %v3112 = vld [vmem:[%s1 + $0x78] sm:$0xff]
        %v3113 = vld [vmem:[%s1 + $0x80] sm:$0xff]
        %v3114 = vld [vmem:[%s1 + $0x88] sm:$0xff]
        %v3115 = vld [vmem:[%s2] sm:$0xf]
        %v3117 = vperm.slane %v3115, 0
        %v3118 = vperm.slane %v3115, 1
        %v3119 = vperm.slane %v3115, 2
        %v3120 = vperm.slane %v3115, 3
        %v3143 = vunpack.c.l.b16 %v3097
        %v3144 = vunpack.c.h.b16 %v3097
        %v3145 = vunpack.c.l.b16 %v3098
        %v3146 = vunpack.c.h.b16 %v3098
        %v3147 = vunpack.c.l.b16 %v3099
        %v3148 = vunpack.c.h.b16 %v3099
        %v3149 = vunpack.c.l.b16 %v3100
        %v3150 = vunpack.c.h.b16 %v3100
        %v3151 = vunpack.c.l.b16 %v3101
        %v3152 = vunpack.c.h.b16 %v3101
        %v3153 = vunpack.c.l.b16 %v3102
        %v3154 = vunpack.c.h.b16 %v3102
        %v3155 = vunpack.c.l.b16 %v3103
        %v3156 = vunpack.c.h.b16 %v3103
        %v3157 = vunpack.c.l.b16 %v3104
        %v3158 = vunpack.c.h.b16 %v3104
        %v3159 = vunpack.c.l.b16 %v3105
        %v3160 = vunpack.c.h.b16 %v3105
        %v3161 = vunpack.c.l.b16 %v3106
        %v3162 = vunpack.c.h.b16 %v3106
        %v3163 = vunpack.c.l.b16 %v3107
        %v3164 = vunpack.c.h.b16 %v3107
        %v3165 = vunpack.c.l.b16 %v3108
        %v3166 = vunpack.c.h.b16 %v3108
        %v3167 = vunpack.c.l.b16 %v3109
        %v3168 = vunpack.c.h.b16 %v3109
        %v3169 = vunpack.c.l.b16 %v3110
        %v3170 = vunpack.c.h.b16 %v3110
        %v3171 = vunpack.c.l.b16 %v3111
        %v3172 = vunpack.c.h.b16 %v3111
        %v3173 = vunpack.c.l.b16 %v3112
        %v3174 = vunpack.c.h.b16 %v3112
        %v3175 = vunpack.c.l.b16 %v3113
        %v3176 = vunpack.c.h.b16 %v3113
        %v3177 = vunpack.c.l.b16 %v3114
        %v3178 = vunpack.c.h.b16 %v3114
        %v3179 = vpack.c.b16 %v3147, %v3143
        %v3180 = vpack.c.b16 %v3148, %v3144
        %v3181 = vpack.c.b16 %v3149, %v3145
        %v3182 = vpack.c.b16 %v3150, %v3146
        %v3183 = vpack.c.b16 %v3155, %v3151
        %v3184 = vpack.c.b16 %v3156, %v3152
        %v3185 = vpack.c.b16 %v3157, %v3153
        %v3186 = vpack.c.b16 %v3158, %v3154
        %v3187 = vpack.c.b16 %v3163, %v3159
        %v3188 = vpack.c.b16 %v3164, %v3160
        %v3189 = vpack.c.b16 %v3165, %v3161
        %v3190 = vpack.c.b16 %v3166, %v3162
        %v3191 = vpack.c.b16 %v3171, %v3167
        %v3192 = vpack.c.b16 %v3172, %v3168
        %v3193 = vpack.c.b16 %v3173, %v3169
        %v3194 = vpack.c.b16 %v3174, %v3170
        %v3195 = vpack.c.b16 %v3175, %v3175
        %v3196 = vpack.c.b16 %v3176, %v3176
        %v3197 = vpack.c.b16 %v3177, %v3177
        %v3198 = vpack.c.b16 %v3178, %v3178
        %vm3215 = vcmask 588800
        %v3216 = vsel %vm3215, %v3066, 0
        %v3218 = vsel %vm3215, %v3068, 0
        %v3220 = vsel %vm3215, %v3070, 0
        %v3222 = vsel %vm3215, %v3072, 0
        %v3224 = vsel %vm3215, %v3074, 0
        %v3226 = vsel %vm3215, %v3076, 0
        %v3228 = vsel %vm3215, %v3078, 0
        %v3230 = vsel %vm3215, %v3080, 0
        %v3232 = vsel %vm3215, %v3082, 0
        %v3234 = vsel %vm3215, %v3084, 0
        %v3236 = vsel %vm3215, %v3086, 0
        %v3238 = vsel %vm3215, %v3088, 0
        %v3240 = vsel %vm3215, %v3090, 0
        %v3242 = vsel %vm3215, %v3092, 0
        %v3244 = vsel %vm3215, %v3094, 0
        %v3246 = vsel %vm3215, %v3096, 0
        %vm3248 = vcmask 1043456
        %v3250 = vsel %vm3248, %v3195, 0
        %v3253 = vsel %vm3248, %v3196, 0
        %v3256 = vsel %vm3248, %v3197, 0
        %v3259 = vsel %vm3248, %v3198, 0
        %3261 = vmatpush.bf16.msra.mxu0 0
        %3262 = vmatpush.bf16.msra.mxu0 0
        %3263 = vmatpush.bf16.msra.mxu0 0
        %3264 = vmatpush.bf16.msra.mxu0 %v3250
        %3265 = vmatpush.bf16.msra.mxu0 %v3191
        %3266 = vmatpush.bf16.msra.mxu0 %v3187
        %3267 = vmatpush.bf16.msra.mxu0 %v3183
        %3268 = vmatpush.bf16.msra.mxu0 %v3179
        %3269 = vmatmul.bf16.gmra.mxu0 %v3216
        %v3270 = vpop.f32.mrf.mxu0
        %v3271 = vadd.f32 %v3117, %v3270
        %v3272 = vpop.f32.mrf.mxu0
        %v3273 = vadd.f32 %v3117, %v3272
        %3274 = vmatmul.bf16.gmra.mxu0 %v3218
        %v3275 = vpop.f32.mrf.mxu0
        %v3276 = vadd.f32 %v3117, %v3275
        %v3277 = vpop.f32.mrf.mxu0
        %v3278 = vadd.f32 %v3117, %v3277
        %3279 = vmatmul.bf16.gmra.mxu0 %v3220
        %v3280 = vpop.f32.mrf.mxu0
        %v3281 = vadd.f32 %v3117, %v3280
        %v3282 = vpop.f32.mrf.mxu0
        %v3283 = vadd.f32 %v3117, %v3282
        %3284 = vmatmul.bf16.gmra.mxu0 %v3222
        %v3285 = vpop.f32.mrf.mxu0
        %v3286 = vadd.f32 %v3117, %v3285
        %v3287 = vpop.f32.mrf.mxu0
        %v3288 = vadd.f32 %v3117, %v3287
        %3289 = vmatmul.bf16.gmra.mxu0 %v3224
        %v3290 = vpop.f32.mrf.mxu0
        %v3291 = vadd.f32 %v3117, %v3290
        %v3292 = vpop.f32.mrf.mxu0
        %v3293 = vadd.f32 %v3117, %v3292
        %3294 = vmatmul.bf16.gmra.mxu0 %v3226
        %v3295 = vpop.f32.mrf.mxu0
        %v3296 = vadd.f32 %v3117, %v3295
        %v3297 = vpop.f32.mrf.mxu0
        %v3298 = vadd.f32 %v3117, %v3297
        %3299 = vmatmul.bf16.gmra.mxu0 %v3228
        %v3300 = vpop.f32.mrf.mxu0
        %v3301 = vadd.f32 %v3117, %v3300
        %v3302 = vpop.f32.mrf.mxu0
        %v3303 = vadd.f32 %v3117, %v3302
        %3304 = vmatmul.bf16.gmra.mxu0 %v3230
        %v3305 = vpop.f32.mrf.mxu0
        %v3306 = vadd.f32 %v3117, %v3305
        %v3307 = vpop.f32.mrf.mxu0
        %v3308 = vadd.f32 %v3117, %v3307
        %3309 = vmatmul.bf16.gmra.mxu0 %v3232
        %v3310 = vpop.f32.mrf.mxu0
        %v3311 = vadd.f32 %v3117, %v3310
        %v3312 = vpop.f32.mrf.mxu0
        %v3313 = vadd.f32 %v3117, %v3312
        %3314 = vmatmul.bf16.gmra.mxu0 %v3234
        %v3315 = vpop.f32.mrf.mxu0
        %v3316 = vadd.f32 %v3117, %v3315
        %v3317 = vpop.f32.mrf.mxu0
        %v3318 = vadd.f32 %v3117, %v3317
        %3319 = vmatmul.bf16.gmra.mxu0 %v3236
        %v3320 = vpop.f32.mrf.mxu0
        %v3321 = vadd.f32 %v3117, %v3320
        %v3322 = vpop.f32.mrf.mxu0
        %v3323 = vadd.f32 %v3117, %v3322
        %3324 = vmatmul.bf16.gmra.mxu0 %v3238
        %v3325 = vpop.f32.mrf.mxu0
        %v3326 = vadd.f32 %v3117, %v3325
        %v3327 = vpop.f32.mrf.mxu0
        %v3328 = vadd.f32 %v3117, %v3327
        %3329 = vmatmul.bf16.gmra.mxu0 %v3240
        %v3330 = vpop.f32.mrf.mxu0
        %v3331 = vadd.f32 %v3117, %v3330
        %v3332 = vpop.f32.mrf.mxu0
        %v3333 = vadd.f32 %v3117, %v3332
        %3334 = vmatmul.bf16.gmra.mxu0 %v3242
        %v3335 = vpop.f32.mrf.mxu0
        %v3336 = vadd.f32 %v3117, %v3335
        %v3337 = vpop.f32.mrf.mxu0
        %v3338 = vadd.f32 %v3117, %v3337
        %3339 = vmatmul.bf16.gmra.mxu0 %v3244
        %v3340 = vpop.f32.mrf.mxu0
        %v3341 = vadd.f32 %v3117, %v3340
        %v3342 = vpop.f32.mrf.mxu0
        %v3343 = vadd.f32 %v3117, %v3342
        %3344 = vmatmul.bf16.gmra.mxu0 %v3246
        %v3345 = vpop.f32.mrf.mxu0
        %v3346 = vadd.f32 %v3117, %v3345
        %v3347 = vpop.f32.mrf.mxu0
        %v3348 = vadd.f32 %v3117, %v3347
        %3349 = vdwg.mxu0
        %3350 = vmatpush.bf16.msra.mxu0 0
        %3351 = vmatpush.bf16.msra.mxu0 0
        %3352 = vmatpush.bf16.msra.mxu0 0
        %3353 = vmatpush.bf16.msra.mxu0 %v3253
        %3354 = vmatpush.bf16.msra.mxu0 %v3192
        %3355 = vmatpush.bf16.msra.mxu0 %v3188
        %3356 = vmatpush.bf16.msra.mxu0 %v3184
        %3357 = vmatpush.bf16.msra.mxu0 %v3180
        %3358 = vmatmul.bf16.gmra.mxu0 %v3216
        %v3359 = vpop.f32.mrf.mxu0
        %v3360 = vadd.f32 %v3118, %v3359
        %v3361 = vpop.f32.mrf.mxu0
        %v3362 = vadd.f32 %v3118, %v3361
        %3363 = vmatmul.bf16.gmra.mxu0 %v3218
        %v3364 = vpop.f32.mrf.mxu0
        %v3365 = vadd.f32 %v3118, %v3364
        %v3366 = vpop.f32.mrf.mxu0
        %v3367 = vadd.f32 %v3118, %v3366
        %3368 = vmatmul.bf16.gmra.mxu0 %v3220
        %v3369 = vpop.f32.mrf.mxu0
        %v3370 = vadd.f32 %v3118, %v3369
        %v3371 = vpop.f32.mrf.mxu0
        %v3372 = vadd.f32 %v3118, %v3371
        %3373 = vmatmul.bf16.gmra.mxu0 %v3222
        %v3374 = vpop.f32.mrf.mxu0
        %v3375 = vadd.f32 %v3118, %v3374
        %v3376 = vpop.f32.mrf.mxu0
        %v3377 = vadd.f32 %v3118, %v3376
        %3378 = vmatmul.bf16.gmra.mxu0 %v3224
        %v3379 = vpop.f32.mrf.mxu0
        %v3380 = vadd.f32 %v3118, %v3379
        %v3381 = vpop.f32.mrf.mxu0
        %v3382 = vadd.f32 %v3118, %v3381
        %3383 = vmatmul.bf16.gmra.mxu0 %v3226
        %v3384 = vpop.f32.mrf.mxu0
        %v3385 = vadd.f32 %v3118, %v3384
        %v3386 = vpop.f32.mrf.mxu0
        %v3387 = vadd.f32 %v3118, %v3386
        %3388 = vmatmul.bf16.gmra.mxu0 %v3228
        %v3389 = vpop.f32.mrf.mxu0
        %v3390 = vadd.f32 %v3118, %v3389
        %v3391 = vpop.f32.mrf.mxu0
        %v3392 = vadd.f32 %v3118, %v3391
        %3393 = vmatmul.bf16.gmra.mxu0 %v3230
        %v3394 = vpop.f32.mrf.mxu0
        %v3395 = vadd.f32 %v3118, %v3394
        %v3396 = vpop.f32.mrf.mxu0
        %v3397 = vadd.f32 %v3118, %v3396
        %3398 = vmatmul.bf16.gmra.mxu0 %v3232
        %v3399 = vpop.f32.mrf.mxu0
        %v3400 = vadd.f32 %v3118, %v3399
        %v3401 = vpop.f32.mrf.mxu0
        %v3402 = vadd.f32 %v3118, %v3401
        %3403 = vmatmul.bf16.gmra.mxu0 %v3234
        %v3404 = vpop.f32.mrf.mxu0
        %v3405 = vadd.f32 %v3118, %v3404
        %v3406 = vpop.f32.mrf.mxu0
        %v3407 = vadd.f32 %v3118, %v3406
        %3408 = vmatmul.bf16.gmra.mxu0 %v3236
        %v3409 = vpop.f32.mrf.mxu0
        %v3410 = vadd.f32 %v3118, %v3409
        %v3411 = vpop.f32.mrf.mxu0
        %v3412 = vadd.f32 %v3118, %v3411
        %3413 = vmatmul.bf16.gmra.mxu0 %v3238
        %v3414 = vpop.f32.mrf.mxu0
        %v3415 = vadd.f32 %v3118, %v3414
        %v3416 = vpop.f32.mrf.mxu0
        %v3417 = vadd.f32 %v3118, %v3416
        %3418 = vmatmul.bf16.gmra.mxu0 %v3240
        %v3419 = vpop.f32.mrf.mxu0
        %v3420 = vadd.f32 %v3118, %v3419
        %v3421 = vpop.f32.mrf.mxu0
        %v3422 = vadd.f32 %v3118, %v3421
        %3423 = vmatmul.bf16.gmra.mxu0 %v3242
        %v3424 = vpop.f32.mrf.mxu0
        %v3425 = vadd.f32 %v3118, %v3424
        %v3426 = vpop.f32.mrf.mxu0
        %v3427 = vadd.f32 %v3118, %v3426
        %3428 = vmatmul.bf16.gmra.mxu0 %v3244
        %v3429 = vpop.f32.mrf.mxu0
        %v3430 = vadd.f32 %v3118, %v3429
        %v3431 = vpop.f32.mrf.mxu0
        %v3432 = vadd.f32 %v3118, %v3431
        %3433 = vmatmul.bf16.gmra.mxu0 %v3246
        %v3434 = vpop.f32.mrf.mxu0
        %v3435 = vadd.f32 %v3118, %v3434
        %v3436 = vpop.f32.mrf.mxu0
        %v3437 = vadd.f32 %v3118, %v3436
        %3438 = vdwg.mxu0
        %3439 = vmatpush.bf16.msra.mxu0 0
        %3440 = vmatpush.bf16.msra.mxu0 0
        %3441 = vmatpush.bf16.msra.mxu0 0
        %3442 = vmatpush.bf16.msra.mxu0 %v3256
        %3443 = vmatpush.bf16.msra.mxu0 %v3193
        %3444 = vmatpush.bf16.msra.mxu0 %v3189
        %3445 = vmatpush.bf16.msra.mxu0 %v3185
        %3446 = vmatpush.bf16.msra.mxu0 %v3181
        %3447 = vmatmul.bf16.gmra.mxu0 %v3216
        %v3448 = vpop.f32.mrf.mxu0
        %v3449 = vadd.f32 %v3119, %v3448
        %v3450 = vpop.f32.mrf.mxu0
        %v3451 = vadd.f32 %v3119, %v3450
        %3452 = vmatmul.bf16.gmra.mxu0 %v3218
        %v3453 = vpop.f32.mrf.mxu0
        %v3454 = vadd.f32 %v3119, %v3453
        %v3455 = vpop.f32.mrf.mxu0
        %v3456 = vadd.f32 %v3119, %v3455
        %3457 = vmatmul.bf16.gmra.mxu0 %v3220
        %v3458 = vpop.f32.mrf.mxu0
        %v3459 = vadd.f32 %v3119, %v3458
        %v3460 = vpop.f32.mrf.mxu0
        %v3461 = vadd.f32 %v3119, %v3460
        %3462 = vmatmul.bf16.gmra.mxu0 %v3222
        %v3463 = vpop.f32.mrf.mxu0
        %v3464 = vadd.f32 %v3119, %v3463
        %v3465 = vpop.f32.mrf.mxu0
        %v3466 = vadd.f32 %v3119, %v3465
        %3467 = vmatmul.bf16.gmra.mxu0 %v3224
        %v3468 = vpop.f32.mrf.mxu0
        %v3469 = vadd.f32 %v3119, %v3468
        %v3470 = vpop.f32.mrf.mxu0
        %v3471 = vadd.f32 %v3119, %v3470
        %3472 = vmatmul.bf16.gmra.mxu0 %v3226
        %v3473 = vpop.f32.mrf.mxu0
        %v3474 = vadd.f32 %v3119, %v3473
        %v3475 = vpop.f32.mrf.mxu0
        %v3476 = vadd.f32 %v3119, %v3475
        %3477 = vmatmul.bf16.gmra.mxu0 %v3228
        %v3478 = vpop.f32.mrf.mxu0
        %v3479 = vadd.f32 %v3119, %v3478
        %v3480 = vpop.f32.mrf.mxu0
        %v3481 = vadd.f32 %v3119, %v3480
        %3482 = vmatmul.bf16.gmra.mxu0 %v3230
        %v3483 = vpop.f32.mrf.mxu0
        %v3484 = vadd.f32 %v3119, %v3483
        %v3485 = vpop.f32.mrf.mxu0
        %v3486 = vadd.f32 %v3119, %v3485
        %3487 = vmatmul.bf16.gmra.mxu0 %v3232
        %v3488 = vpop.f32.mrf.mxu0
        %v3489 = vadd.f32 %v3119, %v3488
        %v3490 = vpop.f32.mrf.mxu0
        %v3491 = vadd.f32 %v3119, %v3490
        %3492 = vmatmul.bf16.gmra.mxu0 %v3234
        %v3493 = vpop.f32.mrf.mxu0
        %v3494 = vadd.f32 %v3119, %v3493
        %v3495 = vpop.f32.mrf.mxu0
        %v3496 = vadd.f32 %v3119, %v3495
        %3497 = vmatmul.bf16.gmra.mxu0 %v3236
        %v3498 = vpop.f32.mrf.mxu0
        %v3499 = vadd.f32 %v3119, %v3498
        %v3500 = vpop.f32.mrf.mxu0
        %v3501 = vadd.f32 %v3119, %v3500
        %3502 = vmatmul.bf16.gmra.mxu0 %v3238
        %v3503 = vpop.f32.mrf.mxu0
        %v3504 = vadd.f32 %v3119, %v3503
        %v3505 = vpop.f32.mrf.mxu0
        %v3506 = vadd.f32 %v3119, %v3505
        %3507 = vmatmul.bf16.gmra.mxu0 %v3240
        %v3508 = vpop.f32.mrf.mxu0
        %v3509 = vadd.f32 %v3119, %v3508
        %v3510 = vpop.f32.mrf.mxu0
        %v3511 = vadd.f32 %v3119, %v3510
        %3512 = vmatmul.bf16.gmra.mxu0 %v3242
        %v3513 = vpop.f32.mrf.mxu0
        %v3514 = vadd.f32 %v3119, %v3513
        %v3515 = vpop.f32.mrf.mxu0
        %v3516 = vadd.f32 %v3119, %v3515
        %3517 = vmatmul.bf16.gmra.mxu0 %v3244
        %v3518 = vpop.f32.mrf.mxu0
        %v3519 = vadd.f32 %v3119, %v3518
        %v3520 = vpop.f32.mrf.mxu0
        %v3521 = vadd.f32 %v3119, %v3520
        %3522 = vmatmul.bf16.gmra.mxu0 %v3246
        %v3523 = vpop.f32.mrf.mxu0
        %v3524 = vadd.f32 %v3119, %v3523
        %v3525 = vpop.f32.mrf.mxu0
        %v3526 = vadd.f32 %v3119, %v3525
        %3527 = vdwg.mxu0
        %3528 = vmatpush.bf16.msra.mxu0 0
        %3529 = vmatpush.bf16.msra.mxu0 0
        %3530 = vmatpush.bf16.msra.mxu0 0
        %3531 = vmatpush.bf16.msra.mxu0 %v3259
        %3532 = vmatpush.bf16.msra.mxu0 %v3194
        %3533 = vmatpush.bf16.msra.mxu0 %v3190
        %3534 = vmatpush.bf16.msra.mxu0 %v3186
        %3535 = vmatpush.bf16.msra.mxu0 %v3182
        %3536 = vmatmul.bf16.gmra.mxu0 %v3216
        %v3537 = vpop.f32.mrf.mxu0
        %v3538 = vadd.f32 %v3120, %v3537
        %v3539 = vpop.f32.mrf.mxu0
        %v3540 = vadd.f32 %v3120, %v3539
        %3541 = vmatmul.bf16.gmra.mxu0 %v3218
        %v3542 = vpop.f32.mrf.mxu0
        %v3543 = vadd.f32 %v3120, %v3542
        %v3544 = vpop.f32.mrf.mxu0
        %v3545 = vadd.f32 %v3120, %v3544
        %3546 = vmatmul.bf16.gmra.mxu0 %v3220
        %v3547 = vpop.f32.mrf.mxu0
        %v3548 = vadd.f32 %v3120, %v3547
        %v3549 = vpop.f32.mrf.mxu0
        %v3550 = vadd.f32 %v3120, %v3549
        %3551 = vmatmul.bf16.gmra.mxu0 %v3222
        %v3552 = vpop.f32.mrf.mxu0
        %v3553 = vadd.f32 %v3120, %v3552
        %v3554 = vpop.f32.mrf.mxu0
        %v3555 = vadd.f32 %v3120, %v3554
        %3556 = vmatmul.bf16.gmra.mxu0 %v3224
        %v3557 = vpop.f32.mrf.mxu0
        %v3558 = vadd.f32 %v3120, %v3557
        %v3559 = vpop.f32.mrf.mxu0
        %v3560 = vadd.f32 %v3120, %v3559
        %3561 = vmatmul.bf16.gmra.mxu0 %v3226
        %v3562 = vpop.f32.mrf.mxu0
        %v3563 = vadd.f32 %v3120, %v3562
        %v3564 = vpop.f32.mrf.mxu0
        %v3565 = vadd.f32 %v3120, %v3564
        %3566 = vmatmul.bf16.gmra.mxu0 %v3228
        %v3567 = vpop.f32.mrf.mxu0
        %v3568 = vadd.f32 %v3120, %v3567
        %v3569 = vpop.f32.mrf.mxu0
        %v3570 = vadd.f32 %v3120, %v3569
        %3571 = vmatmul.bf16.gmra.mxu0 %v3230
        %v3572 = vpop.f32.mrf.mxu0
        %v3573 = vadd.f32 %v3120, %v3572
        %v3574 = vpop.f32.mrf.mxu0
        %v3575 = vadd.f32 %v3120, %v3574
        %3576 = vmatmul.bf16.gmra.mxu0 %v3232
        %v3577 = vpop.f32.mrf.mxu0
        %v3578 = vadd.f32 %v3120, %v3577
        %v3579 = vpop.f32.mrf.mxu0
        %v3580 = vadd.f32 %v3120, %v3579
        %3581 = vmatmul.bf16.gmra.mxu0 %v3234
        %v3582 = vpop.f32.mrf.mxu0
        %v3583 = vadd.f32 %v3120, %v3582
        %v3584 = vpop.f32.mrf.mxu0
        %v3585 = vadd.f32 %v3120, %v3584
        %3586 = vmatmul.bf16.gmra.mxu0 %v3236
        %v3587 = vpop.f32.mrf.mxu0
        %v3588 = vadd.f32 %v3120, %v3587
        %v3589 = vpop.f32.mrf.mxu0
        %v3590 = vadd.f32 %v3120, %v3589
        %3591 = vmatmul.bf16.gmra.mxu0 %v3238
        %v3592 = vpop.f32.mrf.mxu0
        %v3593 = vadd.f32 %v3120, %v3592
        %v3594 = vpop.f32.mrf.mxu0
        %v3595 = vadd.f32 %v3120, %v3594
        %3596 = vmatmul.bf16.gmra.mxu0 %v3240
        %v3597 = vpop.f32.mrf.mxu0
        %v3598 = vadd.f32 %v3120, %v3597
        %v3599 = vpop.f32.mrf.mxu0
        %v3600 = vadd.f32 %v3120, %v3599
        %3601 = vmatmul.bf16.gmra.mxu0 %v3242
        %v3602 = vpop.f32.mrf.mxu0
        %v3603 = vadd.f32 %v3120, %v3602
        %v3604 = vpop.f32.mrf.mxu0
        %v3605 = vadd.f32 %v3120, %v3604
        %3606 = vmatmul.bf16.gmra.mxu0 %v3244
        %v3607 = vpop.f32.mrf.mxu0
        %v3608 = vadd.f32 %v3120, %v3607
        %v3609 = vpop.f32.mrf.mxu0
        %v3610 = vadd.f32 %v3120, %v3609
        %3611 = vmatmul.bf16.gmra.mxu0 %v3246
        %v3612 = vpop.f32.mrf.mxu0
        %v3613 = vadd.f32 %v3120, %v3612
        %v3614 = vpop.f32.mrf.mxu0
        %v3615 = vadd.f32 %v3120, %v3614
        %3616 = vdwg.mxu0
        %v3617 = vmax.f32 %v3271, 0.0
        %v3618 = vmax.f32 %v3360, 0.0
        %v3619 = vmax.f32 %v3449, 0.0
        %v3620 = vmax.f32 %v3538, 0.0
        %v3621 = vmax.f32 %v3273, 0.0
        %v3622 = vmax.f32 %v3362, 0.0
        %v3623 = vmax.f32 %v3451, 0.0
        %v3624 = vmax.f32 %v3540, 0.0
        %v3625 = vmax.f32 %v3276, 0.0
        %v3626 = vmax.f32 %v3365, 0.0
        %v3627 = vmax.f32 %v3454, 0.0
        %v3628 = vmax.f32 %v3543, 0.0
        %v3629 = vmax.f32 %v3278, 0.0
        %v3630 = vmax.f32 %v3367, 0.0
        %v3631 = vmax.f32 %v3456, 0.0
        %v3632 = vmax.f32 %v3545, 0.0
        %v3633 = vmax.f32 %v3281, 0.0
        %v3634 = vmax.f32 %v3370, 0.0
        %v3635 = vmax.f32 %v3459, 0.0
        %v3636 = vmax.f32 %v3548, 0.0
        %v3637 = vmax.f32 %v3283, 0.0
        %v3638 = vmax.f32 %v3372, 0.0
        %v3639 = vmax.f32 %v3461, 0.0
        %v3640 = vmax.f32 %v3550, 0.0
        %v3641 = vmax.f32 %v3286, 0.0
        %v3642 = vmax.f32 %v3375, 0.0
        %v3643 = vmax.f32 %v3464, 0.0
        %v3644 = vmax.f32 %v3553, 0.0
        %v3645 = vmax.f32 %v3288, 0.0
        %v3646 = vmax.f32 %v3377, 0.0
        %v3647 = vmax.f32 %v3466, 0.0
        %v3648 = vmax.f32 %v3555, 0.0
        %v3649 = vmax.f32 %v3291, 0.0
        %v3650 = vmax.f32 %v3380, 0.0
        %v3651 = vmax.f32 %v3469, 0.0
        %v3652 = vmax.f32 %v3558, 0.0
        %v3653 = vmax.f32 %v3293, 0.0
        %v3654 = vmax.f32 %v3382, 0.0
        %v3655 = vmax.f32 %v3471, 0.0
        %v3656 = vmax.f32 %v3560, 0.0
        %v3657 = vmax.f32 %v3296, 0.0
        %v3658 = vmax.f32 %v3385, 0.0
        %v3659 = vmax.f32 %v3474, 0.0
        %v3660 = vmax.f32 %v3563, 0.0
        %v3661 = vmax.f32 %v3298, 0.0
        %v3662 = vmax.f32 %v3387, 0.0
        %v3663 = vmax.f32 %v3476, 0.0
        %v3664 = vmax.f32 %v3565, 0.0
        %v3665 = vmax.f32 %v3301, 0.0
        %v3666 = vmax.f32 %v3390, 0.0
        %v3667 = vmax.f32 %v3479, 0.0
        %v3668 = vmax.f32 %v3568, 0.0
        %v3669 = vmax.f32 %v3303, 0.0
        %v3670 = vmax.f32 %v3392, 0.0
        %v3671 = vmax.f32 %v3481, 0.0
        %v3672 = vmax.f32 %v3570, 0.0
        %v3673 = vmax.f32 %v3306, 0.0
        %v3674 = vmax.f32 %v3395, 0.0
        %v3675 = vmax.f32 %v3484, 0.0
        %v3676 = vmax.f32 %v3573, 0.0
        %v3677 = vmax.f32 %v3308, 0.0
        %v3678 = vmax.f32 %v3397, 0.0
        %v3679 = vmax.f32 %v3486, 0.0
        %v3680 = vmax.f32 %v3575, 0.0
        %v3681 = vmax.f32 %v3311, 0.0
        %v3682 = vmax.f32 %v3400, 0.0
        %v3683 = vmax.f32 %v3489, 0.0
        %v3684 = vmax.f32 %v3578, 0.0
        %v3685 = vmax.f32 %v3313, 0.0
        %v3686 = vmax.f32 %v3402, 0.0
        %v3687 = vmax.f32 %v3491, 0.0
        %v3688 = vmax.f32 %v3580, 0.0
        %v3689 = vmax.f32 %v3316, 0.0
        %v3690 = vmax.f32 %v3405, 0.0
        %v3691 = vmax.f32 %v3494, 0.0
        %v3692 = vmax.f32 %v3583, 0.0
        %v3693 = vmax.f32 %v3318, 0.0
        %v3694 = vmax.f32 %v3407, 0.0
        %v3695 = vmax.f32 %v3496, 0.0
        %v3696 = vmax.f32 %v3585, 0.0
        %v3697 = vmax.f32 %v3321, 0.0
        %v3698 = vmax.f32 %v3410, 0.0
        %v3699 = vmax.f32 %v3499, 0.0
        %v3700 = vmax.f32 %v3588, 0.0
        %v3701 = vmax.f32 %v3323, 0.0
        %v3702 = vmax.f32 %v3412, 0.0
        %v3703 = vmax.f32 %v3501, 0.0
        %v3704 = vmax.f32 %v3590, 0.0
        %v3705 = vmax.f32 %v3326, 0.0
        %v3706 = vmax.f32 %v3415, 0.0
        %v3707 = vmax.f32 %v3504, 0.0
        %v3708 = vmax.f32 %v3593, 0.0
        %v3709 = vmax.f32 %v3328, 0.0
        %v3710 = vmax.f32 %v3417, 0.0
        %v3711 = vmax.f32 %v3506, 0.0
        %v3712 = vmax.f32 %v3595, 0.0
        %v3713 = vmax.f32 %v3331, 0.0
        %v3714 = vmax.f32 %v3420, 0.0
        %v3715 = vmax.f32 %v3509, 0.0
        %v3716 = vmax.f32 %v3598, 0.0
        %v3717 = vmax.f32 %v3333, 0.0
        %v3718 = vmax.f32 %v3422, 0.0
        %v3719 = vmax.f32 %v3511, 0.0
        %v3720 = vmax.f32 %v3600, 0.0
        %v3721 = vmax.f32 %v3336, 0.0
        %v3722 = vmax.f32 %v3425, 0.0
        %v3723 = vmax.f32 %v3514, 0.0
        %v3724 = vmax.f32 %v3603, 0.0
        %v3725 = vmax.f32 %v3338, 0.0
        %v3726 = vmax.f32 %v3427, 0.0
        %v3727 = vmax.f32 %v3516, 0.0
        %v3728 = vmax.f32 %v3605, 0.0
        %v3729 = vmax.f32 %v3341, 0.0
        %v3730 = vmax.f32 %v3430, 0.0
        %v3731 = vmax.f32 %v3519, 0.0
        %v3732 = vmax.f32 %v3608, 0.0
        %v3733 = vmax.f32 %v3343, 0.0
        %v3734 = vmax.f32 %v3432, 0.0
        %v3735 = vmax.f32 %v3521, 0.0
        %v3736 = vmax.f32 %v3610, 0.0
        %v3737 = vmax.f32 %v3346, 0.0
        %v3738 = vmax.f32 %v3435, 0.0
        %v3739 = vmax.f32 %v3524, 0.0
        %v3740 = vmax.f32 %v3613, 0.0
        %v3741 = vmax.f32 %v3348, 0.0
        %v3742 = vmax.f32 %v3437, 0.0
        %v3743 = vmax.f32 %v3526, 0.0
        %v3744 = vmax.f32 %v3615, 0.0
        %v3745 = vpack.c.bf16 %v3621, %v3617
        %v3746 = vpack.c.bf16 %v3622, %v3618
        %v3747 = vpack.c.bf16 %v3623, %v3619
        %v3748 = vpack.c.bf16 %v3624, %v3620
        %v3749 = vpack.c.bf16 %v3629, %v3625
        %v3750 = vpack.c.bf16 %v3630, %v3626
        %v3751 = vpack.c.bf16 %v3631, %v3627
        %v3752 = vpack.c.bf16 %v3632, %v3628
        %v3753 = vpack.c.bf16 %v3637, %v3633
        %v3754 = vpack.c.bf16 %v3638, %v3634
        %v3755 = vpack.c.bf16 %v3639, %v3635
        %v3756 = vpack.c.bf16 %v3640, %v3636
        %v3757 = vpack.c.bf16 %v3645, %v3641
        %v3758 = vpack.c.bf16 %v3646, %v3642
        %v3759 = vpack.c.bf16 %v3647, %v3643
        %v3760 = vpack.c.bf16 %v3648, %v3644
        %v3761 = vpack.c.bf16 %v3653, %v3649
        %v3762 = vpack.c.bf16 %v3654, %v3650
        %v3763 = vpack.c.bf16 %v3655, %v3651
        %v3764 = vpack.c.bf16 %v3656, %v3652
        %v3765 = vpack.c.bf16 %v3661, %v3657
        %v3766 = vpack.c.bf16 %v3662, %v3658
        %v3767 = vpack.c.bf16 %v3663, %v3659
        %v3768 = vpack.c.bf16 %v3664, %v3660
        %v3769 = vpack.c.bf16 %v3669, %v3665
        %v3770 = vpack.c.bf16 %v3670, %v3666
        %v3771 = vpack.c.bf16 %v3671, %v3667
        %v3772 = vpack.c.bf16 %v3672, %v3668
        %v3773 = vpack.c.bf16 %v3677, %v3673
        %v3774 = vpack.c.bf16 %v3678, %v3674
        %v3775 = vpack.c.bf16 %v3679, %v3675
        %v3776 = vpack.c.bf16 %v3680, %v3676
        %v3777 = vpack.c.bf16 %v3685, %v3681
        %v3778 = vpack.c.bf16 %v3686, %v3682
        %v3779 = vpack.c.bf16 %v3687, %v3683
        %v3780 = vpack.c.bf16 %v3688, %v3684
        %v3781 = vpack.c.bf16 %v3693, %v3689
        %v3782 = vpack.c.bf16 %v3694, %v3690
        %v3783 = vpack.c.bf16 %v3695, %v3691
        %v3784 = vpack.c.bf16 %v3696, %v3692
        %v3785 = vpack.c.bf16 %v3701, %v3697
        %v3786 = vpack.c.bf16 %v3702, %v3698
        %v3787 = vpack.c.bf16 %v3703, %v3699
        %v3788 = vpack.c.bf16 %v3704, %v3700
        %v3789 = vpack.c.bf16 %v3709, %v3705
        %v3790 = vpack.c.bf16 %v3710, %v3706
        %v3791 = vpack.c.bf16 %v3711, %v3707
        %v3792 = vpack.c.bf16 %v3712, %v3708
        %v3793 = vpack.c.bf16 %v3717, %v3713
        %v3794 = vpack.c.bf16 %v3718, %v3714
        %v3795 = vpack.c.bf16 %v3719, %v3715
        %v3796 = vpack.c.bf16 %v3720, %v3716
        %v3797 = vpack.c.bf16 %v3725, %v3721
        %v3798 = vpack.c.bf16 %v3726, %v3722
        %v3799 = vpack.c.bf16 %v3727, %v3723
        %v3800 = vpack.c.bf16 %v3728, %v3724
        %v3801 = vpack.c.bf16 %v3733, %v3729
        %v3802 = vpack.c.bf16 %v3734, %v3730
        %v3803 = vpack.c.bf16 %v3735, %v3731
        %v3804 = vpack.c.bf16 %v3736, %v3732
        %v3805 = vpack.c.bf16 %v3741, %v3737
        %v3806 = vpack.c.bf16 %v3742, %v3738
        %v3807 = vpack.c.bf16 %v3743, %v3739
        %v3808 = vpack.c.bf16 %v3744, %v3740
        %v3809 = vld [vmem:[%s3] sm:$0xf]
        %v3810 = vld [vmem:[%s3 + $0x4] sm:$0xf]
        %v3811 = vld [vmem:[%s3 + $0x8] sm:$0xf]
        %v3812 = vld [vmem:[%s3 + $0xc] sm:$0xf]
        %v3813 = vld [vmem:[%s3 + $0x10] sm:$0xf]
        %v3814 = vld [vmem:[%s3 + $0x14] sm:$0xf]
        %v3815 = vld [vmem:[%s3 + $0x18] sm:$0xf]
        %v3816 = vld [vmem:[%s3 + $0x1c] sm:$0xf]
        %v3817 = vld [vmem:[%s3 + $0x20] sm:$0xf]
        %v3818 = vld [vmem:[%s3 + $0x24] sm:$0xf]
        %v3819 = vld [vmem:[%s3 + $0x28] sm:$0xf]
        %v3820 = vld [vmem:[%s3 + $0x2c] sm:$0xf]
        %v3821 = vld [vmem:[%s3 + $0x30] sm:$0xf]
        %v3822 = vld [vmem:[%s3 + $0x34] sm:$0xf]
        %v3823 = vld [vmem:[%s3 + $0x38] sm:$0xf]
        %v3824 = vld [vmem:[%s3 + $0x3c] sm:$0xf]
        %v3825 = vld [vmem:[%s3 + $0x40] sm:$0xf]
        %v3826 = vld [vmem:[%s3 + $0x44] sm:$0xf]
        %v3827 = vld [vmem:[%s3 + $0x48] sm:$0xf]
        %v3828 = vld [vmem:[%s3 + $0x4c] sm:$0xf]
        %v3829 = vld [vmem:[%s3 + $0x50] sm:$0xf]
        %v3830 = vld [vmem:[%s3 + $0x54] sm:$0xf]
        %v3831 = vld [vmem:[%s3 + $0x58] sm:$0xf]
        %v3832 = vld [vmem:[%s3 + $0x5c] sm:$0xf]
        %v3833 = vld [vmem:[%s3 + $0x60] sm:$0xf]
        %v3834 = vld [vmem:[%s3 + $0x64] sm:$0xf]
        %v3835 = vld [vmem:[%s3 + $0x68] sm:$0xf]
        %v3836 = vld [vmem:[%s3 + $0x6c] sm:$0xf]
        %v3837 = vld [vmem:[%s3 + $0x70] sm:$0xf]
        %v3838 = vld [vmem:[%s3 + $0x74] sm:$0xf]
        %v3839 = vld [vmem:[%s3 + $0x78] sm:$0xf]
        %v3840 = vld [vmem:[%s3 + $0x7c] sm:$0xf]
        %v3841 = vld [vmem:[%s3 + $0x80] sm:$0xf]
        %v3842 = vld [vmem:[%s3 + $0x84] sm:$0xf]
        %v3843 = vld [vmem:[%s3 + $0x88] sm:$0xf]
        %v3844 = vld [vmem:[%s3 + $0x8c] sm:$0xf]
        %v3845 = vld [vmem:[%s3 + $0x90] sm:$0xf]
        %v3846 = vld [vmem:[%s3 + $0x94] sm:$0xf]
        %v3847 = vld [vmem:[%s3 + $0x98] sm:$0xf]
        %v3848 = vld [vmem:[%s3 + $0x9c] sm:$0xf]
        %v3849 = vld [vmem:[%s3 + $0xa0] sm:$0xf]
        %v3850 = vld [vmem:[%s3 + $0xa4] sm:$0xf]
        %v3851 = vld [vmem:[%s3 + $0xa8] sm:$0xf]
        %v3852 = vld [vmem:[%s3 + $0xac] sm:$0xf]
        %v3853 = vld [vmem:[%s3 + $0xb0] sm:$0xf]
        %v3854 = vld [vmem:[%s3 + $0xb4] sm:$0xf]
        %v3855 = vld [vmem:[%s3 + $0xb8] sm:$0xf]
        %v3856 = vld [vmem:[%s3 + $0xbc] sm:$0xf]
        %v3857 = vld [vmem:[%s3 + $0xc0] sm:$0xf]
        %v3858 = vld [vmem:[%s3 + $0xc4] sm:$0xf]
        %v3859 = vld [vmem:[%s3 + $0xc8] sm:$0xf]
        %v3860 = vld [vmem:[%s3 + $0xcc] sm:$0xf]
        %v3861 = vld [vmem:[%s3 + $0xd0] sm:$0xf]
        %v3862 = vld [vmem:[%s3 + $0xd4] sm:$0xf]
        %v3863 = vld [vmem:[%s3 + $0xd8] sm:$0xf]
        %v3864 = vld [vmem:[%s3 + $0xdc] sm:$0xf]
        %v3865 = vld [vmem:[%s3 + $0xe0] sm:$0xf]
        %v3866 = vld [vmem:[%s3 + $0xe4] sm:$0xf]
        %v3867 = vld [vmem:[%s3 + $0xe8] sm:$0xf]
        %v3868 = vld [vmem:[%s3 + $0xec] sm:$0xf]
        %v3869 = vld [vmem:[%s3 + $0xf0] sm:$0xf]
        %v3870 = vld [vmem:[%s3 + $0xf4] sm:$0xf]
        %v3871 = vld [vmem:[%s3 + $0xf8] sm:$0xf]
        %v3872 = vld [vmem:[%s3 + $0xfc] sm:$0xf]
        %v3873 = vld [vmem:[%s4] sm:$0x1]
        %v3875 = vperm.slane %v3873, 0
        %v3941 = vunpack.c.l.b16 %v3809
        %v3942 = vunpack.c.l.b16 %v3810
        %v3943 = vunpack.c.l.b16 %v3811
        %v3944 = vunpack.c.l.b16 %v3812
        %v3945 = vunpack.c.l.b16 %v3813
        %v3946 = vunpack.c.l.b16 %v3814
        %v3947 = vunpack.c.l.b16 %v3815
        %v3948 = vunpack.c.l.b16 %v3816
        %v3949 = vunpack.c.l.b16 %v3817
        %v3950 = vunpack.c.l.b16 %v3818
        %v3951 = vunpack.c.l.b16 %v3819
        %v3952 = vunpack.c.l.b16 %v3820
        %v3953 = vunpack.c.l.b16 %v3821
        %v3954 = vunpack.c.l.b16 %v3822
        %v3955 = vunpack.c.l.b16 %v3823
        %v3956 = vunpack.c.l.b16 %v3824
        %v3957 = vunpack.c.l.b16 %v3825
        %v3958 = vunpack.c.l.b16 %v3826
        %v3959 = vunpack.c.l.b16 %v3827
        %v3960 = vunpack.c.l.b16 %v3828
        %v3961 = vunpack.c.l.b16 %v3829
        %v3962 = vunpack.c.l.b16 %v3830
        %v3963 = vunpack.c.l.b16 %v3831
        %v3964 = vunpack.c.l.b16 %v3832
        %v3965 = vunpack.c.l.b16 %v3833
        %v3966 = vunpack.c.l.b16 %v3834
        %v3967 = vunpack.c.l.b16 %v3835
        %v3968 = vunpack.c.l.b16 %v3836
        %v3969 = vunpack.c.l.b16 %v3837
        %v3970 = vunpack.c.l.b16 %v3838
        %v3971 = vunpack.c.l.b16 %v3839
        %v3972 = vunpack.c.l.b16 %v3840
        %v3973 = vunpack.c.l.b16 %v3841
        %v3974 = vunpack.c.l.b16 %v3842
        %v3975 = vunpack.c.l.b16 %v3843
        %v3976 = vunpack.c.l.b16 %v3844
        %v3977 = vunpack.c.l.b16 %v3845
        %v3978 = vunpack.c.l.b16 %v3846
        %v3979 = vunpack.c.l.b16 %v3847
        %v3980 = vunpack.c.l.b16 %v3848
        %v3981 = vunpack.c.l.b16 %v3849
        %v3982 = vunpack.c.l.b16 %v3850
        %v3983 = vunpack.c.l.b16 %v3851
        %v3984 = vunpack.c.l.b16 %v3852
        %v3985 = vunpack.c.l.b16 %v3853
        %v3986 = vunpack.c.l.b16 %v3854
        %v3987 = vunpack.c.l.b16 %v3855
        %v3988 = vunpack.c.l.b16 %v3856
        %v3989 = vunpack.c.l.b16 %v3857
        %v3990 = vunpack.c.l.b16 %v3858
        %v3991 = vunpack.c.l.b16 %v3859
        %v3992 = vunpack.c.l.b16 %v3860
        %v3993 = vunpack.c.l.b16 %v3861
        %v3994 = vunpack.c.l.b16 %v3862
        %v3995 = vunpack.c.l.b16 %v3863
        %v3996 = vunpack.c.l.b16 %v3864
        %v3997 = vunpack.c.l.b16 %v3865
        %v3998 = vunpack.c.l.b16 %v3866
        %v3999 = vunpack.c.l.b16 %v3867
        %v4000 = vunpack.c.l.b16 %v3868
        %v4001 = vunpack.c.l.b16 %v3869
        %v4002 = vunpack.c.l.b16 %v3870
        %v4003 = vunpack.c.l.b16 %v3871
        %v4004 = vunpack.c.l.b16 %v3872
        %v4005 = vpack.c.b16 %v3942, %v3941
        %v4006 = vpack.c.b16 %v3944, %v3943
        %v4007 = vpack.c.b16 %v3946, %v3945
        %v4008 = vpack.c.b16 %v3948, %v3947
        %v4009 = vpack.c.b16 %v3950, %v3949
        %v4010 = vpack.c.b16 %v3952, %v3951
        %v4011 = vpack.c.b16 %v3954, %v3953
        %v4012 = vpack.c.b16 %v3956, %v3955
        %v4013 = vpack.c.b16 %v3958, %v3957
        %v4014 = vpack.c.b16 %v3960, %v3959
        %v4015 = vpack.c.b16 %v3962, %v3961
        %v4016 = vpack.c.b16 %v3964, %v3963
        %v4017 = vpack.c.b16 %v3966, %v3965
        %v4018 = vpack.c.b16 %v3968, %v3967
        %v4019 = vpack.c.b16 %v3970, %v3969
        %v4020 = vpack.c.b16 %v3972, %v3971
        %v4021 = vpack.c.b16 %v3974, %v3973
        %v4022 = vpack.c.b16 %v3976, %v3975
        %v4023 = vpack.c.b16 %v3978, %v3977
        %v4024 = vpack.c.b16 %v3980, %v3979
        %v4025 = vpack.c.b16 %v3982, %v3981
        %v4026 = vpack.c.b16 %v3984, %v3983
        %v4027 = vpack.c.b16 %v3986, %v3985
        %v4028 = vpack.c.b16 %v3988, %v3987
        %v4029 = vpack.c.b16 %v3990, %v3989
        %v4030 = vpack.c.b16 %v3992, %v3991
        %v4031 = vpack.c.b16 %v3994, %v3993
        %v4032 = vpack.c.b16 %v3996, %v3995
        %v4033 = vpack.c.b16 %v3998, %v3997
        %v4034 = vpack.c.b16 %v4000, %v3999
        %v4035 = vpack.c.b16 %v4002, %v4001
        %v4036 = vpack.c.b16 %v4004, %v4003
        %4069 = vmatpush.bf16.msra.mxu0 %v4012
        %4070 = vmatpush.bf16.msra.mxu0 %v4011
        %4071 = vmatpush.bf16.msra.mxu0 %v4010
        %4072 = vmatpush.bf16.msra.mxu0 %v4009
        %4073 = vmatpush.bf16.msra.mxu0 %v4008
        %4074 = vmatpush.bf16.msra.mxu0 %v4007
        %4075 = vmatpush.bf16.msra.mxu0 %v4006
        %4076 = vmatpush.bf16.msra.mxu0 %v4005
        %4077 = vmatmul.bf16.gmra.mxu0 %v3745
        %v4078 = vpop.f32.mrf.mxu0
        %v4079 = vadd.f32 %v3875, %v4078
        %v4080 = vpop.f32.mrf.mxu0
        %v4081 = vadd.f32 %v3875, %v4080
        %4082 = vmatmul.bf16.gmra.mxu0 %v3749
        %v4083 = vpop.f32.mrf.mxu0
        %v4084 = vadd.f32 %v3875, %v4083
        %v4085 = vpop.f32.mrf.mxu0
        %v4086 = vadd.f32 %v3875, %v4085
        %4087 = vmatmul.bf16.gmra.mxu0 %v3753
        %v4088 = vpop.f32.mrf.mxu0
        %v4089 = vadd.f32 %v3875, %v4088
        %v4090 = vpop.f32.mrf.mxu0
        %v4091 = vadd.f32 %v3875, %v4090
        %4092 = vmatmul.bf16.gmra.mxu0 %v3757
        %v4093 = vpop.f32.mrf.mxu0
        %v4094 = vadd.f32 %v3875, %v4093
        %v4095 = vpop.f32.mrf.mxu0
        %v4096 = vadd.f32 %v3875, %v4095
        %4097 = vmatmul.bf16.gmra.mxu0 %v3761
        %v4098 = vpop.f32.mrf.mxu0
        %v4099 = vadd.f32 %v3875, %v4098
        %v4100 = vpop.f32.mrf.mxu0
        %v4101 = vadd.f32 %v3875, %v4100
        %4102 = vmatmul.bf16.gmra.mxu0 %v3765
        %v4103 = vpop.f32.mrf.mxu0
        %v4104 = vadd.f32 %v3875, %v4103
        %v4105 = vpop.f32.mrf.mxu0
        %v4106 = vadd.f32 %v3875, %v4105
        %4107 = vmatmul.bf16.gmra.mxu0 %v3769
        %v4108 = vpop.f32.mrf.mxu0
        %v4109 = vadd.f32 %v3875, %v4108
        %v4110 = vpop.f32.mrf.mxu0
        %v4111 = vadd.f32 %v3875, %v4110
        %4112 = vmatmul.bf16.gmra.mxu0 %v3773
        %v4113 = vpop.f32.mrf.mxu0
        %v4114 = vadd.f32 %v3875, %v4113
        %v4115 = vpop.f32.mrf.mxu0
        %v4116 = vadd.f32 %v3875, %v4115
        %4117 = vmatmul.bf16.gmra.mxu0 %v3777
        %v4118 = vpop.f32.mrf.mxu0
        %v4119 = vadd.f32 %v3875, %v4118
        %v4120 = vpop.f32.mrf.mxu0
        %v4121 = vadd.f32 %v3875, %v4120
        %4122 = vmatmul.bf16.gmra.mxu0 %v3781
        %v4123 = vpop.f32.mrf.mxu0
        %v4124 = vadd.f32 %v3875, %v4123
        %v4125 = vpop.f32.mrf.mxu0
        %v4126 = vadd.f32 %v3875, %v4125
        %4127 = vmatmul.bf16.gmra.mxu0 %v3785
        %v4128 = vpop.f32.mrf.mxu0
        %v4129 = vadd.f32 %v3875, %v4128
        %v4130 = vpop.f32.mrf.mxu0
        %v4131 = vadd.f32 %v3875, %v4130
        %4132 = vmatmul.bf16.gmra.mxu0 %v3789
        %v4133 = vpop.f32.mrf.mxu0
        %v4134 = vadd.f32 %v3875, %v4133
        %v4135 = vpop.f32.mrf.mxu0
        %v4136 = vadd.f32 %v3875, %v4135
        %4137 = vmatmul.bf16.gmra.mxu0 %v3793
        %v4138 = vpop.f32.mrf.mxu0
        %v4139 = vadd.f32 %v3875, %v4138
        %v4140 = vpop.f32.mrf.mxu0
        %v4141 = vadd.f32 %v3875, %v4140
        %4142 = vmatmul.bf16.gmra.mxu0 %v3797
        %v4143 = vpop.f32.mrf.mxu0
        %v4144 = vadd.f32 %v3875, %v4143
        %v4145 = vpop.f32.mrf.mxu0
        %v4146 = vadd.f32 %v3875, %v4145
        %4147 = vmatmul.bf16.gmra.mxu0 %v3801
        %v4148 = vpop.f32.mrf.mxu0
        %v4149 = vadd.f32 %v3875, %v4148
        %v4150 = vpop.f32.mrf.mxu0
        %v4151 = vadd.f32 %v3875, %v4150
        %4152 = vmatmul.bf16.gmra.mxu0 %v3805
        %v4153 = vpop.f32.mrf.mxu0
        %v4154 = vadd.f32 %v3875, %v4153
        %v4155 = vpop.f32.mrf.mxu0
        %v4156 = vadd.f32 %v3875, %v4155
        %4157 = vdwg.mxu0
        %4158 = vmatpush.bf16.msra.mxu0 %v4020
        %4159 = vmatpush.bf16.msra.mxu0 %v4019
        %4160 = vmatpush.bf16.msra.mxu0 %v4018
        %4161 = vmatpush.bf16.msra.mxu0 %v4017
        %4162 = vmatpush.bf16.msra.mxu0 %v4016
        %4163 = vmatpush.bf16.msra.mxu0 %v4015
        %4164 = vmatpush.bf16.msra.mxu0 %v4014
        %4165 = vmatpush.bf16.msra.mxu0 %v4013
        %4166 = vmatmul.bf16.gmra.mxu0 %v3746
        %v4167 = vpop.f32.mrf.mxu0
        %v4168 = vadd.f32 %v4079, %v4167
        %v4169 = vpop.f32.mrf.mxu0
        %v4170 = vadd.f32 %v4081, %v4169
        %4171 = vmatmul.bf16.gmra.mxu0 %v3750
        %v4172 = vpop.f32.mrf.mxu0
        %v4173 = vadd.f32 %v4084, %v4172
        %v4174 = vpop.f32.mrf.mxu0
        %v4175 = vadd.f32 %v4086, %v4174
        %4176 = vmatmul.bf16.gmra.mxu0 %v3754
        %v4177 = vpop.f32.mrf.mxu0
        %v4178 = vadd.f32 %v4089, %v4177
        %v4179 = vpop.f32.mrf.mxu0
        %v4180 = vadd.f32 %v4091, %v4179
        %4181 = vmatmul.bf16.gmra.mxu0 %v3758
        %v4182 = vpop.f32.mrf.mxu0
        %v4183 = vadd.f32 %v4094, %v4182
        %v4184 = vpop.f32.mrf.mxu0
        %v4185 = vadd.f32 %v4096, %v4184
        %4186 = vmatmul.bf16.gmra.mxu0 %v3762
        %v4187 = vpop.f32.mrf.mxu0
        %v4188 = vadd.f32 %v4099, %v4187
        %v4189 = vpop.f32.mrf.mxu0
        %v4190 = vadd.f32 %v4101, %v4189
        %4191 = vmatmul.bf16.gmra.mxu0 %v3766
        %v4192 = vpop.f32.mrf.mxu0
        %v4193 = vadd.f32 %v4104, %v4192
        %v4194 = vpop.f32.mrf.mxu0
        %v4195 = vadd.f32 %v4106, %v4194
        %4196 = vmatmul.bf16.gmra.mxu0 %v3770
        %v4197 = vpop.f32.mrf.mxu0
        %v4198 = vadd.f32 %v4109, %v4197
        %v4199 = vpop.f32.mrf.mxu0
        %v4200 = vadd.f32 %v4111, %v4199
        %4201 = vmatmul.bf16.gmra.mxu0 %v3774
        %v4202 = vpop.f32.mrf.mxu0
        %v4203 = vadd.f32 %v4114, %v4202
        %v4204 = vpop.f32.mrf.mxu0
        %v4205 = vadd.f32 %v4116, %v4204
        %4206 = vmatmul.bf16.gmra.mxu0 %v3778
        %v4207 = vpop.f32.mrf.mxu0
        %v4208 = vadd.f32 %v4119, %v4207
        %v4209 = vpop.f32.mrf.mxu0
        %v4210 = vadd.f32 %v4121, %v4209
        %4211 = vmatmul.bf16.gmra.mxu0 %v3782
        %v4212 = vpop.f32.mrf.mxu0
        %v4213 = vadd.f32 %v4124, %v4212
        %v4214 = vpop.f32.mrf.mxu0
        %v4215 = vadd.f32 %v4126, %v4214
        %4216 = vmatmul.bf16.gmra.mxu0 %v3786
        %v4217 = vpop.f32.mrf.mxu0
        %v4218 = vadd.f32 %v4129, %v4217
        %v4219 = vpop.f32.mrf.mxu0
        %v4220 = vadd.f32 %v4131, %v4219
        %4221 = vmatmul.bf16.gmra.mxu0 %v3790
        %v4222 = vpop.f32.mrf.mxu0
        %v4223 = vadd.f32 %v4134, %v4222
        %v4224 = vpop.f32.mrf.mxu0
        %v4225 = vadd.f32 %v4136, %v4224
        %4226 = vmatmul.bf16.gmra.mxu0 %v3794
        %v4227 = vpop.f32.mrf.mxu0
        %v4228 = vadd.f32 %v4139, %v4227
        %v4229 = vpop.f32.mrf.mxu0
        %v4230 = vadd.f32 %v4141, %v4229
        %4231 = vmatmul.bf16.gmra.mxu0 %v3798
        %v4232 = vpop.f32.mrf.mxu0
        %v4233 = vadd.f32 %v4144, %v4232
        %v4234 = vpop.f32.mrf.mxu0
        %v4235 = vadd.f32 %v4146, %v4234
        %4236 = vmatmul.bf16.gmra.mxu0 %v3802
        %v4237 = vpop.f32.mrf.mxu0
        %v4238 = vadd.f32 %v4149, %v4237
        %v4239 = vpop.f32.mrf.mxu0
        %v4240 = vadd.f32 %v4151, %v4239
        %4241 = vmatmul.bf16.gmra.mxu0 %v3806
        %v4242 = vpop.f32.mrf.mxu0
        %v4243 = vadd.f32 %v4154, %v4242
        %v4244 = vpop.f32.mrf.mxu0
        %v4245 = vadd.f32 %v4156, %v4244
        %4246 = vdwg.mxu0
        %4247 = vmatpush.bf16.msra.mxu0 %v4028
        %4248 = vmatpush.bf16.msra.mxu0 %v4027
        %4249 = vmatpush.bf16.msra.mxu0 %v4026
        %4250 = vmatpush.bf16.msra.mxu0 %v4025
        %4251 = vmatpush.bf16.msra.mxu0 %v4024
        %4252 = vmatpush.bf16.msra.mxu0 %v4023
        %4253 = vmatpush.bf16.msra.mxu0 %v4022
        %4254 = vmatpush.bf16.msra.mxu0 %v4021
        %4255 = vmatmul.bf16.gmra.mxu0 %v3747
        %v4256 = vpop.f32.mrf.mxu0
        %v4257 = vadd.f32 %v4168, %v4256
        %v4258 = vpop.f32.mrf.mxu0
        %v4259 = vadd.f32 %v4170, %v4258
        %4260 = vmatmul.bf16.gmra.mxu0 %v3751
        %v4261 = vpop.f32.mrf.mxu0
        %v4262 = vadd.f32 %v4173, %v4261
        %v4263 = vpop.f32.mrf.mxu0
        %v4264 = vadd.f32 %v4175, %v4263
        %4265 = vmatmul.bf16.gmra.mxu0 %v3755
        %v4266 = vpop.f32.mrf.mxu0
        %v4267 = vadd.f32 %v4178, %v4266
        %v4268 = vpop.f32.mrf.mxu0
        %v4269 = vadd.f32 %v4180, %v4268
        %4270 = vmatmul.bf16.gmra.mxu0 %v3759
        %v4271 = vpop.f32.mrf.mxu0
        %v4272 = vadd.f32 %v4183, %v4271
        %v4273 = vpop.f32.mrf.mxu0
        %v4274 = vadd.f32 %v4185, %v4273
        %4275 = vmatmul.bf16.gmra.mxu0 %v3763
        %v4276 = vpop.f32.mrf.mxu0
        %v4277 = vadd.f32 %v4188, %v4276
        %v4278 = vpop.f32.mrf.mxu0
        %v4279 = vadd.f32 %v4190, %v4278
        %4280 = vmatmul.bf16.gmra.mxu0 %v3767
        %v4281 = vpop.f32.mrf.mxu0
        %v4282 = vadd.f32 %v4193, %v4281
        %v4283 = vpop.f32.mrf.mxu0
        %v4284 = vadd.f32 %v4195, %v4283
        %4285 = vmatmul.bf16.gmra.mxu0 %v3771
        %v4286 = vpop.f32.mrf.mxu0
        %v4287 = vadd.f32 %v4198, %v4286
        %v4288 = vpop.f32.mrf.mxu0
        %v4289 = vadd.f32 %v4200, %v4288
        %4290 = vmatmul.bf16.gmra.mxu0 %v3775
        %v4291 = vpop.f32.mrf.mxu0
        %v4292 = vadd.f32 %v4203, %v4291
        %v4293 = vpop.f32.mrf.mxu0
        %v4294 = vadd.f32 %v4205, %v4293
        %4295 = vmatmul.bf16.gmra.mxu0 %v3779
        %v4296 = vpop.f32.mrf.mxu0
        %v4297 = vadd.f32 %v4208, %v4296
        %v4298 = vpop.f32.mrf.mxu0
        %v4299 = vadd.f32 %v4210, %v4298
        %4300 = vmatmul.bf16.gmra.mxu0 %v3783
        %v4301 = vpop.f32.mrf.mxu0
        %v4302 = vadd.f32 %v4213, %v4301
        %v4303 = vpop.f32.mrf.mxu0
        %v4304 = vadd.f32 %v4215, %v4303
        %4305 = vmatmul.bf16.gmra.mxu0 %v3787
        %v4306 = vpop.f32.mrf.mxu0
        %v4307 = vadd.f32 %v4218, %v4306
        %v4308 = vpop.f32.mrf.mxu0
        %v4309 = vadd.f32 %v4220, %v4308
        %4310 = vmatmul.bf16.gmra.mxu0 %v3791
        %v4311 = vpop.f32.mrf.mxu0
        %v4312 = vadd.f32 %v4223, %v4311
        %v4313 = vpop.f32.mrf.mxu0
        %v4314 = vadd.f32 %v4225, %v4313
        %4315 = vmatmul.bf16.gmra.mxu0 %v3795
        %v4316 = vpop.f32.mrf.mxu0
        %v4317 = vadd.f32 %v4228, %v4316
        %v4318 = vpop.f32.mrf.mxu0
        %v4319 = vadd.f32 %v4230, %v4318
        %4320 = vmatmul.bf16.gmra.mxu0 %v3799
        %v4321 = vpop.f32.mrf.mxu0
        %v4322 = vadd.f32 %v4233, %v4321
        %v4323 = vpop.f32.mrf.mxu0
        %v4324 = vadd.f32 %v4235, %v4323
        %4325 = vmatmul.bf16.gmra.mxu0 %v3803
        %v4326 = vpop.f32.mrf.mxu0
        %v4327 = vadd.f32 %v4238, %v4326
        %v4328 = vpop.f32.mrf.mxu0
        %v4329 = vadd.f32 %v4240, %v4328
        %4330 = vmatmul.bf16.gmra.mxu0 %v3807
        %v4331 = vpop.f32.mrf.mxu0
        %v4332 = vadd.f32 %v4243, %v4331
        %v4333 = vpop.f32.mrf.mxu0
        %v4334 = vadd.f32 %v4245, %v4333
        %4335 = vdwg.mxu0
        %4336 = vmatpush.bf16.msra.mxu0 %v4036
        %4337 = vmatpush.bf16.msra.mxu0 %v4035
        %4338 = vmatpush.bf16.msra.mxu0 %v4034
        %4339 = vmatpush.bf16.msra.mxu0 %v4033
        %4340 = vmatpush.bf16.msra.mxu0 %v4032
        %4341 = vmatpush.bf16.msra.mxu0 %v4031
        %4342 = vmatpush.bf16.msra.mxu0 %v4030
        %4343 = vmatpush.bf16.msra.mxu0 %v4029
        %4344 = vmatmul.bf16.gmra.mxu0 %v3748
        %v4345 = vpop.f32.mrf.mxu0
        %v4346 = vadd.f32 %v4257, %v4345
        %v4347 = vpop.f32.mrf.mxu0
        %v4348 = vadd.f32 %v4259, %v4347
        %4349 = vmatmul.bf16.gmra.mxu0 %v3752
        %v4350 = vpop.f32.mrf.mxu0
        %v4351 = vadd.f32 %v4262, %v4350
        %v4352 = vpop.f32.mrf.mxu0
        %v4353 = vadd.f32 %v4264, %v4352
        %4354 = vmatmul.bf16.gmra.mxu0 %v3756
        %v4355 = vpop.f32.mrf.mxu0
        %v4356 = vadd.f32 %v4267, %v4355
        %v4357 = vpop.f32.mrf.mxu0
        %v4358 = vadd.f32 %v4269, %v4357
        %4359 = vmatmul.bf16.gmra.mxu0 %v3760
        %v4360 = vpop.f32.mrf.mxu0
        %v4361 = vadd.f32 %v4272, %v4360
        %v4362 = vpop.f32.mrf.mxu0
        %v4363 = vadd.f32 %v4274, %v4362
        %4364 = vmatmul.bf16.gmra.mxu0 %v3764
        %v4365 = vpop.f32.mrf.mxu0
        %v4366 = vadd.f32 %v4277, %v4365
        %v4367 = vpop.f32.mrf.mxu0
        %v4368 = vadd.f32 %v4279, %v4367
        %4369 = vmatmul.bf16.gmra.mxu0 %v3768
        %v4370 = vpop.f32.mrf.mxu0
        %v4371 = vadd.f32 %v4282, %v4370
        %v4372 = vpop.f32.mrf.mxu0
        %v4373 = vadd.f32 %v4284, %v4372
        %4374 = vmatmul.bf16.gmra.mxu0 %v3772
        %v4375 = vpop.f32.mrf.mxu0
        %v4376 = vadd.f32 %v4287, %v4375
        %v4377 = vpop.f32.mrf.mxu0
        %v4378 = vadd.f32 %v4289, %v4377
        %4379 = vmatmul.bf16.gmra.mxu0 %v3776
        %v4380 = vpop.f32.mrf.mxu0
        %v4381 = vadd.f32 %v4292, %v4380
        %v4382 = vpop.f32.mrf.mxu0
        %v4383 = vadd.f32 %v4294, %v4382
        %4384 = vmatmul.bf16.gmra.mxu0 %v3780
        %v4385 = vpop.f32.mrf.mxu0
        %v4386 = vadd.f32 %v4297, %v4385
        %v4387 = vpop.f32.mrf.mxu0
        %v4388 = vadd.f32 %v4299, %v4387
        %4389 = vmatmul.bf16.gmra.mxu0 %v3784
        %v4390 = vpop.f32.mrf.mxu0
        %v4391 = vadd.f32 %v4302, %v4390
        %v4392 = vpop.f32.mrf.mxu0
        %v4393 = vadd.f32 %v4304, %v4392
        %4394 = vmatmul.bf16.gmra.mxu0 %v3788
        %v4395 = vpop.f32.mrf.mxu0
        %v4396 = vadd.f32 %v4307, %v4395
        %v4397 = vpop.f32.mrf.mxu0
        %v4398 = vadd.f32 %v4309, %v4397
        %4399 = vmatmul.bf16.gmra.mxu0 %v3792
        %v4400 = vpop.f32.mrf.mxu0
        %v4401 = vadd.f32 %v4312, %v4400
        %v4402 = vpop.f32.mrf.mxu0
        %v4403 = vadd.f32 %v4314, %v4402
        %4404 = vmatmul.bf16.gmra.mxu0 %v3796
        %v4405 = vpop.f32.mrf.mxu0
        %v4406 = vadd.f32 %v4317, %v4405
        %v4407 = vpop.f32.mrf.mxu0
        %v4408 = vadd.f32 %v4319, %v4407
        %4409 = vmatmul.bf16.gmra.mxu0 %v3800
        %v4410 = vpop.f32.mrf.mxu0
        %v4411 = vadd.f32 %v4322, %v4410
        %v4412 = vpop.f32.mrf.mxu0
        %v4413 = vadd.f32 %v4324, %v4412
        %4414 = vmatmul.bf16.gmra.mxu0 %v3804
        %v4415 = vpop.f32.mrf.mxu0
        %v4416 = vadd.f32 %v4327, %v4415
        %v4417 = vpop.f32.mrf.mxu0
        %v4418 = vadd.f32 %v4329, %v4417
        %4419 = vmatmul.bf16.gmra.mxu0 %v3808
        %v4420 = vpop.f32.mrf.mxu0
        %v4421 = vadd.f32 %v4332, %v4420
        %v4422 = vpop.f32.mrf.mxu0
        %v4423 = vadd.f32 %v4334, %v4422
        %4424 = vdwg.mxu0
        %4457 = vrot.lane.b32.xlu0 %v4346, 119
        %v4458 = vpop.permute.xlu0 %4457
        %4459 = vrot.lane.b32.xlu0 %v4348, 119
        %v4460 = vpop.permute.xlu0 %4459
        %4461 = vrot.lane.b32.xlu0 %v4351, 119
        %v4462 = vpop.permute.xlu0 %4461
        %4463 = vrot.lane.b32.xlu0 %v4353, 119
        %v4464 = vpop.permute.xlu0 %4463
        %4465 = vrot.lane.b32.xlu0 %v4356, 119
        %v4466 = vpop.permute.xlu0 %4465
        %4467 = vrot.lane.b32.xlu0 %v4358, 119
        %v4468 = vpop.permute.xlu0 %4467
        %4469 = vrot.lane.b32.xlu0 %v4361, 119
        %v4470 = vpop.permute.xlu0 %4469
        %4471 = vrot.lane.b32.xlu0 %v4363, 119
        %v4472 = vpop.permute.xlu0 %4471
        %4473 = vrot.lane.b32.xlu0 %v4366, 119
        %v4474 = vpop.permute.xlu0 %4473
        %4475 = vrot.lane.b32.xlu0 %v4368, 119
        %v4476 = vpop.permute.xlu0 %4475
        %4477 = vrot.lane.b32.xlu0 %v4371, 119
        %v4478 = vpop.permute.xlu0 %4477
        %4479 = vrot.lane.b32.xlu0 %v4373, 119
        %v4480 = vpop.permute.xlu0 %4479
        %4481 = vrot.lane.b32.xlu0 %v4376, 119
        %v4482 = vpop.permute.xlu0 %4481
        %4483 = vrot.lane.b32.xlu0 %v4378, 119
        %v4484 = vpop.permute.xlu0 %4483
        %4485 = vrot.lane.b32.xlu0 %v4381, 119
        %v4486 = vpop.permute.xlu0 %4485
        %4487 = vrot.lane.b32.xlu0 %v4383, 119
        %v4488 = vpop.permute.xlu0 %4487
        %4489 = vrot.lane.b32.xlu0 %v4386, 119
        %v4490 = vpop.permute.xlu0 %4489
        %4491 = vrot.lane.b32.xlu0 %v4388, 119
        %v4492 = vpop.permute.xlu0 %4491
        %4493 = vrot.lane.b32.xlu0 %v4391, 119
        %v4494 = vpop.permute.xlu0 %4493
        %4495 = vrot.lane.b32.xlu0 %v4393, 119
        %v4496 = vpop.permute.xlu0 %4495
        %4497 = vrot.lane.b32.xlu0 %v4396, 119
        %v4498 = vpop.permute.xlu0 %4497
        %4499 = vrot.lane.b32.xlu0 %v4398, 119
        %v4500 = vpop.permute.xlu0 %4499
        %4501 = vrot.lane.b32.xlu0 %v4401, 119
        %v4502 = vpop.permute.xlu0 %4501
        %4503 = vrot.lane.b32.xlu0 %v4403, 119
        %v4504 = vpop.permute.xlu0 %4503
        %4505 = vrot.lane.b32.xlu0 %v4406, 119
        %v4506 = vpop.permute.xlu0 %4505
        %4507 = vrot.lane.b32.xlu0 %v4408, 119
        %v4508 = vpop.permute.xlu0 %4507
        %4509 = vrot.lane.b32.xlu0 %v4411, 119
        %v4510 = vpop.permute.xlu0 %4509
        %4511 = vrot.lane.b32.xlu0 %v4413, 119
        %v4512 = vpop.permute.xlu0 %4511
        %4513 = vrot.lane.b32.xlu0 %v4416, 119
        %v4514 = vpop.permute.xlu0 %4513
        %4515 = vrot.lane.b32.xlu0 %v4418, 119
        %v4516 = vpop.permute.xlu0 %4515
        %4517 = vrot.lane.b32.xlu0 %v4421, 119
        %v4518 = vpop.permute.xlu0 %4517
        %4519 = vrot.lane.b32.xlu0 %v4423, 119
        %v4520 = vpop.permute.xlu0 %4519
        %v4553 = vmax.f32 %v4346, %v4458
        %v4554 = vmax.f32 %v4348, %v4460
        %v4555 = vmax.f32 %v4351, %v4462
        %v4556 = vmax.f32 %v4353, %v4464
        %v4557 = vmax.f32 %v4356, %v4466
        %v4558 = vmax.f32 %v4358, %v4468
        %v4559 = vmax.f32 %v4361, %v4470
        %v4560 = vmax.f32 %v4363, %v4472
        %v4561 = vmax.f32 %v4366, %v4474
        %v4562 = vmax.f32 %v4368, %v4476
        %v4563 = vmax.f32 %v4371, %v4478
        %v4564 = vmax.f32 %v4373, %v4480
        %v4565 = vmax.f32 %v4376, %v4482
        %v4566 = vmax.f32 %v4378, %v4484
        %v4567 = vmax.f32 %v4381, %v4486
        %v4568 = vmax.f32 %v4383, %v4488
        %v4569 = vmax.f32 %v4386, %v4490
        %v4570 = vmax.f32 %v4388, %v4492
        %v4571 = vmax.f32 %v4391, %v4494
        %v4572 = vmax.f32 %v4393, %v4496
        %v4573 = vmax.f32 %v4396, %v4498
        %v4574 = vmax.f32 %v4398, %v4500
        %v4575 = vmax.f32 %v4401, %v4502
        %v4576 = vmax.f32 %v4403, %v4504
        %v4577 = vmax.f32 %v4406, %v4506
        %v4578 = vmax.f32 %v4408, %v4508
        %v4579 = vmax.f32 %v4411, %v4510
        %v4580 = vmax.f32 %v4413, %v4512
        %v4581 = vmax.f32 %v4416, %v4514
        %v4582 = vmax.f32 %v4418, %v4516
        %v4583 = vmax.f32 %v4421, %v4518
        %v4584 = vmax.f32 %v4423, %v4520
        %v4585 = vsub.f32 %v4346, %v4553
        %v4586 = vsub.f32 %v4348, %v4554
        %v4587 = vsub.f32 %v4351, %v4555
        %v4588 = vsub.f32 %v4353, %v4556
        %v4589 = vsub.f32 %v4356, %v4557
        %v4590 = vsub.f32 %v4358, %v4558
        %v4591 = vsub.f32 %v4361, %v4559
        %v4592 = vsub.f32 %v4363, %v4560
        %v4593 = vsub.f32 %v4366, %v4561
        %v4594 = vsub.f32 %v4368, %v4562
        %v4595 = vsub.f32 %v4371, %v4563
        %v4596 = vsub.f32 %v4373, %v4564
        %v4597 = vsub.f32 %v4376, %v4565
        %v4598 = vsub.f32 %v4378, %v4566
        %v4599 = vsub.f32 %v4381, %v4567
        %v4600 = vsub.f32 %v4383, %v4568
        %v4601 = vsub.f32 %v4386, %v4569
        %v4602 = vsub.f32 %v4388, %v4570
        %v4603 = vsub.f32 %v4391, %v4571
        %v4604 = vsub.f32 %v4393, %v4572
        %v4605 = vsub.f32 %v4396, %v4573
        %v4606 = vsub.f32 %v4398, %v4574
        %v4607 = vsub.f32 %v4401, %v4575
        %v4608 = vsub.f32 %v4403, %v4576
        %v4609 = vsub.f32 %v4406, %v4577
        %v4610 = vsub.f32 %v4408, %v4578
        %v4611 = vsub.f32 %v4411, %v4579
        %v4612 = vsub.f32 %v4413, %v4580
        %v4613 = vsub.f32 %v4416, %v4581
        %v4614 = vsub.f32 %v4418, %v4582
        %v4615 = vsub.f32 %v4421, %v4583
        %v4616 = vsub.f32 %v4423, %v4584
        %v4617 = vmul.f32 %v4585, 1.442695
        %v4618 = vpow.pop %v4617
        %v4619 = vmul.f32 %v4586, 1.442695
        %v4620 = vpow.pop %v4619
        %v4621 = vmul.f32 %v4587, 1.442695
        %v4622 = vpow.pop %v4621
        %v4623 = vmul.f32 %v4588, 1.442695
        %v4624 = vpow.pop %v4623
        %v4625 = vmul.f32 %v4589, 1.442695
        %v4626 = vpow.pop %v4625
        %v4627 = vmul.f32 %v4590, 1.442695
        %v4628 = vpow.pop %v4627
        %v4629 = vmul.f32 %v4591, 1.442695
        %v4630 = vpow.pop %v4629
        %v4631 = vmul.f32 %v4592, 1.442695
        %v4632 = vpow.pop %v4631
        %v4633 = vmul.f32 %v4593, 1.442695
        %v4634 = vpow.pop %v4633
        %v4635 = vmul.f32 %v4594, 1.442695
        %v4636 = vpow.pop %v4635
        %v4637 = vmul.f32 %v4595, 1.442695
        %v4638 = vpow.pop %v4637
        %v4639 = vmul.f32 %v4596, 1.442695
        %v4640 = vpow.pop %v4639
        %v4641 = vmul.f32 %v4597, 1.442695
        %v4642 = vpow.pop %v4641
        %v4643 = vmul.f32 %v4598, 1.442695
        %v4644 = vpow.pop %v4643
        %v4645 = vmul.f32 %v4599, 1.442695
        %v4646 = vpow.pop %v4645
        %v4647 = vmul.f32 %v4600, 1.442695
        %v4648 = vpow.pop %v4647
        %v4649 = vmul.f32 %v4601, 1.442695
        %v4650 = vpow.pop %v4649
        %v4651 = vmul.f32 %v4602, 1.442695
        %v4652 = vpow.pop %v4651
        %v4653 = vmul.f32 %v4603, 1.442695
        %v4654 = vpow.pop %v4653
        %v4655 = vmul.f32 %v4604, 1.442695
        %v4656 = vpow.pop %v4655
        %v4657 = vmul.f32 %v4605, 1.442695
        %v4658 = vpow.pop %v4657
        %v4659 = vmul.f32 %v4606, 1.442695
        %v4660 = vpow.pop %v4659
        %v4661 = vmul.f32 %v4607, 1.442695
        %v4662 = vpow.pop %v4661
        %v4663 = vmul.f32 %v4608, 1.442695
        %v4664 = vpow.pop %v4663
        %v4665 = vmul.f32 %v4609, 1.442695
        %v4666 = vpow.pop %v4665
        %v4667 = vmul.f32 %v4610, 1.442695
        %v4668 = vpow.pop %v4667
        %v4669 = vmul.f32 %v4611, 1.442695
        %v4670 = vpow.pop %v4669
        %v4671 = vmul.f32 %v4612, 1.442695
        %v4672 = vpow.pop %v4671
        %v4673 = vmul.f32 %v4613, 1.442695
        %v4674 = vpow.pop %v4673
        %v4675 = vmul.f32 %v4614, 1.442695
        %v4676 = vpow.pop %v4675
        %v4677 = vmul.f32 %v4615, 1.442695
        %v4678 = vpow.pop %v4677
        %v4679 = vmul.f32 %v4616, 1.442695
        %v4680 = vpow.pop %v4679
        %4713 = vrot.lane.b32.xlu0 %v4553, 9
        %v4714 = vpop.permute.xlu0 %4713
        %4715 = vrot.lane.b32.xlu0 %v4554, 9
        %v4716 = vpop.permute.xlu0 %4715
        %4717 = vrot.lane.b32.xlu0 %v4555, 9
        %v4718 = vpop.permute.xlu0 %4717
        %4719 = vrot.lane.b32.xlu0 %v4556, 9
        %v4720 = vpop.permute.xlu0 %4719
        %4721 = vrot.lane.b32.xlu0 %v4557, 9
        %v4722 = vpop.permute.xlu0 %4721
        %4723 = vrot.lane.b32.xlu0 %v4558, 9
        %v4724 = vpop.permute.xlu0 %4723
        %4725 = vrot.lane.b32.xlu0 %v4559, 9
        %v4726 = vpop.permute.xlu0 %4725
        %4727 = vrot.lane.b32.xlu0 %v4560, 9
        %v4728 = vpop.permute.xlu0 %4727
        %4729 = vrot.lane.b32.xlu0 %v4561, 9
        %v4730 = vpop.permute.xlu0 %4729
        %4731 = vrot.lane.b32.xlu0 %v4562, 9
        %v4732 = vpop.permute.xlu0 %4731
        %4733 = vrot.lane.b32.xlu0 %v4563, 9
        %v4734 = vpop.permute.xlu0 %4733
        %4735 = vrot.lane.b32.xlu0 %v4564, 9
        %v4736 = vpop.permute.xlu0 %4735
        %4737 = vrot.lane.b32.xlu0 %v4565, 9
        %v4738 = vpop.permute.xlu0 %4737
        %4739 = vrot.lane.b32.xlu0 %v4566, 9
        %v4740 = vpop.permute.xlu0 %4739
        %4741 = vrot.lane.b32.xlu0 %v4567, 9
        %v4742 = vpop.permute.xlu0 %4741
        %4743 = vrot.lane.b32.xlu0 %v4568, 9
        %v4744 = vpop.permute.xlu0 %4743
        %4745 = vrot.lane.b32.xlu0 %v4569, 9
        %v4746 = vpop.permute.xlu0 %4745
        %4747 = vrot.lane.b32.xlu0 %v4570, 9
        %v4748 = vpop.permute.xlu0 %4747
        %4749 = vrot.lane.b32.xlu0 %v4571, 9
        %v4750 = vpop.permute.xlu0 %4749
        %4751 = vrot.lane.b32.xlu0 %v4572, 9
        %v4752 = vpop.permute.xlu0 %4751
        %4753 = vrot.lane.b32.xlu0 %v4573, 9
        %v4754 = vpop.permute.xlu0 %4753
        %4755 = vrot.lane.b32.xlu0 %v4574, 9
        %v4756 = vpop.permute.xlu0 %4755
        %4757 = vrot.lane.b32.xlu0 %v4575, 9
        %v4758 = vpop.permute.xlu0 %4757
        %4759 = vrot.lane.b32.xlu0 %v4576, 9
        %v4760 = vpop.permute.xlu0 %4759
        %4761 = vrot.lane.b32.xlu0 %v4577, 9
        %v4762 = vpop.permute.xlu0 %4761
        %4763 = vrot.lane.b32.xlu0 %v4578, 9
        %v4764 = vpop.permute.xlu0 %4763
        %4765 = vrot.lane.b32.xlu0 %v4579, 9
        %v4766 = vpop.permute.xlu0 %4765
        %4767 = vrot.lane.b32.xlu0 %v4580, 9
        %v4768 = vpop.permute.xlu0 %4767
        %4769 = vrot.lane.b32.xlu0 %v4581, 9
        %v4770 = vpop.permute.xlu0 %4769
        %4771 = vrot.lane.b32.xlu0 %v4582, 9
        %v4772 = vpop.permute.xlu0 %4771
        %4773 = vrot.lane.b32.xlu0 %v4583, 9
        %v4774 = vpop.permute.xlu0 %4773
        %4775 = vrot.lane.b32.xlu0 %v4584, 9
        %v4776 = vpop.permute.xlu0 %4775
        %v4809 = vsub.f32 %v4346, %v4714
        %v4810 = vsub.f32 %v4348, %v4716
        %v4811 = vsub.f32 %v4351, %v4718
        %v4812 = vsub.f32 %v4353, %v4720
        %v4813 = vsub.f32 %v4356, %v4722
        %v4814 = vsub.f32 %v4358, %v4724
        %v4815 = vsub.f32 %v4361, %v4726
        %v4816 = vsub.f32 %v4363, %v4728
        %v4817 = vsub.f32 %v4366, %v4730
        %v4818 = vsub.f32 %v4368, %v4732
        %v4819 = vsub.f32 %v4371, %v4734
        %v4820 = vsub.f32 %v4373, %v4736
        %v4821 = vsub.f32 %v4376, %v4738
        %v4822 = vsub.f32 %v4378, %v4740
        %v4823 = vsub.f32 %v4381, %v4742
        %v4824 = vsub.f32 %v4383, %v4744
        %v4825 = vsub.f32 %v4386, %v4746
        %v4826 = vsub.f32 %v4388, %v4748
        %v4827 = vsub.f32 %v4391, %v4750
        %v4828 = vsub.f32 %v4393, %v4752
        %v4829 = vsub.f32 %v4396, %v4754
        %v4830 = vsub.f32 %v4398, %v4756
        %v4831 = vsub.f32 %v4401, %v4758
        %v4832 = vsub.f32 %v4403, %v4760
        %v4833 = vsub.f32 %v4406, %v4762
        %v4834 = vsub.f32 %v4408, %v4764
        %v4835 = vsub.f32 %v4411, %v4766
        %v4836 = vsub.f32 %v4413, %v4768
        %v4837 = vsub.f32 %v4416, %v4770
        %v4838 = vsub.f32 %v4418, %v4772
        %v4839 = vsub.f32 %v4421, %v4774
        %v4840 = vsub.f32 %v4423, %v4776
        %v4841 = vmul.f32 %v4809, 1.442695
        %v4842 = vpow.pop %v4841
        %v4843 = vmul.f32 %v4810, 1.442695
        %v4844 = vpow.pop %v4843
        %v4845 = vmul.f32 %v4811, 1.442695
        %v4846 = vpow.pop %v4845
        %v4847 = vmul.f32 %v4812, 1.442695
        %v4848 = vpow.pop %v4847
        %v4849 = vmul.f32 %v4813, 1.442695
        %v4850 = vpow.pop %v4849
        %v4851 = vmul.f32 %v4814, 1.442695
        %v4852 = vpow.pop %v4851
        %v4853 = vmul.f32 %v4815, 1.442695
        %v4854 = vpow.pop %v4853
        %v4855 = vmul.f32 %v4816, 1.442695
        %v4856 = vpow.pop %v4855
        %v4857 = vmul.f32 %v4817, 1.442695
        %v4858 = vpow.pop %v4857
        %v4859 = vmul.f32 %v4818, 1.442695
        %v4860 = vpow.pop %v4859
        %v4861 = vmul.f32 %v4819, 1.442695
        %v4862 = vpow.pop %v4861
        %v4863 = vmul.f32 %v4820, 1.442695
        %v4864 = vpow.pop %v4863
        %v4865 = vmul.f32 %v4821, 1.442695
        %v4866 = vpow.pop %v4865
        %v4867 = vmul.f32 %v4822, 1.442695
        %v4868 = vpow.pop %v4867
        %v4869 = vmul.f32 %v4823, 1.442695
        %v4870 = vpow.pop %v4869
        %v4871 = vmul.f32 %v4824, 1.442695
        %v4872 = vpow.pop %v4871
        %v4873 = vmul.f32 %v4825, 1.442695
        %v4874 = vpow.pop %v4873
        %v4875 = vmul.f32 %v4826, 1.442695
        %v4876 = vpow.pop %v4875
        %v4877 = vmul.f32 %v4827, 1.442695
        %v4878 = vpow.pop %v4877
        %v4879 = vmul.f32 %v4828, 1.442695
        %v4880 = vpow.pop %v4879
        %v4881 = vmul.f32 %v4829, 1.442695
        %v4882 = vpow.pop %v4881
        %v4883 = vmul.f32 %v4830, 1.442695
        %v4884 = vpow.pop %v4883
        %v4885 = vmul.f32 %v4831, 1.442695
        %v4886 = vpow.pop %v4885
        %v4887 = vmul.f32 %v4832, 1.442695
        %v4888 = vpow.pop %v4887
        %v4889 = vmul.f32 %v4833, 1.442695
        %v4890 = vpow.pop %v4889
        %v4891 = vmul.f32 %v4834, 1.442695
        %v4892 = vpow.pop %v4891
        %v4893 = vmul.f32 %v4835, 1.442695
        %v4894 = vpow.pop %v4893
        %v4895 = vmul.f32 %v4836, 1.442695
        %v4896 = vpow.pop %v4895
        %v4897 = vmul.f32 %v4837, 1.442695
        %v4898 = vpow.pop %v4897
        %v4899 = vmul.f32 %v4838, 1.442695
        %v4900 = vpow.pop %v4899
        %v4901 = vmul.f32 %v4839, 1.442695
        %v4902 = vpow.pop %v4901
        %v4903 = vmul.f32 %v4840, 1.442695
        %v4904 = vpow.pop %v4903
        %4937 = vrot.lane.b32.xlu0 %v4842, 119
        %v4938 = vpop.permute.xlu0 %4937
        %4939 = vrot.lane.b32.xlu0 %v4844, 119
        %v4940 = vpop.permute.xlu0 %4939
        %4941 = vrot.lane.b32.xlu0 %v4846, 119
        %v4942 = vpop.permute.xlu0 %4941
        %4943 = vrot.lane.b32.xlu0 %v4848, 119
        %v4944 = vpop.permute.xlu0 %4943
        %4945 = vrot.lane.b32.xlu0 %v4850, 119
        %v4946 = vpop.permute.xlu0 %4945
        %4947 = vrot.lane.b32.xlu0 %v4852, 119
        %v4948 = vpop.permute.xlu0 %4947
        %4949 = vrot.lane.b32.xlu0 %v4854, 119
        %v4950 = vpop.permute.xlu0 %4949
        %4951 = vrot.lane.b32.xlu0 %v4856, 119
        %v4952 = vpop.permute.xlu0 %4951
        %4953 = vrot.lane.b32.xlu0 %v4858, 119
        %v4954 = vpop.permute.xlu0 %4953
        %4955 = vrot.lane.b32.xlu0 %v4860, 119
        %v4956 = vpop.permute.xlu0 %4955
        %4957 = vrot.lane.b32.xlu0 %v4862, 119
        %v4958 = vpop.permute.xlu0 %4957
        %4959 = vrot.lane.b32.xlu0 %v4864, 119
        %v4960 = vpop.permute.xlu0 %4959
        %4961 = vrot.lane.b32.xlu0 %v4866, 119
        %v4962 = vpop.permute.xlu0 %4961
        %4963 = vrot.lane.b32.xlu0 %v4868, 119
        %v4964 = vpop.permute.xlu0 %4963
        %4965 = vrot.lane.b32.xlu0 %v4870, 119
        %v4966 = vpop.permute.xlu0 %4965
        %4967 = vrot.lane.b32.xlu0 %v4872, 119
        %v4968 = vpop.permute.xlu0 %4967
        %4969 = vrot.lane.b32.xlu0 %v4874, 119
        %v4970 = vpop.permute.xlu0 %4969
        %4971 = vrot.lane.b32.xlu0 %v4876, 119
        %v4972 = vpop.permute.xlu0 %4971
        %4973 = vrot.lane.b32.xlu0 %v4878, 119
        %v4974 = vpop.permute.xlu0 %4973
        %4975 = vrot.lane.b32.xlu0 %v4880, 119
        %v4976 = vpop.permute.xlu0 %4975
        %4977 = vrot.lane.b32.xlu0 %v4882, 119
        %v4978 = vpop.permute.xlu0 %4977
        %4979 = vrot.lane.b32.xlu0 %v4884, 119
        %v4980 = vpop.permute.xlu0 %4979
        %4981 = vrot.lane.b32.xlu0 %v4886, 119
        %v4982 = vpop.permute.xlu0 %4981
        %4983 = vrot.lane.b32.xlu0 %v4888, 119
        %v4984 = vpop.permute.xlu0 %4983
        %4985 = vrot.lane.b32.xlu0 %v4890, 119
        %v4986 = vpop.permute.xlu0 %4985
        %4987 = vrot.lane.b32.xlu0 %v4892, 119
        %v4988 = vpop.permute.xlu0 %4987
        %4989 = vrot.lane.b32.xlu0 %v4894, 119
        %v4990 = vpop.permute.xlu0 %4989
        %4991 = vrot.lane.b32.xlu0 %v4896, 119
        %v4992 = vpop.permute.xlu0 %4991
        %4993 = vrot.lane.b32.xlu0 %v4898, 119
        %v4994 = vpop.permute.xlu0 %4993
        %4995 = vrot.lane.b32.xlu0 %v4900, 119
        %v4996 = vpop.permute.xlu0 %4995
        %4997 = vrot.lane.b32.xlu0 %v4902, 119
        %v4998 = vpop.permute.xlu0 %4997
        %4999 = vrot.lane.b32.xlu0 %v4904, 119
        %v5000 = vpop.permute.xlu0 %4999
        %v5033 = vadd.f32 %v4618, %v4938
        %v5034 = vadd.f32 %v4620, %v4940
        %v5035 = vadd.f32 %v4622, %v4942
        %v5036 = vadd.f32 %v4624, %v4944
        %v5037 = vadd.f32 %v4626, %v4946
        %v5038 = vadd.f32 %v4628, %v4948
        %v5039 = vadd.f32 %v4630, %v4950
        %v5040 = vadd.f32 %v4632, %v4952
        %v5041 = vadd.f32 %v4634, %v4954
        %v5042 = vadd.f32 %v4636, %v4956
        %v5043 = vadd.f32 %v4638, %v4958
        %v5044 = vadd.f32 %v4640, %v4960
        %v5045 = vadd.f32 %v4642, %v4962
        %v5046 = vadd.f32 %v4644, %v4964
        %v5047 = vadd.f32 %v4646, %v4966
        %v5048 = vadd.f32 %v4648, %v4968
        %v5049 = vadd.f32 %v4650, %v4970
        %v5050 = vadd.f32 %v4652, %v4972
        %v5051 = vadd.f32 %v4654, %v4974
        %v5052 = vadd.f32 %v4656, %v4976
        %v5053 = vadd.f32 %v4658, %v4978
        %v5054 = vadd.f32 %v4660, %v4980
        %v5055 = vadd.f32 %v4662, %v4982
        %v5056 = vadd.f32 %v4664, %v4984
        %v5057 = vadd.f32 %v4666, %v4986
        %v5058 = vadd.f32 %v4668, %v4988
        %v5059 = vadd.f32 %v4670, %v4990
        %v5060 = vadd.f32 %v4672, %v4992
        %v5061 = vadd.f32 %v4674, %v4994
        %v5062 = vadd.f32 %v4676, %v4996
        %v5063 = vadd.f32 %v4678, %v4998
        %v5064 = vadd.f32 %v4680, %v5000
        %v5065 = vrcp.pop %v5033
        %v5066 = vrcp.pop %v5034
        %v5067 = vrcp.pop %v5035
        %v5068 = vrcp.pop %v5036
        %v5069 = vrcp.pop %v5037
        %v5070 = vrcp.pop %v5038
        %v5071 = vrcp.pop %v5039
        %v5072 = vrcp.pop %v5040
        %v5073 = vrcp.pop %v5041
        %v5074 = vrcp.pop %v5042
        %v5075 = vrcp.pop %v5043
        %v5076 = vrcp.pop %v5044
        %v5077 = vrcp.pop %v5045
        %v5078 = vrcp.pop %v5046
        %v5079 = vrcp.pop %v5047
        %v5080 = vrcp.pop %v5048
        %v5081 = vrcp.pop %v5049
        %v5082 = vrcp.pop %v5050
        %v5083 = vrcp.pop %v5051
        %v5084 = vrcp.pop %v5052
        %v5085 = vrcp.pop %v5053
        %v5086 = vrcp.pop %v5054
        %v5087 = vrcp.pop %v5055
        %v5088 = vrcp.pop %v5056
        %v5089 = vrcp.pop %v5057
        %v5090 = vrcp.pop %v5058
        %v5091 = vrcp.pop %v5059
        %v5092 = vrcp.pop %v5060
        %v5093 = vrcp.pop %v5061
        %v5094 = vrcp.pop %v5062
        %v5095 = vrcp.pop %v5063
        %v5096 = vrcp.pop %v5064
        %v5097 = vmul.f32 %v4618, %v5065
        %v5098 = vmul.f32 %v4620, %v5066
        %v5099 = vmul.f32 %v4622, %v5067
        %v5100 = vmul.f32 %v4624, %v5068
        %v5101 = vmul.f32 %v4626, %v5069
        %v5102 = vmul.f32 %v4628, %v5070
        %v5103 = vmul.f32 %v4630, %v5071
        %v5104 = vmul.f32 %v4632, %v5072
        %v5105 = vmul.f32 %v4634, %v5073
        %v5106 = vmul.f32 %v4636, %v5074
        %v5107 = vmul.f32 %v4638, %v5075
        %v5108 = vmul.f32 %v4640, %v5076
        %v5109 = vmul.f32 %v4642, %v5077
        %v5110 = vmul.f32 %v4644, %v5078
        %v5111 = vmul.f32 %v4646, %v5079
        %v5112 = vmul.f32 %v4648, %v5080
        %v5113 = vmul.f32 %v4650, %v5081
        %v5114 = vmul.f32 %v4652, %v5082
        %v5115 = vmul.f32 %v4654, %v5083
        %v5116 = vmul.f32 %v4656, %v5084
        %v5117 = vmul.f32 %v4658, %v5085
        %v5118 = vmul.f32 %v4660, %v5086
        %v5119 = vmul.f32 %v4662, %v5087
        %v5120 = vmul.f32 %v4664, %v5088
        %v5121 = vmul.f32 %v4666, %v5089
        %v5122 = vmul.f32 %v4668, %v5090
        %v5123 = vmul.f32 %v4670, %v5091
        %v5124 = vmul.f32 %v4672, %v5092
        %v5125 = vmul.f32 %v4674, %v5093
        %v5126 = vmul.f32 %v4676, %v5094
        %v5127 = vmul.f32 %v4678, %v5095
        %v5128 = vmul.f32 %v4680, %v5096
        %5161 = vrot.lane.b32.xlu0 %v5065, 9
        %v5162 = vpop.permute.xlu0 %5161
        %5163 = vrot.lane.b32.xlu0 %v5066, 9
        %v5164 = vpop.permute.xlu0 %5163
        %5165 = vrot.lane.b32.xlu0 %v5067, 9
        %v5166 = vpop.permute.xlu0 %5165
        %5167 = vrot.lane.b32.xlu0 %v5068, 9
        %v5168 = vpop.permute.xlu0 %5167
        %5169 = vrot.lane.b32.xlu0 %v5069, 9
        %v5170 = vpop.permute.xlu0 %5169
        %5171 = vrot.lane.b32.xlu0 %v5070, 9
        %v5172 = vpop.permute.xlu0 %5171
        %5173 = vrot.lane.b32.xlu0 %v5071, 9
        %v5174 = vpop.permute.xlu0 %5173
        %5175 = vrot.lane.b32.xlu0 %v5072, 9
        %v5176 = vpop.permute.xlu0 %5175
        %5177 = vrot.lane.b32.xlu0 %v5073, 9
        %v5178 = vpop.permute.xlu0 %5177
        %5179 = vrot.lane.b32.xlu0 %v5074, 9
        %v5180 = vpop.permute.xlu0 %5179
        %5181 = vrot.lane.b32.xlu0 %v5075, 9
        %v5182 = vpop.permute.xlu0 %5181
        %5183 = vrot.lane.b32.xlu0 %v5076, 9
        %v5184 = vpop.permute.xlu0 %5183
        %5185 = vrot.lane.b32.xlu0 %v5077, 9
        %v5186 = vpop.permute.xlu0 %5185
        %5187 = vrot.lane.b32.xlu0 %v5078, 9
        %v5188 = vpop.permute.xlu0 %5187
        %5189 = vrot.lane.b32.xlu0 %v5079, 9
        %v5190 = vpop.permute.xlu0 %5189
        %5191 = vrot.lane.b32.xlu0 %v5080, 9
        %v5192 = vpop.permute.xlu0 %5191
        %5193 = vrot.lane.b32.xlu0 %v5081, 9
        %v5194 = vpop.permute.xlu0 %5193
        %5195 = vrot.lane.b32.xlu0 %v5082, 9
        %v5196 = vpop.permute.xlu0 %5195
        %5197 = vrot.lane.b32.xlu0 %v5083, 9
        %v5198 = vpop.permute.xlu0 %5197
        %5199 = vrot.lane.b32.xlu0 %v5084, 9
        %v5200 = vpop.permute.xlu0 %5199
        %5201 = vrot.lane.b32.xlu0 %v5085, 9
        %v5202 = vpop.permute.xlu0 %5201
        %5203 = vrot.lane.b32.xlu0 %v5086, 9
        %v5204 = vpop.permute.xlu0 %5203
        %5205 = vrot.lane.b32.xlu0 %v5087, 9
        %v5206 = vpop.permute.xlu0 %5205
        %5207 = vrot.lane.b32.xlu0 %v5088, 9
        %v5208 = vpop.permute.xlu0 %5207
        %5209 = vrot.lane.b32.xlu0 %v5089, 9
        %v5210 = vpop.permute.xlu0 %5209
        %5211 = vrot.lane.b32.xlu0 %v5090, 9
        %v5212 = vpop.permute.xlu0 %5211
        %5213 = vrot.lane.b32.xlu0 %v5091, 9
        %v5214 = vpop.permute.xlu0 %5213
        %5215 = vrot.lane.b32.xlu0 %v5092, 9
        %v5216 = vpop.permute.xlu0 %5215
        %5217 = vrot.lane.b32.xlu0 %v5093, 9
        %v5218 = vpop.permute.xlu0 %5217
        %5219 = vrot.lane.b32.xlu0 %v5094, 9
        %v5220 = vpop.permute.xlu0 %5219
        %5221 = vrot.lane.b32.xlu0 %v5095, 9
        %v5222 = vpop.permute.xlu0 %5221
        %5223 = vrot.lane.b32.xlu0 %v5096, 9
        %v5224 = vpop.permute.xlu0 %5223
        %v5257 = vmul.f32 %v4842, %v5162
        %v5258 = vmul.f32 %v4844, %v5164
        %v5259 = vmul.f32 %v4846, %v5166
        %v5260 = vmul.f32 %v4848, %v5168
        %v5261 = vmul.f32 %v4850, %v5170
        %v5262 = vmul.f32 %v4852, %v5172
        %v5263 = vmul.f32 %v4854, %v5174
        %v5264 = vmul.f32 %v4856, %v5176
        %v5265 = vmul.f32 %v4858, %v5178
        %v5266 = vmul.f32 %v4860, %v5180
        %v5267 = vmul.f32 %v4862, %v5182
        %v5268 = vmul.f32 %v4864, %v5184
        %v5269 = vmul.f32 %v4866, %v5186
        %v5270 = vmul.f32 %v4868, %v5188
        %v5271 = vmul.f32 %v4870, %v5190
        %v5272 = vmul.f32 %v4872, %v5192
        %v5273 = vmul.f32 %v4874, %v5194
        %v5274 = vmul.f32 %v4876, %v5196
        %v5275 = vmul.f32 %v4878, %v5198
        %v5276 = vmul.f32 %v4880, %v5200
        %v5277 = vmul.f32 %v4882, %v5202
        %v5278 = vmul.f32 %v4884, %v5204
        %v5279 = vmul.f32 %v4886, %v5206
        %v5280 = vmul.f32 %v4888, %v5208
        %v5281 = vmul.f32 %v4890, %v5210
        %v5282 = vmul.f32 %v4892, %v5212
        %v5283 = vmul.f32 %v4894, %v5214
        %v5284 = vmul.f32 %v4896, %v5216
        %v5285 = vmul.f32 %v4898, %v5218
        %v5286 = vmul.f32 %v4900, %v5220
        %v5287 = vmul.f32 %v4902, %v5222
        %v5288 = vmul.f32 %v4904, %v5224
        %vm5289 = vcmask 72704
        %v5290 = vsel %vm5289, %v5097, %v5257
        %v5291 = vsel %vm5289, %v5098, %v5258
        %v5292 = vsel %vm5289, %v5099, %v5259
        %v5293 = vsel %vm5289, %v5100, %v5260
        %v5294 = vsel %vm5289, %v5101, %v5261
        %v5295 = vsel %vm5289, %v5102, %v5262
        %v5296 = vsel %vm5289, %v5103, %v5263
        %v5297 = vsel %vm5289, %v5104, %v5264
        %v5298 = vsel %vm5289, %v5105, %v5265
        %v5299 = vsel %vm5289, %v5106, %v5266
        %v5300 = vsel %vm5289, %v5107, %v5267
        %v5301 = vsel %vm5289, %v5108, %v5268
        %v5302 = vsel %vm5289, %v5109, %v5269
        %v5303 = vsel %vm5289, %v5110, %v5270
        %v5304 = vsel %vm5289, %v5111, %v5271
        %v5305 = vsel %vm5289, %v5112, %v5272
        %v5306 = vsel %vm5289, %v5113, %v5273
        %v5307 = vsel %vm5289, %v5114, %v5274
        %v5308 = vsel %vm5289, %v5115, %v5275
        %v5309 = vsel %vm5289, %v5116, %v5276
        %v5310 = vsel %vm5289, %v5117, %v5277
        %v5311 = vsel %vm5289, %v5118, %v5278
        %v5312 = vsel %vm5289, %v5119, %v5279
        %v5313 = vsel %vm5289, %v5120, %v5280
        %v5314 = vsel %vm5289, %v5121, %v5281
        %v5315 = vsel %vm5289, %v5122, %v5282
        %v5316 = vsel %vm5289, %v5123, %v5283
        %v5317 = vsel %vm5289, %v5124, %v5284
        %v5318 = vsel %vm5289, %v5125, %v5285
        %v5319 = vsel %vm5289, %v5126, %v5286
        %v5320 = vsel %vm5289, %v5127, %v5287
        %v5321 = vsel %vm5289, %v5128, %v5288
        %vm5322 = vcmask 146432
        %v5323 = vsel %vm5322, %v5290, %v4346
        %v5324 = vsel %vm5322, %v5291, %v4348
        %v5325 = vsel %vm5322, %v5292, %v4351
        %v5326 = vsel %vm5322, %v5293, %v4353
        %v5327 = vsel %vm5322, %v5294, %v4356
        %v5328 = vsel %vm5322, %v5295, %v4358
        %v5329 = vsel %vm5322, %v5296, %v4361
        %v5330 = vsel %vm5322, %v5297, %v4363
        %v5331 = vsel %vm5322, %v5298, %v4366
        %v5332 = vsel %vm5322, %v5299, %v4368
        %v5333 = vsel %vm5322, %v5300, %v4371
        %v5334 = vsel %vm5322, %v5301, %v4373
        %v5335 = vsel %vm5322, %v5302, %v4376
        %v5336 = vsel %vm5322, %v5303, %v4378
        %v5337 = vsel %vm5322, %v5304, %v4381
        %v5338 = vsel %vm5322, %v5305, %v4383
        %v5339 = vsel %vm5322, %v5306, %v4386
        %v5340 = vsel %vm5322, %v5307, %v4388
        %v5341 = vsel %vm5322, %v5308, %v4391
        %v5342 = vsel %vm5322, %v5309, %v4393
        %v5343 = vsel %vm5322, %v5310, %v4396
        %v5344 = vsel %vm5322, %v5311, %v4398
        %v5345 = vsel %vm5322, %v5312, %v4401
        %v5346 = vsel %vm5322, %v5313, %v4403
        %v5347 = vsel %vm5322, %v5314, %v4406
        %v5348 = vsel %vm5322, %v5315, %v4408
        %v5349 = vsel %vm5322, %v5316, %v4411
        %v5350 = vsel %vm5322, %v5317, %v4413
        %v5351 = vsel %vm5322, %v5318, %v4416
        %v5352 = vsel %vm5322, %v5319, %v4418
        %v5353 = vsel %vm5322, %v5320, %v4421
        %v5354 = vsel %vm5322, %v5321, %v4423
        %v5355 = vpack.c.bf16 %v5323, %v5323
        %v5356 = vpack.c.bf16 %v5324, %v5324
        %v5357 = vpack.c.bf16 %v5325, %v5325
        %v5358 = vpack.c.bf16 %v5326, %v5326
        %v5359 = vpack.c.bf16 %v5327, %v5327
        %v5360 = vpack.c.bf16 %v5328, %v5328
        %v5361 = vpack.c.bf16 %v5329, %v5329
        %v5362 = vpack.c.bf16 %v5330, %v5330
        %v5363 = vpack.c.bf16 %v5331, %v5331
        %v5364 = vpack.c.bf16 %v5332, %v5332
        %v5365 = vpack.c.bf16 %v5333, %v5333
        %v5366 = vpack.c.bf16 %v5334, %v5334
        %v5367 = vpack.c.bf16 %v5335, %v5335
        %v5368 = vpack.c.bf16 %v5336, %v5336
        %v5369 = vpack.c.bf16 %v5337, %v5337
        %v5370 = vpack.c.bf16 %v5338, %v5338
        %v5371 = vpack.c.bf16 %v5339, %v5339
        %v5372 = vpack.c.bf16 %v5340, %v5340
        %v5373 = vpack.c.bf16 %v5341, %v5341
        %v5374 = vpack.c.bf16 %v5342, %v5342
        %v5375 = vpack.c.bf16 %v5343, %v5343
        %v5376 = vpack.c.bf16 %v5344, %v5344
        %v5377 = vpack.c.bf16 %v5345, %v5345
        %v5378 = vpack.c.bf16 %v5346, %v5346
        %v5379 = vpack.c.bf16 %v5347, %v5347
        %v5380 = vpack.c.bf16 %v5348, %v5348
        %v5381 = vpack.c.bf16 %v5349, %v5349
        %v5382 = vpack.c.bf16 %v5350, %v5350
        %v5383 = vpack.c.bf16 %v5351, %v5351
        %v5384 = vpack.c.bf16 %v5352, %v5352
        %v5385 = vpack.c.bf16 %v5353, %v5353
        %v5386 = vpack.c.bf16 %v5354, %v5354
        %5387 = vst [vmem:[%s231] sm:$0xf] %v5355
        %5388 = vst [vmem:[%s231 + $0x4] sm:$0xf] %v5356
        %5389 = vst [vmem:[%s231 + $0x8] sm:$0xf] %v5357
        %5390 = vst [vmem:[%s231 + $0xc] sm:$0xf] %v5358
        %5391 = vst [vmem:[%s231 + $0x10] sm:$0xf] %v5359
        %5392 = vst [vmem:[%s231 + $0x14] sm:$0xf] %v5360
        %5393 = vst [vmem:[%s231 + $0x18] sm:$0xf] %v5361
        %5394 = vst [vmem:[%s231 + $0x1c] sm:$0xf] %v5362
        %5395 = vst [vmem:[%s231 + $0x20] sm:$0xf] %v5363
        %5396 = vst [vmem:[%s231 + $0x24] sm:$0xf] %v5364
        %5397 = vst [vmem:[%s231 + $0x28] sm:$0xf] %v5365
        %5398 = vst [vmem:[%s231 + $0x2c] sm:$0xf] %v5366
        %5399 = vst [vmem:[%s231 + $0x30] sm:$0xf] %v5367
        %5400 = vst [vmem:[%s231 + $0x34] sm:$0xf] %v5368
        %5401 = vst [vmem:[%s231 + $0x38] sm:$0xf] %v5369
        %5402 = vst [vmem:[%s231 + $0x3c] sm:$0xf] %v5370
        %5403 = vst [vmem:[%s231 + $0x40] sm:$0xf] %v5371
        %5404 = vst [vmem:[%s231 + $0x44] sm:$0xf] %v5372
        %5405 = vst [vmem:[%s231 + $0x48] sm:$0xf] %v5373
        %5406 = vst [vmem:[%s231 + $0x4c] sm:$0xf] %v5374
        %5407 = vst [vmem:[%s231 + $0x50] sm:$0xf] %v5375
        %5408 = vst [vmem:[%s231 + $0x54] sm:$0xf] %v5376
        %5409 = vst [vmem:[%s231 + $0x58] sm:$0xf] %v5377
        %5410 = vst [vmem:[%s231 + $0x5c] sm:$0xf] %v5378
        %5411 = vst [vmem:[%s231 + $0x60] sm:$0xf] %v5379
        %5412 = vst [vmem:[%s231 + $0x64] sm:$0xf] %v5380
        %5413 = vst [vmem:[%s231 + $0x68] sm:$0xf] %v5381
        %5414 = vst [vmem:[%s231 + $0x6c] sm:$0xf] %v5382
        %5415 = vst [vmem:[%s231 + $0x70] sm:$0xf] %v5383
        %5416 = vst [vmem:[%s231 + $0x74] sm:$0xf] %v5384
        %5417 = vst [vmem:[%s231 + $0x78] sm:$0xf] %v5385
        %5418 = vst [vmem:[%s231 + $0x7c] sm:$0xf] %v5386
        %s5419 = sand.u32 %s151, 1
        %s5420 = scalar_lea.sflag [#allocation3], %s5419
        %s5421 = sand.u32 %s151, 1
        %s5422 = smul.addr %s5421, 128
        %s5423 = scalar_lea.vmem [#allocation2], %s5422
        // Predicated region
        $region41: #{tpu_custom_call.1} parent=39 // pred_check
          %p5424 = pneg %p161
        $region42: #{tpu_custom_call.1} parent=39 // pred_check_branch
          %5426 = sbr.rel (%p5424) target = $region44
        $region43: #{tpu_custom_call.1} parent=39 // pred_region
          %s5427 = smul.u32 32, %s24
          %5429 = vsyncadd %s5420, 0
          %s5430 = smul.addr %s23, 32
          %s5431 = sadd.s32 %s5427, %s5430
          %s5432 = smul.addr %s5431, 4
          %s5433 = scalar_lea.hbm %s5, %s5432
          %s5434 = sshll.u32 %s5423, 4
          %s5435 = int_to_ptr.vmem [resolvable:$true] %s5434
          %s5436 = sshll.u32 %s5433, 4
          %s5437 = int_to_ptr.hbm [resolvable:$true] %s5436
          %5442 = dma.vmem_to_hbm [thread:$0]  %s5435, 2048, %s5437, %s5420, 64, 64, 4
        $region44: #{tpu_custom_call.1} parent=39 // pred_fallthru
          _
      $region40: #{tpu_custom_call.1} parent=5 // pred_fallthru
        _
      %p5443 = scmp.le.s32.totalorder 2, %s14
      // Predicated region
      $region45: #{tpu_custom_call.1} parent=5 // pred_check
        %p5444 = pneg %p5443
      $region46: #{tpu_custom_call.1} parent=5 // pred_check_branch
        %5446 = sbr.rel (%p5444) target = $region48
      $region47: #{tpu_custom_call.1} parent=5 // pred_region
        %s5447 = ssub.s32 %s14, 2
        // Predicated region
        $region49: #{tpu_custom_call.1} parent=47 // pred_check
          %p5448 = pneg %p167
        $region50: #{tpu_custom_call.1} parent=47 // pred_check_branch
          %5450 = sbr.rel (%p5448) target = $region52
        $region51: #{tpu_custom_call.1} parent=47 // pred_region
          %s5451 = sand.u32 %s152, 1
          %s5452 = scalar_lea.sflag [#allocation3], %s5451
          %s5453 = sand.u32 %s152, 1
          %s5454 = smul.addr %s5453, 128
          %s5455 = scalar_lea.vmem [#allocation2], %s5454
          %5457 = dma.done %s5452, 2048
        $region52: #{tpu_custom_call.1} parent=47 // pred_fallthru
          _
      $region48: #{tpu_custom_call.1} parent=5 // pred_fallthru
        _
    $region6: #{tpu_custom_call.1} parent=1 // loop_footer
      %s18 = sadd.s32 1, %s14
    $region7: #{tpu_custom_call.1} parent=1 // loop_footer_branch
      %13 = sbr.rel target = $region3
    $region8: #{tpu_custom_call.1} parent=1 // loop_exit
      _
    %5458 = vsyncpa [#allocation3], 1
    %s5459 = scalar_lea.sflag [#allocation3], 1
    %5460 = vsyncpa %s5459, 1

// kernel: tpu_custom_call.1
$region0: #{tpu_custom_call.1}
  #allocation0 [shape = 'u32[]', space=smem, size = 0x4, offset = 0x4, fixed_abs, tag = 'smem constant byte address 0x4 - core index']
  #allocation1 [shape = 'u32[72,128]{1,0:T(1,128)}', space=vmem, size = 0x9000, scoped, tag = 'internal scratch']
  %s0 = inlined_call_operand.vmem [shape: bf16[2,18,18,8], index: 0, kind: input, shape index: {}]
  %s1 = inlined_call_operand.vmem [shape: bf16[72,512], index: 1, kind: input, shape index: {}]
  %s2 = inlined_call_operand.vmem [shape: f32[1,512], index: 2, kind: input, shape index: {}]
  %s3 = inlined_call_operand.vmem [shape: bf16[512,128], index: 3, kind: input, shape index: {}]
  %s4 = inlined_call_operand.vmem [shape: f32[1,128], index: 4, kind: input, shape index: {}]
  %s5 = inlined_call_operand.hbm [shape: bf16[2,256,128], index: 5, kind: output, shape index: {}]
  %s6 = sld [smem:[#allocation0]]
  $region53: #{tpu_custom_call.1} parent=0
    _
  %s8 = ssub.s32 1, %s6
  %s9 = scalar_select 0, %s8, %s6
  $region1: #{tpu_custom_call.1} parent=0
    #allocation2 [shape = 'u8[131072]{0}', space=vmem, size = 0x20000, scoped, tag = 'output window, operand 0']
    #allocation3 [shape = 's32[2]{0}', space=sflag, size = 0x8, scoped, tag = 'scoped memory for tpu_custom_call.1']
    %10 = vsyncpa [#allocation3], 0
    %s11 = scalar_lea.sflag [#allocation3], 1
    %12 = vsyncpa %s11, 0
    loop: start=0, step=1, limit=4
    $region2: #{tpu_custom_call.1} parent=1 // loop_pre_header
      _
    $region3: #{tpu_custom_call.1} parent=1 // loop_header
      %s14 = sphi 0, %s18
      %p15 = scmp.ge.s32.totalorder %s14, 4
      %s21 = sphi 0, %s33
      %s22 = sphi 0, %s29
      %s23 = sphi 0, %s21
      %s24 = sphi 0, %s22
      %s25 = sphi 0, %s23
      %s26 = sphi 0, %s24
      %s36 = sphi 0, %s38
      %s39 = sphi 0, %s36
      %s40 = sphi 0, %s39
      %s56 = sphi 0, %s40
      %s60 = sphi 0, %s60
      %s62 = sphi 0, %s60
      %s63 = sphi 0, %s62
      %s77 = sphi 0, %s63
      %s81 = sphi 0, %s81
      %s83 = sphi 0, %s81
      %s84 = sphi 0, %s83
      %s98 = sphi 0, %s84
      %s102 = sphi 0, %s102
      %s104 = sphi 0, %s102
      %s105 = sphi 0, %s104
      %s119 = sphi 0, %s105
      %s123 = sphi 0, %s123
      %s125 = sphi 0, %s123
      %s126 = sphi 0, %s125
      %s140 = sphi 0, %s126
      %s148 = sphi 0, %s150
      %s151 = sphi 0, %s148
      %s152 = sphi 0, %s151
      %s168 = sphi 0, %s152
    $region4: #{tpu_custom_call.1} parent=1 // loop_header_branch
      %17 = sbr.rel (%p15) target = $region8
    $region5: #{tpu_custom_call.1} parent=1 // loop_body
      %s19 = ssub.s32 %s14, 1
      %s20 = ssub.s32 %s14, 2
      %s27 = sadd.s32 1, %s22
      %p28 = scmp.ge.s32.totalorder %s27, 1
      %s29 = scalar_select %p28, 0, %s27
      %s30 = sadd.s32 1, %s21
      %s31 = scalar_select %p28, %s30, %s21
      %p32 = scmp.ge.s32.totalorder %s31, 2
      %s33 = scalar_select %p32, 0, %s31
      %s34 = ssub.s32 %s21, %s33
      %p35 = scmp.eq.s32.totalorder %s34, 0
      %s37 = sadd.s32 %s36, 1
      %s38 = scalar_select %p35, %s36, %s37
      %p41 = pneg %p35
      %p42 = scmp.eq.s32.totalorder %s14, 1
      %p43 = por %p41, %p42
      %p44 = scmp.ne.s32.totalorder %s36, %s39
      %p45 = scmp.eq.s32.totalorder %s14, 0
      %p46 = por %p44, %p45
      %p47 = scmp.ne.s32.totalorder %s36, %s39
      %p48 = scmp.eq.s32.totalorder %s19, 1
      %p49 = por %p47, %p48
      %p50 = scmp.ne.s32.totalorder %s39, %s40
      %p51 = scmp.eq.s32.totalorder %s19, 0
      %p52 = por %p50, %p51
      %p53 = scmp.ne.s32.totalorder %s39, %s40
      %p54 = scmp.eq.s32.totalorder %s20, 1
      %p55 = por %p53, %p54
      %p57 = scmp.ne.s32.totalorder %s40, %s56
      %p58 = scmp.eq.s32.totalorder %s20, 0
      %p59 = por %p57, %p58
      %s61 = sadd.s32 %s60, 1
      %p64 = scmp.eq.s32.totalorder %s14, 1
      %p65 = scmp.ne.s32.totalorder %s60, %s62
      %p66 = scmp.eq.s32.totalorder %s14, 0
      %p67 = por %p65, %p66
      %p68 = scmp.ne.s32.totalorder %s60, %s62
      %p69 = scmp.eq.s32.totalorder %s19, 1
      %p70 = por %p68, %p69
      %p71 = scmp.ne.s32.totalorder %s62, %s63
      %p72 = scmp.eq.s32.totalorder %s19, 0
      %p73 = por %p71, %p72
      %p74 = scmp.ne.s32.totalorder %s62, %s63
      %p75 = scmp.eq.s32.totalorder %s20, 1
      %p76 = por %p74, %p75
      %p78 = scmp.ne.s32.totalorder %s63, %s77
      %p79 = scmp.eq.s32.totalorder %s20, 0
      %p80 = por %p78, %p79
      %s82 = sadd.s32 %s81, 1
      %p85 = scmp.eq.s32.totalorder %s14, 1
      %p86 = scmp.ne.s32.totalorder %s81, %s83
      %p87 = scmp.eq.s32.totalorder %s14, 0
      %p88 = por %p86, %p87
      %p89 = scmp.ne.s32.totalorder %s81, %s83
      %p90 = scmp.eq.s32.totalorder %s19, 1
      %p91 = por %p89, %p90
      %p92 = scmp.ne.s32.totalorder %s83, %s84
      %p93 = scmp.eq.s32.totalorder %s19, 0
      %p94 = por %p92, %p93
      %p95 = scmp.ne.s32.totalorder %s83, %s84
      %p96 = scmp.eq.s32.totalorder %s20, 1
      %p97 = por %p95, %p96
      %p99 = scmp.ne.s32.totalorder %s84, %s98
      %p100 = scmp.eq.s32.totalorder %s20, 0
      %p101 = por %p99, %p100
      %s103 = sadd.s32 %s102, 1
      %p106 = scmp.eq.s32.totalorder %s14, 1
      %p107 = scmp.ne.s32.totalorder %s102, %s104
      %p108 = scmp.eq.s32.totalorder %s14, 0
      %p109 = por %p107, %p108
      %p110 = scmp.ne.s32.totalorder %s102, %s104
      %p111 = scmp.eq.s32.totalorder %s19, 1
      %p112 = por %p110, %p111
      %p113 = scmp.ne.s32.totalorder %s104, %s105
      %p114 = scmp.eq.s32.totalorder %s19, 0
      %p115 = por %p113, %p114
      %p116 = scmp.ne.s32.totalorder %s104, %s105
      %p117 = scmp.eq.s32.totalorder %s20, 1
      %p118 = por %p116, %p117
      %p120 = scmp.ne.s32.totalorder %s105, %s119
      %p121 = scmp.eq.s32.totalorder %s20, 0
      %p122 = por %p120, %p121
      %s124 = sadd.s32 %s123, 1
      %p127 = scmp.eq.s32.totalorder %s14, 1
      %p128 = scmp.ne.s32.totalorder %s123, %s125
      %p129 = scmp.eq.s32.totalorder %s14, 0
      %p130 = por %p128, %p129
      %p131 = scmp.ne.s32.totalorder %s123, %s125
      %p132 = scmp.eq.s32.totalorder %s19, 1
      %p133 = por %p131, %p132
      %p134 = scmp.ne.s32.totalorder %s125, %s126
      %p135 = scmp.eq.s32.totalorder %s19, 0
      %p136 = por %p134, %p135
      %p137 = scmp.ne.s32.totalorder %s125, %s126
      %p138 = scmp.eq.s32.totalorder %s20, 1
      %p139 = por %p137, %p138
      %p141 = scmp.ne.s32.totalorder %s126, %s140
      %p142 = scmp.eq.s32.totalorder %s20, 0
      %p143 = por %p141, %p142
      %s144 = ssub.s32 %s21, %s33
      %s145 = ssub.s32 %s22, %s29
      %s146 = sor.u32 %s144, %s145
      %p147 = scmp.eq.s32.totalorder %s146, 0
      %s149 = sadd.s32 %s148, 1
      %s150 = scalar_select %p147, %s148, %s149
      %p153 = pneg %p147
      %p154 = scmp.eq.s32.totalorder %s14, 1
      %p155 = por %p153, %p154
      %p156 = scmp.ne.s32.totalorder %s148, %s151
      %p157 = scmp.eq.s32.totalorder %s14, 0
      %p158 = por %p156, %p157
      %p159 = scmp.ne.s32.totalorder %s148, %s151
      %p160 = scmp.eq.s32.totalorder %s19, 1
      %p161 = por %p159, %p160
      %p162 = scmp.ne.s32.totalorder %s151, %s152
      %p163 = scmp.eq.s32.totalorder %s19, 0
      %p164 = por %p162, %p163
      %p165 = scmp.ne.s32.totalorder %s151, %s152
      %p166 = scmp.eq.s32.totalorder %s20, 1
      %p167 = por %p165, %p166
      %p169 = scmp.ne.s32.totalorder %s152, %s168
      %p170 = scmp.eq.s32.totalorder %s20, 0
      %p171 = por %p169, %p170
      %p172 = scmp.le.s32.totalorder 1, %s14
      %p173 = scmp.lt.s32.totalorder %s14, 3
      %p174 = pnand %p172, %p173
      %p175 = pneg %p174
      // Predicated region
      $region9: #{tpu_custom_call.1} parent=5 // pred_check
        _
      $region10: #{tpu_custom_call.1} parent=5 // pred_check_branch
        %177 = sbr.rel (%p174) target = $region12
      $region11: #{tpu_custom_call.1} parent=5 // pred_region
        %s178 = ssub.s32 %s14, 1
        // Predicated region
        $region13: #{tpu_custom_call.1} parent=11 // pred_check
          %p179 = pneg %p73
        $region14: #{tpu_custom_call.1} parent=11 // pred_check_branch
          %181 = sbr.rel (%p179) target = $region16
        $region15: #{tpu_custom_call.1} parent=11 // pred_region
          _
        $region16: #{tpu_custom_call.1} parent=11 // pred_fallthru
          _
        // Predicated region
        $region17: #{tpu_custom_call.1} parent=11 // pred_check
          %p182 = pneg %p94
        $region18: #{tpu_custom_call.1} parent=11 // pred_check_branch
          %184 = sbr.rel (%p182) target = $region20
        $region19: #{tpu_custom_call.1} parent=11 // pred_region
          _
        $region20: #{tpu_custom_call.1} parent=11 // pred_fallthru
          _
        // Predicated region
        $region21: #{tpu_custom_call.1} parent=11 // pred_check
          %p185 = pneg %p115
        $region22: #{tpu_custom_call.1} parent=11 // pred_check_branch
          %187 = sbr.rel (%p185) target = $region24
        $region23: #{tpu_custom_call.1} parent=11 // pred_region
          _
        $region24: #{tpu_custom_call.1} parent=11 // pred_fallthru
          _
        // Predicated region
        $region25: #{tpu_custom_call.1} parent=11 // pred_check
          %p188 = pneg %p136
        $region26: #{tpu_custom_call.1} parent=11 // pred_check_branch
          %190 = sbr.rel (%p188) target = $region28
        $region27: #{tpu_custom_call.1} parent=11 // pred_region
          _
        $region28: #{tpu_custom_call.1} parent=11 // pred_fallthru
          _
      $region12: #{tpu_custom_call.1} parent=5 // pred_fallthru
        _
      %p191 = scmp.lt.s32.totalorder %s14, 2
      // Predicated region
      $region29: #{tpu_custom_call.1} parent=5 // pred_check
        %p192 = pneg %p191
      $region30: #{tpu_custom_call.1} parent=5 // pred_check_branch
        %194 = sbr.rel (%p192) target = $region32
      $region31: #{tpu_custom_call.1} parent=5 // pred_region
        // Predicated region
        $region33: #{tpu_custom_call.1} parent=31 // pred_check
          %p195 = pneg %p46
        $region34: #{tpu_custom_call.1} parent=31 // pred_check_branch
          %197 = sbr.rel (%p195) target = $region36
        $region35: #{tpu_custom_call.1} parent=31 // pred_region
          %p198 = scmp.lt.s32.totalorder %s21, 1
          %s199 = scalar_select %p198, %s21, 1
          %s200 = smul.addr %s199, 54
          %s201 = smul.addr %s200, 4
          %s202 = scalar_lea.vmem %s0, %s201
        $region36: #{tpu_custom_call.1} parent=31 // pred_fallthru
          _
      $region32: #{tpu_custom_call.1} parent=5 // pred_fallthru
        _
      %p203 = scmp.le.s32.totalorder 1, %s14
      %p204 = scmp.lt.s32.totalorder %s14, 3
      %p205 = pnand %p203, %p204
      %p206 = pneg %p205
      // Predicated region
      $region37: #{tpu_custom_call.1} parent=5 // pred_check
        _
      $region38: #{tpu_custom_call.1} parent=5 // pred_check_branch
        %208 = sbr.rel (%p205) target = $region40
      $region39: #{tpu_custom_call.1} parent=5 // pred_region
        %s209 = ssub.s32 %s14, 1
        %p210 = scmp.lt.s32.totalorder %s23, 1
        %s211 = scalar_select %p210, %s23, 1
        %s212 = smul.addr %s211, 54
        %s213 = smul.addr %s212, 4
        %s214 = scalar_lea.vmem %s0, %s213
        %p215 = pneg %p52
        %p216 = pneg %p49
        %p217 = pneg %p73
        %p218 = pneg %p70
        %p219 = pneg %p94
        %p220 = pneg %p91
        %p221 = pneg %p115
        %p222 = pneg %p112
        %p223 = pneg %p136
        %p224 = pneg %p133
        %p225 = pneg %p164
        %p226 = pneg %p161
        %s227 = sand.u32 %s151, 1
        %s228 = scalar_lea.sflag [#allocation3], %s227
        %s229 = sand.u32 %s151, 1
        %s230 = smul.addr %s229, 128
        %s231 = scalar_lea.vmem [#allocation2], %s230
        %p232 = scmp.lt.s32.totalorder %s23, 1
        %s233 = scalar_select %p232, %s23, 1
        %s234 = smul.addr %s233, 54
        %s235 = smul.addr %s234, 4
        %s236 = scalar_lea.vmem %s0, %s235
        %s237 = smul.u32 32, %s24
        %s239 = smul.u32 %s24, 16
        %s240 = smul.u32 %s239, 3
        %s241 = smul.addr %s240, 4
        %s242 = scalar_lea.vmem %s236, %s241
        %v243 = vld [vmem:[%s242] sm:$0xf]
        %v244 = vld [vmem:[%s242 + $0x4] sm:$0xf]
        %v245 = vld [vmem:[%s242 + $0xc] sm:$0xf]
        %v246 = vld [vmem:[%s242 + $0x10] sm:$0xf]
        %v247 = vld [vmem:[%s242 + $0x18] sm:$0xf]
        %v248 = vld [vmem:[%s242 + $0x1c] sm:$0xf]
        %v249 = vld [vmem:[%s242 + $0x24] sm:$0xf]
        %v250 = vld [vmem:[%s242 + $0x28] sm:$0xf]
        %v251 = vld [vmem:[%s242 + $0x30] sm:$0xf]
        %v252 = vld [vmem:[%s242 + $0x34] sm:$0xf]
        %v253 = vld [vmem:[%s242 + $0x3c] sm:$0xf]
        %v254 = vld [vmem:[%s242 + $0x40] sm:$0xf]
        %v255 = vld [vmem:[%s242 + $0x48] sm:$0xf]
        %v256 = vld [vmem:[%s242 + $0x4c] sm:$0xf]
        %v257 = vld [vmem:[%s242 + $0x54] sm:$0xf]
        %v258 = vld [vmem:[%s242 + $0x58] sm:$0xf]
        %v259 = vld [vmem:[%s242 + $0x60] sm:$0xf]
        %v260 = vld [vmem:[%s242 + $0x64] sm:$0xf]
        %v261 = vld [vmem:[%s242 + $0x6c] sm:$0xf]
        %v262 = vld [vmem:[%s242 + $0x70] sm:$0xf]
        %v263 = vld [vmem:[%s242 + $0x78] sm:$0xf]
        %v264 = vld [vmem:[%s242 + $0x7c] sm:$0xf]
        %v265 = vld [vmem:[%s242 + $0x84] sm:$0xf]
        %v266 = vld [vmem:[%s242 + $0x88] sm:$0xf]
        %v267 = vld [vmem:[%s242 + $0x90] sm:$0xf]
        %v268 = vld [vmem:[%s242 + $0x94] sm:$0xf]
        %v269 = vld [vmem:[%s242 + $0x9c] sm:$0xf]
        %v270 = vld [vmem:[%s242 + $0xa0] sm:$0xf]
        %v271 = vld [vmem:[%s242 + $0xa8] sm:$0xf]
        %v272 = vld [vmem:[%s242 + $0xac] sm:$0xf]
        %v273 = vld [vmem:[%s242 + $0xb4] sm:$0xf]
        %v274 = vld [vmem:[%s242 + $0xb8] sm:$0xf]
        %v275 = vld [vmem:[%s242 + $0x8] sm:$0x1]
        %v276 = vld [vmem:[%s242 + $0x14] sm:$0x1]
        %v277 = vld [vmem:[%s242 + $0x20] sm:$0x1]
        %v278 = vld [vmem:[%s242 + $0x2c] sm:$0x1]
        %v279 = vld [vmem:[%s242 + $0x38] sm:$0x1]
        %v280 = vld [vmem:[%s242 + $0x44] sm:$0x1]
        %v281 = vld [vmem:[%s242 + $0x50] sm:$0x1]
        %v282 = vld [vmem:[%s242 + $0x5c] sm:$0x1]
        %v283 = vld [vmem:[%s242 + $0x68] sm:$0x1]
        %v284 = vld [vmem:[%s242 + $0x74] sm:$0x1]
        %v285 = vld [vmem:[%s242 + $0x80] sm:$0x1]
        %v286 = vld [vmem:[%s242 + $0x8c] sm:$0x1]
        %v287 = vld [vmem:[%s242 + $0x98] sm:$0x1]
        %v288 = vld [vmem:[%s242 + $0xa4] sm:$0x1]
        %v289 = vld [vmem:[%s242 + $0xb0] sm:$0x1]
        %v290 = vld [vmem:[%s242 + $0xbc] sm:$0x1]
        %vm291 = vsmask.f32 3328
        %vm292 = vsmask.f32 7440
        %vm293 = vmor %vm291, %vm292
        %v295 = vshrl.u32 %v243, 16
        %v297 = vrot.slane %v295, 4
        %v298 = vshll.u32 %v243, 16
        %v300 = vrot.slane %v298, 5
        %v301 = vor.u32 %v297, %v300
        %v302 = vrot.slane %v301, 4
        %v304 = vshll.u32 %v244, 16
        %v306 = vrot.slane %v304, 5
        %v307 = vsel %vm293, %v302, %v306
        %v308 = vshrl.u32 %v244, 16
        %v310 = vrot.slane %v308, 4
        %v311 = vor.u32 %v310, %v306
        %v312 = vrot.slane %v311, 4
        %v314 = vshll.u32 %v275, 16
        %v316 = vrot.slane %v314, 5
        %v317 = vsel %vm293, %v312, %v316
        %v319 = vshrl.u32 %v245, 16
        %v321 = vrot.slane %v319, 4
        %v322 = vshll.u32 %v245, 16
        %v324 = vrot.slane %v322, 5
        %v325 = vor.u32 %v321, %v324
        %v326 = vrot.slane %v325, 4
        %v328 = vshll.u32 %v246, 16
        %v330 = vrot.slane %v328, 5
        %v331 = vsel %vm293, %v326, %v330
        %v332 = vshrl.u32 %v246, 16
        %v334 = vrot.slane %v332, 4
        %v335 = vor.u32 %v334, %v330
        %v336 = vrot.slane %v335, 4
        %v338 = vshll.u32 %v276, 16
        %v340 = vrot.slane %v338, 5
        %v341 = vsel %vm293, %v336, %v340
        %v343 = vshrl.u32 %v247, 16
        %v345 = vrot.slane %v343, 4
        %v346 = vshll.u32 %v247, 16
        %v348 = vrot.slane %v346, 5
        %v349 = vor.u32 %v345, %v348
        %v350 = vrot.slane %v349, 4
        %v352 = vshll.u32 %v248, 16
        %v354 = vrot.slane %v352, 5
        %v355 = vsel %vm293, %v350, %v354
        %v356 = vshrl.u32 %v248, 16
        %v358 = vrot.slane %v356, 4
        %v359 = vor.u32 %v358, %v354
        %v360 = vrot.slane %v359, 4
        %v362 = vshll.u32 %v277, 16
        %v364 = vrot.slane %v362, 5
        %v365 = vsel %vm293, %v360, %v364
        %v367 = vshrl.u32 %v249, 16
        %v369 = vrot.slane %v367, 4
        %v370 = vshll.u32 %v249, 16
        %v372 = vrot.slane %v370, 5
        %v373 = vor.u32 %v369, %v372
        %v374 = vrot.slane %v373, 4
        %v376 = vshll.u32 %v250, 16
        %v378 = vrot.slane %v376, 5
        %v379 = vsel %vm293, %v374, %v378
        %v380 = vshrl.u32 %v250, 16
        %v382 = vrot.slane %v380, 4
        %v383 = vor.u32 %v382, %v378
        %v384 = vrot.slane %v383, 4
        %v386 = vshll.u32 %v278, 16
        %v388 = vrot.slane %v386, 5
        %v389 = vsel %vm293, %v384, %v388
        %v391 = vshrl.u32 %v251, 16
        %v393 = vrot.slane %v391, 4
        %v394 = vshll.u32 %v251, 16
        %v396 = vrot.slane %v394, 5
        %v397 = vor.u32 %v393, %v396
        %v398 = vrot.slane %v397, 4
        %v400 = vshll.u32 %v252, 16
        %v402 = vrot.slane %v400, 5
        %v403 = vsel %vm293, %v398, %v402
        %v404 = vshrl.u32 %v252, 16
        %v406 = vrot.slane %v404, 4
        %v407 = vor.u32 %v406, %v402
        %v408 = vrot.slane %v407, 4
        %v410 = vshll.u32 %v279, 16
        %v412 = vrot.slane %v410, 5
        %v413 = vsel %vm293, %v408, %v412
        %v415 = vshrl.u32 %v253, 16
        %v417 = vrot.slane %v415, 4
        %v418 = vshll.u32 %v253, 16
        %v420 = vrot.slane %v418, 5
        %v421 = vor.u32 %v417, %v420
        %v422 = vrot.slane %v421, 4
        %v424 = vshll.u32 %v254, 16
        %v426 = vrot.slane %v424, 5
        %v427 = vsel %vm293, %v422, %v426
        %v428 = vshrl.u32 %v254, 16
        %v430 = vrot.slane %v428, 4
        %v431 = vor.u32 %v430, %v426
        %v432 = vrot.slane %v431, 4
        %v434 = vshll.u32 %v280, 16
        %v436 = vrot.slane %v434, 5
        %v437 = vsel %vm293, %v432, %v436
        %v439 = vshrl.u32 %v255, 16
        %v441 = vrot.slane %v439, 4
        %v442 = vshll.u32 %v255, 16
        %v444 = vrot.slane %v442, 5
        %v445 = vor.u32 %v441, %v444
        %v446 = vrot.slane %v445, 4
        %v448 = vshll.u32 %v256, 16
        %v450 = vrot.slane %v448, 5
        %v451 = vsel %vm293, %v446, %v450
        %v452 = vshrl.u32 %v256, 16
        %v454 = vrot.slane %v452, 4
        %v455 = vor.u32 %v454, %v450
        %v456 = vrot.slane %v455, 4
        %v458 = vshll.u32 %v281, 16
        %v460 = vrot.slane %v458, 5
        %v461 = vsel %vm293, %v456, %v460
        %v463 = vshrl.u32 %v257, 16
        %v465 = vrot.slane %v463, 4
        %v466 = vshll.u32 %v257, 16
        %v468 = vrot.slane %v466, 5
        %v469 = vor.u32 %v465, %v468
        %v470 = vrot.slane %v469, 4
        %v472 = vshll.u32 %v258, 16
        %v474 = vrot.slane %v472, 5
        %v475 = vsel %vm293, %v470, %v474
        %v476 = vshrl.u32 %v258, 16
        %v478 = vrot.slane %v476, 4
        %v479 = vor.u32 %v478, %v474
        %v480 = vrot.slane %v479, 4
        %v482 = vshll.u32 %v282, 16
        %v484 = vrot.slane %v482, 5
        %v485 = vsel %vm293, %v480, %v484
        %v487 = vshrl.u32 %v259, 16
        %v489 = vrot.slane %v487, 4
        %v490 = vshll.u32 %v259, 16
        %v492 = vrot.slane %v490, 5
        %v493 = vor.u32 %v489, %v492
        %v494 = vrot.slane %v493, 4
        %v496 = vshll.u32 %v260, 16
        %v498 = vrot.slane %v496, 5
        %v499 = vsel %vm293, %v494, %v498
        %v500 = vshrl.u32 %v260, 16
        %v502 = vrot.slane %v500, 4
        %v503 = vor.u32 %v502, %v498
        %v504 = vrot.slane %v503, 4
        %v506 = vshll.u32 %v283, 16
        %v508 = vrot.slane %v506, 5
        %v509 = vsel %vm293, %v504, %v508
        %v511 = vshrl.u32 %v261, 16
        %v513 = vrot.slane %v511, 4
        %v514 = vshll.u32 %v261, 16
        %v516 = vrot.slane %v514, 5
        %v517 = vor.u32 %v513, %v516
        %v518 = vrot.slane %v517, 4
        %v520 = vshll.u32 %v262, 16
        %v522 = vrot.slane %v520, 5
        %v523 = vsel %vm293, %v518, %v522
        %v524 = vshrl.u32 %v262, 16
        %v526 = vrot.slane %v524, 4
        %v527 = vor.u32 %v526, %v522
        %v528 = vrot.slane %v527, 4
        %v530 = vshll.u32 %v284, 16
        %v532 = vrot.slane %v530, 5
        %v533 = vsel %vm293, %v528, %v532
        %v535 = vshrl.u32 %v263, 16
        %v537 = vrot.slane %v535, 4
        %v538 = vshll.u32 %v263, 16
        %v540 = vrot.slane %v538, 5
        %v541 = vor.u32 %v537, %v540
        %v542 = vrot.slane %v541, 4
        %v544 = vshll.u32 %v264, 16
        %v546 = vrot.slane %v544, 5
        %v547 = vsel %vm293, %v542, %v546
        %v548 = vshrl.u32 %v264, 16
        %v550 = vrot.slane %v548, 4
        %v551 = vor.u32 %v550, %v546
        %v552 = vrot.slane %v551, 4
        %v554 = vshll.u32 %v285, 16
        %v556 = vrot.slane %v554, 5
        %v557 = vsel %vm293, %v552, %v556
        %v559 = vshrl.u32 %v265, 16
        %v561 = vrot.slane %v559, 4
        %v562 = vshll.u32 %v265, 16
        %v564 = vrot.slane %v562, 5
        %v565 = vor.u32 %v561, %v564
        %v566 = vrot.slane %v565, 4
        %v568 = vshll.u32 %v266, 16
        %v570 = vrot.slane %v568, 5
        %v571 = vsel %vm293, %v566, %v570
        %v572 = vshrl.u32 %v266, 16
        %v574 = vrot.slane %v572, 4
        %v575 = vor.u32 %v574, %v570
        %v576 = vrot.slane %v575, 4
        %v578 = vshll.u32 %v286, 16
        %v580 = vrot.slane %v578, 5
        %v581 = vsel %vm293, %v576, %v580
        %v583 = vshrl.u32 %v267, 16
        %v585 = vrot.slane %v583, 4
        %v586 = vshll.u32 %v267, 16
        %v588 = vrot.slane %v586, 5
        %v589 = vor.u32 %v585, %v588
        %v590 = vrot.slane %v589, 4
        %v592 = vshll.u32 %v268, 16
        %v594 = vrot.slane %v592, 5
        %v595 = vsel %vm293, %v590, %v594
        %v596 = vshrl.u32 %v268, 16
        %v598 = vrot.slane %v596, 4
        %v599 = vor.u32 %v598, %v594
        %v600 = vrot.slane %v599, 4
        %v602 = vshll.u32 %v287, 16
        %v604 = vrot.slane %v602, 5
        %v605 = vsel %vm293, %v600, %v604
        %v607 = vshrl.u32 %v269, 16
        %v609 = vrot.slane %v607, 4
        %v610 = vshll.u32 %v269, 16
        %v612 = vrot.slane %v610, 5
        %v613 = vor.u32 %v609, %v612
        %v614 = vrot.slane %v613, 4
        %v616 = vshll.u32 %v270, 16
        %v618 = vrot.slane %v616, 5
        %v619 = vsel %vm293, %v614, %v618
        %v620 = vshrl.u32 %v270, 16
        %v622 = vrot.slane %v620, 4
        %v623 = vor.u32 %v622, %v618
        %v624 = vrot.slane %v623, 4
        %v626 = vshll.u32 %v288, 16
        %v628 = vrot.slane %v626, 5
        %v629 = vsel %vm293, %v624, %v628
        %v631 = vshrl.u32 %v271, 16
        %v633 = vrot.slane %v631, 4
        %v634 = vshll.u32 %v271, 16
        %v636 = vrot.slane %v634, 5
        %v637 = vor.u32 %v633, %v636
        %v638 = vrot.slane %v637, 4
        %v640 = vshll.u32 %v272, 16
        %v642 = vrot.slane %v640, 5
        %v643 = vsel %vm293, %v638, %v642
        %v644 = vshrl.u32 %v272, 16
        %v646 = vrot.slane %v644, 4
        %v647 = vor.u32 %v646, %v642
        %v648 = vrot.slane %v647, 4
        %v650 = vshll.u32 %v289, 16
        %v652 = vrot.slane %v650, 5
        %v653 = vsel %vm293, %v648, %v652
        %v655 = vshrl.u32 %v273, 16
        %v657 = vrot.slane %v655, 4
        %v658 = vshll.u32 %v273, 16
        %v660 = vrot.slane %v658, 5
        %v661 = vor.u32 %v657, %v660
        %v662 = vrot.slane %v661, 4
        %v664 = vshll.u32 %v274, 16
        %v666 = vrot.slane %v664, 5
        %v667 = vsel %vm293, %v662, %v666
        %v668 = vshrl.u32 %v274, 16
        %v670 = vrot.slane %v668, 4
        %v671 = vor.u32 %v670, %v666
        %v672 = vrot.slane %v671, 4
        %v674 = vshll.u32 %v290, 16
        %v676 = vrot.slane %v674, 5
        %v677 = vsel %vm293, %v672, %v676
        %v678 = vld [vmem:[%s242] sm:$0xe]
        %v679 = vld [vmem:[%s242 + $0xc] sm:$0xe]
        %v680 = vld [vmem:[%s242 + $0x18] sm:$0xe]
        %v681 = vld [vmem:[%s242 + $0x24] sm:$0xe]
        %v682 = vld [vmem:[%s242 + $0x30] sm:$0xe]
        %v683 = vld [vmem:[%s242 + $0x3c] sm:$0xe]
        %v684 = vld [vmem:[%s242 + $0x48] sm:$0xe]
        %v685 = vld [vmem:[%s242 + $0x54] sm:$0xe]
        %v686 = vld [vmem:[%s242 + $0x60] sm:$0xe]
        %v687 = vld [vmem:[%s242 + $0x6c] sm:$0xe]
        %v688 = vld [vmem:[%s242 + $0x78] sm:$0xe]
        %v689 = vld [vmem:[%s242 + $0x84] sm:$0xe]
        %v690 = vld [vmem:[%s242 + $0x90] sm:$0xe]
        %v691 = vld [vmem:[%s242 + $0x9c] sm:$0xe]
        %v692 = vld [vmem:[%s242 + $0xa8] sm:$0xe]
        %v693 = vld [vmem:[%s242 + $0xb4] sm:$0xe]
        %vm742 = vcmask 1042432
        %vm743 = vcmask 1046532
        %vm744 = vmor %vm742, %vm743
        %v745 = vrot.slane %v678, 5
        %v746 = vrot.slane %v745, 4
        %v747 = vrot.slane %v244, 5
        %v748 = vsel %vm744, %v746, %v747
        %v749 = vrot.slane %v747, 4
        %v750 = vrot.slane %v275, 5
        %v751 = vsel %vm744, %v749, %v750
        %v752 = vrot.slane %v679, 5
        %v753 = vrot.slane %v752, 4
        %v754 = vrot.slane %v246, 5
        %v755 = vsel %vm744, %v753, %v754
        %v756 = vrot.slane %v754, 4
        %v757 = vrot.slane %v276, 5
        %v758 = vsel %vm744, %v756, %v757
        %v759 = vrot.slane %v680, 5
        %v760 = vrot.slane %v759, 4
        %v761 = vrot.slane %v248, 5
        %v762 = vsel %vm744, %v760, %v761
        %v763 = vrot.slane %v761, 4
        %v764 = vrot.slane %v277, 5
        %v765 = vsel %vm744, %v763, %v764
        %v766 = vrot.slane %v681, 5
        %v767 = vrot.slane %v766, 4
        %v768 = vrot.slane %v250, 5
        %v769 = vsel %vm744, %v767, %v768
        %v770 = vrot.slane %v768, 4
        %v771 = vrot.slane %v278, 5
        %v772 = vsel %vm744, %v770, %v771
        %v773 = vrot.slane %v682, 5
        %v774 = vrot.slane %v773, 4
        %v775 = vrot.slane %v252, 5
        %v776 = vsel %vm744, %v774, %v775
        %v777 = vrot.slane %v775, 4
        %v778 = vrot.slane %v279, 5
        %v779 = vsel %vm744, %v777, %v778
        %v780 = vrot.slane %v683, 5
        %v781 = vrot.slane %v780, 4
        %v782 = vrot.slane %v254, 5
        %v783 = vsel %vm744, %v781, %v782
        %v784 = vrot.slane %v782, 4
        %v785 = vrot.slane %v280, 5
        %v786 = vsel %vm744, %v784, %v785
        %v787 = vrot.slane %v684, 5
        %v788 = vrot.slane %v787, 4
        %v789 = vrot.slane %v256, 5
        %v790 = vsel %vm744, %v788, %v789
        %v791 = vrot.slane %v789, 4
        %v792 = vrot.slane %v281, 5
        %v793 = vsel %vm744, %v791, %v792
        %v794 = vrot.slane %v685, 5
        %v795 = vrot.slane %v794, 4
        %v796 = vrot.slane %v258, 5
        %v797 = vsel %vm744, %v795, %v796
        %v798 = vrot.slane %v796, 4
        %v799 = vrot.slane %v282, 5
        %v800 = vsel %vm744, %v798, %v799
        %v801 = vrot.slane %v686, 5
        %v802 = vrot.slane %v801, 4
        %v803 = vrot.slane %v260, 5
        %v804 = vsel %vm744, %v802, %v803
        %v805 = vrot.slane %v803, 4
        %v806 = vrot.slane %v283, 5
        %v807 = vsel %vm744, %v805, %v806
        %v808 = vrot.slane %v687, 5
        %v809 = vrot.slane %v808, 4
        %v810 = vrot.slane %v262, 5
        %v811 = vsel %vm744, %v809, %v810
        %v812 = vrot.slane %v810, 4
        %v813 = vrot.slane %v284, 5
        %v814 = vsel %vm744, %v812, %v813
        %v815 = vrot.slane %v688, 5
        %v816 = vrot.slane %v815, 4
        %v817 = vrot.slane %v264, 5
        %v818 = vsel %vm744, %v816, %v817
        %v819 = vrot.slane %v817, 4
        %v820 = vrot.slane %v285, 5
        %v821 = vsel %vm744, %v819, %v820
        %v822 = vrot.slane %v689, 5
        %v823 = vrot.slane %v822, 4
        %v824 = vrot.slane %v266, 5
        %v825 = vsel %vm744, %v823, %v824
        %v826 = vrot.slane %v824, 4
        %v827 = vrot.slane %v286, 5
        %v828 = vsel %vm744, %v826, %v827
        %v829 = vrot.slane %v690, 5
        %v830 = vrot.slane %v829, 4
        %v831 = vrot.slane %v268, 5
        %v832 = vsel %vm744, %v830, %v831
        %v833 = vrot.slane %v831, 4
        %v834 = vrot.slane %v287, 5
        %v835 = vsel %vm744, %v833, %v834
        %v836 = vrot.slane %v691, 5
        %v837 = vrot.slane %v836, 4
        %v838 = vrot.slane %v270, 5
        %v839 = vsel %vm744, %v837, %v838
        %v840 = vrot.slane %v838, 4
        %v841 = vrot.slane %v288, 5
        %v842 = vsel %vm744, %v840, %v841
        %v843 = vrot.slane %v692, 5
        %v844 = vrot.slane %v843, 4
        %v845 = vrot.slane %v272, 5
        %v846 = vsel %vm744, %v844, %v845
        %v847 = vrot.slane %v845, 4
        %v848 = vrot.slane %v289, 5
        %v849 = vsel %vm744, %v847, %v848
        %v850 = vrot.slane %v693, 5
        %v851 = vrot.slane %v850, 4
        %v852 = vrot.slane %v274, 5
        %v853 = vsel %vm744, %v851, %v852
        %v854 = vrot.slane %v852, 4
        %v855 = vrot.slane %v290, 5
        %v856 = vsel %vm744, %v854, %v855
        %s857 = sadd.s32 %s239, 1
        %s858 = smul.u32 %s857, 3
        %s859 = smul.addr %s858, 4
        %s860 = scalar_lea.vmem %s236, %s859
        %v861 = vld [vmem:[%s860] sm:$0xf]
        %v862 = vld [vmem:[%s860 + $0x4] sm:$0xf]
        %v863 = vld [vmem:[%s860 + $0xc] sm:$0xf]
        %v864 = vld [vmem:[%s860 + $0x10] sm:$0xf]
        %v865 = vld [vmem:[%s860 + $0x18] sm:$0xf]
        %v866 = vld [vmem:[%s860 + $0x1c] sm:$0xf]
        %v867 = vld [vmem:[%s860 + $0x24] sm:$0xf]
        %v868 = vld [vmem:[%s860 + $0x28] sm:$0xf]
        %v869 = vld [vmem:[%s860 + $0x30] sm:$0xf]
        %v870 = vld [vmem:[%s860 + $0x34] sm:$0xf]
        %v871 = vld [vmem:[%s860 + $0x3c] sm:$0xf]
        %v872 = vld [vmem:[%s860 + $0x40] sm:$0xf]
        %v873 = vld [vmem:[%s860 + $0x48] sm:$0xf]
        %v874 = vld [vmem:[%s860 + $0x4c] sm:$0xf]
        %v875 = vld [vmem:[%s860 + $0x54] sm:$0xf]
        %v876 = vld [vmem:[%s860 + $0x58] sm:$0xf]
        %v877 = vld [vmem:[%s860 + $0x60] sm:$0xf]
        %v878 = vld [vmem:[%s860 + $0x64] sm:$0xf]
        %v879 = vld [vmem:[%s860 + $0x6c] sm:$0xf]
        %v880 = vld [vmem:[%s860 + $0x70] sm:$0xf]
        %v881 = vld [vmem:[%s860 + $0x78] sm:$0xf]
        %v882 = vld [vmem:[%s860 + $0x7c] sm:$0xf]
        %v883 = vld [vmem:[%s860 + $0x84] sm:$0xf]
        %v884 = vld [vmem:[%s860 + $0x88] sm:$0xf]
        %v885 = vld [vmem:[%s860 + $0x90] sm:$0xf]
        %v886 = vld [vmem:[%s860 + $0x94] sm:$0xf]
        %v887 = vld [vmem:[%s860 + $0x9c] sm:$0xf]
        %v888 = vld [vmem:[%s860 + $0xa0] sm:$0xf]
        %v889 = vld [vmem:[%s860 + $0xa8] sm:$0xf]
        %v890 = vld [vmem:[%s860 + $0xac] sm:$0xf]
        %v891 = vld [vmem:[%s860 + $0xb4] sm:$0xf]
        %v892 = vld [vmem:[%s860 + $0xb8] sm:$0xf]
        %v893 = vld [vmem:[%s860 + $0x8] sm:$0x1]
        %v894 = vld [vmem:[%s860 + $0x14] sm:$0x1]
        %v895 = vld [vmem:[%s860 + $0x20] sm:$0x1]
        %v896 = vld [vmem:[%s860 + $0x2c] sm:$0x1]
        %v897 = vld [vmem:[%s860 + $0x38] sm:$0x1]
        %v898 = vld [vmem:[%s860 + $0x44] sm:$0x1]
        %v899 = vld [vmem:[%s860 + $0x50] sm:$0x1]
        %v900 = vld [vmem:[%s860 + $0x5c] sm:$0x1]
        %v901 = vld [vmem:[%s860 + $0x68] sm:$0x1]
        %v902 = vld [vmem:[%s860 + $0x74] sm:$0x1]
        %v903 = vld [vmem:[%s860 + $0x80] sm:$0x1]
        %v904 = vld [vmem:[%s860 + $0x8c] sm:$0x1]
        %v905 = vld [vmem:[%s860 + $0x98] sm:$0x1]
        %v906 = vld [vmem:[%s860 + $0xa4] sm:$0x1]
        %v907 = vld [vmem:[%s860 + $0xb0] sm:$0x1]
        %v908 = vld [vmem:[%s860 + $0xbc] sm:$0x1]
        %v910 = vshrl.u32 %v861, 16
        %v912 = vrot.slane %v910, 4
        %v913 = vshll.u32 %v861, 16
        %v915 = vrot.slane %v913, 5
        %v916 = vor.u32 %v912, %v915
        %v917 = vrot.slane %v916, 4
        %v919 = vshll.u32 %v862, 16
        %v921 = vrot.slane %v919, 5
        %v922 = vsel %vm293, %v917, %v921
        %v923 = vshrl.u32 %v862, 16
        %v925 = vrot.slane %v923, 4
        %v926 = vor.u32 %v925, %v921
        %v927 = vrot.slane %v926, 4
        %v929 = vshll.u32 %v893, 16
        %v931 = vrot.slane %v929, 5
        %v932 = vsel %vm293, %v927, %v931
        %v934 = vshrl.u32 %v863, 16
        %v936 = vrot.slane %v934, 4
        %v937 = vshll.u32 %v863, 16
        %v939 = vrot.slane %v937, 5
        %v940 = vor.u32 %v936, %v939
        %v941 = vrot.slane %v940, 4
        %v943 = vshll.u32 %v864, 16
        %v945 = vrot.slane %v943, 5
        %v946 = vsel %vm293, %v941, %v945
        %v947 = vshrl.u32 %v864, 16
        %v949 = vrot.slane %v947, 4
        %v950 = vor.u32 %v949, %v945
        %v951 = vrot.slane %v950, 4
        %v953 = vshll.u32 %v894, 16
        %v955 = vrot.slane %v953, 5
        %v956 = vsel %vm293, %v951, %v955
        %v958 = vshrl.u32 %v865, 16
        %v960 = vrot.slane %v958, 4
        %v961 = vshll.u32 %v865, 16
        %v963 = vrot.slane %v961, 5
        %v964 = vor.u32 %v960, %v963
        %v965 = vrot.slane %v964, 4
        %v967 = vshll.u32 %v866, 16
        %v969 = vrot.slane %v967, 5
        %v970 = vsel %vm293, %v965, %v969
        %v971 = vshrl.u32 %v866, 16
        %v973 = vrot.slane %v971, 4
        %v974 = vor.u32 %v973, %v969
        %v975 = vrot.slane %v974, 4
        %v977 = vshll.u32 %v895, 16
        %v979 = vrot.slane %v977, 5
        %v980 = vsel %vm293, %v975, %v979
        %v982 = vshrl.u32 %v867, 16
        %v984 = vrot.slane %v982, 4
        %v985 = vshll.u32 %v867, 16
        %v987 = vrot.slane %v985, 5
        %v988 = vor.u32 %v984, %v987
        %v989 = vrot.slane %v988, 4
        %v991 = vshll.u32 %v868, 16
        %v993 = vrot.slane %v991, 5
        %v994 = vsel %vm293, %v989, %v993
        %v995 = vshrl.u32 %v868, 16
        %v997 = vrot.slane %v995, 4
        %v998 = vor.u32 %v997, %v993
        %v999 = vrot.slane %v998, 4
        %v1001 = vshll.u32 %v896, 16
        %v1003 = vrot.slane %v1001, 5
        %v1004 = vsel %vm293, %v999, %v1003
        %v1006 = vshrl.u32 %v869, 16
        %v1008 = vrot.slane %v1006, 4
        %v1009 = vshll.u32 %v869, 16
        %v1011 = vrot.slane %v1009, 5
        %v1012 = vor.u32 %v1008, %v1011
        %v1013 = vrot.slane %v1012, 4
        %v1015 = vshll.u32 %v870, 16
        %v1017 = vrot.slane %v1015, 5
        %v1018 = vsel %vm293, %v1013, %v1017
        %v1019 = vshrl.u32 %v870, 16
        %v1021 = vrot.slane %v1019, 4
        %v1022 = vor.u32 %v1021, %v1017
        %v1023 = vrot.slane %v1022, 4
        %v1025 = vshll.u32 %v897, 16
        %v1027 = vrot.slane %v1025, 5
        %v1028 = vsel %vm293, %v1023, %v1027
        %v1030 = vshrl.u32 %v871, 16
        %v1032 = vrot.slane %v1030, 4
        %v1033 = vshll.u32 %v871, 16
        %v1035 = vrot.slane %v1033, 5
        %v1036 = vor.u32 %v1032, %v1035
        %v1037 = vrot.slane %v1036, 4
        %v1039 = vshll.u32 %v872, 16
        %v1041 = vrot.slane %v1039, 5
        %v1042 = vsel %vm293, %v1037, %v1041
        %v1043 = vshrl.u32 %v872, 16
        %v1045 = vrot.slane %v1043, 4
        %v1046 = vor.u32 %v1045, %v1041
        %v1047 = vrot.slane %v1046, 4
        %v1049 = vshll.u32 %v898, 16
        %v1051 = vrot.slane %v1049, 5
        %v1052 = vsel %vm293, %v1047, %v1051
        %v1054 = vshrl.u32 %v873, 16
        %v1056 = vrot.slane %v1054, 4
        %v1057 = vshll.u32 %v873, 16
        %v1059 = vrot.slane %v1057, 5
        %v1060 = vor.u32 %v1056, %v1059
        %v1061 = vrot.slane %v1060, 4
        %v1063 = vshll.u32 %v874, 16
        %v1065 = vrot.slane %v1063, 5
        %v1066 = vsel %vm293, %v1061, %v1065
        %v1067 = vshrl.u32 %v874, 16
        %v1069 = vrot.slane %v1067, 4
        %v1070 = vor.u32 %v1069, %v1065
        %v1071 = vrot.slane %v1070, 4
        %v1073 = vshll.u32 %v899, 16
        %v1075 = vrot.slane %v1073, 5
        %v1076 = vsel %vm293, %v1071, %v1075
        %v1078 = vshrl.u32 %v875, 16
        %v1080 = vrot.slane %v1078, 4
        %v1081 = vshll.u32 %v875, 16
        %v1083 = vrot.slane %v1081, 5
        %v1084 = vor.u32 %v1080, %v1083
        %v1085 = vrot.slane %v1084, 4
        %v1087 = vshll.u32 %v876, 16
        %v1089 = vrot.slane %v1087, 5
        %v1090 = vsel %vm293, %v1085, %v1089
        %v1091 = vshrl.u32 %v876, 16
        %v1093 = vrot.slane %v1091, 4
        %v1094 = vor.u32 %v1093, %v1089
        %v1095 = vrot.slane %v1094, 4
        %v1097 = vshll.u32 %v900, 16
        %v1099 = vrot.slane %v1097, 5
        %v1100 = vsel %vm293, %v1095, %v1099
        %v1102 = vshrl.u32 %v877, 16
        %v1104 = vrot.slane %v1102, 4
        %v1105 = vshll.u32 %v877, 16
        %v1107 = vrot.slane %v1105, 5
        %v1108 = vor.u32 %v1104, %v1107
        %v1109 = vrot.slane %v1108, 4
        %v1111 = vshll.u32 %v878, 16
        %v1113 = vrot.slane %v1111, 5
        %v1114 = vsel %vm293, %v1109, %v1113
        %v1115 = vshrl.u32 %v878, 16
        %v1117 = vrot.slane %v1115, 4
        %v1118 = vor.u32 %v1117, %v1113
        %v1119 = vrot.slane %v1118, 4
        %v1121 = vshll.u32 %v901, 16
        %v1123 = vrot.slane %v1121, 5
        %v1124 = vsel %vm293, %v1119, %v1123
        %v1126 = vshrl.u32 %v879, 16
        %v1128 = vrot.slane %v1126, 4
        %v1129 = vshll.u32 %v879, 16
        %v1131 = vrot.slane %v1129, 5
        %v1132 = vor.u32 %v1128, %v1131
        %v1133 = vrot.slane %v1132, 4
        %v1135 = vshll.u32 %v880, 16
        %v1137 = vrot.slane %v1135, 5
        %v1138 = vsel %vm293, %v1133, %v1137
        %v1139 = vshrl.u32 %v880, 16
        %v1141 = vrot.slane %v1139, 4
        %v1142 = vor.u32 %v1141, %v1137
        %v1143 = vrot.slane %v1142, 4
        %v1145 = vshll.u32 %v902, 16
        %v1147 = vrot.slane %v1145, 5
        %v1148 = vsel %vm293, %v1143, %v1147
        %v1150 = vshrl.u32 %v881, 16
        %v1152 = vrot.slane %v1150, 4
        %v1153 = vshll.u32 %v881, 16
        %v1155 = vrot.slane %v1153, 5
        %v1156 = vor.u32 %v1152, %v1155
        %v1157 = vrot.slane %v1156, 4
        %v1159 = vshll.u32 %v882, 16
        %v1161 = vrot.slane %v1159, 5
        %v1162 = vsel %vm293, %v1157, %v1161
        %v1163 = vshrl.u32 %v882, 16
        %v1165 = vrot.slane %v1163, 4
        %v1166 = vor.u32 %v1165, %v1161
        %v1167 = vrot.slane %v1166, 4
        %v1169 = vshll.u32 %v903, 16
        %v1171 = vrot.slane %v1169, 5
        %v1172 = vsel %vm293, %v1167, %v1171
        %v1174 = vshrl.u32 %v883, 16
        %v1176 = vrot.slane %v1174, 4
        %v1177 = vshll.u32 %v883, 16
        %v1179 = vrot.slane %v1177, 5
        %v1180 = vor.u32 %v1176, %v1179
        %v1181 = vrot.slane %v1180, 4
        %v1183 = vshll.u32 %v884, 16
        %v1185 = vrot.slane %v1183, 5
        %v1186 = vsel %vm293, %v1181, %v1185
        %v1187 = vshrl.u32 %v884, 16
        %v1189 = vrot.slane %v1187, 4
        %v1190 = vor.u32 %v1189, %v1185
        %v1191 = vrot.slane %v1190, 4
        %v1193 = vshll.u32 %v904, 16
        %v1195 = vrot.slane %v1193, 5
        %v1196 = vsel %vm293, %v1191, %v1195
        %v1198 = vshrl.u32 %v885, 16
        %v1200 = vrot.slane %v1198, 4
        %v1201 = vshll.u32 %v885, 16
        %v1203 = vrot.slane %v1201, 5
        %v1204 = vor.u32 %v1200, %v1203
        %v1205 = vrot.slane %v1204, 4
        %v1207 = vshll.u32 %v886, 16
        %v1209 = vrot.slane %v1207, 5
        %v1210 = vsel %vm293, %v1205, %v1209
        %v1211 = vshrl.u32 %v886, 16
        %v1213 = vrot.slane %v1211, 4
        %v1214 = vor.u32 %v1213, %v1209
        %v1215 = vrot.slane %v1214, 4
        %v1217 = vshll.u32 %v905, 16
        %v1219 = vrot.slane %v1217, 5
        %v1220 = vsel %vm293, %v1215, %v1219
        %v1222 = vshrl.u32 %v887, 16
        %v1224 = vrot.slane %v1222, 4
        %v1225 = vshll.u32 %v887, 16
        %v1227 = vrot.slane %v1225, 5
        %v1228 = vor.u32 %v1224, %v1227
        %v1229 = vrot.slane %v1228, 4
        %v1231 = vshll.u32 %v888, 16
        %v1233 = vrot.slane %v1231, 5
        %v1234 = vsel %vm293, %v1229, %v1233
        %v1235 = vshrl.u32 %v888, 16
        %v1237 = vrot.slane %v1235, 4
        %v1238 = vor.u32 %v1237, %v1233
        %v1239 = vrot.slane %v1238, 4
        %v1241 = vshll.u32 %v906, 16
        %v1243 = vrot.slane %v1241, 5
        %v1244 = vsel %vm293, %v1239, %v1243
        %v1246 = vshrl.u32 %v889, 16
        %v1248 = vrot.slane %v1246, 4
        %v1249 = vshll.u32 %v889, 16
        %v1251 = vrot.slane %v1249, 5
        %v1252 = vor.u32 %v1248, %v1251
        %v1253 = vrot.slane %v1252, 4
        %v1255 = vshll.u32 %v890, 16
        %v1257 = vrot.slane %v1255, 5
        %v1258 = vsel %vm293, %v1253, %v1257
        %v1259 = vshrl.u32 %v890, 16
        %v1261 = vrot.slane %v1259, 4
        %v1262 = vor.u32 %v1261, %v1257
        %v1263 = vrot.slane %v1262, 4
        %v1265 = vshll.u32 %v907, 16
        %v1267 = vrot.slane %v1265, 5
        %v1268 = vsel %vm293, %v1263, %v1267
        %v1270 = vshrl.u32 %v891, 16
        %v1272 = vrot.slane %v1270, 4
        %v1273 = vshll.u32 %v891, 16
        %v1275 = vrot.slane %v1273, 5
        %v1276 = vor.u32 %v1272, %v1275
        %v1277 = vrot.slane %v1276, 4
        %v1279 = vshll.u32 %v892, 16
        %v1281 = vrot.slane %v1279, 5
        %v1282 = vsel %vm293, %v1277, %v1281
        %v1283 = vshrl.u32 %v892, 16
        %v1285 = vrot.slane %v1283, 4
        %v1286 = vor.u32 %v1285, %v1281
        %v1287 = vrot.slane %v1286, 4
        %v1289 = vshll.u32 %v908, 16
        %v1291 = vrot.slane %v1289, 5
        %v1292 = vsel %vm293, %v1287, %v1291
        %v1293 = vld [vmem:[%s860] sm:$0xe]
        %v1294 = vld [vmem:[%s860 + $0xc] sm:$0xe]
        %v1295 = vld [vmem:[%s860 + $0x18] sm:$0xe]
        %v1296 = vld [vmem:[%s860 + $0x24] sm:$0xe]
        %v1297 = vld [vmem:[%s860 + $0x30] sm:$0xe]
        %v1298 = vld [vmem:[%s860 + $0x3c] sm:$0xe]
        %v1299 = vld [vmem:[%s860 + $0x48] sm:$0xe]
        %v1300 = vld [vmem:[%s860 + $0x54] sm:$0xe]
        %v1301 = vld [vmem:[%s860 + $0x60] sm:$0xe]
        %v1302 = vld [vmem:[%s860 + $0x6c] sm:$0xe]
        %v1303 = vld [vmem:[%s860 + $0x78] sm:$0xe]
        %v1304 = vld [vmem:[%s860 + $0x84] sm:$0xe]
        %v1305 = vld [vmem:[%s860 + $0x90] sm:$0xe]
        %v1306 = vld [vmem:[%s860 + $0x9c] sm:$0xe]
        %v1307 = vld [vmem:[%s860 + $0xa8] sm:$0xe]
        %v1308 = vld [vmem:[%s860 + $0xb4] sm:$0xe]
        %v1357 = vrot.slane %v1293, 5
        %v1358 = vrot.slane %v1357, 4
        %v1359 = vrot.slane %v862, 5
        %v1360 = vsel %vm744, %v1358, %v1359
        %v1361 = vrot.slane %v1359, 4
        %v1362 = vrot.slane %v893, 5
        %v1363 = vsel %vm744, %v1361, %v1362
        %v1364 = vrot.slane %v1294, 5
        %v1365 = vrot.slane %v1364, 4
        %v1366 = vrot.slane %v864, 5
        %v1367 = vsel %vm744, %v1365, %v1366
        %v1368 = vrot.slane %v1366, 4
        %v1369 = vrot.slane %v894, 5
        %v1370 = vsel %vm744, %v1368, %v1369
        %v1371 = vrot.slane %v1295, 5
        %v1372 = vrot.slane %v1371, 4
        %v1373 = vrot.slane %v866, 5
        %v1374 = vsel %vm744, %v1372, %v1373
        %v1375 = vrot.slane %v1373, 4
        %v1376 = vrot.slane %v895, 5
        %v1377 = vsel %vm744, %v1375, %v1376
        %v1378 = vrot.slane %v1296, 5
        %v1379 = vrot.slane %v1378, 4
        %v1380 = vrot.slane %v868, 5
        %v1381 = vsel %vm744, %v1379, %v1380
        %v1382 = vrot.slane %v1380, 4
        %v1383 = vrot.slane %v896, 5
        %v1384 = vsel %vm744, %v1382, %v1383
        %v1385 = vrot.slane %v1297, 5
        %v1386 = vrot.slane %v1385, 4
        %v1387 = vrot.slane %v870, 5
        %v1388 = vsel %vm744, %v1386, %v1387
        %v1389 = vrot.slane %v1387, 4
        %v1390 = vrot.slane %v897, 5
        %v1391 = vsel %vm744, %v1389, %v1390
        %v1392 = vrot.slane %v1298, 5
        %v1393 = vrot.slane %v1392, 4
        %v1394 = vrot.slane %v872, 5
        %v1395 = vsel %vm744, %v1393, %v1394
        %v1396 = vrot.slane %v1394, 4
        %v1397 = vrot.slane %v898, 5
        %v1398 = vsel %vm744, %v1396, %v1397
        %v1399 = vrot.slane %v1299, 5
        %v1400 = vrot.slane %v1399, 4
        %v1401 = vrot.slane %v874, 5
        %v1402 = vsel %vm744, %v1400, %v1401
        %v1403 = vrot.slane %v1401, 4
        %v1404 = vrot.slane %v899, 5
        %v1405 = vsel %vm744, %v1403, %v1404
        %v1406 = vrot.slane %v1300, 5
        %v1407 = vrot.slane %v1406, 4
        %v1408 = vrot.slane %v876, 5
        %v1409 = vsel %vm744, %v1407, %v1408
        %v1410 = vrot.slane %v1408, 4
        %v1411 = vrot.slane %v900, 5
        %v1412 = vsel %vm744, %v1410, %v1411
        %v1413 = vrot.slane %v1301, 5
        %v1414 = vrot.slane %v1413, 4
        %v1415 = vrot.slane %v878, 5
        %v1416 = vsel %vm744, %v1414, %v1415
        %v1417 = vrot.slane %v1415, 4
        %v1418 = vrot.slane %v901, 5
        %v1419 = vsel %vm744, %v1417, %v1418
        %v1420 = vrot.slane %v1302, 5
        %v1421 = vrot.slane %v1420, 4
        %v1422 = vrot.slane %v880, 5
        %v1423 = vsel %vm744, %v1421, %v1422
        %v1424 = vrot.slane %v1422, 4
        %v1425 = vrot.slane %v902, 5
        %v1426 = vsel %vm744, %v1424, %v1425
        %v1427 = vrot.slane %v1303, 5
        %v1428 = vrot.slane %v1427, 4
        %v1429 = vrot.slane %v882, 5
        %v1430 = vsel %vm744, %v1428, %v1429
        %v1431 = vrot.slane %v1429, 4
        %v1432 = vrot.slane %v903, 5
        %v1433 = vsel %vm744, %v1431, %v1432
        %v1434 = vrot.slane %v1304, 5
        %v1435 = vrot.slane %v1434, 4
        %v1436 = vrot.slane %v884, 5
        %v1437 = vsel %vm744, %v1435, %v1436
        %v1438 = vrot.slane %v1436, 4
        %v1439 = vrot.slane %v904, 5
        %v1440 = vsel %vm744, %v1438, %v1439
        %v1441 = vrot.slane %v1305, 5
        %v1442 = vrot.slane %v1441, 4
        %v1443 = vrot.slane %v886, 5
        %v1444 = vsel %vm744, %v1442, %v1443
        %v1445 = vrot.slane %v1443, 4
        %v1446 = vrot.slane %v905, 5
        %v1447 = vsel %vm744, %v1445, %v1446
        %v1448 = vrot.slane %v1306, 5
        %v1449 = vrot.slane %v1448, 4
        %v1450 = vrot.slane %v888, 5
        %v1451 = vsel %vm744, %v1449, %v1450
        %v1452 = vrot.slane %v1450, 4
        %v1453 = vrot.slane %v906, 5
        %v1454 = vsel %vm744, %v1452, %v1453
        %v1455 = vrot.slane %v1307, 5
        %v1456 = vrot.slane %v1455, 4
        %v1457 = vrot.slane %v890, 5
        %v1458 = vsel %vm744, %v1456, %v1457
        %v1459 = vrot.slane %v1457, 4
        %v1460 = vrot.slane %v907, 5
        %v1461 = vsel %vm744, %v1459, %v1460
        %v1462 = vrot.slane %v1308, 5
        %v1463 = vrot.slane %v1462, 4
        %v1464 = vrot.slane %v892, 5
        %v1465 = vsel %vm744, %v1463, %v1464
        %v1466 = vrot.slane %v1464, 4
        %v1467 = vrot.slane %v908, 5
        %v1468 = vsel %vm744, %v1466, %v1467
        %s1469 = sadd.s32 %s239, 2
        %s1470 = smul.u32 %s1469, 3
        %s1471 = smul.addr %s1470, 4
        %s1472 = scalar_lea.vmem %s236, %s1471
        %v1473 = vld [vmem:[%s1472] sm:$0xf]
        %v1474 = vld [vmem:[%s1472 + $0x4] sm:$0xf]
        %v1475 = vld [vmem:[%s1472 + $0xc] sm:$0xf]
        %v1476 = vld [vmem:[%s1472 + $0x10] sm:$0xf]
        %v1477 = vld [vmem:[%s1472 + $0x18] sm:$0xf]
        %v1478 = vld [vmem:[%s1472 + $0x1c] sm:$0xf]
        %v1479 = vld [vmem:[%s1472 + $0x24] sm:$0xf]
        %v1480 = vld [vmem:[%s1472 + $0x28] sm:$0xf]
        %v1481 = vld [vmem:[%s1472 + $0x30] sm:$0xf]
        %v1482 = vld [vmem:[%s1472 + $0x34] sm:$0xf]
        %v1483 = vld [vmem:[%s1472 + $0x3c] sm:$0xf]
        %v1484 = vld [vmem:[%s1472 + $0x40] sm:$0xf]
        %v1485 = vld [vmem:[%s1472 + $0x48] sm:$0xf]
        %v1486 = vld [vmem:[%s1472 + $0x4c] sm:$0xf]
        %v1487 = vld [vmem:[%s1472 + $0x54] sm:$0xf]
        %v1488 = vld [vmem:[%s1472 + $0x58] sm:$0xf]
        %v1489 = vld [vmem:[%s1472 + $0x60] sm:$0xf]
        %v1490 = vld [vmem:[%s1472 + $0x64] sm:$0xf]
        %v1491 = vld [vmem:[%s1472 + $0x6c] sm:$0xf]
        %v1492 = vld [vmem:[%s1472 + $0x70] sm:$0xf]
        %v1493 = vld [vmem:[%s1472 + $0x78] sm:$0xf]
        %v1494 = vld [vmem:[%s1472 + $0x7c] sm:$0xf]
        %v1495 = vld [vmem:[%s1472 + $0x84] sm:$0xf]
        %v1496 = vld [vmem:[%s1472 + $0x88] sm:$0xf]
        %v1497 = vld [vmem:[%s1472 + $0x90] sm:$0xf]
        %v1498 = vld [vmem:[%s1472 + $0x94] sm:$0xf]
        %v1499 = vld [vmem:[%s1472 + $0x9c] sm:$0xf]
        %v1500 = vld [vmem:[%s1472 + $0xa0] sm:$0xf]
        %v1501 = vld [vmem:[%s1472 + $0xa8] sm:$0xf]
        %v1502 = vld [vmem:[%s1472 + $0xac] sm:$0xf]
        %v1503 = vld [vmem:[%s1472 + $0xb4] sm:$0xf]
        %v1504 = vld [vmem:[%s1472 + $0xb8] sm:$0xf]
        %v1505 = vld [vmem:[%s1472 + $0x8] sm:$0x1]
        %v1506 = vld [vmem:[%s1472 + $0x14] sm:$0x1]
        %v1507 = vld [vmem:[%s1472 + $0x20] sm:$0x1]
        %v1508 = vld [vmem:[%s1472 + $0x2c] sm:$0x1]
        %v1509 = vld [vmem:[%s1472 + $0x38] sm:$0x1]
        %v1510 = vld [vmem:[%s1472 + $0x44] sm:$0x1]
        %v1511 = vld [vmem:[%s1472 + $0x50] sm:$0x1]
        %v1512 = vld [vmem:[%s1472 + $0x5c] sm:$0x1]
        %v1513 = vld [vmem:[%s1472 + $0x68] sm:$0x1]
        %v1514 = vld [vmem:[%s1472 + $0x74] sm:$0x1]
        %v1515 = vld [vmem:[%s1472 + $0x80] sm:$0x1]
        %v1516 = vld [vmem:[%s1472 + $0x8c] sm:$0x1]
        %v1517 = vld [vmem:[%s1472 + $0x98] sm:$0x1]
        %v1518 = vld [vmem:[%s1472 + $0xa4] sm:$0x1]
        %v1519 = vld [vmem:[%s1472 + $0xb0] sm:$0x1]
        %v1520 = vld [vmem:[%s1472 + $0xbc] sm:$0x1]
        %v1522 = vshrl.u32 %v1473, 16
        %v1524 = vrot.slane %v1522, 4
        %v1525 = vshll.u32 %v1473, 16
        %v1527 = vrot.slane %v1525, 5
        %v1528 = vor.u32 %v1524, %v1527
        %v1529 = vrot.slane %v1528, 4
        %v1531 = vshll.u32 %v1474, 16
        %v1533 = vrot.slane %v1531, 5
        %v1534 = vsel %vm293, %v1529, %v1533
        %v1535 = vshrl.u32 %v1474, 16
        %v1537 = vrot.slane %v1535, 4
        %v1538 = vor.u32 %v1537, %v1533
        %v1539 = vrot.slane %v1538, 4
        %v1541 = vshll.u32 %v1505, 16
        %v1543 = vrot.slane %v1541, 5
        %v1544 = vsel %vm293, %v1539, %v1543
        %v1546 = vshrl.u32 %v1475, 16
        %v1548 = vrot.slane %v1546, 4
        %v1549 = vshll.u32 %v1475, 16
        %v1551 = vrot.slane %v1549, 5
        %v1552 = vor.u32 %v1548, %v1551
        %v1553 = vrot.slane %v1552, 4
        %v1555 = vshll.u32 %v1476, 16
        %v1557 = vrot.slane %v1555, 5
        %v1558 = vsel %vm293, %v1553, %v1557
        %v1559 = vshrl.u32 %v1476, 16
        %v1561 = vrot.slane %v1559, 4
        %v1562 = vor.u32 %v1561, %v1557
        %v1563 = vrot.slane %v1562, 4
        %v1565 = vshll.u32 %v1506, 16
        %v1567 = vrot.slane %v1565, 5
        %v1568 = vsel %vm293, %v1563, %v1567
        %v1570 = vshrl.u32 %v1477, 16
        %v1572 = vrot.slane %v1570, 4
        %v1573 = vshll.u32 %v1477, 16
        %v1575 = vrot.slane %v1573, 5
        %v1576 = vor.u32 %v1572, %v1575
        %v1577 = vrot.slane %v1576, 4
        %v1579 = vshll.u32 %v1478, 16
        %v1581 = vrot.slane %v1579, 5
        %v1582 = vsel %vm293, %v1577, %v1581
        %v1583 = vshrl.u32 %v1478, 16
        %v1585 = vrot.slane %v1583, 4
        %v1586 = vor.u32 %v1585, %v1581
        %v1587 = vrot.slane %v1586, 4
        %v1589 = vshll.u32 %v1507, 16
        %v1591 = vrot.slane %v1589, 5
        %v1592 = vsel %vm293, %v1587, %v1591
        %v1594 = vshrl.u32 %v1479, 16
        %v1596 = vrot.slane %v1594, 4
        %v1597 = vshll.u32 %v1479, 16
        %v1599 = vrot.slane %v1597, 5
        %v1600 = vor.u32 %v1596, %v1599
        %v1601 = vrot.slane %v1600, 4
        %v1603 = vshll.u32 %v1480, 16
        %v1605 = vrot.slane %v1603, 5
        %v1606 = vsel %vm293, %v1601, %v1605
        %v1607 = vshrl.u32 %v1480, 16
        %v1609 = vrot.slane %v1607, 4
        %v1610 = vor.u32 %v1609, %v1605
        %v1611 = vrot.slane %v1610, 4
        %v1613 = vshll.u32 %v1508, 16
        %v1615 = vrot.slane %v1613, 5
        %v1616 = vsel %vm293, %v1611, %v1615
        %v1618 = vshrl.u32 %v1481, 16
        %v1620 = vrot.slane %v1618, 4
        %v1621 = vshll.u32 %v1481, 16
        %v1623 = vrot.slane %v1621, 5
        %v1624 = vor.u32 %v1620, %v1623
        %v1625 = vrot.slane %v1624, 4
        %v1627 = vshll.u32 %v1482, 16
        %v1629 = vrot.slane %v1627, 5
        %v1630 = vsel %vm293, %v1625, %v1629
        %v1631 = vshrl.u32 %v1482, 16
        %v1633 = vrot.slane %v1631, 4
        %v1634 = vor.u32 %v1633, %v1629
        %v1635 = vrot.slane %v1634, 4
        %v1637 = vshll.u32 %v1509, 16
        %v1639 = vrot.slane %v1637, 5
        %v1640 = vsel %vm293, %v1635, %v1639
        %v1642 = vshrl.u32 %v1483, 16
        %v1644 = vrot.slane %v1642, 4
        %v1645 = vshll.u32 %v1483, 16
        %v1647 = vrot.slane %v1645, 5
        %v1648 = vor.u32 %v1644, %v1647
        %v1649 = vrot.slane %v1648, 4
        %v1651 = vshll.u32 %v1484, 16
        %v1653 = vrot.slane %v1651, 5
        %v1654 = vsel %vm293, %v1649, %v1653
        %v1655 = vshrl.u32 %v1484, 16
        %v1657 = vrot.slane %v1655, 4
        %v1658 = vor.u32 %v1657, %v1653
        %v1659 = vrot.slane %v1658, 4
        %v1661 = vshll.u32 %v1510, 16
        %v1663 = vrot.slane %v1661, 5
        %v1664 = vsel %vm293, %v1659, %v1663
        %v1666 = vshrl.u32 %v1485, 16
        %v1668 = vrot.slane %v1666, 4
        %v1669 = vshll.u32 %v1485, 16
        %v1671 = vrot.slane %v1669, 5
        %v1672 = vor.u32 %v1668, %v1671
        %v1673 = vrot.slane %v1672, 4
        %v1675 = vshll.u32 %v1486, 16
        %v1677 = vrot.slane %v1675, 5
        %v1678 = vsel %vm293, %v1673, %v1677
        %v1679 = vshrl.u32 %v1486, 16
        %v1681 = vrot.slane %v1679, 4
        %v1682 = vor.u32 %v1681, %v1677
        %v1683 = vrot.slane %v1682, 4
        %v1685 = vshll.u32 %v1511, 16
        %v1687 = vrot.slane %v1685, 5
        %v1688 = vsel %vm293, %v1683, %v1687
        %v1690 = vshrl.u32 %v1487, 16
        %v1692 = vrot.slane %v1690, 4
        %v1693 = vshll.u32 %v1487, 16
        %v1695 = vrot.slane %v1693, 5
        %v1696 = vor.u32 %v1692, %v1695
        %v1697 = vrot.slane %v1696, 4
        %v1699 = vshll.u32 %v1488, 16
        %v1701 = vrot.slane %v1699, 5
        %v1702 = vsel %vm293, %v1697, %v1701
        %v1703 = vshrl.u32 %v1488, 16
        %v1705 = vrot.slane %v1703, 4
        %v1706 = vor.u32 %v1705, %v1701
        %v1707 = vrot.slane %v1706, 4
        %v1709 = vshll.u32 %v1512, 16
        %v1711 = vrot.slane %v1709, 5
        %v1712 = vsel %vm293, %v1707, %v1711
        %v1714 = vshrl.u32 %v1489, 16
        %v1716 = vrot.slane %v1714, 4
        %v1717 = vshll.u32 %v1489, 16
        %v1719 = vrot.slane %v1717, 5
        %v1720 = vor.u32 %v1716, %v1719
        %v1721 = vrot.slane %v1720, 4
        %v1723 = vshll.u32 %v1490, 16
        %v1725 = vrot.slane %v1723, 5
        %v1726 = vsel %vm293, %v1721, %v1725
        %v1727 = vshrl.u32 %v1490, 16
        %v1729 = vrot.slane %v1727, 4
        %v1730 = vor.u32 %v1729, %v1725
        %v1731 = vrot.slane %v1730, 4
        %v1733 = vshll.u32 %v1513, 16
        %v1735 = vrot.slane %v1733, 5
        %v1736 = vsel %vm293, %v1731, %v1735
        %v1738 = vshrl.u32 %v1491, 16
        %v1740 = vrot.slane %v1738, 4
        %v1741 = vshll.u32 %v1491, 16
        %v1743 = vrot.slane %v1741, 5
        %v1744 = vor.u32 %v1740, %v1743
        %v1745 = vrot.slane %v1744, 4
        %v1747 = vshll.u32 %v1492, 16
        %v1749 = vrot.slane %v1747, 5
        %v1750 = vsel %vm293, %v1745, %v1749
        %v1751 = vshrl.u32 %v1492, 16
        %v1753 = vrot.slane %v1751, 4
        %v1754 = vor.u32 %v1753, %v1749
        %v1755 = vrot.slane %v1754, 4
        %v1757 = vshll.u32 %v1514, 16
        %v1759 = vrot.slane %v1757, 5
        %v1760 = vsel %vm293, %v1755, %v1759
        %v1762 = vshrl.u32 %v1493, 16
        %v1764 = vrot.slane %v1762, 4
        %v1765 = vshll.u32 %v1493, 16
        %v1767 = vrot.slane %v1765, 5
        %v1768 = vor.u32 %v1764, %v1767
        %v1769 = vrot.slane %v1768, 4
        %v1771 = vshll.u32 %v1494, 16
        %v1773 = vrot.slane %v1771, 5
        %v1774 = vsel %vm293, %v1769, %v1773
        %v1775 = vshrl.u32 %v1494, 16
        %v1777 = vrot.slane %v1775, 4
        %v1778 = vor.u32 %v1777, %v1773
        %v1779 = vrot.slane %v1778, 4
        %v1781 = vshll.u32 %v1515, 16
        %v1783 = vrot.slane %v1781, 5
        %v1784 = vsel %vm293, %v1779, %v1783
        %v1786 = vshrl.u32 %v1495, 16
        %v1788 = vrot.slane %v1786, 4
        %v1789 = vshll.u32 %v1495, 16
        %v1791 = vrot.slane %v1789, 5
        %v1792 = vor.u32 %v1788, %v1791
        %v1793 = vrot.slane %v1792, 4
        %v1795 = vshll.u32 %v1496, 16
        %v1797 = vrot.slane %v1795, 5
        %v1798 = vsel %vm293, %v1793, %v1797
        %v1799 = vshrl.u32 %v1496, 16
        %v1801 = vrot.slane %v1799, 4
        %v1802 = vor.u32 %v1801, %v1797
        %v1803 = vrot.slane %v1802, 4
        %v1805 = vshll.u32 %v1516, 16
        %v1807 = vrot.slane %v1805, 5
        %v1808 = vsel %vm293, %v1803, %v1807
        %v1810 = vshrl.u32 %v1497, 16
        %v1812 = vrot.slane %v1810, 4
        %v1813 = vshll.u32 %v1497, 16
        %v1815 = vrot.slane %v1813, 5
        %v1816 = vor.u32 %v1812, %v1815
        %v1817 = vrot.slane %v1816, 4
        %v1819 = vshll.u32 %v1498, 16
        %v1821 = vrot.slane %v1819, 5
        %v1822 = vsel %vm293, %v1817, %v1821
        %v1823 = vshrl.u32 %v1498, 16
        %v1825 = vrot.slane %v1823, 4
        %v1826 = vor.u32 %v1825, %v1821
        %v1827 = vrot.slane %v1826, 4
        %v1829 = vshll.u32 %v1517, 16
        %v1831 = vrot.slane %v1829, 5
        %v1832 = vsel %vm293, %v1827, %v1831
        %v1834 = vshrl.u32 %v1499, 16
        %v1836 = vrot.slane %v1834, 4
        %v1837 = vshll.u32 %v1499, 16
        %v1839 = vrot.slane %v1837, 5
        %v1840 = vor.u32 %v1836, %v1839
        %v1841 = vrot.slane %v1840, 4
        %v1843 = vshll.u32 %v1500, 16
        %v1845 = vrot.slane %v1843, 5
        %v1846 = vsel %vm293, %v1841, %v1845
        %v1847 = vshrl.u32 %v1500, 16
        %v1849 = vrot.slane %v1847, 4
        %v1850 = vor.u32 %v1849, %v1845
        %v1851 = vrot.slane %v1850, 4
        %v1853 = vshll.u32 %v1518, 16
        %v1855 = vrot.slane %v1853, 5
        %v1856 = vsel %vm293, %v1851, %v1855
        %v1858 = vshrl.u32 %v1501, 16
        %v1860 = vrot.slane %v1858, 4
        %v1861 = vshll.u32 %v1501, 16
        %v1863 = vrot.slane %v1861, 5
        %v1864 = vor.u32 %v1860, %v1863
        %v1865 = vrot.slane %v1864, 4
        %v1867 = vshll.u32 %v1502, 16
        %v1869 = vrot.slane %v1867, 5
        %v1870 = vsel %vm293, %v1865, %v1869
        %v1871 = vshrl.u32 %v1502, 16
        %v1873 = vrot.slane %v1871, 4
        %v1874 = vor.u32 %v1873, %v1869
        %v1875 = vrot.slane %v1874, 4
        %v1877 = vshll.u32 %v1519, 16
        %v1879 = vrot.slane %v1877, 5
        %v1880 = vsel %vm293, %v1875, %v1879
        %v1882 = vshrl.u32 %v1503, 16
        %v1884 = vrot.slane %v1882, 4
        %v1885 = vshll.u32 %v1503, 16
        %v1887 = vrot.slane %v1885, 5
        %v1888 = vor.u32 %v1884, %v1887
        %v1889 = vrot.slane %v1888, 4
        %v1891 = vshll.u32 %v1504, 16
        %v1893 = vrot.slane %v1891, 5
        %v1894 = vsel %vm293, %v1889, %v1893
        %v1895 = vshrl.u32 %v1504, 16
        %v1897 = vrot.slane %v1895, 4
        %v1898 = vor.u32 %v1897, %v1893
        %v1899 = vrot.slane %v1898, 4
        %v1901 = vshll.u32 %v1520, 16
        %v1903 = vrot.slane %v1901, 5
        %v1904 = vsel %vm293, %v1899, %v1903
        %v1905 = vld [vmem:[%s1472] sm:$0xe]
        %v1906 = vld [vmem:[%s1472 + $0xc] sm:$0xe]
        %v1907 = vld [vmem:[%s1472 + $0x18] sm:$0xe]
        %v1908 = vld [vmem:[%s1472 + $0x24] sm:$0xe]
        %v1909 = vld [vmem:[%s1472 + $0x30] sm:$0xe]
        %v1910 = vld [vmem:[%s1472 + $0x3c] sm:$0xe]
        %v1911 = vld [vmem:[%s1472 + $0x48] sm:$0xe]
        %v1912 = vld [vmem:[%s1472 + $0x54] sm:$0xe]
        %v1913 = vld [vmem:[%s1472 + $0x60] sm:$0xe]
        %v1914 = vld [vmem:[%s1472 + $0x6c] sm:$0xe]
        %v1915 = vld [vmem:[%s1472 + $0x78] sm:$0xe]
        %v1916 = vld [vmem:[%s1472 + $0x84] sm:$0xe]
        %v1917 = vld [vmem:[%s1472 + $0x90] sm:$0xe]
        %v1918 = vld [vmem:[%s1472 + $0x9c] sm:$0xe]
        %v1919 = vld [vmem:[%s1472 + $0xa8] sm:$0xe]
        %v1920 = vld [vmem:[%s1472 + $0xb4] sm:$0xe]
        %v1969 = vrot.slane %v1905, 5
        %v1970 = vrot.slane %v1969, 4
        %v1971 = vrot.slane %v1474, 5
        %v1972 = vsel %vm744, %v1970, %v1971
        %v1973 = vrot.slane %v1971, 4
        %v1974 = vrot.slane %v1505, 5
        %v1975 = vsel %vm744, %v1973, %v1974
        %v1976 = vrot.slane %v1906, 5
        %v1977 = vrot.slane %v1976, 4
        %v1978 = vrot.slane %v1476, 5
        %v1979 = vsel %vm744, %v1977, %v1978
        %v1980 = vrot.slane %v1978, 4
        %v1981 = vrot.slane %v1506, 5
        %v1982 = vsel %vm744, %v1980, %v1981
        %v1983 = vrot.slane %v1907, 5
        %v1984 = vrot.slane %v1983, 4
        %v1985 = vrot.slane %v1478, 5
        %v1986 = vsel %vm744, %v1984, %v1985
        %v1987 = vrot.slane %v1985, 4
        %v1988 = vrot.slane %v1507, 5
        %v1989 = vsel %vm744, %v1987, %v1988
        %v1990 = vrot.slane %v1908, 5
        %v1991 = vrot.slane %v1990, 4
        %v1992 = vrot.slane %v1480, 5
        %v1993 = vsel %vm744, %v1991, %v1992
        %v1994 = vrot.slane %v1992, 4
        %v1995 = vrot.slane %v1508, 5
        %v1996 = vsel %vm744, %v1994, %v1995
        %v1997 = vrot.slane %v1909, 5
        %v1998 = vrot.slane %v1997, 4
        %v1999 = vrot.slane %v1482, 5
        %v2000 = vsel %vm744, %v1998, %v1999
        %v2001 = vrot.slane %v1999, 4
        %v2002 = vrot.slane %v1509, 5
        %v2003 = vsel %vm744, %v2001, %v2002
        %v2004 = vrot.slane %v1910, 5
        %v2005 = vrot.slane %v2004, 4
        %v2006 = vrot.slane %v1484, 5
        %v2007 = vsel %vm744, %v2005, %v2006
        %v2008 = vrot.slane %v2006, 4
        %v2009 = vrot.slane %v1510, 5
        %v2010 = vsel %vm744, %v2008, %v2009
        %v2011 = vrot.slane %v1911, 5
        %v2012 = vrot.slane %v2011, 4
        %v2013 = vrot.slane %v1486, 5
        %v2014 = vsel %vm744, %v2012, %v2013
        %v2015 = vrot.slane %v2013, 4
        %v2016 = vrot.slane %v1511, 5
        %v2017 = vsel %vm744, %v2015, %v2016
        %v2018 = vrot.slane %v1912, 5
        %v2019 = vrot.slane %v2018, 4
        %v2020 = vrot.slane %v1488, 5
        %v2021 = vsel %vm744, %v2019, %v2020
        %v2022 = vrot.slane %v2020, 4
        %v2023 = vrot.slane %v1512, 5
        %v2024 = vsel %vm744, %v2022, %v2023
        %v2025 = vrot.slane %v1913, 5
        %v2026 = vrot.slane %v2025, 4
        %v2027 = vrot.slane %v1490, 5
        %v2028 = vsel %vm744, %v2026, %v2027
        %v2029 = vrot.slane %v2027, 4
        %v2030 = vrot.slane %v1513, 5
        %v2031 = vsel %vm744, %v2029, %v2030
        %v2032 = vrot.slane %v1914, 5
        %v2033 = vrot.slane %v2032, 4
        %v2034 = vrot.slane %v1492, 5
        %v2035 = vsel %vm744, %v2033, %v2034
        %v2036 = vrot.slane %v2034, 4
        %v2037 = vrot.slane %v1514, 5
        %v2038 = vsel %vm744, %v2036, %v2037
        %v2039 = vrot.slane %v1915, 5
        %v2040 = vrot.slane %v2039, 4
        %v2041 = vrot.slane %v1494, 5
        %v2042 = vsel %vm744, %v2040, %v2041
        %v2043 = vrot.slane %v2041, 4
        %v2044 = vrot.slane %v1515, 5
        %v2045 = vsel %vm744, %v2043, %v2044
        %v2046 = vrot.slane %v1916, 5
        %v2047 = vrot.slane %v2046, 4
        %v2048 = vrot.slane %v1496, 5
        %v2049 = vsel %vm744, %v2047, %v2048
        %v2050 = vrot.slane %v2048, 4
        %v2051 = vrot.slane %v1516, 5
        %v2052 = vsel %vm744, %v2050, %v2051
        %v2053 = vrot.slane %v1917, 5
        %v2054 = vrot.slane %v2053, 4
        %v2055 = vrot.slane %v1498, 5
        %v2056 = vsel %vm744, %v2054, %v2055
        %v2057 = vrot.slane %v2055, 4
        %v2058 = vrot.slane %v1517, 5
        %v2059 = vsel %vm744, %v2057, %v2058
        %v2060 = vrot.slane %v1918, 5
        %v2061 = vrot.slane %v2060, 4
        %v2062 = vrot.slane %v1500, 5
        %v2063 = vsel %vm744, %v2061, %v2062
        %v2064 = vrot.slane %v2062, 4
        %v2065 = vrot.slane %v1518, 5
        %v2066 = vsel %vm744, %v2064, %v2065
        %v2067 = vrot.slane %v1919, 5
        %v2068 = vrot.slane %v2067, 4
        %v2069 = vrot.slane %v1502, 5
        %v2070 = vsel %vm744, %v2068, %v2069
        %v2071 = vrot.slane %v2069, 4
        %v2072 = vrot.slane %v1519, 5
        %v2073 = vsel %vm744, %v2071, %v2072
        %v2074 = vrot.slane %v1920, 5
        %v2075 = vrot.slane %v2074, 4
        %v2076 = vrot.slane %v1504, 5
        %v2077 = vsel %vm744, %v2075, %v2076
        %v2078 = vrot.slane %v2076, 4
        %v2079 = vrot.slane %v1520, 5
        %v2080 = vsel %vm744, %v2078, %v2079
        %v2097 = vunpack.c.l.b16 %v243
        %v2098 = vunpack.c.l.b16 %v244
        %v2099 = vunpack.c.l.b16 %v245
        %v2100 = vunpack.c.l.b16 %v246
        %v2101 = vunpack.c.l.b16 %v247
        %v2102 = vunpack.c.l.b16 %v248
        %v2103 = vunpack.c.l.b16 %v249
        %v2104 = vunpack.c.l.b16 %v250
        %v2105 = vunpack.c.l.b16 %v251
        %v2106 = vunpack.c.l.b16 %v252
        %v2107 = vunpack.c.l.b16 %v253
        %v2108 = vunpack.c.l.b16 %v254
        %v2109 = vunpack.c.l.b16 %v255
        %v2110 = vunpack.c.l.b16 %v256
        %v2111 = vunpack.c.l.b16 %v257
        %v2112 = vunpack.c.l.b16 %v258
        %v2113 = vunpack.c.l.b16 %v259
        %v2114 = vunpack.c.l.b16 %v260
        %v2115 = vunpack.c.l.b16 %v261
        %v2116 = vunpack.c.l.b16 %v262
        %v2117 = vunpack.c.l.b16 %v263
        %v2118 = vunpack.c.l.b16 %v264
        %v2119 = vunpack.c.l.b16 %v265
        %v2120 = vunpack.c.l.b16 %v266
        %v2121 = vunpack.c.l.b16 %v267
        %v2122 = vunpack.c.l.b16 %v268
        %v2123 = vunpack.c.l.b16 %v269
        %v2124 = vunpack.c.l.b16 %v270
        %v2125 = vunpack.c.l.b16 %v271
        %v2126 = vunpack.c.l.b16 %v272
        %v2127 = vunpack.c.l.b16 %v273
        %v2128 = vunpack.c.l.b16 %v274
        %v2129 = vpack.c.b16 %v2098, %v2097
        %v2130 = vpack.c.b16 %v2100, %v2099
        %v2131 = vpack.c.b16 %v2102, %v2101
        %v2132 = vpack.c.b16 %v2104, %v2103
        %v2133 = vpack.c.b16 %v2106, %v2105
        %v2134 = vpack.c.b16 %v2108, %v2107
        %v2135 = vpack.c.b16 %v2110, %v2109
        %v2136 = vpack.c.b16 %v2112, %v2111
        %v2137 = vpack.c.b16 %v2114, %v2113
        %v2138 = vpack.c.b16 %v2116, %v2115
        %v2139 = vpack.c.b16 %v2118, %v2117
        %v2140 = vpack.c.b16 %v2120, %v2119
        %v2141 = vpack.c.b16 %v2122, %v2121
        %v2142 = vpack.c.b16 %v2124, %v2123
        %v2143 = vpack.c.b16 %v2126, %v2125
        %v2144 = vpack.c.b16 %v2128, %v2127
        %v2145 = vunpack.c.l.b16 %v307
        %v2146 = vunpack.c.l.b16 %v317
        %v2147 = vunpack.c.l.b16 %v331
        %v2148 = vunpack.c.l.b16 %v341
        %v2149 = vunpack.c.l.b16 %v355
        %v2150 = vunpack.c.l.b16 %v365
        %v2151 = vunpack.c.l.b16 %v379
        %v2152 = vunpack.c.l.b16 %v389
        %v2153 = vunpack.c.l.b16 %v403
        %v2154 = vunpack.c.l.b16 %v413
        %v2155 = vunpack.c.l.b16 %v427
        %v2156 = vunpack.c.l.b16 %v437
        %v2157 = vunpack.c.l.b16 %v451
        %v2158 = vunpack.c.l.b16 %v461
        %v2159 = vunpack.c.l.b16 %v475
        %v2160 = vunpack.c.l.b16 %v485
        %v2161 = vunpack.c.l.b16 %v499
        %v2162 = vunpack.c.l.b16 %v509
        %v2163 = vunpack.c.l.b16 %v523
        %v2164 = vunpack.c.l.b16 %v533
        %v2165 = vunpack.c.l.b16 %v547
        %v2166 = vunpack.c.l.b16 %v557
        %v2167 = vunpack.c.l.b16 %v571
        %v2168 = vunpack.c.l.b16 %v581
        %v2169 = vunpack.c.l.b16 %v595
        %v2170 = vunpack.c.l.b16 %v605
        %v2171 = vunpack.c.l.b16 %v619
        %v2172 = vunpack.c.l.b16 %v629
        %v2173 = vunpack.c.l.b16 %v643
        %v2174 = vunpack.c.l.b16 %v653
        %v2175 = vunpack.c.l.b16 %v667
        %v2176 = vunpack.c.l.b16 %v677
        %v2177 = vpack.c.b16 %v2146, %v2145
        %v2178 = vpack.c.b16 %v2148, %v2147
        %v2179 = vpack.c.b16 %v2150, %v2149
        %v2180 = vpack.c.b16 %v2152, %v2151
        %v2181 = vpack.c.b16 %v2154, %v2153
        %v2182 = vpack.c.b16 %v2156, %v2155
        %v2183 = vpack.c.b16 %v2158, %v2157
        %v2184 = vpack.c.b16 %v2160, %v2159
        %v2185 = vpack.c.b16 %v2162, %v2161
        %v2186 = vpack.c.b16 %v2164, %v2163
        %v2187 = vpack.c.b16 %v2166, %v2165
        %v2188 = vpack.c.b16 %v2168, %v2167
        %v2189 = vpack.c.b16 %v2170, %v2169
        %v2190 = vpack.c.b16 %v2172, %v2171
        %v2191 = vpack.c.b16 %v2174, %v2173
        %v2192 = vpack.c.b16 %v2176, %v2175
        %2193 = vrot.lane.b32.xlu0 %v2177, 8
        %v2194 = vpop.permute.xlu0 %2193
        %2195 = vrot.lane.b32.xlu0 %v2178, 8
        %v2196 = vpop.permute.xlu0 %2195
        %2197 = vrot.lane.b32.xlu0 %v2179, 8
        %v2198 = vpop.permute.xlu0 %2197
        %2199 = vrot.lane.b32.xlu0 %v2180, 8
        %v2200 = vpop.permute.xlu0 %2199
        %2201 = vrot.lane.b32.xlu0 %v2181, 8
        %v2202 = vpop.permute.xlu0 %2201
        %2203 = vrot.lane.b32.xlu0 %v2182, 8
        %v2204 = vpop.permute.xlu0 %2203
        %2205 = vrot.lane.b32.xlu0 %v2183, 8
        %v2206 = vpop.permute.xlu0 %2205
        %2207 = vrot.lane.b32.xlu0 %v2184, 8
        %v2208 = vpop.permute.xlu0 %2207
        %2209 = vrot.lane.b32.xlu0 %v2185, 8
        %v2210 = vpop.permute.xlu0 %2209
        %2211 = vrot.lane.b32.xlu0 %v2186, 8
        %v2212 = vpop.permute.xlu0 %2211
        %2213 = vrot.lane.b32.xlu0 %v2187, 8
        %v2214 = vpop.permute.xlu0 %2213
        %2215 = vrot.lane.b32.xlu0 %v2188, 8
        %v2216 = vpop.permute.xlu0 %2215
        %2217 = vrot.lane.b32.xlu0 %v2189, 8
        %v2218 = vpop.permute.xlu0 %2217
        %2219 = vrot.lane.b32.xlu0 %v2190, 8
        %v2220 = vpop.permute.xlu0 %2219
        %2221 = vrot.lane.b32.xlu0 %v2191, 8
        %v2222 = vpop.permute.xlu0 %2221
        %2223 = vrot.lane.b32.xlu0 %v2192, 8
        %v2224 = vpop.permute.xlu0 %2223
        %v2225 = vunpack.c.l.b16 %v748
        %v2226 = vunpack.c.l.b16 %v751
        %v2227 = vunpack.c.l.b16 %v755
        %v2228 = vunpack.c.l.b16 %v758
        %v2229 = vunpack.c.l.b16 %v762
        %v2230 = vunpack.c.l.b16 %v765
        %v2231 = vunpack.c.l.b16 %v769
        %v2232 = vunpack.c.l.b16 %v772
        %v2233 = vunpack.c.l.b16 %v776
        %v2234 = vunpack.c.l.b16 %v779
        %v2235 = vunpack.c.l.b16 %v783
        %v2236 = vunpack.c.l.b16 %v786
        %v2237 = vunpack.c.l.b16 %v790
        %v2238 = vunpack.c.l.b16 %v793
        %v2239 = vunpack.c.l.b16 %v797
        %v2240 = vunpack.c.l.b16 %v800
        %v2241 = vunpack.c.l.b16 %v804
        %v2242 = vunpack.c.l.b16 %v807
        %v2243 = vunpack.c.l.b16 %v811
        %v2244 = vunpack.c.l.b16 %v814
        %v2245 = vunpack.c.l.b16 %v818
        %v2246 = vunpack.c.l.b16 %v821
        %v2247 = vunpack.c.l.b16 %v825
        %v2248 = vunpack.c.l.b16 %v828
        %v2249 = vunpack.c.l.b16 %v832
        %v2250 = vunpack.c.l.b16 %v835
        %v2251 = vunpack.c.l.b16 %v839
        %v2252 = vunpack.c.l.b16 %v842
        %v2253 = vunpack.c.l.b16 %v846
        %v2254 = vunpack.c.l.b16 %v849
        %v2255 = vunpack.c.l.b16 %v853
        %v2256 = vunpack.c.l.b16 %v856
        %v2257 = vpack.c.b16 %v2226, %v2225
        %v2258 = vpack.c.b16 %v2228, %v2227
        %v2259 = vpack.c.b16 %v2230, %v2229
        %v2260 = vpack.c.b16 %v2232, %v2231
        %v2261 = vpack.c.b16 %v2234, %v2233
        %v2262 = vpack.c.b16 %v2236, %v2235
        %v2263 = vpack.c.b16 %v2238, %v2237
        %v2264 = vpack.c.b16 %v2240, %v2239
        %v2265 = vpack.c.b16 %v2242, %v2241
        %v2266 = vpack.c.b16 %v2244, %v2243
        %v2267 = vpack.c.b16 %v2246, %v2245
        %v2268 = vpack.c.b16 %v2248, %v2247
        %v2269 = vpack.c.b16 %v2250, %v2249
        %v2270 = vpack.c.b16 %v2252, %v2251
        %v2271 = vpack.c.b16 %v2254, %v2253
        %v2272 = vpack.c.b16 %v2256, %v2255
        %2273 = vrot.lane.b32.xlu0 %v2257, 16
        %v2274 = vpop.permute.xlu0 %2273
        %2275 = vrot.lane.b32.xlu0 %v2258, 16
        %v2276 = vpop.permute.xlu0 %2275
        %2277 = vrot.lane.b32.xlu0 %v2259, 16
        %v2278 = vpop.permute.xlu0 %2277
        %2279 = vrot.lane.b32.xlu0 %v2260, 16
        %v2280 = vpop.permute.xlu0 %2279
        %2281 = vrot.lane.b32.xlu0 %v2261, 16
        %v2282 = vpop.permute.xlu0 %2281
        %2283 = vrot.lane.b32.xlu0 %v2262, 16
        %v2284 = vpop.permute.xlu0 %2283
        %2285 = vrot.lane.b32.xlu0 %v2263, 16
        %v2286 = vpop.permute.xlu0 %2285
        %2287 = vrot.lane.b32.xlu0 %v2264, 16
        %v2288 = vpop.permute.xlu0 %2287
        %2289 = vrot.lane.b32.xlu0 %v2265, 16
        %v2290 = vpop.permute.xlu0 %2289
        %2291 = vrot.lane.b32.xlu0 %v2266, 16
        %v2292 = vpop.permute.xlu0 %2291
        %2293 = vrot.lane.b32.xlu0 %v2267, 16
        %v2294 = vpop.permute.xlu0 %2293
        %2295 = vrot.lane.b32.xlu0 %v2268, 16
        %v2296 = vpop.permute.xlu0 %2295
        %2297 = vrot.lane.b32.xlu0 %v2269, 16
        %v2298 = vpop.permute.xlu0 %2297
        %2299 = vrot.lane.b32.xlu0 %v2270, 16
        %v2300 = vpop.permute.xlu0 %2299
        %2301 = vrot.lane.b32.xlu0 %v2271, 16
        %v2302 = vpop.permute.xlu0 %2301
        %2303 = vrot.lane.b32.xlu0 %v2272, 16
        %v2304 = vpop.permute.xlu0 %2303
        %v2321 = vunpack.c.l.b16 %v861
        %v2322 = vunpack.c.l.b16 %v862
        %v2323 = vunpack.c.l.b16 %v863
        %v2324 = vunpack.c.l.b16 %v864
        %v2325 = vunpack.c.l.b16 %v865
        %v2326 = vunpack.c.l.b16 %v866
        %v2327 = vunpack.c.l.b16 %v867
        %v2328 = vunpack.c.l.b16 %v868
        %v2329 = vunpack.c.l.b16 %v869
        %v2330 = vunpack.c.l.b16 %v870
        %v2331 = vunpack.c.l.b16 %v871
        %v2332 = vunpack.c.l.b16 %v872
        %v2333 = vunpack.c.l.b16 %v873
        %v2334 = vunpack.c.l.b16 %v874
        %v2335 = vunpack.c.l.b16 %v875
        %v2336 = vunpack.c.l.b16 %v876
        %v2337 = vunpack.c.l.b16 %v877
        %v2338 = vunpack.c.l.b16 %v878
        %v2339 = vunpack.c.l.b16 %v879
        %v2340 = vunpack.c.l.b16 %v880
        %v2341 = vunpack.c.l.b16 %v881
        %v2342 = vunpack.c.l.b16 %v882
        %v2343 = vunpack.c.l.b16 %v883
        %v2344 = vunpack.c.l.b16 %v884
        %v2345 = vunpack.c.l.b16 %v885
        %v2346 = vunpack.c.l.b16 %v886
        %v2347 = vunpack.c.l.b16 %v887
        %v2348 = vunpack.c.l.b16 %v888
        %v2349 = vunpack.c.l.b16 %v889
        %v2350 = vunpack.c.l.b16 %v890
        %v2351 = vunpack.c.l.b16 %v891
        %v2352 = vunpack.c.l.b16 %v892
        %v2353 = vpack.c.b16 %v2322, %v2321
        %v2354 = vpack.c.b16 %v2324, %v2323
        %v2355 = vpack.c.b16 %v2326, %v2325
        %v2356 = vpack.c.b16 %v2328, %v2327
        %v2357 = vpack.c.b16 %v2330, %v2329
        %v2358 = vpack.c.b16 %v2332, %v2331
        %v2359 = vpack.c.b16 %v2334, %v2333
        %v2360 = vpack.c.b16 %v2336, %v2335
        %v2361 = vpack.c.b16 %v2338, %v2337
        %v2362 = vpack.c.b16 %v2340, %v2339
        %v2363 = vpack.c.b16 %v2342, %v2341
        %v2364 = vpack.c.b16 %v2344, %v2343
        %v2365 = vpack.c.b16 %v2346, %v2345
        %v2366 = vpack.c.b16 %v2348, %v2347
        %v2367 = vpack.c.b16 %v2350, %v2349
        %v2368 = vpack.c.b16 %v2352, %v2351
        %2369 = vrot.lane.b32.xlu0 %v2353, 24
        %v2370 = vpop.permute.xlu0 %2369
        %2371 = vrot.lane.b32.xlu0 %v2354, 24
        %v2372 = vpop.permute.xlu0 %2371
        %2373 = vrot.lane.b32.xlu0 %v2355, 24
        %v2374 = vpop.permute.xlu0 %2373
        %2375 = vrot.lane.b32.xlu0 %v2356, 24
        %v2376 = vpop.permute.xlu0 %2375
        %2377 = vrot.lane.b32.xlu0 %v2357, 24
        %v2378 = vpop.permute.xlu0 %2377
        %2379 = vrot.lane.b32.xlu0 %v2358, 24
        %v2380 = vpop.permute.xlu0 %2379
        %2381 = vrot.lane.b32.xlu0 %v2359, 24
        %v2382 = vpop.permute.xlu0 %2381
        %2383 = vrot.lane.b32.xlu0 %v2360, 24
        %v2384 = vpop.permute.xlu0 %2383
        %2385 = vrot.lane.b32.xlu0 %v2361, 24
        %v2386 = vpop.permute.xlu0 %2385
        %2387 = vrot.lane.b32.xlu0 %v2362, 24
        %v2388 = vpop.permute.xlu0 %2387
        %2389 = vrot.lane.b32.xlu0 %v2363, 24
        %v2390 = vpop.permute.xlu0 %2389
        %2391 = vrot.lane.b32.xlu0 %v2364, 24
        %v2392 = vpop.permute.xlu0 %2391
        %2393 = vrot.lane.b32.xlu0 %v2365, 24
        %v2394 = vpop.permute.xlu0 %2393
        %2395 = vrot.lane.b32.xlu0 %v2366, 24
        %v2396 = vpop.permute.xlu0 %2395
        %2397 = vrot.lane.b32.xlu0 %v2367, 24
        %v2398 = vpop.permute.xlu0 %2397
        %2399 = vrot.lane.b32.xlu0 %v2368, 24
        %v2400 = vpop.permute.xlu0 %2399
        %v2401 = vunpack.c.l.b16 %v922
        %v2402 = vunpack.c.l.b16 %v932
        %v2403 = vunpack.c.l.b16 %v946
        %v2404 = vunpack.c.l.b16 %v956
        %v2405 = vunpack.c.l.b16 %v970
        %v2406 = vunpack.c.l.b16 %v980
        %v2407 = vunpack.c.l.b16 %v994
        %v2408 = vunpack.c.l.b16 %v1004
        %v2409 = vunpack.c.l.b16 %v1018
        %v2410 = vunpack.c.l.b16 %v1028
        %v2411 = vunpack.c.l.b16 %v1042
        %v2412 = vunpack.c.l.b16 %v1052
        %v2413 = vunpack.c.l.b16 %v1066
        %v2414 = vunpack.c.l.b16 %v1076
        %v2415 = vunpack.c.l.b16 %v1090
        %v2416 = vunpack.c.l.b16 %v1100
        %v2417 = vunpack.c.l.b16 %v1114
        %v2418 = vunpack.c.l.b16 %v1124
        %v2419 = vunpack.c.l.b16 %v1138
        %v2420 = vunpack.c.l.b16 %v1148
        %v2421 = vunpack.c.l.b16 %v1162
        %v2422 = vunpack.c.l.b16 %v1172
        %v2423 = vunpack.c.l.b16 %v1186
        %v2424 = vunpack.c.l.b16 %v1196
        %v2425 = vunpack.c.l.b16 %v1210
        %v2426 = vunpack.c.l.b16 %v1220
        %v2427 = vunpack.c.l.b16 %v1234
        %v2428 = vunpack.c.l.b16 %v1244
        %v2429 = vunpack.c.l.b16 %v1258
        %v2430 = vunpack.c.l.b16 %v1268
        %v2431 = vunpack.c.l.b16 %v1282
        %v2432 = vunpack.c.l.b16 %v1292
        %v2433 = vpack.c.b16 %v2402, %v2401
        %v2434 = vpack.c.b16 %v2404, %v2403
        %v2435 = vpack.c.b16 %v2406, %v2405
        %v2436 = vpack.c.b16 %v2408, %v2407
        %v2437 = vpack.c.b16 %v2410, %v2409
        %v2438 = vpack.c.b16 %v2412, %v2411
        %v2439 = vpack.c.b16 %v2414, %v2413
        %v2440 = vpack.c.b16 %v2416, %v2415
        %v2441 = vpack.c.b16 %v2418, %v2417
        %v2442 = vpack.c.b16 %v2420, %v2419
        %v2443 = vpack.c.b16 %v2422, %v2421
        %v2444 = vpack.c.b16 %v2424, %v2423
        %v2445 = vpack.c.b16 %v2426, %v2425
        %v2446 = vpack.c.b16 %v2428, %v2427
        %v2447 = vpack.c.b16 %v2430, %v2429
        %v2448 = vpack.c.b16 %v2432, %v2431
        %2449 = vrot.lane.b32.xlu0 %v2433, 32
        %v2450 = vpop.permute.xlu0 %2449
        %2451 = vrot.lane.b32.xlu0 %v2434, 32
        %v2452 = vpop.permute.xlu0 %2451
        %2453 = vrot.lane.b32.xlu0 %v2435, 32
        %v2454 = vpop.permute.xlu0 %2453
        %2455 = vrot.lane.b32.xlu0 %v2436, 32
        %v2456 = vpop.permute.xlu0 %2455
        %2457 = vrot.lane.b32.xlu0 %v2437, 32
        %v2458 = vpop.permute.xlu0 %2457
        %2459 = vrot.lane.b32.xlu0 %v2438, 32
        %v2460 = vpop.permute.xlu0 %2459
        %2461 = vrot.lane.b32.xlu0 %v2439, 32
        %v2462 = vpop.permute.xlu0 %2461
        %2463 = vrot.lane.b32.xlu0 %v2440, 32
        %v2464 = vpop.permute.xlu0 %2463
        %2465 = vrot.lane.b32.xlu0 %v2441, 32
        %v2466 = vpop.permute.xlu0 %2465
        %2467 = vrot.lane.b32.xlu0 %v2442, 32
        %v2468 = vpop.permute.xlu0 %2467
        %2469 = vrot.lane.b32.xlu0 %v2443, 32
        %v2470 = vpop.permute.xlu0 %2469
        %2471 = vrot.lane.b32.xlu0 %v2444, 32
        %v2472 = vpop.permute.xlu0 %2471
        %2473 = vrot.lane.b32.xlu0 %v2445, 32
        %v2474 = vpop.permute.xlu0 %2473
        %2475 = vrot.lane.b32.xlu0 %v2446, 32
        %v2476 = vpop.permute.xlu0 %2475
        %2477 = vrot.lane.b32.xlu0 %v2447, 32
        %v2478 = vpop.permute.xlu0 %2477
        %2479 = vrot.lane.b32.xlu0 %v2448, 32
        %v2480 = vpop.permute.xlu0 %2479
        %v2481 = vunpack.c.l.b16 %v1360
        %v2482 = vunpack.c.l.b16 %v1363
        %v2483 = vunpack.c.l.b16 %v1367
        %v2484 = vunpack.c.l.b16 %v1370
        %v2485 = vunpack.c.l.b16 %v1374
        %v2486 = vunpack.c.l.b16 %v1377
        %v2487 = vunpack.c.l.b16 %v1381
        %v2488 = vunpack.c.l.b16 %v1384
        %v2489 = vunpack.c.l.b16 %v1388
        %v2490 = vunpack.c.l.b16 %v1391
        %v2491 = vunpack.c.l.b16 %v1395
        %v2492 = vunpack.c.l.b16 %v1398
        %v2493 = vunpack.c.l.b16 %v1402
        %v2494 = vunpack.c.l.b16 %v1405
        %v2495 = vunpack.c.l.b16 %v1409
        %v2496 = vunpack.c.l.b16 %v1412
        %v2497 = vunpack.c.l.b16 %v1416
        %v2498 = vunpack.c.l.b16 %v1419
        %v2499 = vunpack.c.l.b16 %v1423
        %v2500 = vunpack.c.l.b16 %v1426
        %v2501 = vunpack.c.l.b16 %v1430
        %v2502 = vunpack.c.l.b16 %v1433
        %v2503 = vunpack.c.l.b16 %v1437
        %v2504 = vunpack.c.l.b16 %v1440
        %v2505 = vunpack.c.l.b16 %v1444
        %v2506 = vunpack.c.l.b16 %v1447
        %v2507 = vunpack.c.l.b16 %v1451
        %v2508 = vunpack.c.l.b16 %v1454
        %v2509 = vunpack.c.l.b16 %v1458
        %v2510 = vunpack.c.l.b16 %v1461
        %v2511 = vunpack.c.l.b16 %v1465
        %v2512 = vunpack.c.l.b16 %v1468
        %v2513 = vpack.c.b16 %v2482, %v2481
        %v2514 = vpack.c.b16 %v2484, %v2483
        %v2515 = vpack.c.b16 %v2486, %v2485
        %v2516 = vpack.c.b16 %v2488, %v2487
        %v2517 = vpack.c.b16 %v2490, %v2489
        %v2518 = vpack.c.b16 %v2492, %v2491
        %v2519 = vpack.c.b16 %v2494, %v2493
        %v2520 = vpack.c.b16 %v2496, %v2495
        %v2521 = vpack.c.b16 %v2498, %v2497
        %v2522 = vpack.c.b16 %v2500, %v2499
        %v2523 = vpack.c.b16 %v2502, %v2501
        %v2524 = vpack.c.b16 %v2504, %v2503
        %v2525 = vpack.c.b16 %v2506, %v2505
        %v2526 = vpack.c.b16 %v2508, %v2507
        %v2527 = vpack.c.b16 %v2510, %v2509
        %v2528 = vpack.c.b16 %v2512, %v2511
        %2529 = vrot.lane.b32.xlu0 %v2513, 40
        %v2530 = vpop.permute.xlu0 %2529
        %2531 = vrot.lane.b32.xlu0 %v2514, 40
        %v2532 = vpop.permute.xlu0 %2531
        %2533 = vrot.lane.b32.xlu0 %v2515, 40
        %v2534 = vpop.permute.xlu0 %2533
        %2535 = vrot.lane.b32.xlu0 %v2516, 40
        %v2536 = vpop.permute.xlu0 %2535
        %2537 = vrot.lane.b32.xlu0 %v2517, 40
        %v2538 = vpop.permute.xlu0 %2537
        %2539 = vrot.lane.b32.xlu0 %v2518, 40
        %v2540 = vpop.permute.xlu0 %2539
        %2541 = vrot.lane.b32.xlu0 %v2519, 40
        %v2542 = vpop.permute.xlu0 %2541
        %2543 = vrot.lane.b32.xlu0 %v2520, 40
        %v2544 = vpop.permute.xlu0 %2543
        %2545 = vrot.lane.b32.xlu0 %v2521, 40
        %v2546 = vpop.permute.xlu0 %2545
        %2547 = vrot.lane.b32.xlu0 %v2522, 40
        %v2548 = vpop.permute.xlu0 %2547
        %2549 = vrot.lane.b32.xlu0 %v2523, 40
        %v2550 = vpop.permute.xlu0 %2549
        %2551 = vrot.lane.b32.xlu0 %v2524, 40
        %v2552 = vpop.permute.xlu0 %2551
        %2553 = vrot.lane.b32.xlu0 %v2525, 40
        %v2554 = vpop.permute.xlu0 %2553
        %2555 = vrot.lane.b32.xlu0 %v2526, 40
        %v2556 = vpop.permute.xlu0 %2555
        %2557 = vrot.lane.b32.xlu0 %v2527, 40
        %v2558 = vpop.permute.xlu0 %2557
        %2559 = vrot.lane.b32.xlu0 %v2528, 40
        %v2560 = vpop.permute.xlu0 %2559
        %v2577 = vunpack.c.l.b16 %v1473
        %v2578 = vunpack.c.l.b16 %v1474
        %v2579 = vunpack.c.l.b16 %v1475
        %v2580 = vunpack.c.l.b16 %v1476
        %v2581 = vunpack.c.l.b16 %v1477
        %v2582 = vunpack.c.l.b16 %v1478
        %v2583 = vunpack.c.l.b16 %v1479
        %v2584 = vunpack.c.l.b16 %v1480
        %v2585 = vunpack.c.l.b16 %v1481
        %v2586 = vunpack.c.l.b16 %v1482
        %v2587 = vunpack.c.l.b16 %v1483
        %v2588 = vunpack.c.l.b16 %v1484
        %v2589 = vunpack.c.l.b16 %v1485
        %v2590 = vunpack.c.l.b16 %v1486
        %v2591 = vunpack.c.l.b16 %v1487
        %v2592 = vunpack.c.l.b16 %v1488
        %v2593 = vunpack.c.l.b16 %v1489
        %v2594 = vunpack.c.l.b16 %v1490
        %v2595 = vunpack.c.l.b16 %v1491
        %v2596 = vunpack.c.l.b16 %v1492
        %v2597 = vunpack.c.l.b16 %v1493
        %v2598 = vunpack.c.l.b16 %v1494
        %v2599 = vunpack.c.l.b16 %v1495
        %v2600 = vunpack.c.l.b16 %v1496
        %v2601 = vunpack.c.l.b16 %v1497
        %v2602 = vunpack.c.l.b16 %v1498
        %v2603 = vunpack.c.l.b16 %v1499
        %v2604 = vunpack.c.l.b16 %v1500
        %v2605 = vunpack.c.l.b16 %v1501
        %v2606 = vunpack.c.l.b16 %v1502
        %v2607 = vunpack.c.l.b16 %v1503
        %v2608 = vunpack.c.l.b16 %v1504
        %v2609 = vpack.c.b16 %v2578, %v2577
        %v2610 = vpack.c.b16 %v2580, %v2579
        %v2611 = vpack.c.b16 %v2582, %v2581
        %v2612 = vpack.c.b16 %v2584, %v2583
        %v2613 = vpack.c.b16 %v2586, %v2585
        %v2614 = vpack.c.b16 %v2588, %v2587
        %v2615 = vpack.c.b16 %v2590, %v2589
        %v2616 = vpack.c.b16 %v2592, %v2591
        %v2617 = vpack.c.b16 %v2594, %v2593
        %v2618 = vpack.c.b16 %v2596, %v2595
        %v2619 = vpack.c.b16 %v2598, %v2597
        %v2620 = vpack.c.b16 %v2600, %v2599
        %v2621 = vpack.c.b16 %v2602, %v2601
        %v2622 = vpack.c.b16 %v2604, %v2603
        %v2623 = vpack.c.b16 %v2606, %v2605
        %v2624 = vpack.c.b16 %v2608, %v2607
        %2625 = vrot.lane.b32.xlu0 %v2609, 48
        %v2626 = vpop.permute.xlu0 %2625
        %2627 = vrot.lane.b32.xlu0 %v2610, 48
        %v2628 = vpop.permute.xlu0 %2627
        %2629 = vrot.lane.b32.xlu0 %v2611, 48
        %v2630 = vpop.permute.xlu0 %2629
        %2631 = vrot.lane.b32.xlu0 %v2612, 48
        %v2632 = vpop.permute.xlu0 %2631
        %2633 = vrot.lane.b32.xlu0 %v2613, 48
        %v2634 = vpop.permute.xlu0 %2633
        %2635 = vrot.lane.b32.xlu0 %v2614, 48
        %v2636 = vpop.permute.xlu0 %2635
        %2637 = vrot.lane.b32.xlu0 %v2615, 48
        %v2638 = vpop.permute.xlu0 %2637
        %2639 = vrot.lane.b32.xlu0 %v2616, 48
        %v2640 = vpop.permute.xlu0 %2639
        %2641 = vrot.lane.b32.xlu0 %v2617, 48
        %v2642 = vpop.permute.xlu0 %2641
        %2643 = vrot.lane.b32.xlu0 %v2618, 48
        %v2644 = vpop.permute.xlu0 %2643
        %2645 = vrot.lane.b32.xlu0 %v2619, 48
        %v2646 = vpop.permute.xlu0 %2645
        %2647 = vrot.lane.b32.xlu0 %v2620, 48
        %v2648 = vpop.permute.xlu0 %2647
        %2649 = vrot.lane.b32.xlu0 %v2621, 48
        %v2650 = vpop.permute.xlu0 %2649
        %2651 = vrot.lane.b32.xlu0 %v2622, 48
        %v2652 = vpop.permute.xlu0 %2651
        %2653 = vrot.lane.b32.xlu0 %v2623, 48
        %v2654 = vpop.permute.xlu0 %2653
        %2655 = vrot.lane.b32.xlu0 %v2624, 48
        %v2656 = vpop.permute.xlu0 %2655
        %v2657 = vunpack.c.l.b16 %v1534
        %v2658 = vunpack.c.l.b16 %v1544
        %v2659 = vunpack.c.l.b16 %v1558
        %v2660 = vunpack.c.l.b16 %v1568
        %v2661 = vunpack.c.l.b16 %v1582
        %v2662 = vunpack.c.l.b16 %v1592
        %v2663 = vunpack.c.l.b16 %v1606
        %v2664 = vunpack.c.l.b16 %v1616
        %v2665 = vunpack.c.l.b16 %v1630
        %v2666 = vunpack.c.l.b16 %v1640
        %v2667 = vunpack.c.l.b16 %v1654
        %v2668 = vunpack.c.l.b16 %v1664
        %v2669 = vunpack.c.l.b16 %v1678
        %v2670 = vunpack.c.l.b16 %v1688
        %v2671 = vunpack.c.l.b16 %v1702
        %v2672 = vunpack.c.l.b16 %v1712
        %v2673 = vunpack.c.l.b16 %v1726
        %v2674 = vunpack.c.l.b16 %v1736
        %v2675 = vunpack.c.l.b16 %v1750
        %v2676 = vunpack.c.l.b16 %v1760
        %v2677 = vunpack.c.l.b16 %v1774
        %v2678 = vunpack.c.l.b16 %v1784
        %v2679 = vunpack.c.l.b16 %v1798
        %v2680 = vunpack.c.l.b16 %v1808
        %v2681 = vunpack.c.l.b16 %v1822
        %v2682 = vunpack.c.l.b16 %v1832
        %v2683 = vunpack.c.l.b16 %v1846
        %v2684 = vunpack.c.l.b16 %v1856
        %v2685 = vunpack.c.l.b16 %v1870
        %v2686 = vunpack.c.l.b16 %v1880
        %v2687 = vunpack.c.l.b16 %v1894
        %v2688 = vunpack.c.l.b16 %v1904
        %v2689 = vpack.c.b16 %v2658, %v2657
        %v2690 = vpack.c.b16 %v2660, %v2659
        %v2691 = vpack.c.b16 %v2662, %v2661
        %v2692 = vpack.c.b16 %v2664, %v2663
        %v2693 = vpack.c.b16 %v2666, %v2665
        %v2694 = vpack.c.b16 %v2668, %v2667
        %v2695 = vpack.c.b16 %v2670, %v2669
        %v2696 = vpack.c.b16 %v2672, %v2671
        %v2697 = vpack.c.b16 %v2674, %v2673
        %v2698 = vpack.c.b16 %v2676, %v2675
        %v2699 = vpack.c.b16 %v2678, %v2677
        %v2700 = vpack.c.b16 %v2680, %v2679
        %v2701 = vpack.c.b16 %v2682, %v2681
        %v2702 = vpack.c.b16 %v2684, %v2683
        %v2703 = vpack.c.b16 %v2686, %v2685
        %v2704 = vpack.c.b16 %v2688, %v2687
        %2705 = vrot.lane.b32.xlu0 %v2689, 56
        %v2706 = vpop.permute.xlu0 %2705
        %2707 = vrot.lane.b32.xlu0 %v2690, 56
        %v2708 = vpop.permute.xlu0 %2707
        %2709 = vrot.lane.b32.xlu0 %v2691, 56
        %v2710 = vpop.permute.xlu0 %2709
        %2711 = vrot.lane.b32.xlu0 %v2692, 56
        %v2712 = vpop.permute.xlu0 %2711
        %2713 = vrot.lane.b32.xlu0 %v2693, 56
        %v2714 = vpop.permute.xlu0 %2713
        %2715 = vrot.lane.b32.xlu0 %v2694, 56
        %v2716 = vpop.permute.xlu0 %2715
        %2717 = vrot.lane.b32.xlu0 %v2695, 56
        %v2718 = vpop.permute.xlu0 %2717
        %2719 = vrot.lane.b32.xlu0 %v2696, 56
        %v2720 = vpop.permute.xlu0 %2719
        %2721 = vrot.lane.b32.xlu0 %v2697, 56
        %v2722 = vpop.permute.xlu0 %2721
        %2723 = vrot.lane.b32.xlu0 %v2698, 56
        %v2724 = vpop.permute.xlu0 %2723
        %2725 = vrot.lane.b32.xlu0 %v2699, 56
        %v2726 = vpop.permute.xlu0 %2725
        %2727 = vrot.lane.b32.xlu0 %v2700, 56
        %v2728 = vpop.permute.xlu0 %2727
        %2729 = vrot.lane.b32.xlu0 %v2701, 56
        %v2730 = vpop.permute.xlu0 %2729
        %2731 = vrot.lane.b32.xlu0 %v2702, 56
        %v2732 = vpop.permute.xlu0 %2731
        %2733 = vrot.lane.b32.xlu0 %v2703, 56
        %v2734 = vpop.permute.xlu0 %2733
        %2735 = vrot.lane.b32.xlu0 %v2704, 56
        %v2736 = vpop.permute.xlu0 %2735
        %v2737 = vunpack.c.l.b16 %v1972
        %v2738 = vunpack.c.l.b16 %v1975
        %v2739 = vunpack.c.l.b16 %v1979
        %v2740 = vunpack.c.l.b16 %v1982
        %v2741 = vunpack.c.l.b16 %v1986
        %v2742 = vunpack.c.l.b16 %v1989
        %v2743 = vunpack.c.l.b16 %v1993
        %v2744 = vunpack.c.l.b16 %v1996
        %v2745 = vunpack.c.l.b16 %v2000
        %v2746 = vunpack.c.l.b16 %v2003
        %v2747 = vunpack.c.l.b16 %v2007
        %v2748 = vunpack.c.l.b16 %v2010
        %v2749 = vunpack.c.l.b16 %v2014
        %v2750 = vunpack.c.l.b16 %v2017
        %v2751 = vunpack.c.l.b16 %v2021
        %v2752 = vunpack.c.l.b16 %v2024
        %v2753 = vunpack.c.l.b16 %v2028
        %v2754 = vunpack.c.l.b16 %v2031
        %v2755 = vunpack.c.l.b16 %v2035
        %v2756 = vunpack.c.l.b16 %v2038
        %v2757 = vunpack.c.l.b16 %v2042
        %v2758 = vunpack.c.l.b16 %v2045
        %v2759 = vunpack.c.l.b16 %v2049
        %v2760 = vunpack.c.l.b16 %v2052
        %v2761 = vunpack.c.l.b16 %v2056
        %v2762 = vunpack.c.l.b16 %v2059
        %v2763 = vunpack.c.l.b16 %v2063
        %v2764 = vunpack.c.l.b16 %v2066
        %v2765 = vunpack.c.l.b16 %v2070
        %v2766 = vunpack.c.l.b16 %v2073
        %v2767 = vunpack.c.l.b16 %v2077
        %v2768 = vunpack.c.l.b16 %v2080
        %v2769 = vpack.c.b16 %v2738, %v2737
        %v2770 = vpack.c.b16 %v2740, %v2739
        %v2771 = vpack.c.b16 %v2742, %v2741
        %v2772 = vpack.c.b16 %v2744, %v2743
        %v2773 = vpack.c.b16 %v2746, %v2745
        %v2774 = vpack.c.b16 %v2748, %v2747
        %v2775 = vpack.c.b16 %v2750, %v2749
        %v2776 = vpack.c.b16 %v2752, %v2751
        %v2777 = vpack.c.b16 %v2754, %v2753
        %v2778 = vpack.c.b16 %v2756, %v2755
        %v2779 = vpack.c.b16 %v2758, %v2757
        %v2780 = vpack.c.b16 %v2760, %v2759
        %v2781 = vpack.c.b16 %v2762, %v2761
        %v2782 = vpack.c.b16 %v2764, %v2763
        %v2783 = vpack.c.b16 %v2766, %v2765
        %v2784 = vpack.c.b16 %v2768, %v2767
        %2785 = vrot.lane.b32.xlu0 %v2769, 64
        %v2786 = vpop.permute.xlu0 %2785
        %2787 = vrot.lane.b32.xlu0 %v2770, 64
        %v2788 = vpop.permute.xlu0 %2787
        %2789 = vrot.lane.b32.xlu0 %v2771, 64
        %v2790 = vpop.permute.xlu0 %2789
        %2791 = vrot.lane.b32.xlu0 %v2772, 64
        %v2792 = vpop.permute.xlu0 %2791
        %2793 = vrot.lane.b32.xlu0 %v2773, 64
        %v2794 = vpop.permute.xlu0 %2793
        %2795 = vrot.lane.b32.xlu0 %v2774, 64
        %v2796 = vpop.permute.xlu0 %2795
        %2797 = vrot.lane.b32.xlu0 %v2775, 64
        %v2798 = vpop.permute.xlu0 %2797
        %2799 = vrot.lane.b32.xlu0 %v2776, 64
        %v2800 = vpop.permute.xlu0 %2799
        %2801 = vrot.lane.b32.xlu0 %v2777, 64
        %v2802 = vpop.permute.xlu0 %2801
        %2803 = vrot.lane.b32.xlu0 %v2778, 64
        %v2804 = vpop.permute.xlu0 %2803
        %2805 = vrot.lane.b32.xlu0 %v2779, 64
        %v2806 = vpop.permute.xlu0 %2805
        %2807 = vrot.lane.b32.xlu0 %v2780, 64
        %v2808 = vpop.permute.xlu0 %2807
        %2809 = vrot.lane.b32.xlu0 %v2781, 64
        %v2810 = vpop.permute.xlu0 %2809
        %2811 = vrot.lane.b32.xlu0 %v2782, 64
        %v2812 = vpop.permute.xlu0 %2811
        %2813 = vrot.lane.b32.xlu0 %v2783, 64
        %v2814 = vpop.permute.xlu0 %2813
        %2815 = vrot.lane.b32.xlu0 %v2784, 64
        %v2816 = vpop.permute.xlu0 %2815
        %vm2817 = vcmask 64512
        %v2820 = vsel %vm2817, %v2129, %v2194
        %v2823 = vsel %vm2817, %v2130, %v2196
        %v2826 = vsel %vm2817, %v2131, %v2198
        %v2829 = vsel %vm2817, %v2132, %v2200
        %v2832 = vsel %vm2817, %v2133, %v2202
        %v2835 = vsel %vm2817, %v2134, %v2204
        %v2838 = vsel %vm2817, %v2135, %v2206
        %v2841 = vsel %vm2817, %v2136, %v2208
        %v2844 = vsel %vm2817, %v2137, %v2210
        %v2847 = vsel %vm2817, %v2138, %v2212
        %v2850 = vsel %vm2817, %v2139, %v2214
        %v2853 = vsel %vm2817, %v2140, %v2216
        %v2856 = vsel %vm2817, %v2141, %v2218
        %v2859 = vsel %vm2817, %v2142, %v2220
        %v2862 = vsel %vm2817, %v2143, %v2222
        %v2865 = vsel %vm2817, %v2144, %v2224
        %vm2866 = vcmask 130048
        %v2868 = vsel %vm2866, %v2820, %v2274
        %v2870 = vsel %vm2866, %v2823, %v2276
        %v2872 = vsel %vm2866, %v2826, %v2278
        %v2874 = vsel %vm2866, %v2829, %v2280
        %v2876 = vsel %vm2866, %v2832, %v2282
        %v2878 = vsel %vm2866, %v2835, %v2284
        %v2880 = vsel %vm2866, %v2838, %v2286
        %v2882 = vsel %vm2866, %v2841, %v2288
        %v2884 = vsel %vm2866, %v2844, %v2290
        %v2886 = vsel %vm2866, %v2847, %v2292
        %v2888 = vsel %vm2866, %v2850, %v2294
        %v2890 = vsel %vm2866, %v2853, %v2296
        %v2892 = vsel %vm2866, %v2856, %v2298
        %v2894 = vsel %vm2866, %v2859, %v2300
        %v2896 = vsel %vm2866, %v2862, %v2302
        %v2898 = vsel %vm2866, %v2865, %v2304
        %vm2899 = vcmask 195584
        %v2901 = vsel %vm2899, %v2868, %v2370
        %v2903 = vsel %vm2899, %v2870, %v2372
        %v2905 = vsel %vm2899, %v2872, %v2374
        %v2907 = vsel %vm2899, %v2874, %v2376
        %v2909 = vsel %vm2899, %v2876, %v2378
        %v2911 = vsel %vm2899, %v2878, %v2380
        %v2913 = vsel %vm2899, %v2880, %v2382
        %v2915 = vsel %vm2899, %v2882, %v2384
        %v2917 = vsel %vm2899, %v2884, %v2386
        %v2919 = vsel %vm2899, %v2886, %v2388
        %v2921 = vsel %vm2899, %v2888, %v2390
        %v2923 = vsel %vm2899, %v2890, %v2392
        %v2925 = vsel %vm2899, %v2892, %v2394
        %v2927 = vsel %vm2899, %v2894, %v2396
        %v2929 = vsel %vm2899, %v2896, %v2398
        %v2931 = vsel %vm2899, %v2898, %v2400
        %vm2932 = vcmask 261120
        %v2934 = vsel %vm2932, %v2901, %v2450
        %v2936 = vsel %vm2932, %v2903, %v2452
        %v2938 = vsel %vm2932, %v2905, %v2454
        %v2940 = vsel %vm2932, %v2907, %v2456
        %v2942 = vsel %vm2932, %v2909, %v2458
        %v2944 = vsel %vm2932, %v2911, %v2460
        %v2946 = vsel %vm2932, %v2913, %v2462
        %v2948 = vsel %vm2932, %v2915, %v2464
        %v2950 = vsel %vm2932, %v2917, %v2466
        %v2952 = vsel %vm2932, %v2919, %v2468
        %v2954 = vsel %vm2932, %v2921, %v2470
        %v2956 = vsel %vm2932, %v2923, %v2472
        %v2958 = vsel %vm2932, %v2925, %v2474
        %v2960 = vsel %vm2932, %v2927, %v2476
        %v2962 = vsel %vm2932, %v2929, %v2478
        %v2964 = vsel %vm2932, %v2931, %v2480
        %vm2965 = vcmask 326656
        %v2967 = vsel %vm2965, %v2934, %v2530
        %v2969 = vsel %vm2965, %v2936, %v2532
        %v2971 = vsel %vm2965, %v2938, %v2534
        %v2973 = vsel %vm2965, %v2940, %v2536
        %v2975 = vsel %vm2965, %v2942, %v2538
        %v2977 = vsel %vm2965, %v2944, %v2540
        %v2979 = vsel %vm2965, %v2946, %v2542
        %v2981 = vsel %vm2965, %v2948, %v2544
        %v2983 = vsel %vm2965, %v2950, %v2546
        %v2985 = vsel %vm2965, %v2952, %v2548
        %v2987 = vsel %vm2965, %v2954, %v2550
        %v2989 = vsel %vm2965, %v2956, %v2552
        %v2991 = vsel %vm2965, %v2958, %v2554
        %v2993 = vsel %vm2965, %v2960, %v2556
        %v2995 = vsel %vm2965, %v2962, %v2558
        %v2997 = vsel %vm2965, %v2964, %v2560
        %vm2998 = vcmask 392192
        %v3000 = vsel %vm2998, %v2967, %v2626
        %v3002 = vsel %vm2998, %v2969, %v2628
        %v3004 = vsel %vm2998, %v2971, %v2630
        %v3006 = vsel %vm2998, %v2973, %v2632
        %v3008 = vsel %vm2998, %v2975, %v2634
        %v3010 = vsel %vm2998, %v2977, %v2636
        %v3012 = vsel %vm2998, %v2979, %v2638
        %v3014 = vsel %vm2998, %v2981, %v2640
        %v3016 = vsel %vm2998, %v2983, %v2642
        %v3018 = vsel %vm2998, %v2985, %v2644
        %v3020 = vsel %vm2998, %v2987, %v2646
        %v3022 = vsel %vm2998, %v2989, %v2648
        %v3024 = vsel %vm2998, %v2991, %v2650
        %v3026 = vsel %vm2998, %v2993, %v2652
        %v3028 = vsel %vm2998, %v2995, %v2654
        %v3030 = vsel %vm2998, %v2997, %v2656
        %vm3031 = vcmask 457728
        %v3033 = vsel %vm3031, %v3000, %v2706
        %v3035 = vsel %vm3031, %v3002, %v2708
        %v3037 = vsel %vm3031, %v3004, %v2710
        %v3039 = vsel %vm3031, %v3006, %v2712
        %v3041 = vsel %vm3031, %v3008, %v2714
        %v3043 = vsel %vm3031, %v3010, %v2716
        %v3045 = vsel %vm3031, %v3012, %v2718
        %v3047 = vsel %vm3031, %v3014, %v2720
        %v3049 = vsel %vm3031, %v3016, %v2722
        %v3051 = vsel %vm3031, %v3018, %v2724
        %v3053 = vsel %vm3031, %v3020, %v2726
        %v3055 = vsel %vm3031, %v3022, %v2728
        %v3057 = vsel %vm3031, %v3024, %v2730
        %v3059 = vsel %vm3031, %v3026, %v2732
        %v3061 = vsel %vm3031, %v3028, %v2734
        %v3063 = vsel %vm3031, %v3030, %v2736
        %vm3064 = vcmask 523264
        %v3066 = vsel %vm3064, %v3033, %v2786
        %v3068 = vsel %vm3064, %v3035, %v2788
        %v3070 = vsel %vm3064, %v3037, %v2790
        %v3072 = vsel %vm3064, %v3039, %v2792
        %v3074 = vsel %vm3064, %v3041, %v2794
        %v3076 = vsel %vm3064, %v3043, %v2796
        %v3078 = vsel %vm3064, %v3045, %v2798
        %v3080 = vsel %vm3064, %v3047, %v2800
        %v3082 = vsel %vm3064, %v3049, %v2802
        %v3084 = vsel %vm3064, %v3051, %v2804
        %v3086 = vsel %vm3064, %v3053, %v2806
        %v3088 = vsel %vm3064, %v3055, %v2808
        %v3090 = vsel %vm3064, %v3057, %v2810
        %v3092 = vsel %vm3064, %v3059, %v2812
        %v3094 = vsel %vm3064, %v3061, %v2814
        %v3096 = vsel %vm3064, %v3063, %v2816
        %v3097 = vld [vmem:[%s1] sm:$0xff]
        %v3098 = vld [vmem:[%s1 + $0x8] sm:$0xff]
        %v3099 = vld [vmem:[%s1 + $0x10] sm:$0xff]
        %v3100 = vld [vmem:[%s1 + $0x18] sm:$0xff]
        %v3101 = vld [vmem:[%s1 + $0x20] sm:$0xff]
        %v3102 = vld [vmem:[%s1 + $0x28] sm:$0xff]
        %v3103 = vld [vmem:[%s1 + $0x30] sm:$0xff]
        %v3104 = vld [vmem:[%s1 + $0x38] sm:$0xff]
        %v3105 = vld [vmem:[%s1 + $0x40] sm:$0xff]
        %v3106 = vld [vmem:[%s1 + $0x48] sm:$0xff]
        %v3107 = vld [vmem:[%s1 + $0x50] sm:$0xff]
        %v3108 = vld [vmem:[%s1 + $0x58] sm:$0xff]
        %v3109 = vld [vmem:[%s1 + $0x60] sm:$0xff]
        %v3110 = vld [vmem:[%s1 + $0x68] sm:$0xff]
        %v3111 = vld [vmem:[%s1 + $0x70] sm:$0xff]
        %v3112 = vld [vmem:[%s1 + $0x78] sm:$0xff]
        %v3113 = vld [vmem:[%s1 + $0x80] sm:$0xff]
        %v3114 = vld [vmem:[%s1 + $0x88] sm:$0xff]
        %v3115 = vld [vmem:[%s2] sm:$0xf]
        %v3117 = vperm.slane %v3115, 0
        %v3118 = vperm.slane %v3115, 1
        %v3119 = vperm.slane %v3115, 2
        %v3120 = vperm.slane %v3115, 3
        %v3143 = vunpack.c.l.b16 %v3097
        %v3144 = vunpack.c.h.b16 %v3097
        %v3145 = vunpack.c.l.b16 %v3098
        %v3146 = vunpack.c.h.b16 %v3098
        %v3147 = vunpack.c.l.b16 %v3099
        %v3148 = vunpack.c.h.b16 %v3099
        %v3149 = vunpack.c.l.b16 %v3100
        %v3150 = vunpack.c.h.b16 %v3100
        %v3151 = vunpack.c.l.b16 %v3101
        %v3152 = vunpack.c.h.b16 %v3101
        %v3153 = vunpack.c.l.b16 %v3102
        %v3154 = vunpack.c.h.b16 %v3102
        %v3155 = vunpack.c.l.b16 %v3103
        %v3156 = vunpack.c.h.b16 %v3103
        %v3157 = vunpack.c.l.b16 %v3104
        %v3158 = vunpack.c.h.b16 %v3104
        %v3159 = vunpack.c.l.b16 %v3105
        %v3160 = vunpack.c.h.b16 %v3105
        %v3161 = vunpack.c.l.b16 %v3106
        %v3162 = vunpack.c.h.b16 %v3106
        %v3163 = vunpack.c.l.b16 %v3107
        %v3164 = vunpack.c.h.b16 %v3107
        %v3165 = vunpack.c.l.b16 %v3108
        %v3166 = vunpack.c.h.b16 %v3108
        %v3167 = vunpack.c.l.b16 %v3109
        %v3168 = vunpack.c.h.b16 %v3109
        %v3169 = vunpack.c.l.b16 %v3110
        %v3170 = vunpack.c.h.b16 %v3110
        %v3171 = vunpack.c.l.b16 %v3111
        %v3172 = vunpack.c.h.b16 %v3111
        %v3173 = vunpack.c.l.b16 %v3112
        %v3174 = vunpack.c.h.b16 %v3112
        %v3175 = vunpack.c.l.b16 %v3113
        %v3176 = vunpack.c.h.b16 %v3113
        %v3177 = vunpack.c.l.b16 %v3114
        %v3178 = vunpack.c.h.b16 %v3114
        %v3179 = vpack.c.b16 %v3147, %v3143
        %v3180 = vpack.c.b16 %v3148, %v3144
        %v3181 = vpack.c.b16 %v3149, %v3145
        %v3182 = vpack.c.b16 %v3150, %v3146
        %v3183 = vpack.c.b16 %v3155, %v3151
        %v3184 = vpack.c.b16 %v3156, %v3152
        %v3185 = vpack.c.b16 %v3157, %v3153
        %v3186 = vpack.c.b16 %v3158, %v3154
        %v3187 = vpack.c.b16 %v3163, %v3159
        %v3188 = vpack.c.b16 %v3164, %v3160
        %v3189 = vpack.c.b16 %v3165, %v3161
        %v3190 = vpack.c.b16 %v3166, %v3162
        %v3191 = vpack.c.b16 %v3171, %v3167
        %v3192 = vpack.c.b16 %v3172, %v3168
        %v3193 = vpack.c.b16 %v3173, %v3169
        %v3194 = vpack.c.b16 %v3174, %v3170
        %v3195 = vpack.c.b16 %v3175, %v3175
        %v3196 = vpack.c.b16 %v3176, %v3176
        %v3197 = vpack.c.b16 %v3177, %v3177
        %v3198 = vpack.c.b16 %v3178, %v3178
        %vm3215 = vcmask 588800
        %v3216 = vsel %vm3215, %v3066, 0
        %v3218 = vsel %vm3215, %v3068, 0
        %v3220 = vsel %vm3215, %v3070, 0
        %v3222 = vsel %vm3215, %v3072, 0
        %v3224 = vsel %vm3215, %v3074, 0
        %v3226 = vsel %vm3215, %v3076, 0
        %v3228 = vsel %vm3215, %v3078, 0
        %v3230 = vsel %vm3215, %v3080, 0
        %v3232 = vsel %vm3215, %v3082, 0
        %v3234 = vsel %vm3215, %v3084, 0
        %v3236 = vsel %vm3215, %v3086, 0
        %v3238 = vsel %vm3215, %v3088, 0
        %v3240 = vsel %vm3215, %v3090, 0
        %v3242 = vsel %vm3215, %v3092, 0
        %v3244 = vsel %vm3215, %v3094, 0
        %v3246 = vsel %vm3215, %v3096, 0
        %vm3248 = vcmask 1043456
        %v3250 = vsel %vm3248, %v3195, 0
        %v3253 = vsel %vm3248, %v3196, 0
        %v3256 = vsel %vm3248, %v3197, 0
        %v3259 = vsel %vm3248, %v3198, 0
        %3261 = vmatpush.bf16.msra.mxu0 0
        %3262 = vmatpush.bf16.msra.mxu0 0
        %3263 = vmatpush.bf16.msra.mxu0 0
        %3264 = vmatpush.bf16.msra.mxu0 %v3250
        %3265 = vmatpush.bf16.msra.mxu0 %v3191
        %3266 = vmatpush.bf16.msra.mxu0 %v3187
        %3267 = vmatpush.bf16.msra.mxu0 %v3183
        %3268 = vmatpush.bf16.msra.mxu0 %v3179
        %3269 = vmatmul.bf16.gmra.mxu0 %v3216
        %v3270 = vpop.f32.mrf.mxu0
        %v3271 = vadd.f32 %v3117, %v3270
        %v3272 = vpop.f32.mrf.mxu0
        %v3273 = vadd.f32 %v3117, %v3272
        %3274 = vmatmul.bf16.gmra.mxu0 %v3218
        %v3275 = vpop.f32.mrf.mxu0
        %v3276 = vadd.f32 %v3117, %v3275
        %v3277 = vpop.f32.mrf.mxu0
        %v3278 = vadd.f32 %v3117, %v3277
        %3279 = vmatmul.bf16.gmra.mxu0 %v3220
        %v3280 = vpop.f32.mrf.mxu0
        %v3281 = vadd.f32 %v3117, %v3280
        %v3282 = vpop.f32.mrf.mxu0
        %v3283 = vadd.f32 %v3117, %v3282
        %3284 = vmatmul.bf16.gmra.mxu0 %v3222
        %v3285 = vpop.f32.mrf.mxu0
        %v3286 = vadd.f32 %v3117, %v3285
        %v3287 = vpop.f32.mrf.mxu0
        %v3288 = vadd.f32 %v3117, %v3287
        %3289 = vmatmul.bf16.gmra.mxu0 %v3224
        %v3290 = vpop.f32.mrf.mxu0
        %v3291 = vadd.f32 %v3117, %v3290
        %v3292 = vpop.f32.mrf.mxu0
        %v3293 = vadd.f32 %v3117, %v3292
        %3294 = vmatmul.bf16.gmra.mxu0 %v3226
        %v3295 = vpop.f32.mrf.mxu0
        %v3296 = vadd.f32 %v3117, %v3295
        %v3297 = vpop.f32.mrf.mxu0
        %v3298 = vadd.f32 %v3117, %v3297
        %3299 = vmatmul.bf16.gmra.mxu0 %v3228
        %v3300 = vpop.f32.mrf.mxu0
        %v3301 = vadd.f32 %v3117, %v3300
        %v3302 = vpop.f32.mrf.mxu0
        %v3303 = vadd.f32 %v3117, %v3302
        %3304 = vmatmul.bf16.gmra.mxu0 %v3230
        %v3305 = vpop.f32.mrf.mxu0
        %v3306 = vadd.f32 %v3117, %v3305
        %v3307 = vpop.f32.mrf.mxu0
        %v3308 = vadd.f32 %v3117, %v3307
        %3309 = vmatmul.bf16.gmra.mxu0 %v3232
        %v3310 = vpop.f32.mrf.mxu0
        %v3311 = vadd.f32 %v3117, %v3310
        %v3312 = vpop.f32.mrf.mxu0
        %v3313 = vadd.f32 %v3117, %v3312
        %3314 = vmatmul.bf16.gmra.mxu0 %v3234
        %v3315 = vpop.f32.mrf.mxu0
        %v3316 = vadd.f32 %v3117, %v3315
        %v3317 = vpop.f32.mrf.mxu0
        %v3318 = vadd.f32 %v3117, %v3317
        %3319 = vmatmul.bf16.gmra.mxu0 %v3236
        %v3320 = vpop.f32.mrf.mxu0
        %v3321 = vadd.f32 %v3117, %v3320
        %v3322 = vpop.f32.mrf.mxu0
        %v3323 = vadd.f32 %v3117, %v3322
        %3324 = vmatmul.bf16.gmra.mxu0 %v3238
        %v3325 = vpop.f32.mrf.mxu0
        %v3326 = vadd.f32 %v3117, %v3325
        %v3327 = vpop.f32.mrf.mxu0
        %v3328 = vadd.f32 %v3117, %v3327
        %3329 = vmatmul.bf16.gmra.mxu0 %v3240
        %v3330 = vpop.f32.mrf.mxu0
        %v3331 = vadd.f32 %v3117, %v3330
        %v3332 = vpop.f32.mrf.mxu0
        %v3333 = vadd.f32 %v3117, %v3332
        %3334 = vmatmul.bf16.gmra.mxu0 %v3242
        %v3335 = vpop.f32.mrf.mxu0
        %v3336 = vadd.f32 %v3117, %v3335
        %v3337 = vpop.f32.mrf.mxu0
        %v3338 = vadd.f32 %v3117, %v3337
        %3339 = vmatmul.bf16.gmra.mxu0 %v3244
        %v3340 = vpop.f32.mrf.mxu0
        %v3341 = vadd.f32 %v3117, %v3340
        %v3342 = vpop.f32.mrf.mxu0
        %v3343 = vadd.f32 %v3117, %v3342
        %3344 = vmatmul.bf16.gmra.mxu0 %v3246
        %v3345 = vpop.f32.mrf.mxu0
        %v3346 = vadd.f32 %v3117, %v3345
        %v3347 = vpop.f32.mrf.mxu0
        %v3348 = vadd.f32 %v3117, %v3347
        %3349 = vdwg.mxu0
        %3350 = vmatpush.bf16.msra.mxu0 0
        %3351 = vmatpush.bf16.msra.mxu0 0
        %3352 = vmatpush.bf16.msra.mxu0 0
        %3353 = vmatpush.bf16.msra.mxu0 %v3253
        %3354 = vmatpush.bf16.msra.mxu0 %v3192
        %3355 = vmatpush.bf16.msra.mxu0 %v3188
        %3356 = vmatpush.bf16.msra.mxu0 %v3184
        %3357 = vmatpush.bf16.msra.mxu0 %v3180
        %3358 = vmatmul.bf16.gmra.mxu0 %v3216
        %v3359 = vpop.f32.mrf.mxu0
        %v3360 = vadd.f32 %v3118, %v3359
        %v3361 = vpop.f32.mrf.mxu0
        %v3362 = vadd.f32 %v3118, %v3361
        %3363 = vmatmul.bf16.gmra.mxu0 %v3218
        %v3364 = vpop.f32.mrf.mxu0
        %v3365 = vadd.f32 %v3118, %v3364
        %v3366 = vpop.f32.mrf.mxu0
        %v3367 = vadd.f32 %v3118, %v3366
        %3368 = vmatmul.bf16.gmra.mxu0 %v3220
        %v3369 = vpop.f32.mrf.mxu0
        %v3370 = vadd.f32 %v3118, %v3369
        %v3371 = vpop.f32.mrf.mxu0
        %v3372 = vadd.f32 %v3118, %v3371
        %3373 = vmatmul.bf16.gmra.mxu0 %v3222
        %v3374 = vpop.f32.mrf.mxu0
        %v3375 = vadd.f32 %v3118, %v3374
        %v3376 = vpop.f32.mrf.mxu0
        %v3377 = vadd.f32 %v3118, %v3376
        %3378 = vmatmul.bf16.gmra.mxu0 %v3224
        %v3379 = vpop.f32.mrf.mxu0
        %v3380 = vadd.f32 %v3118, %v3379
        %v3381 = vpop.f32.mrf.mxu0
        %v3382 = vadd.f32 %v3118, %v3381
        %3383 = vmatmul.bf16.gmra.mxu0 %v3226
        %v3384 = vpop.f32.mrf.mxu0
        %v3385 = vadd.f32 %v3118, %v3384
        %v3386 = vpop.f32.mrf.mxu0
        %v3387 = vadd.f32 %v3118, %v3386
        %3388 = vmatmul.bf16.gmra.mxu0 %v3228
        %v3389 = vpop.f32.mrf.mxu0
        %v3390 = vadd.f32 %v3118, %v3389
        %v3391 = vpop.f32.mrf.mxu0
        %v3392 = vadd.f32 %v3118, %v3391
        %3393 = vmatmul.bf16.gmra.mxu0 %v3230
        %v3394 = vpop.f32.mrf.mxu0
        %v3395 = vadd.f32 %v3118, %v3394
        %v3396 = vpop.f32.mrf.mxu0
        %v3397 = vadd.f32 %v3118, %v3396
        %3398 = vmatmul.bf16.gmra.mxu0 %v3232
        %v3399 = vpop.f32.mrf.mxu0
        %v3400 = vadd.f32 %v3118, %v3399
        %v3401 = vpop.f32.mrf.mxu0
        %v3402 = vadd.f32 %v3118, %v3401
        %3403 = vmatmul.bf16.gmra.mxu0 %v3234
        %v3404 = vpop.f32.mrf.mxu0
        %v3405 = vadd.f32 %v3118, %v3404
        %v3406 = vpop.f32.mrf.mxu0
        %v3407 = vadd.f32 %v3118, %v3406
        %3408 = vmatmul.bf16.gmra.mxu0 %v3236
        %v3409 = vpop.f32.mrf.mxu0
        %v3410 = vadd.f32 %v3118, %v3409
        %v3411 = vpop.f32.mrf.mxu0
        %v3412 = vadd.f32 %v3118, %v3411
        %3413 = vmatmul.bf16.gmra.mxu0 %v3238
        %v3414 = vpop.f32.mrf.mxu0
        %v3415 = vadd.f32 %v3118, %v3414
        %v3416 = vpop.f32.mrf.mxu0
        %v3417 = vadd.f32 %v3118, %v3416
        %3418 = vmatmul.bf16.gmra.mxu0 %v3240
        %v3419 = vpop.f32.mrf.mxu0
        %v3420 = vadd.f32 %v3118, %v3419
        %v3421 = vpop.f32.mrf.mxu0
        %v3422 = vadd.f32 %v3118, %v3421
        %3423 = vmatmul.bf16.gmra.mxu0 %v3242
        %v3424 = vpop.f32.mrf.mxu0
        %v3425 = vadd.f32 %v3118, %v3424
        %v3426 = vpop.f32.mrf.mxu0
        %v3427 = vadd.f32 %v3118, %v3426
        %3428 = vmatmul.bf16.gmra.mxu0 %v3244
        %v3429 = vpop.f32.mrf.mxu0
        %v3430 = vadd.f32 %v3118, %v3429
        %v3431 = vpop.f32.mrf.mxu0
        %v3432 = vadd.f32 %v3118, %v3431
        %3433 = vmatmul.bf16.gmra.mxu0 %v3246
        %v3434 = vpop.f32.mrf.mxu0
        %v3435 = vadd.f32 %v3118, %v3434
        %v3436 = vpop.f32.mrf.mxu0
        %v3437 = vadd.f32 %v3118, %v3436
        %3438 = vdwg.mxu0
        %3439 = vmatpush.bf16.msra.mxu0 0
        %3440 = vmatpush.bf16.msra.mxu0 0
        %3441 = vmatpush.bf16.msra.mxu0 0
        %3442 = vmatpush.bf16.msra.mxu0 %v3256
        %3443 = vmatpush.bf16.msra.mxu0 %v3193
        %3444 = vmatpush.bf16.msra.mxu0 %v3189
        %3445 = vmatpush.bf16.msra.mxu0 %v3185
        %3446 = vmatpush.bf16.msra.mxu0 %v3181
        %3447 = vmatmul.bf16.gmra.mxu0 %v3216
        %v3448 = vpop.f32.mrf.mxu0
        %v3449 = vadd.f32 %v3119, %v3448
        %v3450 = vpop.f32.mrf.mxu0
        %v3451 = vadd.f32 %v3119, %v3450
        %3452 = vmatmul.bf16.gmra.mxu0 %v3218
        %v3453 = vpop.f32.mrf.mxu0
        %v3454 = vadd.f32 %v3119, %v3453
        %v3455 = vpop.f32.mrf.mxu0
        %v3456 = vadd.f32 %v3119, %v3455
        %3457 = vmatmul.bf16.gmra.mxu0 %v3220
        %v3458 = vpop.f32.mrf.mxu0
        %v3459 = vadd.f32 %v3119, %v3458
        %v3460 = vpop.f32.mrf.mxu0
        %v3461 = vadd.f32 %v3119, %v3460
        %3462 = vmatmul.bf16.gmra.mxu0 %v3222
        %v3463 = vpop.f32.mrf.mxu0
        %v3464 = vadd.f32 %v3119, %v3463
        %v3465 = vpop.f32.mrf.mxu0
        %v3466 = vadd.f32 %v3119, %v3465
        %3467 = vmatmul.bf16.gmra.mxu0 %v3224
        %v3468 = vpop.f32.mrf.mxu0
        %v3469 = vadd.f32 %v3119, %v3468
        %v3470 = vpop.f32.mrf.mxu0
        %v3471 = vadd.f32 %v3119, %v3470
        %3472 = vmatmul.bf16.gmra.mxu0 %v3226
        %v3473 = vpop.f32.mrf.mxu0
        %v3474 = vadd.f32 %v3119, %v3473
        %v3475 = vpop.f32.mrf.mxu0
        %v3476 = vadd.f32 %v3119, %v3475
        %3477 = vmatmul.bf16.gmra.mxu0 %v3228
        %v3478 = vpop.f32.mrf.mxu0
        %v3479 = vadd.f32 %v3119, %v3478
        %v3480 = vpop.f32.mrf.mxu0
        %v3481 = vadd.f32 %v3119, %v3480
        %3482 = vmatmul.bf16.gmra.mxu0 %v3230
        %v3483 = vpop.f32.mrf.mxu0
        %v3484 = vadd.f32 %v3119, %v3483
        %v3485 = vpop.f32.mrf.mxu0
        %v3486 = vadd.f32 %v3119, %v3485
        %3487 = vmatmul.bf16.gmra.mxu0 %v3232
        %v3488 = vpop.f32.mrf.mxu0
        %v3489 = vadd.f32 %v3119, %v3488
        %v3490 = vpop.f32.mrf.mxu0
        %v3491 = vadd.f32 %v3119, %v3490
        %3492 = vmatmul.bf16.gmra.mxu0 %v3234
        %v3493 = vpop.f32.mrf.mxu0
        %v3494 = vadd.f32 %v3119, %v3493
        %v3495 = vpop.f32.mrf.mxu0
        %v3496 = vadd.f32 %v3119, %v3495
        %3497 = vmatmul.bf16.gmra.mxu0 %v3236
        %v3498 = vpop.f32.mrf.mxu0
        %v3499 = vadd.f32 %v3119, %v3498
        %v3500 = vpop.f32.mrf.mxu0
        %v3501 = vadd.f32 %v3119, %v3500
        %3502 = vmatmul.bf16.gmra.mxu0 %v3238
        %v3503 = vpop.f32.mrf.mxu0
        %v3504 = vadd.f32 %v3119, %v3503
        %v3505 = vpop.f32.mrf.mxu0
        %v3506 = vadd.f32 %v3119, %v3505
        %3507 = vmatmul.bf16.gmra.mxu0 %v3240
        %v3508 = vpop.f32.mrf.mxu0
        %v3509 = vadd.f32 %v3119, %v3508
        %v3510 = vpop.f32.mrf.mxu0
        %v3511 = vadd.f32 %v3119, %v3510
        %3512 = vmatmul.bf16.gmra.mxu0 %v3242
        %v3513 = vpop.f32.mrf.mxu0
        %v3514 = vadd.f32 %v3119, %v3513
        %v3515 = vpop.f32.mrf.mxu0
        %v3516 = vadd.f32 %v3119, %v3515
        %3517 = vmatmul.bf16.gmra.mxu0 %v3244
        %v3518 = vpop.f32.mrf.mxu0
        %v3519 = vadd.f32 %v3119, %v3518
        %v3520 = vpop.f32.mrf.mxu0
        %v3521 = vadd.f32 %v3119, %v3520
        %3522 = vmatmul.bf16.gmra.mxu0 %v3246
        %v3523 = vpop.f32.mrf.mxu0
        %v3524 = vadd.f32 %v3119, %v3523
        %v3525 = vpop.f32.mrf.mxu0
        %v3526 = vadd.f32 %v3119, %v3525
        %3527 = vdwg.mxu0
        %3528 = vmatpush.bf16.msra.mxu0 0
        %3529 = vmatpush.bf16.msra.mxu0 0
        %3530 = vmatpush.bf16.msra.mxu0 0
        %3531 = vmatpush.bf16.msra.mxu0 %v3259
        %3532 = vmatpush.bf16.msra.mxu0 %v3194
        %3533 = vmatpush.bf16.msra.mxu0 %v3190
        %3534 = vmatpush.bf16.msra.mxu0 %v3186
        %3535 = vmatpush.bf16.msra.mxu0 %v3182
        %3536 = vmatmul.bf16.gmra.mxu0 %v3216
        %v3537 = vpop.f32.mrf.mxu0
        %v3538 = vadd.f32 %v3120, %v3537
        %v3539 = vpop.f32.mrf.mxu0
        %v3540 = vadd.f32 %v3120, %v3539
        %3541 = vmatmul.bf16.gmra.mxu0 %v3218
        %v3542 = vpop.f32.mrf.mxu0
        %v3543 = vadd.f32 %v3120, %v3542
        %v3544 = vpop.f32.mrf.mxu0
        %v3545 = vadd.f32 %v3120, %v3544
        %3546 = vmatmul.bf16.gmra.mxu0 %v3220
        %v3547 = vpop.f32.mrf.mxu0
        %v3548 = vadd.f32 %v3120, %v3547
        %v3549 = vpop.f32.mrf.mxu0
        %v3550 = vadd.f32 %v3120, %v3549
        %3551 = vmatmul.bf16.gmra.mxu0 %v3222
        %v3552 = vpop.f32.mrf.mxu0
        %v3553 = vadd.f32 %v3120, %v3552
        %v3554 = vpop.f32.mrf.mxu0
        %v3555 = vadd.f32 %v3120, %v3554
        %3556 = vmatmul.bf16.gmra.mxu0 %v3224
        %v3557 = vpop.f32.mrf.mxu0
        %v3558 = vadd.f32 %v3120, %v3557
        %v3559 = vpop.f32.mrf.mxu0
        %v3560 = vadd.f32 %v3120, %v3559
        %3561 = vmatmul.bf16.gmra.mxu0 %v3226
        %v3562 = vpop.f32.mrf.mxu0
        %v3563 = vadd.f32 %v3120, %v3562
        %v3564 = vpop.f32.mrf.mxu0
        %v3565 = vadd.f32 %v3120, %v3564
        %3566 = vmatmul.bf16.gmra.mxu0 %v3228
        %v3567 = vpop.f32.mrf.mxu0
        %v3568 = vadd.f32 %v3120, %v3567
        %v3569 = vpop.f32.mrf.mxu0
        %v3570 = vadd.f32 %v3120, %v3569
        %3571 = vmatmul.bf16.gmra.mxu0 %v3230
        %v3572 = vpop.f32.mrf.mxu0
        %v3573 = vadd.f32 %v3120, %v3572
        %v3574 = vpop.f32.mrf.mxu0
        %v3575 = vadd.f32 %v3120, %v3574
        %3576 = vmatmul.bf16.gmra.mxu0 %v3232
        %v3577 = vpop.f32.mrf.mxu0
        %v3578 = vadd.f32 %v3120, %v3577
        %v3579 = vpop.f32.mrf.mxu0
        %v3580 = vadd.f32 %v3120, %v3579
        %3581 = vmatmul.bf16.gmra.mxu0 %v3234
        %v3582 = vpop.f32.mrf.mxu0
        %v3583 = vadd.f32 %v3120, %v3582
        %v3584 = vpop.f32.mrf.mxu0
        %v3585 = vadd.f32 %v3120, %v3584
        %3586 = vmatmul.bf16.gmra.mxu0 %v3236
        %v3587 = vpop.f32.mrf.mxu0
        %v3588 = vadd.f32 %v3120, %v3587
        %v3589 = vpop.f32.mrf.mxu0
        %v3590 = vadd.f32 %v3120, %v3589
        %3591 = vmatmul.bf16.gmra.mxu0 %v3238
        %v3592 = vpop.f32.mrf.mxu0
        %v3593 = vadd.f32 %v3120, %v3592
        %v3594 = vpop.f32.mrf.mxu0
        %v3595 = vadd.f32 %v3120, %v3594
        %3596 = vmatmul.bf16.gmra.mxu0 %v3240
        %v3597 = vpop.f32.mrf.mxu0
        %v3598 = vadd.f32 %v3120, %v3597
        %v3599 = vpop.f32.mrf.mxu0
        %v3600 = vadd.f32 %v3120, %v3599
        %3601 = vmatmul.bf16.gmra.mxu0 %v3242
        %v3602 = vpop.f32.mrf.mxu0
        %v3603 = vadd.f32 %v3120, %v3602
        %v3604 = vpop.f32.mrf.mxu0
        %v3605 = vadd.f32 %v3120, %v3604
        %3606 = vmatmul.bf16.gmra.mxu0 %v3244
        %v3607 = vpop.f32.mrf.mxu0
        %v3608 = vadd.f32 %v3120, %v3607
        %v3609 = vpop.f32.mrf.mxu0
        %v3610 = vadd.f32 %v3120, %v3609
        %3611 = vmatmul.bf16.gmra.mxu0 %v3246
        %v3612 = vpop.f32.mrf.mxu0
        %v3613 = vadd.f32 %v3120, %v3612
        %v3614 = vpop.f32.mrf.mxu0
        %v3615 = vadd.f32 %v3120, %v3614
        %3616 = vdwg.mxu0
        %v3617 = vmax.f32 %v3271, 0.0
        %v3618 = vmax.f32 %v3360, 0.0
        %v3619 = vmax.f32 %v3449, 0.0
        %v3620 = vmax.f32 %v3538, 0.0
        %v3621 = vmax.f32 %v3273, 0.0
        %v3622 = vmax.f32 %v3362, 0.0
        %v3623 = vmax.f32 %v3451, 0.0
        %v3624 = vmax.f32 %v3540, 0.0
        %v3625 = vmax.f32 %v3276, 0.0
        %v3626 = vmax.f32 %v3365, 0.0
        %v3627 = vmax.f32 %v3454, 0.0
        %v3628 = vmax.f32 %v3543, 0.0
        %v3629 = vmax.f32 %v3278, 0.0
        %v3630 = vmax.f32 %v3367, 0.0
        %v3631 = vmax.f32 %v3456, 0.0
        %v3632 = vmax.f32 %v3545, 0.0
        %v3633 = vmax.f32 %v3281, 0.0
        %v3634 = vmax.f32 %v3370, 0.0
        %v3635 = vmax.f32 %v3459, 0.0
        %v3636 = vmax.f32 %v3548, 0.0
        %v3637 = vmax.f32 %v3283, 0.0
        %v3638 = vmax.f32 %v3372, 0.0
        %v3639 = vmax.f32 %v3461, 0.0
        %v3640 = vmax.f32 %v3550, 0.0
        %v3641 = vmax.f32 %v3286, 0.0
        %v3642 = vmax.f32 %v3375, 0.0
        %v3643 = vmax.f32 %v3464, 0.0
        %v3644 = vmax.f32 %v3553, 0.0
        %v3645 = vmax.f32 %v3288, 0.0
        %v3646 = vmax.f32 %v3377, 0.0
        %v3647 = vmax.f32 %v3466, 0.0
        %v3648 = vmax.f32 %v3555, 0.0
        %v3649 = vmax.f32 %v3291, 0.0
        %v3650 = vmax.f32 %v3380, 0.0
        %v3651 = vmax.f32 %v3469, 0.0
        %v3652 = vmax.f32 %v3558, 0.0
        %v3653 = vmax.f32 %v3293, 0.0
        %v3654 = vmax.f32 %v3382, 0.0
        %v3655 = vmax.f32 %v3471, 0.0
        %v3656 = vmax.f32 %v3560, 0.0
        %v3657 = vmax.f32 %v3296, 0.0
        %v3658 = vmax.f32 %v3385, 0.0
        %v3659 = vmax.f32 %v3474, 0.0
        %v3660 = vmax.f32 %v3563, 0.0
        %v3661 = vmax.f32 %v3298, 0.0
        %v3662 = vmax.f32 %v3387, 0.0
        %v3663 = vmax.f32 %v3476, 0.0
        %v3664 = vmax.f32 %v3565, 0.0
        %v3665 = vmax.f32 %v3301, 0.0
        %v3666 = vmax.f32 %v3390, 0.0
        %v3667 = vmax.f32 %v3479, 0.0
        %v3668 = vmax.f32 %v3568, 0.0
        %v3669 = vmax.f32 %v3303, 0.0
        %v3670 = vmax.f32 %v3392, 0.0
        %v3671 = vmax.f32 %v3481, 0.0
        %v3672 = vmax.f32 %v3570, 0.0
        %v3673 = vmax.f32 %v3306, 0.0
        %v3674 = vmax.f32 %v3395, 0.0
        %v3675 = vmax.f32 %v3484, 0.0
        %v3676 = vmax.f32 %v3573, 0.0
        %v3677 = vmax.f32 %v3308, 0.0
        %v3678 = vmax.f32 %v3397, 0.0
        %v3679 = vmax.f32 %v3486, 0.0
        %v3680 = vmax.f32 %v3575, 0.0
        %v3681 = vmax.f32 %v3311, 0.0
        %v3682 = vmax.f32 %v3400, 0.0
        %v3683 = vmax.f32 %v3489, 0.0
        %v3684 = vmax.f32 %v3578, 0.0
        %v3685 = vmax.f32 %v3313, 0.0
        %v3686 = vmax.f32 %v3402, 0.0
        %v3687 = vmax.f32 %v3491, 0.0
        %v3688 = vmax.f32 %v3580, 0.0
        %v3689 = vmax.f32 %v3316, 0.0
        %v3690 = vmax.f32 %v3405, 0.0
        %v3691 = vmax.f32 %v3494, 0.0
        %v3692 = vmax.f32 %v3583, 0.0
        %v3693 = vmax.f32 %v3318, 0.0
        %v3694 = vmax.f32 %v3407, 0.0
        %v3695 = vmax.f32 %v3496, 0.0
        %v3696 = vmax.f32 %v3585, 0.0
        %v3697 = vmax.f32 %v3321, 0.0
        %v3698 = vmax.f32 %v3410, 0.0
        %v3699 = vmax.f32 %v3499, 0.0
        %v3700 = vmax.f32 %v3588, 0.0
        %v3701 = vmax.f32 %v3323, 0.0
        %v3702 = vmax.f32 %v3412, 0.0
        %v3703 = vmax.f32 %v3501, 0.0
        %v3704 = vmax.f32 %v3590, 0.0
        %v3705 = vmax.f32 %v3326, 0.0
        %v3706 = vmax.f32 %v3415, 0.0
        %v3707 = vmax.f32 %v3504, 0.0
        %v3708 = vmax.f32 %v3593, 0.0
        %v3709 = vmax.f32 %v3328, 0.0
        %v3710 = vmax.f32 %v3417, 0.0
        %v3711 = vmax.f32 %v3506, 0.0
        %v3712 = vmax.f32 %v3595, 0.0
        %v3713 = vmax.f32 %v3331, 0.0
        %v3714 = vmax.f32 %v3420, 0.0
        %v3715 = vmax.f32 %v3509, 0.0
        %v3716 = vmax.f32 %v3598, 0.0
        %v3717 = vmax.f32 %v3333, 0.0
        %v3718 = vmax.f32 %v3422, 0.0
        %v3719 = vmax.f32 %v3511, 0.0
        %v3720 = vmax.f32 %v3600, 0.0
        %v3721 = vmax.f32 %v3336, 0.0
        %v3722 = vmax.f32 %v3425, 0.0
        %v3723 = vmax.f32 %v3514, 0.0
        %v3724 = vmax.f32 %v3603, 0.0
        %v3725 = vmax.f32 %v3338, 0.0
        %v3726 = vmax.f32 %v3427, 0.0
        %v3727 = vmax.f32 %v3516, 0.0
        %v3728 = vmax.f32 %v3605, 0.0
        %v3729 = vmax.f32 %v3341, 0.0
        %v3730 = vmax.f32 %v3430, 0.0
        %v3731 = vmax.f32 %v3519, 0.0
        %v3732 = vmax.f32 %v3608, 0.0
        %v3733 = vmax.f32 %v3343, 0.0
        %v3734 = vmax.f32 %v3432, 0.0
        %v3735 = vmax.f32 %v3521, 0.0
        %v3736 = vmax.f32 %v3610, 0.0
        %v3737 = vmax.f32 %v3346, 0.0
        %v3738 = vmax.f32 %v3435, 0.0
        %v3739 = vmax.f32 %v3524, 0.0
        %v3740 = vmax.f32 %v3613, 0.0
        %v3741 = vmax.f32 %v3348, 0.0
        %v3742 = vmax.f32 %v3437, 0.0
        %v3743 = vmax.f32 %v3526, 0.0
        %v3744 = vmax.f32 %v3615, 0.0
        %v3745 = vpack.c.bf16 %v3621, %v3617
        %v3746 = vpack.c.bf16 %v3622, %v3618
        %v3747 = vpack.c.bf16 %v3623, %v3619
        %v3748 = vpack.c.bf16 %v3624, %v3620
        %v3749 = vpack.c.bf16 %v3629, %v3625
        %v3750 = vpack.c.bf16 %v3630, %v3626
        %v3751 = vpack.c.bf16 %v3631, %v3627
        %v3752 = vpack.c.bf16 %v3632, %v3628
        %v3753 = vpack.c.bf16 %v3637, %v3633
        %v3754 = vpack.c.bf16 %v3638, %v3634
        %v3755 = vpack.c.bf16 %v3639, %v3635
        %v3756 = vpack.c.bf16 %v3640, %v3636
        %v3757 = vpack.c.bf16 %v3645, %v3641
        %v3758 = vpack.c.bf16 %v3646, %v3642
        %v3759 = vpack.c.bf16 %v3647, %v3643
        %v3760 = vpack.c.bf16 %v3648, %v3644
        %v3761 = vpack.c.bf16 %v3653, %v3649
        %v3762 = vpack.c.bf16 %v3654, %v3650
        %v3763 = vpack.c.bf16 %v3655, %v3651
        %v3764 = vpack.c.bf16 %v3656, %v3652
        %v3765 = vpack.c.bf16 %v3661, %v3657
        %v3766 = vpack.c.bf16 %v3662, %v3658
        %v3767 = vpack.c.bf16 %v3663, %v3659
        %v3768 = vpack.c.bf16 %v3664, %v3660
        %v3769 = vpack.c.bf16 %v3669, %v3665
        %v3770 = vpack.c.bf16 %v3670, %v3666
        %v3771 = vpack.c.bf16 %v3671, %v3667
        %v3772 = vpack.c.bf16 %v3672, %v3668
        %v3773 = vpack.c.bf16 %v3677, %v3673
        %v3774 = vpack.c.bf16 %v3678, %v3674
        %v3775 = vpack.c.bf16 %v3679, %v3675
        %v3776 = vpack.c.bf16 %v3680, %v3676
        %v3777 = vpack.c.bf16 %v3685, %v3681
        %v3778 = vpack.c.bf16 %v3686, %v3682
        %v3779 = vpack.c.bf16 %v3687, %v3683
        %v3780 = vpack.c.bf16 %v3688, %v3684
        %v3781 = vpack.c.bf16 %v3693, %v3689
        %v3782 = vpack.c.bf16 %v3694, %v3690
        %v3783 = vpack.c.bf16 %v3695, %v3691
        %v3784 = vpack.c.bf16 %v3696, %v3692
        %v3785 = vpack.c.bf16 %v3701, %v3697
        %v3786 = vpack.c.bf16 %v3702, %v3698
        %v3787 = vpack.c.bf16 %v3703, %v3699
        %v3788 = vpack.c.bf16 %v3704, %v3700
        %v3789 = vpack.c.bf16 %v3709, %v3705
        %v3790 = vpack.c.bf16 %v3710, %v3706
        %v3791 = vpack.c.bf16 %v3711, %v3707
        %v3792 = vpack.c.bf16 %v3712, %v3708
        %v3793 = vpack.c.bf16 %v3717, %v3713
        %v3794 = vpack.c.bf16 %v3718, %v3714
        %v3795 = vpack.c.bf16 %v3719, %v3715
        %v3796 = vpack.c.bf16 %v3720, %v3716
        %v3797 = vpack.c.bf16 %v3725, %v3721
        %v3798 = vpack.c.bf16 %v3726, %v3722
        %v3799 = vpack.c.bf16 %v3727, %v3723
        %v3800 = vpack.c.bf16 %v3728, %v3724
        %v3801 = vpack.c.bf16 %v3733, %v3729
        %v3802 = vpack.c.bf16 %v3734, %v3730
        %v3803 = vpack.c.bf16 %v3735, %v3731
        %v3804 = vpack.c.bf16 %v3736, %v3732
        %v3805 = vpack.c.bf16 %v3741, %v3737
        %v3806 = vpack.c.bf16 %v3742, %v3738
        %v3807 = vpack.c.bf16 %v3743, %v3739
        %v3808 = vpack.c.bf16 %v3744, %v3740
        %v3809 = vld [vmem:[%s3] sm:$0xf]
        %v3810 = vld [vmem:[%s3 + $0x4] sm:$0xf]
        %v3811 = vld [vmem:[%s3 + $0x8] sm:$0xf]
        %v3812 = vld [vmem:[%s3 + $0xc] sm:$0xf]
        %v3813 = vld [vmem:[%s3 + $0x10] sm:$0xf]
        %v3814 = vld [vmem:[%s3 + $0x14] sm:$0xf]
        %v3815 = vld [vmem:[%s3 + $0x18] sm:$0xf]
        %v3816 = vld [vmem:[%s3 + $0x1c] sm:$0xf]
        %v3817 = vld [vmem:[%s3 + $0x20] sm:$0xf]
        %v3818 = vld [vmem:[%s3 + $0x24] sm:$0xf]
        %v3819 = vld [vmem:[%s3 + $0x28] sm:$0xf]
        %v3820 = vld [vmem:[%s3 + $0x2c] sm:$0xf]
        %v3821 = vld [vmem:[%s3 + $0x30] sm:$0xf]
        %v3822 = vld [vmem:[%s3 + $0x34] sm:$0xf]
        %v3823 = vld [vmem:[%s3 + $0x38] sm:$0xf]
        %v3824 = vld [vmem:[%s3 + $0x3c] sm:$0xf]
        %v3825 = vld [vmem:[%s3 + $0x40] sm:$0xf]
        %v3826 = vld [vmem:[%s3 + $0x44] sm:$0xf]
        %v3827 = vld [vmem:[%s3 + $0x48] sm:$0xf]
        %v3828 = vld [vmem:[%s3 + $0x4c] sm:$0xf]
        %v3829 = vld [vmem:[%s3 + $0x50] sm:$0xf]
        %v3830 = vld [vmem:[%s3 + $0x54] sm:$0xf]
        %v3831 = vld [vmem:[%s3 + $0x58] sm:$0xf]
        %v3832 = vld [vmem:[%s3 + $0x5c] sm:$0xf]
        %v3833 = vld [vmem:[%s3 + $0x60] sm:$0xf]
        %v3834 = vld [vmem:[%s3 + $0x64] sm:$0xf]
        %v3835 = vld [vmem:[%s3 + $0x68] sm:$0xf]
        %v3836 = vld [vmem:[%s3 + $0x6c] sm:$0xf]
        %v3837 = vld [vmem:[%s3 + $0x70] sm:$0xf]
        %v3838 = vld [vmem:[%s3 + $0x74] sm:$0xf]
        %v3839 = vld [vmem:[%s3 + $0x78] sm:$0xf]
        %v3840 = vld [vmem:[%s3 + $0x7c] sm:$0xf]
        %v3841 = vld [vmem:[%s3 + $0x80] sm:$0xf]
        %v3842 = vld [vmem:[%s3 + $0x84] sm:$0xf]
        %v3843 = vld [vmem:[%s3 + $0x88] sm:$0xf]
        %v3844 = vld [vmem:[%s3 + $0x8c] sm:$0xf]
        %v3845 = vld [vmem:[%s3 + $0x90] sm:$0xf]
        %v3846 = vld [vmem:[%s3 + $0x94] sm:$0xf]
        %v3847 = vld [vmem:[%s3 + $0x98] sm:$0xf]
        %v3848 = vld [vmem:[%s3 + $0x9c] sm:$0xf]
        %v3849 = vld [vmem:[%s3 + $0xa0] sm:$0xf]
        %v3850 = vld [vmem:[%s3 + $0xa4] sm:$0xf]
        %v3851 = vld [vmem:[%s3 + $0xa8] sm:$0xf]
        %v3852 = vld [vmem:[%s3 + $0xac] sm:$0xf]
        %v3853 = vld [vmem:[%s3 + $0xb0] sm:$0xf]
        %v3854 = vld [vmem:[%s3 + $0xb4] sm:$0xf]
        %v3855 = vld [vmem:[%s3 + $0xb8] sm:$0xf]
        %v3856 = vld [vmem:[%s3 + $0xbc] sm:$0xf]
        %v3857 = vld [vmem:[%s3 + $0xc0] sm:$0xf]
        %v3858 = vld [vmem:[%s3 + $0xc4] sm:$0xf]
        %v3859 = vld [vmem:[%s3 + $0xc8] sm:$0xf]
        %v3860 = vld [vmem:[%s3 + $0xcc] sm:$0xf]
        %v3861 = vld [vmem:[%s3 + $0xd0] sm:$0xf]
        %v3862 = vld [vmem:[%s3 + $0xd4] sm:$0xf]
        %v3863 = vld [vmem:[%s3 + $0xd8] sm:$0xf]
        %v3864 = vld [vmem:[%s3 + $0xdc] sm:$0xf]
        %v3865 = vld [vmem:[%s3 + $0xe0] sm:$0xf]
        %v3866 = vld [vmem:[%s3 + $0xe4] sm:$0xf]
        %v3867 = vld [vmem:[%s3 + $0xe8] sm:$0xf]
        %v3868 = vld [vmem:[%s3 + $0xec] sm:$0xf]
        %v3869 = vld [vmem:[%s3 + $0xf0] sm:$0xf]
        %v3870 = vld [vmem:[%s3 + $0xf4] sm:$0xf]
        %v3871 = vld [vmem:[%s3 + $0xf8] sm:$0xf]
        %v3872 = vld [vmem:[%s3 + $0xfc] sm:$0xf]
        %v3873 = vld [vmem:[%s4] sm:$0x1]
        %v3875 = vperm.slane %v3873, 0
        %v3941 = vunpack.c.l.b16 %v3809
        %v3942 = vunpack.c.l.b16 %v3810
        %v3943 = vunpack.c.l.b16 %v3811
        %v3944 = vunpack.c.l.b16 %v3812
        %v3945 = vunpack.c.l.b16 %v3813
        %v3946 = vunpack.c.l.b16 %v3814
        %v3947 = vunpack.c.l.b16 %v3815
        %v3948 = vunpack.c.l.b16 %v3816
        %v3949 = vunpack.c.l.b16 %v3817
        %v3950 = vunpack.c.l.b16 %v3818
        %v3951 = vunpack.c.l.b16 %v3819
        %v3952 = vunpack.c.l.b16 %v3820
        %v3953 = vunpack.c.l.b16 %v3821
        %v3954 = vunpack.c.l.b16 %v3822
        %v3955 = vunpack.c.l.b16 %v3823
        %v3956 = vunpack.c.l.b16 %v3824
        %v3957 = vunpack.c.l.b16 %v3825
        %v3958 = vunpack.c.l.b16 %v3826
        %v3959 = vunpack.c.l.b16 %v3827
        %v3960 = vunpack.c.l.b16 %v3828
        %v3961 = vunpack.c.l.b16 %v3829
        %v3962 = vunpack.c.l.b16 %v3830
        %v3963 = vunpack.c.l.b16 %v3831
        %v3964 = vunpack.c.l.b16 %v3832
        %v3965 = vunpack.c.l.b16 %v3833
        %v3966 = vunpack.c.l.b16 %v3834
        %v3967 = vunpack.c.l.b16 %v3835
        %v3968 = vunpack.c.l.b16 %v3836
        %v3969 = vunpack.c.l.b16 %v3837
        %v3970 = vunpack.c.l.b16 %v3838
        %v3971 = vunpack.c.l.b16 %v3839
        %v3972 = vunpack.c.l.b16 %v3840
        %v3973 = vunpack.c.l.b16 %v3841
        %v3974 = vunpack.c.l.b16 %v3842
        %v3975 = vunpack.c.l.b16 %v3843
        %v3976 = vunpack.c.l.b16 %v3844
        %v3977 = vunpack.c.l.b16 %v3845
        %v3978 = vunpack.c.l.b16 %v3846
        %v3979 = vunpack.c.l.b16 %v3847
        %v3980 = vunpack.c.l.b16 %v3848
        %v3981 = vunpack.c.l.b16 %v3849
        %v3982 = vunpack.c.l.b16 %v3850
        %v3983 = vunpack.c.l.b16 %v3851
        %v3984 = vunpack.c.l.b16 %v3852
        %v3985 = vunpack.c.l.b16 %v3853
        %v3986 = vunpack.c.l.b16 %v3854
        %v3987 = vunpack.c.l.b16 %v3855
        %v3988 = vunpack.c.l.b16 %v3856
        %v3989 = vunpack.c.l.b16 %v3857
        %v3990 = vunpack.c.l.b16 %v3858
        %v3991 = vunpack.c.l.b16 %v3859
        %v3992 = vunpack.c.l.b16 %v3860
        %v3993 = vunpack.c.l.b16 %v3861
        %v3994 = vunpack.c.l.b16 %v3862
        %v3995 = vunpack.c.l.b16 %v3863
        %v3996 = vunpack.c.l.b16 %v3864
        %v3997 = vunpack.c.l.b16 %v3865
        %v3998 = vunpack.c.l.b16 %v3866
        %v3999 = vunpack.c.l.b16 %v3867
        %v4000 = vunpack.c.l.b16 %v3868
        %v4001 = vunpack.c.l.b16 %v3869
        %v4002 = vunpack.c.l.b16 %v3870
        %v4003 = vunpack.c.l.b16 %v3871
        %v4004 = vunpack.c.l.b16 %v3872
        %v4005 = vpack.c.b16 %v3942, %v3941
        %v4006 = vpack.c.b16 %v3944, %v3943
        %v4007 = vpack.c.b16 %v3946, %v3945
        %v4008 = vpack.c.b16 %v3948, %v3947
        %v4009 = vpack.c.b16 %v3950, %v3949
        %v4010 = vpack.c.b16 %v3952, %v3951
        %v4011 = vpack.c.b16 %v3954, %v3953
        %v4012 = vpack.c.b16 %v3956, %v3955
        %v4013 = vpack.c.b16 %v3958, %v3957
        %v4014 = vpack.c.b16 %v3960, %v3959
        %v4015 = vpack.c.b16 %v3962, %v3961
        %v4016 = vpack.c.b16 %v3964, %v3963
        %v4017 = vpack.c.b16 %v3966, %v3965
        %v4018 = vpack.c.b16 %v3968, %v3967
        %v4019 = vpack.c.b16 %v3970, %v3969
        %v4020 = vpack.c.b16 %v3972, %v3971
        %v4021 = vpack.c.b16 %v3974, %v3973
        %v4022 = vpack.c.b16 %v3976, %v3975
        %v4023 = vpack.c.b16 %v3978, %v3977
        %v4024 = vpack.c.b16 %v3980, %v3979
        %v4025 = vpack.c.b16 %v3982, %v3981
        %v4026 = vpack.c.b16 %v3984, %v3983
        %v4027 = vpack.c.b16 %v3986, %v3985
        %v4028 = vpack.c.b16 %v3988, %v3987
        %v4029 = vpack.c.b16 %v3990, %v3989
        %v4030 = vpack.c.b16 %v3992, %v3991
        %v4031 = vpack.c.b16 %v3994, %v3993
        %v4032 = vpack.c.b16 %v3996, %v3995
        %v4033 = vpack.c.b16 %v3998, %v3997
        %v4034 = vpack.c.b16 %v4000, %v3999
        %v4035 = vpack.c.b16 %v4002, %v4001
        %v4036 = vpack.c.b16 %v4004, %v4003
        %4069 = vmatpush.bf16.msra.mxu0 %v4012
        %4070 = vmatpush.bf16.msra.mxu0 %v4011
        %4071 = vmatpush.bf16.msra.mxu0 %v4010
        %4072 = vmatpush.bf16.msra.mxu0 %v4009
        %4073 = vmatpush.bf16.msra.mxu0 %v4008
        %4074 = vmatpush.bf16.msra.mxu0 %v4007
        %4075 = vmatpush.bf16.msra.mxu0 %v4006
        %4076 = vmatpush.bf16.msra.mxu0 %v4005
        %4077 = vmatmul.bf16.gmra.mxu0 %v3745
        %v4078 = vpop.f32.mrf.mxu0
        %v4079 = vadd.f32 %v3875, %v4078
        %v4080 = vpop.f32.mrf.mxu0
        %v4081 = vadd.f32 %v3875, %v4080
        %4082 = vmatmul.bf16.gmra.mxu0 %v3749
        %v4083 = vpop.f32.mrf.mxu0
        %v4084 = vadd.f32 %v3875, %v4083
        %v4085 = vpop.f32.mrf.mxu0
        %v4086 = vadd.f32 %v3875, %v4085
        %4087 = vmatmul.bf16.gmra.mxu0 %v3753
        %v4088 = vpop.f32.mrf.mxu0
        %v4089 = vadd.f32 %v3875, %v4088
        %v4090 = vpop.f32.mrf.mxu0
        %v4091 = vadd.f32 %v3875, %v4090
        %4092 = vmatmul.bf16.gmra.mxu0 %v3757
        %v4093 = vpop.f32.mrf.mxu0
        %v4094 = vadd.f32 %v3875, %v4093
        %v4095 = vpop.f32.mrf.mxu0
        %v4096 = vadd.f32 %v3875, %v4095
        %4097 = vmatmul.bf16.gmra.mxu0 %v3761
        %v4098 = vpop.f32.mrf.mxu0
        %v4099 = vadd.f32 %v3875, %v4098
        %v4100 = vpop.f32.mrf.mxu0
        %v4101 = vadd.f32 %v3875, %v4100
        %4102 = vmatmul.bf16.gmra.mxu0 %v3765
        %v4103 = vpop.f32.mrf.mxu0
        %v4104 = vadd.f32 %v3875, %v4103
        %v4105 = vpop.f32.mrf.mxu0
        %v4106 = vadd.f32 %v3875, %v4105
        %4107 = vmatmul.bf16.gmra.mxu0 %v3769
        %v4108 = vpop.f32.mrf.mxu0
        %v4109 = vadd.f32 %v3875, %v4108
        %v4110 = vpop.f32.mrf.mxu0
        %v4111 = vadd.f32 %v3875, %v4110
        %4112 = vmatmul.bf16.gmra.mxu0 %v3773
        %v4113 = vpop.f32.mrf.mxu0
        %v4114 = vadd.f32 %v3875, %v4113
        %v4115 = vpop.f32.mrf.mxu0
        %v4116 = vadd.f32 %v3875, %v4115
        %4117 = vmatmul.bf16.gmra.mxu0 %v3777
        %v4118 = vpop.f32.mrf.mxu0
        %v4119 = vadd.f32 %v3875, %v4118
        %v4120 = vpop.f32.mrf.mxu0
        %v4121 = vadd.f32 %v3875, %v4120
        %4122 = vmatmul.bf16.gmra.mxu0 %v3781
        %v4123 = vpop.f32.mrf.mxu0
        %v4124 = vadd.f32 %v3875, %v4123
        %v4125 = vpop.f32.mrf.mxu0
        %v4126 = vadd.f32 %v3875, %v4125
        %4127 = vmatmul.bf16.gmra.mxu0 %v3785
        %v4128 = vpop.f32.mrf.mxu0
        %v4129 = vadd.f32 %v3875, %v4128
        %v4130 = vpop.f32.mrf.mxu0
        %v4131 = vadd.f32 %v3875, %v4130
        %4132 = vmatmul.bf16.gmra.mxu0 %v3789
        %v4133 = vpop.f32.mrf.mxu0
        %v4134 = vadd.f32 %v3875, %v4133
        %v4135 = vpop.f32.mrf.mxu0
        %v4136 = vadd.f32 %v3875, %v4135
        %4137 = vmatmul.bf16.gmra.mxu0 %v3793
        %v4138 = vpop.f32.mrf.mxu0
        %v4139 = vadd.f32 %v3875, %v4138
        %v4140 = vpop.f32.mrf.mxu0
        %v4141 = vadd.f32 %v3875, %v4140
        %4142 = vmatmul.bf16.gmra.mxu0 %v3797
        %v4143 = vpop.f32.mrf.mxu0
        %v4144 = vadd.f32 %v3875, %v4143
        %v4145 = vpop.f32.mrf.mxu0
        %v4146 = vadd.f32 %v3875, %v4145
        %4147 = vmatmul.bf16.gmra.mxu0 %v3801
        %v4148 = vpop.f32.mrf.mxu0
        %v4149 = vadd.f32 %v3875, %v4148
        %v4150 = vpop.f32.mrf.mxu0
        %v4151 = vadd.f32 %v3875, %v4150
        %4152 = vmatmul.bf16.gmra.mxu0 %v3805
        %v4153 = vpop.f32.mrf.mxu0
        %v4154 = vadd.f32 %v3875, %v4153
        %v4155 = vpop.f32.mrf.mxu0
        %v4156 = vadd.f32 %v3875, %v4155
        %4157 = vdwg.mxu0
        %4158 = vmatpush.bf16.msra.mxu0 %v4020
        %4159 = vmatpush.bf16.msra.mxu0 %v4019
        %4160 = vmatpush.bf16.msra.mxu0 %v4018
        %4161 = vmatpush.bf16.msra.mxu0 %v4017
        %4162 = vmatpush.bf16.msra.mxu0 %v4016
        %4163 = vmatpush.bf16.msra.mxu0 %v4015
        %4164 = vmatpush.bf16.msra.mxu0 %v4014
        %4165 = vmatpush.bf16.msra.mxu0 %v4013
        %4166 = vmatmul.bf16.gmra.mxu0 %v3746
        %v4167 = vpop.f32.mrf.mxu0
        %v4168 = vadd.f32 %v4079, %v4167
        %v4169 = vpop.f32.mrf.mxu0
        %v4170 = vadd.f32 %v4081, %v4169
        %4171 = vmatmul.bf16.gmra.mxu0 %v3750
        %v4172 = vpop.f32.mrf.mxu0
        %v4173 = vadd.f32 %v4084, %v4172
        %v4174 = vpop.f32.mrf.mxu0
        %v4175 = vadd.f32 %v4086, %v4174
        %4176 = vmatmul.bf16.gmra.mxu0 %v3754
        %v4177 = vpop.f32.mrf.mxu0
        %v4178 = vadd.f32 %v4089, %v4177
        %v4179 = vpop.f32.mrf.mxu0
        %v4180 = vadd.f32 %v4091, %v4179
        %4181 = vmatmul.bf16.gmra.mxu0 %v3758
        %v4182 = vpop.f32.mrf.mxu0
        %v4183 = vadd.f32 %v4094, %v4182
        %v4184 = vpop.f32.mrf.mxu0
        %v4185 = vadd.f32 %v4096, %v4184
        %4186 = vmatmul.bf16.gmra.mxu0 %v3762
        %v4187 = vpop.f32.mrf.mxu0
        %v4188 = vadd.f32 %v4099, %v4187
        %v4189 = vpop.f32.mrf.mxu0
        %v4190 = vadd.f32 %v4101, %v4189
        %4191 = vmatmul.bf16.gmra.mxu0 %v3766
        %v4192 = vpop.f32.mrf.mxu0
        %v4193 = vadd.f32 %v4104, %v4192
        %v4194 = vpop.f32.mrf.mxu0
        %v4195 = vadd.f32 %v4106, %v4194
        %4196 = vmatmul.bf16.gmra.mxu0 %v3770
        %v4197 = vpop.f32.mrf.mxu0
        %v4198 = vadd.f32 %v4109, %v4197
        %v4199 = vpop.f32.mrf.mxu0
        %v4200 = vadd.f32 %v4111, %v4199
        %4201 = vmatmul.bf16.gmra.mxu0 %v3774
        %v4202 = vpop.f32.mrf.mxu0
        %v4203 = vadd.f32 %v4114, %v4202
        %v4204 = vpop.f32.mrf.mxu0
        %v4205 = vadd.f32 %v4116, %v4204
        %4206 = vmatmul.bf16.gmra.mxu0 %v3778
        %v4207 = vpop.f32.mrf.mxu0
        %v4208 = vadd.f32 %v4119, %v4207
        %v4209 = vpop.f32.mrf.mxu0
        %v4210 = vadd.f32 %v4121, %v4209
        %4211 = vmatmul.bf16.gmra.mxu0 %v3782
        %v4212 = vpop.f32.mrf.mxu0
        %v4213 = vadd.f32 %v4124, %v4212
        %v4214 = vpop.f32.mrf.mxu0
        %v4215 = vadd.f32 %v4126, %v4214
        %4216 = vmatmul.bf16.gmra.mxu0 %v3786
        %v4217 = vpop.f32.mrf.mxu0
        %v4218 = vadd.f32 %v4129, %v4217
        %v4219 = vpop.f32.mrf.mxu0
        %v4220 = vadd.f32 %v4131, %v4219
        %4221 = vmatmul.bf16.gmra.mxu0 %v3790
        %v4222 = vpop.f32.mrf.mxu0
        %v4223 = vadd.f32 %v4134, %v4222
        %v4224 = vpop.f32.mrf.mxu0
        %v4225 = vadd.f32 %v4136, %v4224
        %4226 = vmatmul.bf16.gmra.mxu0 %v3794
        %v4227 = vpop.f32.mrf.mxu0
        %v4228 = vadd.f32 %v4139, %v4227
        %v4229 = vpop.f32.mrf.mxu0
        %v4230 = vadd.f32 %v4141, %v4229
        %4231 = vmatmul.bf16.gmra.mxu0 %v3798
        %v4232 = vpop.f32.mrf.mxu0
        %v4233 = vadd.f32 %v4144, %v4232
        %v4234 = vpop.f32.mrf.mxu0
        %v4235 = vadd.f32 %v4146, %v4234
        %4236 = vmatmul.bf16.gmra.mxu0 %v3802
        %v4237 = vpop.f32.mrf.mxu0
        %v4238 = vadd.f32 %v4149, %v4237
        %v4239 = vpop.f32.mrf.mxu0
        %v4240 = vadd.f32 %v4151, %v4239
        %4241 = vmatmul.bf16.gmra.mxu0 %v3806
        %v4242 = vpop.f32.mrf.mxu0
        %v4243 = vadd.f32 %v4154, %v4242
        %v4244 = vpop.f32.mrf.mxu0
        %v4245 = vadd.f32 %v4156, %v4244
        %4246 = vdwg.mxu0
        %4247 = vmatpush.bf16.msra.mxu0 %v4028
        %4248 = vmatpush.bf16.msra.mxu0 %v4027
        %4249 = vmatpush.bf16.msra.mxu0 %v4026
        %4250 = vmatpush.bf16.msra.mxu0 %v4025
        %4251 = vmatpush.bf16.msra.mxu0 %v4024
        %4252 = vmatpush.bf16.msra.mxu0 %v4023
        %4253 = vmatpush.bf16.msra.mxu0 %v4022
        %4254 = vmatpush.bf16.msra.mxu0 %v4021
        %4255 = vmatmul.bf16.gmra.mxu0 %v3747
        %v4256 = vpop.f32.mrf.mxu0
        %v4257 = vadd.f32 %v4168, %v4256
        %v4258 = vpop.f32.mrf.mxu0
        %v4259 = vadd.f32 %v4170, %v4258
        %4260 = vmatmul.bf16.gmra.mxu0 %v3751
        %v4261 = vpop.f32.mrf.mxu0
        %v4262 = vadd.f32 %v4173, %v4261
        %v4263 = vpop.f32.mrf.mxu0
        %v4264 = vadd.f32 %v4175, %v4263
        %4265 = vmatmul.bf16.gmra.mxu0 %v3755
        %v4266 = vpop.f32.mrf.mxu0
        %v4267 = vadd.f32 %v4178, %v4266
        %v4268 = vpop.f32.mrf.mxu0
        %v4269 = vadd.f32 %v4180, %v4268
        %4270 = vmatmul.bf16.gmra.mxu0 %v3759
        %v4271 = vpop.f32.mrf.mxu0
        %v4272 = vadd.f32 %v4183, %v4271
        %v4273 = vpop.f32.mrf.mxu0
        %v4274 = vadd.f32 %v4185, %v4273
        %4275 = vmatmul.bf16.gmra.mxu0 %v3763
        %v4276 = vpop.f32.mrf.mxu0
        %v4277 = vadd.f32 %v4188, %v4276
        %v4278 = vpop.f32.mrf.mxu0
        %v4279 = vadd.f32 %v4190, %v4278
        %4280 = vmatmul.bf16.gmra.mxu0 %v3767
        %v4281 = vpop.f32.mrf.mxu0
        %v4282 = vadd.f32 %v4193, %v4281
        %v4283 = vpop.f32.mrf.mxu0
        %v4284 = vadd.f32 %v4195, %v4283
        %4285 = vmatmul.bf16.gmra.mxu0 %v3771
        %v4286 = vpop.f32.mrf.mxu0
        %v4287 = vadd.f32 %v4198, %v4286
        %v4288 = vpop.f32.mrf.mxu0
        %v4289 = vadd.f32 %v4200, %v4288
        %4290 = vmatmul.bf16.gmra.mxu0 %v3775
        %v4291 = vpop.f32.mrf.mxu0
        %v4292 = vadd.f32 %v4203, %v4291
        %v4293 = vpop.f32.mrf.mxu0
        %v4294 = vadd.f32 %v4205, %v4293
        %4295 = vmatmul.bf16.gmra.mxu0 %v3779
        %v4296 = vpop.f32.mrf.mxu0
        %v4297 = vadd.f32 %v4208, %v4296
        %v4298 = vpop.f32.mrf.mxu0
        %v4299 = vadd.f32 %v4210, %v4298
        %4300 = vmatmul.bf16.gmra.mxu0 %v3783
        %v4301 = vpop.f32.mrf.mxu0
        %v4302 = vadd.f32 %v4213, %v4301
        %v4303 = vpop.f32.mrf.mxu0
        %v4304 = vadd.f32 %v4215, %v4303
        %4305 = vmatmul.bf16.gmra.mxu0 %v3787
        %v4306 = vpop.f32.mrf.mxu0
        %v4307 = vadd.f32 %v4218, %v4306
        %v4308 = vpop.f32.mrf.mxu0
        %v4309 = vadd.f32 %v4220, %v4308
        %4310 = vmatmul.bf16.gmra.mxu0 %v3791
        %v4311 = vpop.f32.mrf.mxu0
        %v4312 = vadd.f32 %v4223, %v4311
        %v4313 = vpop.f32.mrf.mxu0
        %v4314 = vadd.f32 %v4225, %v4313
        %4315 = vmatmul.bf16.gmra.mxu0 %v3795
        %v4316 = vpop.f32.mrf.mxu0
        %v4317 = vadd.f32 %v4228, %v4316
        %v4318 = vpop.f32.mrf.mxu0
        %v4319 = vadd.f32 %v4230, %v4318
        %4320 = vmatmul.bf16.gmra.mxu0 %v3799
        %v4321 = vpop.f32.mrf.mxu0
        %v4322 = vadd.f32 %v4233, %v4321
        %v4323 = vpop.f32.mrf.mxu0
        %v4324 = vadd.f32 %v4235, %v4323
        %4325 = vmatmul.bf16.gmra.mxu0 %v3803
        %v4326 = vpop.f32.mrf.mxu0
        %v4327 = vadd.f32 %v4238, %v4326
        %v4328 = vpop.f32.mrf.mxu0
        %v4329 = vadd.f32 %v4240, %v4328
        %4330 = vmatmul.bf16.gmra.mxu0 %v3807
        %v4331 = vpop.f32.mrf.mxu0
        %v4332 = vadd.f32 %v4243, %v4331
        %v4333 = vpop.f32.mrf.mxu0
        %v4334 = vadd.f32 %v4245, %v4333
        %4335 = vdwg.mxu0
        %4336 = vmatpush.bf16.msra.mxu0 %v4036
        %4337 = vmatpush.bf16.msra.mxu0 %v4035
        %4338 = vmatpush.bf16.msra.mxu0 %v4034
        %4339 = vmatpush.bf16.msra.mxu0 %v4033
        %4340 = vmatpush.bf16.msra.mxu0 %v4032
        %4341 = vmatpush.bf16.msra.mxu0 %v4031
        %4342 = vmatpush.bf16.msra.mxu0 %v4030
        %4343 = vmatpush.bf16.msra.mxu0 %v4029
        %4344 = vmatmul.bf16.gmra.mxu0 %v3748
        %v4345 = vpop.f32.mrf.mxu0
        %v4346 = vadd.f32 %v4257, %v4345
        %v4347 = vpop.f32.mrf.mxu0
        %v4348 = vadd.f32 %v4259, %v4347
        %4349 = vmatmul.bf16.gmra.mxu0 %v3752
        %v4350 = vpop.f32.mrf.mxu0
        %v4351 = vadd.f32 %v4262, %v4350
        %v4352 = vpop.f32.mrf.mxu0
        %v4353 = vadd.f32 %v4264, %v4352
        %4354 = vmatmul.bf16.gmra.mxu0 %v3756
        %v4355 = vpop.f32.mrf.mxu0
        %v4356 = vadd.f32 %v4267, %v4355
        %v4357 = vpop.f32.mrf.mxu0
        %v4358 = vadd.f32 %v4269, %v4357
        %4359 = vmatmul.bf16.gmra.mxu0 %v3760
        %v4360 = vpop.f32.mrf.mxu0
        %v4361 = vadd.f32 %v4272, %v4360
        %v4362 = vpop.f32.mrf.mxu0
        %v4363 = vadd.f32 %v4274, %v4362
        %4364 = vmatmul.bf16.gmra.mxu0 %v3764
        %v4365 = vpop.f32.mrf.mxu0
        %v4366 = vadd.f32 %v4277, %v4365
        %v4367 = vpop.f32.mrf.mxu0
        %v4368 = vadd.f32 %v4279, %v4367
        %4369 = vmatmul.bf16.gmra.mxu0 %v3768
        %v4370 = vpop.f32.mrf.mxu0
        %v4371 = vadd.f32 %v4282, %v4370
        %v4372 = vpop.f32.mrf.mxu0
        %v4373 = vadd.f32 %v4284, %v4372
        %4374 = vmatmul.bf16.gmra.mxu0 %v3772
        %v4375 = vpop.f32.mrf.mxu0
        %v4376 = vadd.f32 %v4287, %v4375
        %v4377 = vpop.f32.mrf.mxu0
        %v4378 = vadd.f32 %v4289, %v4377
        %4379 = vmatmul.bf16.gmra.mxu0 %v3776
        %v4380 = vpop.f32.mrf.mxu0
        %v4381 = vadd.f32 %v4292, %v4380
        %v4382 = vpop.f32.mrf.mxu0
        %v4383 = vadd.f32 %v4294, %v4382
        %4384 = vmatmul.bf16.gmra.mxu0 %v3780
        %v4385 = vpop.f32.mrf.mxu0
        %v4386 = vadd.f32 %v4297, %v4385
        %v4387 = vpop.f32.mrf.mxu0
        %v4388 = vadd.f32 %v4299, %v4387
        %4389 = vmatmul.bf16.gmra.mxu0 %v3784
        %v4390 = vpop.f32.mrf.mxu0
        %v4391 = vadd.f32 %v4302, %v4390
        %v4392 = vpop.f32.mrf.mxu0
        %v4393 = vadd.f32 %v4304, %v4392
        %4394 = vmatmul.bf16.gmra.mxu0 %v3788
        %v4395 = vpop.f32.mrf.mxu0
        %v4396 = vadd.f32 %v4307, %v4395
        %v4397 = vpop.f32.mrf.mxu0
        %v4398 = vadd.f32 %v4309, %v4397
        %4399 = vmatmul.bf16.gmra.mxu0 %v3792
        %v4400 = vpop.f32.mrf.mxu0
        %v4401 = vadd.f32 %v4312, %v4400
        %v4402 = vpop.f32.mrf.mxu0
        %v4403 = vadd.f32 %v4314, %v4402
        %4404 = vmatmul.bf16.gmra.mxu0 %v3796
        %v4405 = vpop.f32.mrf.mxu0
        %v4406 = vadd.f32 %v4317, %v4405
        %v4407 = vpop.f32.mrf.mxu0
        %v4408 = vadd.f32 %v4319, %v4407
        %4409 = vmatmul.bf16.gmra.mxu0 %v3800
        %v4410 = vpop.f32.mrf.mxu0
        %v4411 = vadd.f32 %v4322, %v4410
        %v4412 = vpop.f32.mrf.mxu0
        %v4413 = vadd.f32 %v4324, %v4412
        %4414 = vmatmul.bf16.gmra.mxu0 %v3804
        %v4415 = vpop.f32.mrf.mxu0
        %v4416 = vadd.f32 %v4327, %v4415
        %v4417 = vpop.f32.mrf.mxu0
        %v4418 = vadd.f32 %v4329, %v4417
        %4419 = vmatmul.bf16.gmra.mxu0 %v3808
        %v4420 = vpop.f32.mrf.mxu0
        %v4421 = vadd.f32 %v4332, %v4420
        %v4422 = vpop.f32.mrf.mxu0
        %v4423 = vadd.f32 %v4334, %v4422
        %4424 = vdwg.mxu0
        %4457 = vrot.lane.b32.xlu0 %v4346, 119
        %v4458 = vpop.permute.xlu0 %4457
        %4459 = vrot.lane.b32.xlu0 %v4348, 119
        %v4460 = vpop.permute.xlu0 %4459
        %4461 = vrot.lane.b32.xlu0 %v4351, 119
        %v4462 = vpop.permute.xlu0 %4461
        %4463 = vrot.lane.b32.xlu0 %v4353, 119
        %v4464 = vpop.permute.xlu0 %4463
        %4465 = vrot.lane.b32.xlu0 %v4356, 119
        %v4466 = vpop.permute.xlu0 %4465
        %4467 = vrot.lane.b32.xlu0 %v4358, 119
        %v4468 = vpop.permute.xlu0 %4467
        %4469 = vrot.lane.b32.xlu0 %v4361, 119
        %v4470 = vpop.permute.xlu0 %4469
        %4471 = vrot.lane.b32.xlu0 %v4363, 119
        %v4472 = vpop.permute.xlu0 %4471
        %4473 = vrot.lane.b32.xlu0 %v4366, 119
        %v4474 = vpop.permute.xlu0 %4473
        %4475 = vrot.lane.b32.xlu0 %v4368, 119
        %v4476 = vpop.permute.xlu0 %4475
        %4477 = vrot.lane.b32.xlu0 %v4371, 119
        %v4478 = vpop.permute.xlu0 %4477
        %4479 = vrot.lane.b32.xlu0 %v4373, 119
        %v4480 = vpop.permute.xlu0 %4479
        %4481 = vrot.lane.b32.xlu0 %v4376, 119
        %v4482 = vpop.permute.xlu0 %4481
        %4483 = vrot.lane.b32.xlu0 %v4378, 119
        %v4484 = vpop.permute.xlu0 %4483
        %4485 = vrot.lane.b32.xlu0 %v4381, 119
        %v4486 = vpop.permute.xlu0 %4485
        %4487 = vrot.lane.b32.xlu0 %v4383, 119
        %v4488 = vpop.permute.xlu0 %4487
        %4489 = vrot.lane.b32.xlu0 %v4386, 119
        %v4490 = vpop.permute.xlu0 %4489
        %4491 = vrot.lane.b32.xlu0 %v4388, 119
        %v4492 = vpop.permute.xlu0 %4491
        %4493 = vrot.lane.b32.xlu0 %v4391, 119
        %v4494 = vpop.permute.xlu0 %4493
        %4495 = vrot.lane.b32.xlu0 %v4393, 119
        %v4496 = vpop.permute.xlu0 %4495
        %4497 = vrot.lane.b32.xlu0 %v4396, 119
        %v4498 = vpop.permute.xlu0 %4497
        %4499 = vrot.lane.b32.xlu0 %v4398, 119
        %v4500 = vpop.permute.xlu0 %4499
        %4501 = vrot.lane.b32.xlu0 %v4401, 119
        %v4502 = vpop.permute.xlu0 %4501
        %4503 = vrot.lane.b32.xlu0 %v4403, 119
        %v4504 = vpop.permute.xlu0 %4503
        %4505 = vrot.lane.b32.xlu0 %v4406, 119
        %v4506 = vpop.permute.xlu0 %4505
        %4507 = vrot.lane.b32.xlu0 %v4408, 119
        %v4508 = vpop.permute.xlu0 %4507
        %4509 = vrot.lane.b32.xlu0 %v4411, 119
        %v4510 = vpop.permute.xlu0 %4509
        %4511 = vrot.lane.b32.xlu0 %v4413, 119
        %v4512 = vpop.permute.xlu0 %4511
        %4513 = vrot.lane.b32.xlu0 %v4416, 119
        %v4514 = vpop.permute.xlu0 %4513
        %4515 = vrot.lane.b32.xlu0 %v4418, 119
        %v4516 = vpop.permute.xlu0 %4515
        %4517 = vrot.lane.b32.xlu0 %v4421, 119
        %v4518 = vpop.permute.xlu0 %4517
        %4519 = vrot.lane.b32.xlu0 %v4423, 119
        %v4520 = vpop.permute.xlu0 %4519
        %v4553 = vmax.f32 %v4346, %v4458
        %v4554 = vmax.f32 %v4348, %v4460
        %v4555 = vmax.f32 %v4351, %v4462
        %v4556 = vmax.f32 %v4353, %v4464
        %v4557 = vmax.f32 %v4356, %v4466
        %v4558 = vmax.f32 %v4358, %v4468
        %v4559 = vmax.f32 %v4361, %v4470
        %v4560 = vmax.f32 %v4363, %v4472
        %v4561 = vmax.f32 %v4366, %v4474
        %v4562 = vmax.f32 %v4368, %v4476
        %v4563 = vmax.f32 %v4371, %v4478
        %v4564 = vmax.f32 %v4373, %v4480
        %v4565 = vmax.f32 %v4376, %v4482
        %v4566 = vmax.f32 %v4378, %v4484
        %v4567 = vmax.f32 %v4381, %v4486
        %v4568 = vmax.f32 %v4383, %v4488
        %v4569 = vmax.f32 %v4386, %v4490
        %v4570 = vmax.f32 %v4388, %v4492
        %v4571 = vmax.f32 %v4391, %v4494
        %v4572 = vmax.f32 %v4393, %v4496
        %v4573 = vmax.f32 %v4396, %v4498
        %v4574 = vmax.f32 %v4398, %v4500
        %v4575 = vmax.f32 %v4401, %v4502
        %v4576 = vmax.f32 %v4403, %v4504
        %v4577 = vmax.f32 %v4406, %v4506
        %v4578 = vmax.f32 %v4408, %v4508
        %v4579 = vmax.f32 %v4411, %v4510
        %v4580 = vmax.f32 %v4413, %v4512
        %v4581 = vmax.f32 %v4416, %v4514
        %v4582 = vmax.f32 %v4418, %v4516
        %v4583 = vmax.f32 %v4421, %v4518
        %v4584 = vmax.f32 %v4423, %v4520
        %v4585 = vsub.f32 %v4346, %v4553
        %v4586 = vsub.f32 %v4348, %v4554
        %v4587 = vsub.f32 %v4351, %v4555
        %v4588 = vsub.f32 %v4353, %v4556
        %v4589 = vsub.f32 %v4356, %v4557
        %v4590 = vsub.f32 %v4358, %v4558
        %v4591 = vsub.f32 %v4361, %v4559
        %v4592 = vsub.f32 %v4363, %v4560
        %v4593 = vsub.f32 %v4366, %v4561
        %v4594 = vsub.f32 %v4368, %v4562
        %v4595 = vsub.f32 %v4371, %v4563
        %v4596 = vsub.f32 %v4373, %v4564
        %v4597 = vsub.f32 %v4376, %v4565
        %v4598 = vsub.f32 %v4378, %v4566
        %v4599 = vsub.f32 %v4381, %v4567
        %v4600 = vsub.f32 %v4383, %v4568
        %v4601 = vsub.f32 %v4386, %v4569
        %v4602 = vsub.f32 %v4388, %v4570
        %v4603 = vsub.f32 %v4391, %v4571
        %v4604 = vsub.f32 %v4393, %v4572
        %v4605 = vsub.f32 %v4396, %v4573
        %v4606 = vsub.f32 %v4398, %v4574
        %v4607 = vsub.f32 %v4401, %v4575
        %v4608 = vsub.f32 %v4403, %v4576
        %v4609 = vsub.f32 %v4406, %v4577
        %v4610 = vsub.f32 %v4408, %v4578
        %v4611 = vsub.f32 %v4411, %v4579
        %v4612 = vsub.f32 %v4413, %v4580
        %v4613 = vsub.f32 %v4416, %v4581
        %v4614 = vsub.f32 %v4418, %v4582
        %v4615 = vsub.f32 %v4421, %v4583
        %v4616 = vsub.f32 %v4423, %v4584
        %v4617 = vmul.f32 %v4585, 1.442695
        %v4618 = vpow.pop %v4617
        %v4619 = vmul.f32 %v4586, 1.442695
        %v4620 = vpow.pop %v4619
        %v4621 = vmul.f32 %v4587, 1.442695
        %v4622 = vpow.pop %v4621
        %v4623 = vmul.f32 %v4588, 1.442695
        %v4624 = vpow.pop %v4623
        %v4625 = vmul.f32 %v4589, 1.442695
        %v4626 = vpow.pop %v4625
        %v4627 = vmul.f32 %v4590, 1.442695
        %v4628 = vpow.pop %v4627
        %v4629 = vmul.f32 %v4591, 1.442695
        %v4630 = vpow.pop %v4629
        %v4631 = vmul.f32 %v4592, 1.442695
        %v4632 = vpow.pop %v4631
        %v4633 = vmul.f32 %v4593, 1.442695
        %v4634 = vpow.pop %v4633
        %v4635 = vmul.f32 %v4594, 1.442695
        %v4636 = vpow.pop %v4635
        %v4637 = vmul.f32 %v4595, 1.442695
        %v4638 = vpow.pop %v4637
        %v4639 = vmul.f32 %v4596, 1.442695
        %v4640 = vpow.pop %v4639
        %v4641 = vmul.f32 %v4597, 1.442695
        %v4642 = vpow.pop %v4641
        %v4643 = vmul.f32 %v4598, 1.442695
        %v4644 = vpow.pop %v4643
        %v4645 = vmul.f32 %v4599, 1.442695
        %v4646 = vpow.pop %v4645
        %v4647 = vmul.f32 %v4600, 1.442695
        %v4648 = vpow.pop %v4647
        %v4649 = vmul.f32 %v4601, 1.442695
        %v4650 = vpow.pop %v4649
        %v4651 = vmul.f32 %v4602, 1.442695
        %v4652 = vpow.pop %v4651
        %v4653 = vmul.f32 %v4603, 1.442695
        %v4654 = vpow.pop %v4653
        %v4655 = vmul.f32 %v4604, 1.442695
        %v4656 = vpow.pop %v4655
        %v4657 = vmul.f32 %v4605, 1.442695
        %v4658 = vpow.pop %v4657
        %v4659 = vmul.f32 %v4606, 1.442695
        %v4660 = vpow.pop %v4659
        %v4661 = vmul.f32 %v4607, 1.442695
        %v4662 = vpow.pop %v4661
        %v4663 = vmul.f32 %v4608, 1.442695
        %v4664 = vpow.pop %v4663
        %v4665 = vmul.f32 %v4609, 1.442695
        %v4666 = vpow.pop %v4665
        %v4667 = vmul.f32 %v4610, 1.442695
        %v4668 = vpow.pop %v4667
        %v4669 = vmul.f32 %v4611, 1.442695
        %v4670 = vpow.pop %v4669
        %v4671 = vmul.f32 %v4612, 1.442695
        %v4672 = vpow.pop %v4671
        %v4673 = vmul.f32 %v4613, 1.442695
        %v4674 = vpow.pop %v4673
        %v4675 = vmul.f32 %v4614, 1.442695
        %v4676 = vpow.pop %v4675
        %v4677 = vmul.f32 %v4615, 1.442695
        %v4678 = vpow.pop %v4677
        %v4679 = vmul.f32 %v4616, 1.442695
        %v4680 = vpow.pop %v4679
        %4713 = vrot.lane.b32.xlu0 %v4553, 9
        %v4714 = vpop.permute.xlu0 %4713
        %4715 = vrot.lane.b32.xlu0 %v4554, 9
        %v4716 = vpop.permute.xlu0 %4715
        %4717 = vrot.lane.b32.xlu0 %v4555, 9
        %v4718 = vpop.permute.xlu0 %4717
        %4719 = vrot.lane.b32.xlu0 %v4556, 9
        %v4720 = vpop.permute.xlu0 %4719
        %4721 = vrot.lane.b32.xlu0 %v4557, 9
        %v4722 = vpop.permute.xlu0 %4721
        %4723 = vrot.lane.b32.xlu0 %v4558, 9
        %v4724 = vpop.permute.xlu0 %4723
        %4725 = vrot.lane.b32.xlu0 %v4559, 9
        %v4726 = vpop.permute.xlu0 %4725
        %4727 = vrot.lane.b32.xlu0 %v4560, 9
        %v4728 = vpop.permute.xlu0 %4727
        %4729 = vrot.lane.b32.xlu0 %v4561, 9
        %v4730 = vpop.permute.xlu0 %4729
        %4731 = vrot.lane.b32.xlu0 %v4562, 9
        %v4732 = vpop.permute.xlu0 %4731
        %4733 = vrot.lane.b32.xlu0 %v4563, 9
        %v4734 = vpop.permute.xlu0 %4733
        %4735 = vrot.lane.b32.xlu0 %v4564, 9
        %v4736 = vpop.permute.xlu0 %4735
        %4737 = vrot.lane.b32.xlu0 %v4565, 9
        %v4738 = vpop.permute.xlu0 %4737
        %4739 = vrot.lane.b32.xlu0 %v4566, 9
        %v4740 = vpop.permute.xlu0 %4739
        %4741 = vrot.lane.b32.xlu0 %v4567, 9
        %v4742 = vpop.permute.xlu0 %4741
        %4743 = vrot.lane.b32.xlu0 %v4568, 9
        %v4744 = vpop.permute.xlu0 %4743
        %4745 = vrot.lane.b32.xlu0 %v4569, 9
        %v4746 = vpop.permute.xlu0 %4745
        %4747 = vrot.lane.b32.xlu0 %v4570, 9
        %v4748 = vpop.permute.xlu0 %4747
        %4749 = vrot.lane.b32.xlu0 %v4571, 9
        %v4750 = vpop.permute.xlu0 %4749
        %4751 = vrot.lane.b32.xlu0 %v4572, 9
        %v4752 = vpop.permute.xlu0 %4751
        %4753 = vrot.lane.b32.xlu0 %v4573, 9
        %v4754 = vpop.permute.xlu0 %4753
        %4755 = vrot.lane.b32.xlu0 %v4574, 9
        %v4756 = vpop.permute.xlu0 %4755
        %4757 = vrot.lane.b32.xlu0 %v4575, 9
        %v4758 = vpop.permute.xlu0 %4757
        %4759 = vrot.lane.b32.xlu0 %v4576, 9
        %v4760 = vpop.permute.xlu0 %4759
        %4761 = vrot.lane.b32.xlu0 %v4577, 9
        %v4762 = vpop.permute.xlu0 %4761
        %4763 = vrot.lane.b32.xlu0 %v4578, 9
        %v4764 = vpop.permute.xlu0 %4763
        %4765 = vrot.lane.b32.xlu0 %v4579, 9
        %v4766 = vpop.permute.xlu0 %4765
        %4767 = vrot.lane.b32.xlu0 %v4580, 9
        %v4768 = vpop.permute.xlu0 %4767
        %4769 = vrot.lane.b32.xlu0 %v4581, 9
        %v4770 = vpop.permute.xlu0 %4769
        %4771 = vrot.lane.b32.xlu0 %v4582, 9
        %v4772 = vpop.permute.xlu0 %4771
        %4773 = vrot.lane.b32.xlu0 %v4583, 9
        %v4774 = vpop.permute.xlu0 %4773
        %4775 = vrot.lane.b32.xlu0 %v4584, 9
        %v4776 = vpop.permute.xlu0 %4775
        %v4809 = vsub.f32 %v4346, %v4714
        %v4810 = vsub.f32 %v4348, %v4716
        %v4811 = vsub.f32 %v4351, %v4718
        %v4812 = vsub.f32 %v4353, %v4720
        %v4813 = vsub.f32 %v4356, %v4722
        %v4814 = vsub.f32 %v4358, %v4724
        %v4815 = vsub.f32 %v4361, %v4726
        %v4816 = vsub.f32 %v4363, %v4728
        %v4817 = vsub.f32 %v4366, %v4730
        %v4818 = vsub.f32 %v4368, %v4732
        %v4819 = vsub.f32 %v4371, %v4734
        %v4820 = vsub.f32 %v4373, %v4736
        %v4821 = vsub.f32 %v4376, %v4738
        %v4822 = vsub.f32 %v4378, %v4740
        %v4823 = vsub.f32 %v4381, %v4742
        %v4824 = vsub.f32 %v4383, %v4744
        %v4825 = vsub.f32 %v4386, %v4746
        %v4826 = vsub.f32 %v4388, %v4748
        %v4827 = vsub.f32 %v4391, %v4750
        %v4828 = vsub.f32 %v4393, %v4752
        %v4829 = vsub.f32 %v4396, %v4754
        %v4830 = vsub.f32 %v4398, %v4756
        %v4831 = vsub.f32 %v4401, %v4758
        %v4832 = vsub.f32 %v4403, %v4760
        %v4833 = vsub.f32 %v4406, %v4762
        %v4834 = vsub.f32 %v4408, %v4764
        %v4835 = vsub.f32 %v4411, %v4766
        %v4836 = vsub.f32 %v4413, %v4768
        %v4837 = vsub.f32 %v4416, %v4770
        %v4838 = vsub.f32 %v4418, %v4772
        %v4839 = vsub.f32 %v4421, %v4774
        %v4840 = vsub.f32 %v4423, %v4776
        %v4841 = vmul.f32 %v4809, 1.442695
        %v4842 = vpow.pop %v4841
        %v4843 = vmul.f32 %v4810, 1.442695
        %v4844 = vpow.pop %v4843
        %v4845 = vmul.f32 %v4811, 1.442695
        %v4846 = vpow.pop %v4845
        %v4847 = vmul.f32 %v4812, 1.442695
        %v4848 = vpow.pop %v4847
        %v4849 = vmul.f32 %v4813, 1.442695
        %v4850 = vpow.pop %v4849
        %v4851 = vmul.f32 %v4814, 1.442695
        %v4852 = vpow.pop %v4851
        %v4853 = vmul.f32 %v4815, 1.442695
        %v4854 = vpow.pop %v4853
        %v4855 = vmul.f32 %v4816, 1.442695
        %v4856 = vpow.pop %v4855
        %v4857 = vmul.f32 %v4817, 1.442695
        %v4858 = vpow.pop %v4857
        %v4859 = vmul.f32 %v4818, 1.442695
        %v4860 = vpow.pop %v4859
        %v4861 = vmul.f32 %v4819, 1.442695
        %v4862 = vpow.pop %v4861
        %v4863 = vmul.f32 %v4820, 1.442695
        %v4864 = vpow.pop %v4863
        %v4865 = vmul.f32 %v4821, 1.442695
        %v4866 = vpow.pop %v4865
        %v4867 = vmul.f32 %v4822, 1.442695
        %v4868 = vpow.pop %v4867
        %v4869 = vmul.f32 %v4823, 1.442695
        %v4870 = vpow.pop %v4869
        %v4871 = vmul.f32 %v4824, 1.442695
        %v4872 = vpow.pop %v4871
        %v4873 = vmul.f32 %v4825, 1.442695
        %v4874 = vpow.pop %v4873
        %v4875 = vmul.f32 %v4826, 1.442695
        %v4876 = vpow.pop %v4875
        %v4877 = vmul.f32 %v4827, 1.442695
        %v4878 = vpow.pop %v4877
        %v4879 = vmul.f32 %v4828, 1.442695
        %v4880 = vpow.pop %v4879
        %v4881 = vmul.f32 %v4829, 1.442695
        %v4882 = vpow.pop %v4881
        %v4883 = vmul.f32 %v4830, 1.442695
        %v4884 = vpow.pop %v4883
        %v4885 = vmul.f32 %v4831, 1.442695
        %v4886 = vpow.pop %v4885
        %v4887 = vmul.f32 %v4832, 1.442695
        %v4888 = vpow.pop %v4887
        %v4889 = vmul.f32 %v4833, 1.442695
        %v4890 = vpow.pop %v4889
        %v4891 = vmul.f32 %v4834, 1.442695
        %v4892 = vpow.pop %v4891
        %v4893 = vmul.f32 %v4835, 1.442695
        %v4894 = vpow.pop %v4893
        %v4895 = vmul.f32 %v4836, 1.442695
        %v4896 = vpow.pop %v4895
        %v4897 = vmul.f32 %v4837, 1.442695
        %v4898 = vpow.pop %v4897
        %v4899 = vmul.f32 %v4838, 1.442695
        %v4900 = vpow.pop %v4899
        %v4901 = vmul.f32 %v4839, 1.442695
        %v4902 = vpow.pop %v4901
        %v4903 = vmul.f32 %v4840, 1.442695
        %v4904 = vpow.pop %v4903
        %4937 = vrot.lane.b32.xlu0 %v4842, 119
        %v4938 = vpop.permute.xlu0 %4937
        %4939 = vrot.lane.b32.xlu0 %v4844, 119
        %v4940 = vpop.permute.xlu0 %4939
        %4941 = vrot.lane.b32.xlu0 %v4846, 119
        %v4942 = vpop.permute.xlu0 %4941
        %4943 = vrot.lane.b32.xlu0 %v4848, 119
        %v4944 = vpop.permute.xlu0 %4943
        %4945 = vrot.lane.b32.xlu0 %v4850, 119
        %v4946 = vpop.permute.xlu0 %4945
        %4947 = vrot.lane.b32.xlu0 %v4852, 119
        %v4948 = vpop.permute.xlu0 %4947
        %4949 = vrot.lane.b32.xlu0 %v4854, 119
        %v4950 = vpop.permute.xlu0 %4949
        %4951 = vrot.lane.b32.xlu0 %v4856, 119
        %v4952 = vpop.permute.xlu0 %4951
        %4953 = vrot.lane.b32.xlu0 %v4858, 119
        %v4954 = vpop.permute.xlu0 %4953
        %4955 = vrot.lane.b32.xlu0 %v4860, 119
        %v4956 = vpop.permute.xlu0 %4955
        %4957 = vrot.lane.b32.xlu0 %v4862, 119
        %v4958 = vpop.permute.xlu0 %4957
        %4959 = vrot.lane.b32.xlu0 %v4864, 119
        %v4960 = vpop.permute.xlu0 %4959
        %4961 = vrot.lane.b32.xlu0 %v4866, 119
        %v4962 = vpop.permute.xlu0 %4961
        %4963 = vrot.lane.b32.xlu0 %v4868, 119
        %v4964 = vpop.permute.xlu0 %4963
        %4965 = vrot.lane.b32.xlu0 %v4870, 119
        %v4966 = vpop.permute.xlu0 %4965
        %4967 = vrot.lane.b32.xlu0 %v4872, 119
        %v4968 = vpop.permute.xlu0 %4967
        %4969 = vrot.lane.b32.xlu0 %v4874, 119
        %v4970 = vpop.permute.xlu0 %4969
        %4971 = vrot.lane.b32.xlu0 %v4876, 119
        %v4972 = vpop.permute.xlu0 %4971
        %4973 = vrot.lane.b32.xlu0 %v4878, 119
        %v4974 = vpop.permute.xlu0 %4973
        %4975 = vrot.lane.b32.xlu0 %v4880, 119
        %v4976 = vpop.permute.xlu0 %4975
        %4977 = vrot.lane.b32.xlu0 %v4882, 119
        %v4978 = vpop.permute.xlu0 %4977
        %4979 = vrot.lane.b32.xlu0 %v4884, 119
        %v4980 = vpop.permute.xlu0 %4979
        %4981 = vrot.lane.b32.xlu0 %v4886, 119
        %v4982 = vpop.permute.xlu0 %4981
        %4983 = vrot.lane.b32.xlu0 %v4888, 119
        %v4984 = vpop.permute.xlu0 %4983
        %4985 = vrot.lane.b32.xlu0 %v4890, 119
        %v4986 = vpop.permute.xlu0 %4985
        %4987 = vrot.lane.b32.xlu0 %v4892, 119
        %v4988 = vpop.permute.xlu0 %4987
        %4989 = vrot.lane.b32.xlu0 %v4894, 119
        %v4990 = vpop.permute.xlu0 %4989
        %4991 = vrot.lane.b32.xlu0 %v4896, 119
        %v4992 = vpop.permute.xlu0 %4991
        %4993 = vrot.lane.b32.xlu0 %v4898, 119
        %v4994 = vpop.permute.xlu0 %4993
        %4995 = vrot.lane.b32.xlu0 %v4900, 119
        %v4996 = vpop.permute.xlu0 %4995
        %4997 = vrot.lane.b32.xlu0 %v4902, 119
        %v4998 = vpop.permute.xlu0 %4997
        %4999 = vrot.lane.b32.xlu0 %v4904, 119
        %v5000 = vpop.permute.xlu0 %4999
        %v5033 = vadd.f32 %v4618, %v4938
        %v5034 = vadd.f32 %v4620, %v4940
        %v5035 = vadd.f32 %v4622, %v4942
        %v5036 = vadd.f32 %v4624, %v4944
        %v5037 = vadd.f32 %v4626, %v4946
        %v5038 = vadd.f32 %v4628, %v4948
        %v5039 = vadd.f32 %v4630, %v4950
        %v5040 = vadd.f32 %v4632, %v4952
        %v5041 = vadd.f32 %v4634, %v4954
        %v5042 = vadd.f32 %v4636, %v4956
        %v5043 = vadd.f32 %v4638, %v4958
        %v5044 = vadd.f32 %v4640, %v4960
        %v5045 = vadd.f32 %v4642, %v4962
        %v5046 = vadd.f32 %v4644, %v4964
        %v5047 = vadd.f32 %v4646, %v4966
        %v5048 = vadd.f32 %v4648, %v4968
        %v5049 = vadd.f32 %v4650, %v4970
        %v5050 = vadd.f32 %v4652, %v4972
        %v5051 = vadd.f32 %v4654, %v4974
        %v5052 = vadd.f32 %v4656, %v4976
        %v5053 = vadd.f32 %v4658, %v4978
        %v5054 = vadd.f32 %v4660, %v4980
        %v5055 = vadd.f32 %v4662, %v4982
        %v5056 = vadd.f32 %v4664, %v4984
        %v5057 = vadd.f32 %v4666, %v4986
        %v5058 = vadd.f32 %v4668, %v4988
        %v5059 = vadd.f32 %v4670, %v4990
        %v5060 = vadd.f32 %v4672, %v4992
        %v5061 = vadd.f32 %v4674, %v4994
        %v5062 = vadd.f32 %v4676, %v4996
        %v5063 = vadd.f32 %v4678, %v4998
        %v5064 = vadd.f32 %v4680, %v5000
        %v5065 = vrcp.pop %v5033
        %v5066 = vrcp.pop %v5034
        %v5067 = vrcp.pop %v5035
        %v5068 = vrcp.pop %v5036
        %v5069 = vrcp.pop %v5037
        %v5070 = vrcp.pop %v5038
        %v5071 = vrcp.pop %v5039
        %v5072 = vrcp.pop %v5040
        %v5073 = vrcp.pop %v5041
        %v5074 = vrcp.pop %v5042
        %v5075 = vrcp.pop %v5043
        %v5076 = vrcp.pop %v5044
        %v5077 = vrcp.pop %v5045
        %v5078 = vrcp.pop %v5046
        %v5079 = vrcp.pop %v5047
        %v5080 = vrcp.pop %v5048
        %v5081 = vrcp.pop %v5049
        %v5082 = vrcp.pop %v5050
        %v5083 = vrcp.pop %v5051
        %v5084 = vrcp.pop %v5052
        %v5085 = vrcp.pop %v5053
        %v5086 = vrcp.pop %v5054
        %v5087 = vrcp.pop %v5055
        %v5088 = vrcp.pop %v5056
        %v5089 = vrcp.pop %v5057
        %v5090 = vrcp.pop %v5058
        %v5091 = vrcp.pop %v5059
        %v5092 = vrcp.pop %v5060
        %v5093 = vrcp.pop %v5061
        %v5094 = vrcp.pop %v5062
        %v5095 = vrcp.pop %v5063
        %v5096 = vrcp.pop %v5064
        %v5097 = vmul.f32 %v4618, %v5065
        %v5098 = vmul.f32 %v4620, %v5066
        %v5099 = vmul.f32 %v4622, %v5067
        %v5100 = vmul.f32 %v4624, %v5068
        %v5101 = vmul.f32 %v4626, %v5069
        %v5102 = vmul.f32 %v4628, %v5070
        %v5103 = vmul.f32 %v4630, %v5071
        %v5104 = vmul.f32 %v4632, %v5072
        %v5105 = vmul.f32 %v4634, %v5073
        %v5106 = vmul.f32 %v4636, %v5074
        %v5107 = vmul.f32 %v4638, %v5075
        %v5108 = vmul.f32 %v4640, %v5076
        %v5109 = vmul.f32 %v4642, %v5077
        %v5110 = vmul.f32 %v4644, %v5078
        %v5111 = vmul.f32 %v4646, %v5079
        %v5112 = vmul.f32 %v4648, %v5080
        %v5113 = vmul.f32 %v4650, %v5081
        %v5114 = vmul.f32 %v4652, %v5082
        %v5115 = vmul.f32 %v4654, %v5083
        %v5116 = vmul.f32 %v4656, %v5084
        %v5117 = vmul.f32 %v4658, %v5085
        %v5118 = vmul.f32 %v4660, %v5086
        %v5119 = vmul.f32 %v4662, %v5087
        %v5120 = vmul.f32 %v4664, %v5088
        %v5121 = vmul.f32 %v4666, %v5089
        %v5122 = vmul.f32 %v4668, %v5090
        %v5123 = vmul.f32 %v4670, %v5091
        %v5124 = vmul.f32 %v4672, %v5092
        %v5125 = vmul.f32 %v4674, %v5093
        %v5126 = vmul.f32 %v4676, %v5094
        %v5127 = vmul.f32 %v4678, %v5095
        %v5128 = vmul.f32 %v4680, %v5096
        %5161 = vrot.lane.b32.xlu0 %v5065, 9
        %v5162 = vpop.permute.xlu0 %5161
        %5163 = vrot.lane.b32.xlu0 %v5066, 9
        %v5164 = vpop.permute.xlu0 %5163
        %5165 = vrot.lane.b32.xlu0 %v5067, 9
        %v5166 = vpop.permute.xlu0 %5165
        %5167 = vrot.lane.b32.xlu0 %v5068, 9
        %v5168 = vpop.permute.xlu0 %5167
        %5169 = vrot.lane.b32.xlu0 %v5069, 9
        %v5170 = vpop.permute.xlu0 %5169
        %5171 = vrot.lane.b32.xlu0 %v5070, 9
        %v5172 = vpop.permute.xlu0 %5171
        %5173 = vrot.lane.b32.xlu0 %v5071, 9
        %v5174 = vpop.permute.xlu0 %5173
        %5175 = vrot.lane.b32.xlu0 %v5072, 9
        %v5176 = vpop.permute.xlu0 %5175
        %5177 = vrot.lane.b32.xlu0 %v5073, 9
        %v5178 = vpop.permute.xlu0 %5177
        %5179 = vrot.lane.b32.xlu0 %v5074, 9
        %v5180 = vpop.permute.xlu0 %5179
        %5181 = vrot.lane.b32.xlu0 %v5075, 9
        %v5182 = vpop.permute.xlu0 %5181
        %5183 = vrot.lane.b32.xlu0 %v5076, 9
        %v5184 = vpop.permute.xlu0 %5183
        %5185 = vrot.lane.b32.xlu0 %v5077, 9
        %v5186 = vpop.permute.xlu0 %5185
        %5187 = vrot.lane.b32.xlu0 %v5078, 9
        %v5188 = vpop.permute.xlu0 %5187
        %5189 = vrot.lane.b32.xlu0 %v5079, 9
        %v5190 = vpop.permute.xlu0 %5189
        %5191 = vrot.lane.b32.xlu0 %v5080, 9
        %v5192 = vpop.permute.xlu0 %5191
        %5193 = vrot.lane.b32.xlu0 %v5081, 9
        %v5194 = vpop.permute.xlu0 %5193
        %5195 = vrot.lane.b32.xlu0 %v5082, 9
        %v5196 = vpop.permute.xlu0 %5195
        %5197 = vrot.lane.b32.xlu0 %v5083, 9
        %v5198 = vpop.permute.xlu0 %5197
        %5199 = vrot.lane.b32.xlu0 %v5084, 9
        %v5200 = vpop.permute.xlu0 %5199
        %5201 = vrot.lane.b32.xlu0 %v5085, 9
        %v5202 = vpop.permute.xlu0 %5201
        %5203 = vrot.lane.b32.xlu0 %v5086, 9
        %v5204 = vpop.permute.xlu0 %5203
        %5205 = vrot.lane.b32.xlu0 %v5087, 9
        %v5206 = vpop.permute.xlu0 %5205
        %5207 = vrot.lane.b32.xlu0 %v5088, 9
        %v5208 = vpop.permute.xlu0 %5207
        %5209 = vrot.lane.b32.xlu0 %v5089, 9
        %v5210 = vpop.permute.xlu0 %5209
        %5211 = vrot.lane.b32.xlu0 %v5090, 9
        %v5212 = vpop.permute.xlu0 %5211
        %5213 = vrot.lane.b32.xlu0 %v5091, 9
        %v5214 = vpop.permute.xlu0 %5213
        %5215 = vrot.lane.b32.xlu0 %v5092, 9
        %v5216 = vpop.permute.xlu0 %5215
        %5217 = vrot.lane.b32.xlu0 %v5093, 9
        %v5218 = vpop.permute.xlu0 %5217
        %5219 = vrot.lane.b32.xlu0 %v5094, 9
        %v5220 = vpop.permute.xlu0 %5219
        %5221 = vrot.lane.b32.xlu0 %v5095, 9
        %v5222 = vpop.permute.xlu0 %5221
        %5223 = vrot.lane.b32.xlu0 %v5096, 9
        %v5224 = vpop.permute.xlu0 %5223
        %v5257 = vmul.f32 %v4842, %v5162
        %v5258 = vmul.f32 %v4844, %v5164
        %v5259 = vmul.f32 %v4846, %v5166
        %v5260 = vmul.f32 %v4848, %v5168
        %v5261 = vmul.f32 %v4850, %v5170
        %v5262 = vmul.f32 %v4852, %v5172
        %v5263 = vmul.f32 %v4854, %v5174
        %v5264 = vmul.f32 %v4856, %v5176
        %v5265 = vmul.f32 %v4858, %v5178
        %v5266 = vmul.f32 %v4860, %v5180
        %v5267 = vmul.f32 %v4862, %v5182
        %v5268 = vmul.f32 %v4864, %v5184
        %v5269 = vmul.f32 %v4866, %v5186
        %v5270 = vmul.f32 %v4868, %v5188
        %v5271 = vmul.f32 %v4870, %v5190
        %v5272 = vmul.f32 %v4872, %v5192
        %v5273 = vmul.f32 %v4874, %v5194
        %v5274 = vmul.f32 %v4876, %v5196
        %v5275 = vmul.f32 %v4878, %v5198
        %v5276 = vmul.f32 %v4880, %v5200
        %v5277 = vmul.f32 %v4882, %v5202
        %v5278 = vmul.f32 %v4884, %v5204
        %v5279 = vmul.f32 %v4886, %v5206
        %v5280 = vmul.f32 %v4888, %v5208
        %v5281 = vmul.f32 %v4890, %v5210
        %v5282 = vmul.f32 %v4892, %v5212
        %v5283 = vmul.f32 %v4894, %v5214
        %v5284 = vmul.f32 %v4896, %v5216
        %v5285 = vmul.f32 %v4898, %v5218
        %v5286 = vmul.f32 %v4900, %v5220
        %v5287 = vmul.f32 %v4902, %v5222
        %v5288 = vmul.f32 %v4904, %v5224
        %vm5289 = vcmask 72704
        %v5290 = vsel %vm5289, %v5097, %v5257
        %v5291 = vsel %vm5289, %v5098, %v5258
        %v5292 = vsel %vm5289, %v5099, %v5259
        %v5293 = vsel %vm5289, %v5100, %v5260
        %v5294 = vsel %vm5289, %v5101, %v5261
        %v5295 = vsel %vm5289, %v5102, %v5262
        %v5296 = vsel %vm5289, %v5103, %v5263
        %v5297 = vsel %vm5289, %v5104, %v5264
        %v5298 = vsel %vm5289, %v5105, %v5265
        %v5299 = vsel %vm5289, %v5106, %v5266
        %v5300 = vsel %vm5289, %v5107, %v5267
        %v5301 = vsel %vm5289, %v5108, %v5268
        %v5302 = vsel %vm5289, %v5109, %v5269
        %v5303 = vsel %vm5289, %v5110, %v5270
        %v5304 = vsel %vm5289, %v5111, %v5271
        %v5305 = vsel %vm5289, %v5112, %v5272
        %v5306 = vsel %vm5289, %v5113, %v5273
        %v5307 = vsel %vm5289, %v5114, %v5274
        %v5308 = vsel %vm5289, %v5115, %v5275
        %v5309 = vsel %vm5289, %v5116, %v5276
        %v5310 = vsel %vm5289, %v5117, %v5277
        %v5311 = vsel %vm5289, %v5118, %v5278
        %v5312 = vsel %vm5289, %v5119, %v5279
        %v5313 = vsel %vm5289, %v5120, %v5280
        %v5314 = vsel %vm5289, %v5121, %v5281
        %v5315 = vsel %vm5289, %v5122, %v5282
        %v5316 = vsel %vm5289, %v5123, %v5283
        %v5317 = vsel %vm5289, %v5124, %v5284
        %v5318 = vsel %vm5289, %v5125, %v5285
        %v5319 = vsel %vm5289, %v5126, %v5286
        %v5320 = vsel %vm5289, %v5127, %v5287
        %v5321 = vsel %vm5289, %v5128, %v5288
        %vm5322 = vcmask 146432
        %v5323 = vsel %vm5322, %v5290, %v4346
        %v5324 = vsel %vm5322, %v5291, %v4348
        %v5325 = vsel %vm5322, %v5292, %v4351
        %v5326 = vsel %vm5322, %v5293, %v4353
        %v5327 = vsel %vm5322, %v5294, %v4356
        %v5328 = vsel %vm5322, %v5295, %v4358
        %v5329 = vsel %vm5322, %v5296, %v4361
        %v5330 = vsel %vm5322, %v5297, %v4363
        %v5331 = vsel %vm5322, %v5298, %v4366
        %v5332 = vsel %vm5322, %v5299, %v4368
        %v5333 = vsel %vm5322, %v5300, %v4371
        %v5334 = vsel %vm5322, %v5301, %v4373
        %v5335 = vsel %vm5322, %v5302, %v4376
        %v5336 = vsel %vm5322, %v5303, %v4378
        %v5337 = vsel %vm5322, %v5304, %v4381
        %v5338 = vsel %vm5322, %v5305, %v4383
        %v5339 = vsel %vm5322, %v5306, %v4386
        %v5340 = vsel %vm5322, %v5307, %v4388
        %v5341 = vsel %vm5322, %v5308, %v4391
        %v5342 = vsel %vm5322, %v5309, %v4393
        %v5343 = vsel %vm5322, %v5310, %v4396
        %v5344 = vsel %vm5322, %v5311, %v4398
        %v5345 = vsel %vm5322, %v5312, %v4401
        %v5346 = vsel %vm5322, %v5313, %v4403
        %v5347 = vsel %vm5322, %v5314, %v4406
        %v5348 = vsel %vm5322, %v5315, %v4408
        %v5349 = vsel %vm5322, %v5316, %v4411
        %v5350 = vsel %vm5322, %v5317, %v4413
        %v5351 = vsel %vm5322, %v5318, %v4416
        %v5352 = vsel %vm5322, %v5319, %v4418
        %v5353 = vsel %vm5322, %v5320, %v4421
        %v5354 = vsel %vm5322, %v5321, %v4423
        %v5355 = vpack.c.bf16 %v5323, %v5323
        %v5356 = vpack.c.bf16 %v5324, %v5324
        %v5357 = vpack.c.bf16 %v5325, %v5325
        %v5358 = vpack.c.bf16 %v5326, %v5326
        %v5359 = vpack.c.bf16 %v5327, %v5327
        %v5360 = vpack.c.bf16 %v5328, %v5328
        %v5361 = vpack.c.bf16 %v5329, %v5329
        %v5362 = vpack.c.bf16 %v5330, %v5330
        %v5363 = vpack.c.bf16 %v5331, %v5331
        %v5364 = vpack.c.bf16 %v5332, %v5332
        %v5365 = vpack.c.bf16 %v5333, %v5333
        %v5366 = vpack.c.bf16 %v5334, %v5334
        %v5367 = vpack.c.bf16 %v5335, %v5335
        %v5368 = vpack.c.bf16 %v5336, %v5336
        %v5369 = vpack.c.bf16 %v5337, %v5337
        %v5370 = vpack.c.bf16 %v5338, %v5338
        %v5371 = vpack.c.bf16 %v5339, %v5339
        %v5372 = vpack.c.bf16 %v5340, %v5340
        %v5373 = vpack.c.bf16 %v5341, %v5341
        %v5374 = vpack.c.bf16 %v5342, %v5342
        %v5375 = vpack.c.bf16 %v5343, %v5343
        %v5376 = vpack.c.bf16 %v5344, %v5344
        %v5377 = vpack.c.bf16 %v5345, %v5345
        %v5378 = vpack.c.bf16 %v5346, %v5346
        %v5379 = vpack.c.bf16 %v5347, %v5347
        %v5380 = vpack.c.bf16 %v5348, %v5348
        %v5381 = vpack.c.bf16 %v5349, %v5349
        %v5382 = vpack.c.bf16 %v5350, %v5350
        %v5383 = vpack.c.bf16 %v5351, %v5351
        %v5384 = vpack.c.bf16 %v5352, %v5352
        %v5385 = vpack.c.bf16 %v5353, %v5353
        %v5386 = vpack.c.bf16 %v5354, %v5354
        %5387 = vst [vmem:[%s231] sm:$0xf] %v5355
        %5388 = vst [vmem:[%s231 + $0x4] sm:$0xf] %v5356
        %5389 = vst [vmem:[%s231 + $0x8] sm:$0xf] %v5357
        %5390 = vst [vmem:[%s231 + $0xc] sm:$0xf] %v5358
        %5391 = vst [vmem:[%s231 + $0x10] sm:$0xf] %v5359
        %5392 = vst [vmem:[%s231 + $0x14] sm:$0xf] %v5360
        %5393 = vst [vmem:[%s231 + $0x18] sm:$0xf] %v5361
        %5394 = vst [vmem:[%s231 + $0x1c] sm:$0xf] %v5362
        %5395 = vst [vmem:[%s231 + $0x20] sm:$0xf] %v5363
        %5396 = vst [vmem:[%s231 + $0x24] sm:$0xf] %v5364
        %5397 = vst [vmem:[%s231 + $0x28] sm:$0xf] %v5365
        %5398 = vst [vmem:[%s231 + $0x2c] sm:$0xf] %v5366
        %5399 = vst [vmem:[%s231 + $0x30] sm:$0xf] %v5367
        %5400 = vst [vmem:[%s231 + $0x34] sm:$0xf] %v5368
        %5401 = vst [vmem:[%s231 + $0x38] sm:$0xf] %v5369
        %5402 = vst [vmem:[%s231 + $0x3c] sm:$0xf] %v5370
        %5403 = vst [vmem:[%s231 + $0x40] sm:$0xf] %v5371
        %5404 = vst [vmem:[%s231 + $0x44] sm:$0xf] %v5372
        %5405 = vst [vmem:[%s231 + $0x48] sm:$0xf] %v5373
        %5406 = vst [vmem:[%s231 + $0x4c] sm:$0xf] %v5374
        %5407 = vst [vmem:[%s231 + $0x50] sm:$0xf] %v5375
        %5408 = vst [vmem:[%s231 + $0x54] sm:$0xf] %v5376
        %5409 = vst [vmem:[%s231 + $0x58] sm:$0xf] %v5377
        %5410 = vst [vmem:[%s231 + $0x5c] sm:$0xf] %v5378
        %5411 = vst [vmem:[%s231 + $0x60] sm:$0xf] %v5379
        %5412 = vst [vmem:[%s231 + $0x64] sm:$0xf] %v5380
        %5413 = vst [vmem:[%s231 + $0x68] sm:$0xf] %v5381
        %5414 = vst [vmem:[%s231 + $0x6c] sm:$0xf] %v5382
        %5415 = vst [vmem:[%s231 + $0x70] sm:$0xf] %v5383
        %5416 = vst [vmem:[%s231 + $0x74] sm:$0xf] %v5384
        %5417 = vst [vmem:[%s231 + $0x78] sm:$0xf] %v5385
        %5418 = vst [vmem:[%s231 + $0x7c] sm:$0xf] %v5386
        %s5419 = sand.u32 %s151, 1
        %s5420 = scalar_lea.sflag [#allocation3], %s5419
        %s5421 = sand.u32 %s151, 1
        %s5422 = smul.addr %s5421, 128
        %s5423 = scalar_lea.vmem [#allocation2], %s5422
        // Predicated region
        $region41: #{tpu_custom_call.1} parent=39 // pred_check
          %p5424 = pneg %p161
        $region42: #{tpu_custom_call.1} parent=39 // pred_check_branch
          %5426 = sbr.rel (%p5424) target = $region44
        $region43: #{tpu_custom_call.1} parent=39 // pred_region
          %s5427 = smul.u32 32, %s24
          %5429 = vsyncadd %s5420, 0
          %s5430 = smul.addr %s23, 32
          %s5431 = sadd.s32 %s5427, %s5430
          %s5432 = smul.addr %s5431, 4
          %s5433 = scalar_lea.hbm %s5, %s5432
          %s5434 = sshll.u32 %s5423, 4
          %s5435 = int_to_ptr.vmem [resolvable:$true] %s5434
          %s5436 = sshll.u32 %s5433, 4
          %s5437 = int_to_ptr.hbm [resolvable:$true] %s5436
          %5442 = dma.vmem_to_hbm [thread:$0]  %s5435, 2048, %s5437, %s5420, 64, 64, 4
        $region44: #{tpu_custom_call.1} parent=39 // pred_fallthru
          _
      $region40: #{tpu_custom_call.1} parent=5 // pred_fallthru
        _
      %p5443 = scmp.le.s32.totalorder 2, %s14
      // Predicated region
      $region45: #{tpu_custom_call.1} parent=5 // pred_check
        %p5444 = pneg %p5443
      $region46: #{tpu_custom_call.1} parent=5 // pred_check_branch
        %5446 = sbr.rel (%p5444) target = $region48
      $region47: #{tpu_custom_call.1} parent=5 // pred_region
        %s5447 = ssub.s32 %s14, 2
        // Predicated region
        $region49: #{tpu_custom_call.1} parent=47 // pred_check
          %p5448 = pneg %p167
        $region50: #{tpu_custom_call.1} parent=47 // pred_check_branch
          %5450 = sbr.rel (%p5448) target = $region52
        $region51: #{tpu_custom_call.1} parent=47 // pred_region
          %s5451 = sand.u32 %s152, 1
          %s5452 = scalar_lea.sflag [#allocation3], %s5451
          %s5453 = sand.u32 %s152, 1
          %s5454 = smul.addr %s5453, 128
          %s5455 = scalar_lea.vmem [#allocation2], %s5454
          %5457 = dma.done %s5452, 2048
        $region52: #{tpu_custom_call.1} parent=47 // pred_fallthru
          _
      $region48: #{tpu_custom_call.1} parent=5 // pred_fallthru
        _
    $region6: #{tpu_custom_call.1} parent=1 // loop_footer
      %s18 = sadd.s32 1, %s14
    $region7: #{tpu_custom_call.1} parent=1 // loop_footer_branch
      %13 = sbr.rel target = $region3
    $region8: #{tpu_custom_call.1} parent=1 // loop_exit
      _
    %5458 = vsyncpa [#allocation3], 1
    %s5459 = scalar_lea.sflag [#allocation3], 1
    %5460 = vsyncpa %s5459, 1

</llo_original>
